<compile_context>
chip_gen: v7x
topology: tpu7x:2x2x1
jax: 0.10.0
libtpu: 0.0.40
codegen_flags: <defaults>
</compile_context>

<pallas_src>
import functools
import math

import jax
import jax.numpy as jnp
import numpy as np
from jax.experimental import pallas as pl
from jax.experimental.pallas import tpu as pltpu


# ----------------------------------------------------------------------------
# Synthetic encoder configuration
# ----------------------------------------------------------------------------
INPUT_CHANNELS = 4
FEATURES_PER_STAGE = (8, 16, 32)
STRIDES_PER_STAGE = (1, 2, 2)
N_CONV_PER_STAGE = 2
KERNEL = 3
EPS = 1e-5
NEG_SLOPE = 0.01

_SUBLANE = 8
_LANE = 128
CIN_PAD = ((INPUT_CHANNELS + _SUBLANE - 1) // _SUBLANE) * _SUBLANE


def _round_up(x, m):
    return ((x + m - 1) // m) * m


# ----------------------------------------------------------------------------
# Deterministic parameter init (kaiming_normal fan_out / leaky_relu conv weights,
# zero conv bias, norm weight=1 / bias=0) -- mirrors the module's __init__.
# ----------------------------------------------------------------------------
def init_encoder_params(key):
    params = []
    cin = INPUT_CHANNELS
    for feats in FEATURES_PER_STAGE:
        stage = []
        for i in range(N_CONV_PER_STAGE):
            key, sub = jax.random.split(key)
            c_in_blk = cin if i == 0 else feats
            fan_out = feats * KERNEL * KERNEL
            std = math.sqrt(2.0 / fan_out)
            w = std * jax.random.normal(sub, (KERNEL, KERNEL, c_in_blk, feats),
                                        dtype=jnp.float32)       # HWIO
            stage.append(dict(
                w=w,
                # kept for checkpoint fidelity; cancelled by InstanceNorm -> not used in kernel
                b=jnp.zeros((feats,), jnp.float32),
                gamma=jnp.ones((feats,), jnp.float32),
                beta=jnp.zeros((feats,), jnp.float32),
            ))
        params.append(stage)
        cin = feats
    return params


# ----------------------------------------------------------------------------
# Constant helpers built at trace time (numpy) and passed as kernel operands.
# ----------------------------------------------------------------------------
def _make_mask(h, w, l_pad):
    """(1, l_pad) mask: 1.0 at interior columns of the flat padded layout, 0 at flat-pad
    columns and at the 128-lane slack."""
    wp = w + 2
    l = h * wp
    cols = np.arange(l) % wp
    m = np.zeros((1, l_pad), np.float32)
    m[0, :l] = ((cols >= 1) & (cols <= w)).astype(np.float32)
    return m


def _make_sel(h_in, w_in, l_in_pad, l_out_pad):
    """0/1 decimation matrix mapping a dense stride-1 conv result (flat layout at the
    input resolution, padded to l_in_pad) to the stride-2 output (flat layout at the
    output resolution, padded to l_out_pad)."""
    wp_in = w_in + 2
    h_out, w_out = h_in // 2, w_in // 2
    wp_out = w_out + 2
    s = np.zeros((l_in_pad, l_out_pad), np.float32)
    for yo in range(h_out):
        for xo in range(w_out):
            s[2 * yo * wp_in + 2 * xo + 1, yo * wp_out + xo + 1] = 1.0
    return s


# ----------------------------------------------------------------------------
# Fused Conv3x3 (+ optional stride-2) + InstanceNorm + LeakyReLU, on flat layout.
# ----------------------------------------------------------------------------
def _conv_block(src_ref, w_ref, prm_ref, mask_ref, *, wp_in, dense_len, cout, hw,
                sel_ref=None):
    """src_ref  : (C_in_pad, L_src)   bf16 flat zero-padded activation (VMEM ref)
       w_ref    : (9*C_out, C_in_pad) bf16 per-tap weights; tap t = rows [t*C_out,(t+1)*C_out)
       prm_ref  : (C_out, 2)          f32 packed [gamma, beta] (conv bias dropped: it is
                                      mathematically cancelled by the IN mean subtraction)
       mask_ref : (1, L_out)          f32, 1.0 at valid interior cols, 0 at pad/slack cols
       sel_ref  : (L_dense, L_out)    bf16 0/1 decimation matrix (stride-2 convs only)
       returns  : (C_out, L_out)      f32 activation, zeroed at pad/slack columns
    """
    # 9 direct-slice tap GEMMs (no im2col concat): each tap is a constant-offset contiguous
    # lane slice of the source ref, fed straight to the MXU with f32 accumulation.
    acc = None
    for t in range(9):
        i, j = divmod(t, 3)
        sh = i * wp_in + j
        wt = w_ref[t * cout:(t + 1) * cout, :]              # (C_out, C_in_pad) bf16
        xt = src_ref[:, sh:sh + dense_len]                  # (C_in_pad, L_dense) bf16
        p = jnp.dot(wt, xt, preferred_element_type=jnp.float32)
        acc = p if acc is None else acc + p

    if sel_ref is not None:
        # stride 2: decimate the dense stride-1 result with a constant 0/1 matrix
        # (bf16 operands -> single-pass MXU matmul, f32 accumulate; no gather loads).
        acc = jnp.dot(acc.astype(jnp.bfloat16), sel_ref[...],
                      preferred_element_type=jnp.float32)   # (C_out, L_out)

    # fused InstanceNorm + LeakyReLU epilogue: one sweep for both stats, folded affine.
    mask = mask_ref[...]                                    # (1, L_out)
    am = acc * mask
    inv_n = 1.0 / float(hw)
    mean = jnp.sum(am, axis=1, keepdims=True) * inv_n
    var = jnp.sum(am * acc, axis=1, keepdims=True) * inv_n - mean * mean
    var = jnp.maximum(var, 0.0)                             # guard cancellation
    a = prm_ref[:, 0:1] * jax.lax.rsqrt(var + EPS)          # gamma / std
    b = prm_ref[:, 1:2] - mean * a                          # beta - mean * gamma / std
    y = acc * a + b
    y = jnp.where(y >= 0.0, y, NEG_SLOPE * y)               # LeakyReLU(0.01)
    return y * mask                                         # re-zero pad / slack columns


def _encoder_kernel(x_ref,
                    cw0, cp0, cw1, cp1, cw2, cp2, cw3, cp3, cw4, cp4, cw5, cp5,
                    sel1, sel2, m0, m1, m2,
                    o0, o1, o2,
                    a0, a1, a2, a3, a4,
                    *, geoms, lens):
    (h0, wd0), (h1, wd1), (h2, wd2) = geoms
    l0p, l1p, l2p = lens
    wp0, wp1, wp2 = wd0 + 2, wd1 + 2, wd2 + 2
    f0, f1, f2 = FEATURES_PER_STAGE

    # zero the activation scratch so the 1-px halos / slack stay 0 (noise at these sizes;
    # per-core safe under v7x megacore grid splitting -- deliberately no program_id guard).
    for r in (a0, a1, a2, a3, a4):
        r[...] = jnp.zeros_like(r)

    # ---------------- stage 0 : stride 1, two convs ----------------
    y = _conv_block(x_ref, cw0, cp0, m0, wp_in=wp0, dense_len=l0p, cout=f0, hw=h0 * wd0)
    a0[:, 1 + wp0:1 + wp0 + l0p] = y.astype(jnp.bfloat16)
    y = _conv_block(a0, cw1, cp1, m0, wp_in=wp0, dense_len=l0p, cout=f0, hw=h0 * wd0)
    o0[...] = y                                              # skip 0 (lane-dense store)
    a1[:, 1 + wp0:1 + wp0 + l0p] = y.astype(jnp.bfloat16)

    # ---------------- stage 1 : first conv stride 2 ----------------
    y = _conv_block(a1, cw2, cp2, m1, wp_in=wp0, dense_len=l0p, cout=f1, hw=h1 * wd1,
                    sel_ref=sel1)
    a2[:, 1 + wp1:1 + wp1 + l1p] = y.astype(jnp.bfloat16)
    y = _conv_block(a2, cw3, cp3, m1, wp_in=wp1, dense_len=l1p, cout=f1, hw=h1 * wd1)
    o1[...] = y                                              # skip 1
    a3[:, 1 + wp1:1 + wp1 + l1p] = y.astype(jnp.bfloat16)

    # ---------------- stage 2 : first conv stride 2 ----------------
    y = _conv_block(a3, cw4, cp4, m2, wp_in=wp1, dense_len=l1p, cout=f2, hw=h2 * wd2,
                    sel_ref=sel2)
    a4[:, 1 + wp2:1 + wp2 + l2p] = y.astype(jnp.bfloat16)
    y = _conv_block(a4, cw5, cp5, m2, wp_in=wp2, dense_len=l2p, cout=f2, hw=h2 * wd2)
    o2[...] = y                                              # skip 2


# ----------------------------------------------------------------------------
# Jitted forward: one pallas_call for the whole encoder.
# ----------------------------------------------------------------------------
def _encoder_forward_impl(params, x):
    n, cin, h, w = x.shape
    stride_prod = int(np.prod(STRIDES_PER_STAGE))
    assert h % stride_prod == 0 and w % stride_prod == 0, \
        "kernel geometry requires H, W divisible by prod(strides)"

    # per-stage output resolutions
    geoms = []
    hh, ww = h, w
    for st in STRIDES_PER_STAGE:
        hh, ww = hh // st, ww // st
        geoms.append((hh, ww))
    (h0, w0), (h1, w1), (h2, w2) = geoms
    wp0, wp1, wp2 = w0 + 2, w1 + 2, w2 + 2

    # flat output lengths padded to multiples of 128 lanes -> unmasked lane-dense stores
    l0p = _round_up(h0 * wp0, _LANE)
    l1p = _round_up(h1 * wp1, _LANE)
    l2p = _round_up(h2 * wp2, _LANE)
    # source buffer lengths: must cover max tap offset (2*wp+2) + dense slice length
    ls0 = _round_up(2 * wp0 + 2 + l0p, _LANE)
    ls1 = _round_up(2 * wp1 + 2 + l1p, _LANE)
    ls2 = _round_up(2 * wp2 + 2 + l2p, _LANE)

    # --- prepare the input ONCE (fused under jit): channel-pad to sublane multiple,
    #     spatial zero-pad, flatten to the shifted flat-padded layout, cast bf16 ---
    xp = jnp.pad(x, ((0, 0), (0, CIN_PAD - cin), (1, 1), (1, 1)))
    xflat = xp.reshape(n, CIN_PAD, (h + 2) * (w + 2))
    xflat = jnp.pad(xflat, ((0, 0), (0, 0), (1, ls0 - (h + 2) * (w + 2) - 1)))
    xflat = xflat.astype(jnp.bfloat16)

    # --- per-conv operands: per-tap weight stack (9*Cout, Cin_pad) bf16 and packed
    #     (Cout, 2) [gamma, beta] f32 (conv bias dropped: cancelled by InstanceNorm) ---
    wmats, prms = [], []
    for stage in params:
        for blk in stage:
            wgt = blk["w"]                                   # HWIO (3,3,cin,cout)
            kh, kw, cin_b, cout = wgt.shape
            cin_p = _round_up(cin_b, _SUBLANE)
            if cin_p != cin_b:
                wgt = jnp.pad(wgt, ((0, 0), (0, 0), (0, cin_p - cin_b), (0, 0)))
            wm = jnp.transpose(wgt, (0, 1, 3, 2)).reshape(kh * kw * cout, cin_p)
            wmats.append(wm.astype(jnp.bfloat16))
            prms.append(jnp.stack([blk["gamma"], blk["beta"]], axis=1))

    # constant 0/1 decimation matrices (stride-2 convs, bf16) + interior-column masks
    sel1 = jnp.asarray(_make_sel(h0, w0, l0p, l1p), dtype=jnp.bfloat16)
    sel2 = jnp.asarray(_make_sel(h1, w1, l1p, l2p), dtype=jnp.bfloat16)
    m0 = jnp.asarray(_make_mask(h0, w0, l0p))
    m1 = jnp.asarray(_make_mask(h1, w1, l1p))
    m2 = jnp.asarray(_make_mask(h2, w2, l2p))

    operands = [xflat]
    for wm, pr in zip(wmats, prms):
        operands += [wm, pr]
    operands += [sel1, sel2, m0, m1, m2]

    in_specs = [pl.BlockSpec((None, CIN_PAD, ls0), lambda b: (b, 0, 0))]
    in_specs += [pl.BlockSpec(op.shape, lambda b: (0, 0)) for op in operands[1:]]

    f0, f1, f2 = FEATURES_PER_STAGE
    out_shape = (
        jax.ShapeDtypeStruct((n, f0, l0p), jnp.float32),
        jax.ShapeDtypeStruct((n, f1, l1p), jnp.float32),
        jax.ShapeDtypeStruct((n, f2, l2p), jnp.float32),
    )
    out_specs = (
        pl.BlockSpec((None, f0, l0p), lambda b: (b, 0, 0)),
        pl.BlockSpec((None, f1, l1p), lambda b: (b, 0, 0)),
        pl.BlockSpec((None, f2, l2p), lambda b: (b, 0, 0)),
    )
    # bf16 activation scratch (IN / LeakyReLU math stays f32 in registers)
    scratch_shapes = [
        pltpu.VMEM((f0, ls0), jnp.bfloat16),   # after conv0_0
        pltpu.VMEM((f0, ls0), jnp.bfloat16),   # after conv0_1 (skip0, feeds stride-2)
        pltpu.VMEM((f1, ls1), jnp.bfloat16),   # after conv1_0
        pltpu.VMEM((f1, ls1), jnp.bfloat16),   # after conv1_1 (skip1, feeds stride-2)
        pltpu.VMEM((f2, ls2), jnp.bfloat16),   # after conv2_0
    ]

    kern = functools.partial(_encoder_kernel, geoms=tuple(geoms), lens=(l0p, l1p, l2p))
    o0, o1, o2 = pl.pallas_call(
        kern,
        out_shape=out_shape,
        grid=(n,),
        in_specs=in_specs,
        out_specs=out_specs,
        scratch_shapes=scratch_shapes,
        compiler_params=pltpu.CompilerParams(dimension_semantics=("parallel",)),
    )(*operands)

    # lane-dense flat kernel outputs -> NCHW skips (pure layout plumbing, fused under jit)
    skips = [
        o0[:, :, :h0 * wp0].reshape(n, f0, h0, wp0)[:, :, :, 1:w0 + 1],
        o1[:, :, :h1 * wp1].reshape(n, f1, h1, wp1)[:, :, :, 1:w1 + 1],
        o2[:, :, :h2 * wp2].reshape(n, f2, h2, wp2)[:, :, :, 1:w2 + 1],
    ]
    return skips


encoder_forward = jax.jit(_encoder_forward_impl)


# ----------------------------------------------------------------------------
# Pure-JAX reference (bf16 matmul operands to mirror the kernel's MXU precision).
# The conv bias IS added here (it is a mathematical no-op under InstanceNorm, which
# proves dropping it in the kernel preserves semantics).
# ----------------------------------------------------------------------------
def _reference_encoder(params, x):
    skips = []
    hcur = x
    for stage_params, stage_stride in zip(params, STRIDES_PER_STAGE):
        for i, blk in enumerate(stage_params):
            st = stage_stride if i == 0 else 1
            y = jax.lax.conv_general_dilated(
                hcur.astype(jnp.bfloat16), blk["w"].astype(jnp.bfloat16),
                window_strides=(st, st), padding=((1, 1), (1, 1)),
                dimension_numbers=("NCHW", "HWIO", "NCHW"),
                preferred_element_type=jnp.float32)
            y = y + blk["b"][None, :, None, None]
            mean = jnp.mean(y, axis=(2, 3), keepdims=True)
            var = jnp.mean((y - mean) ** 2, axis=(2, 3), keepdims=True)
            y = (y - mean) * jax.lax.rsqrt(var + EPS)
            y = y * blk["gamma"][None, :, None, None] + blk["beta"][None, :, None, None]
            hcur = jnp.where(y >= 0.0, y, NEG_SLOPE * y)
        skips.append(hcur)
    return skips


if __name__ == "__main__":
    key = jax.random.PRNGKey(0)
    pkey, xkey = jax.random.split(key)

    params = init_encoder_params(pkey)
    x = jax.random.normal(xkey, (2, INPUT_CHANNELS, 16, 16), dtype=jnp.float32)

    skips = encoder_forward(params, x)
    for s in skips:
        jax.block_until_ready(s)

    expected_shapes = [(2, 8, 16, 16), (2, 16, 8, 8), (2, 32, 4, 4)]
    assert [tuple(s.shape) for s in skips] == expected_shapes, \
        [tuple(s.shape) for s in skips]
    assert all(bool(jnp.all(jnp.isfinite(s))) for s in skips)

    # cross-check against a pure-JAX reference of the same encoder
    ref = _reference_encoder(params, x)
    for s, r in zip(skips, ref):
        err = float(jnp.max(jnp.abs(s - r)))
        assert err < 1e-1, f"kernel/reference mismatch: max abs err {err}"

    print("KERNEL_OK")
</pallas_src>

<mosaic_0001>
module attributes {stable_mosaic.version = 11 : i64} {
  func.func @_encoder_kernel(%arg0: i32, %arg1: memref<1x8x512xbf16, #tpu.memory_space<vmem>>, %arg2: memref<72x8xbf16, #tpu.memory_space<vmem>>, %arg3: memref<8x2xf32, #tpu.memory_space<vmem>>, %arg4: memref<72x8xbf16, #tpu.memory_space<vmem>>, %arg5: memref<8x2xf32, #tpu.memory_space<vmem>>, %arg6: memref<144x8xbf16, #tpu.memory_space<vmem>>, %arg7: memref<16x2xf32, #tpu.memory_space<vmem>>, %arg8: memref<144x16xbf16, #tpu.memory_space<vmem>>, %arg9: memref<16x2xf32, #tpu.memory_space<vmem>>, %arg10: memref<288x16xbf16, #tpu.memory_space<vmem>>, %arg11: memref<32x2xf32, #tpu.memory_space<vmem>>, %arg12: memref<288x32xbf16, #tpu.memory_space<vmem>>, %arg13: memref<32x2xf32, #tpu.memory_space<vmem>>, %arg14: memref<384x128xbf16, #tpu.memory_space<vmem>>, %arg15: memref<128x128xbf16, #tpu.memory_space<vmem>>, %arg16: memref<1x384xf32, #tpu.memory_space<vmem>>, %arg17: memref<1x128xf32, #tpu.memory_space<vmem>>, %arg18: memref<1x128xf32, #tpu.memory_space<vmem>>, %arg19: memref<1x8x384xf32, #tpu.memory_space<vmem>>, %arg20: memref<1x16x128xf32, #tpu.memory_space<vmem>>, %arg21: memref<1x32x128xf32, #tpu.memory_space<vmem>>, %arg22: memref<8x512xbf16, #tpu.memory_space<vmem>>, %arg23: memref<8x512xbf16, #tpu.memory_space<vmem>>, %arg24: memref<16x256xbf16, #tpu.memory_space<vmem>>, %arg25: memref<16x256xbf16, #tpu.memory_space<vmem>>, %arg26: memref<32x256xbf16, #tpu.memory_space<vmem>>) attributes {dimension_semantics = [#tpu.dimension_semantics<parallel>], iteration_bounds = array<i64: 2>, scalar_prefetch = 0 : i64, scratch_operands = 5 : i64, tpu.core_type = #tpu.core_type<tc>, window_params = [{transform_indices = @transform_0, window_bounds = array<i64: 1, 8, 512>}, {pipeline_mode = #tpu.pipeline_mode<synchronous>, transform_indices = @transform_1, window_bounds = array<i64: 72, 8>}, {pipeline_mode = #tpu.pipeline_mode<synchronous>, transform_indices = @transform_2, window_bounds = array<i64: 8, 2>}, {pipeline_mode = #tpu.pipeline_mode<synchronous>, transform_indices = @transform_3, window_bounds = array<i64: 72, 8>}, {pipeline_mode = #tpu.pipeline_mode<synchronous>, transform_indices = @transform_4, window_bounds = array<i64: 8, 2>}, {pipeline_mode = #tpu.pipeline_mode<synchronous>, transform_indices = @transform_5, window_bounds = array<i64: 144, 8>}, {pipeline_mode = #tpu.pipeline_mode<synchronous>, transform_indices = @transform_6, window_bounds = array<i64: 16, 2>}, {pipeline_mode = #tpu.pipeline_mode<synchronous>, transform_indices = @transform_7, window_bounds = array<i64: 144, 16>}, {pipeline_mode = #tpu.pipeline_mode<synchronous>, transform_indices = @transform_8, window_bounds = array<i64: 16, 2>}, {pipeline_mode = #tpu.pipeline_mode<synchronous>, transform_indices = @transform_9, window_bounds = array<i64: 288, 16>}, {pipeline_mode = #tpu.pipeline_mode<synchronous>, transform_indices = @transform_10, window_bounds = array<i64: 32, 2>}, {pipeline_mode = #tpu.pipeline_mode<synchronous>, transform_indices = @transform_11, window_bounds = array<i64: 288, 32>}, {pipeline_mode = #tpu.pipeline_mode<synchronous>, transform_indices = @transform_12, window_bounds = array<i64: 32, 2>}, {pipeline_mode = #tpu.pipeline_mode<synchronous>, transform_indices = @transform_13, window_bounds = array<i64: 384, 128>}, {pipeline_mode = #tpu.pipeline_mode<synchronous>, transform_indices = @transform_14, window_bounds = array<i64: 128, 128>}, {pipeline_mode = #tpu.pipeline_mode<synchronous>, transform_indices = @transform_15, window_bounds = array<i64: 1, 384>}, {pipeline_mode = #tpu.pipeline_mode<synchronous>, transform_indices = @transform_16, window_bounds = array<i64: 1, 128>}, {pipeline_mode = #tpu.pipeline_mode<synchronous>, transform_indices = @transform_17, window_bounds = array<i64: 1, 128>}, {transform_indices = @transform_18, window_bounds = array<i64: 1, 8, 384>}, {transform_indices = @transform_19, window_bounds = array<i64: 1, 16, 128>}, {transform_indices = @transform_20, window_bounds = array<i64: 1, 32, 128>}]} {
    %cst = arith.constant 0.000000e+00 : bf16
    %0 = vector.broadcast %cst : bf16 to vector<8x512xbf16>
    %c0 = arith.constant 0 : index
    %c0_0 = arith.constant 0 : index
    %1 = vector.load %arg22[%c0, %c0_0] : memref<8x512xbf16, #tpu.memory_space<vmem>>, vector<8x512xbf16>
    tpu.vector_store %arg22[%c0, %c0_0], %0 {strides = array<i32>} : memref<8x512xbf16, #tpu.memory_space<vmem>>, vector<8x512xbf16>,
    %cst_1 = arith.constant 0.000000e+00 : bf16
    %2 = vector.broadcast %cst_1 : bf16 to vector<8x512xbf16>
    %c0_2 = arith.constant 0 : index
    %c0_3 = arith.constant 0 : index
    %3 = vector.load %arg23[%c0_2, %c0_3] : memref<8x512xbf16, #tpu.memory_space<vmem>>, vector<8x512xbf16>
    tpu.vector_store %arg23[%c0_2, %c0_3], %2 {strides = array<i32>} : memref<8x512xbf16, #tpu.memory_space<vmem>>, vector<8x512xbf16>,
    %cst_4 = arith.constant 0.000000e+00 : bf16
    %4 = vector.broadcast %cst_4 : bf16 to vector<16x256xbf16>
    %c0_5 = arith.constant 0 : index
    %c0_6 = arith.constant 0 : index
    %5 = vector.load %arg24[%c0_5, %c0_6] : memref<16x256xbf16, #tpu.memory_space<vmem>>, vector<16x256xbf16>
    tpu.vector_store %arg24[%c0_5, %c0_6], %4 {strides = array<i32>} : memref<16x256xbf16, #tpu.memory_space<vmem>>, vector<16x256xbf16>,
    %cst_7 = arith.constant 0.000000e+00 : bf16
    %6 = vector.broadcast %cst_7 : bf16 to vector<16x256xbf16>
    %c0_8 = arith.constant 0 : index
    %c0_9 = arith.constant 0 : index
    %7 = vector.load %arg25[%c0_8, %c0_9] : memref<16x256xbf16, #tpu.memory_space<vmem>>, vector<16x256xbf16>
    tpu.vector_store %arg25[%c0_8, %c0_9], %6 {strides = array<i32>} : memref<16x256xbf16, #tpu.memory_space<vmem>>, vector<16x256xbf16>,
    %cst_10 = arith.constant 0.000000e+00 : bf16
    %8 = vector.broadcast %cst_10 : bf16 to vector<32x256xbf16>
    %c0_11 = arith.constant 0 : index
    %c0_12 = arith.constant 0 : index
    %9 = vector.load %arg26[%c0_11, %c0_12] : memref<32x256xbf16, #tpu.memory_space<vmem>>, vector<32x256xbf16>
    tpu.vector_store %arg26[%c0_11, %c0_12], %8 {strides = array<i32>} : memref<32x256xbf16, #tpu.memory_space<vmem>>, vector<32x256xbf16>,
    %c0_13 = arith.constant 0 : index
    %c0_14 = arith.constant 0 : index
    %10 = vector.load %arg2[%c0_13, %c0_14] : memref<72x8xbf16, #tpu.memory_space<vmem>>, vector<8x8xbf16>
    %c0_15 = arith.constant 0 : index
    %c0_16 = arith.constant 0 : index
    %c0_17 = arith.constant 0 : index
    %11 = vector.load %arg1[%c0_15, %c0_16, %c0_17] : memref<1x8x512xbf16, #tpu.memory_space<vmem>>, vector<1x8x384xbf16>
    %12 = vector.shape_cast %11 : vector<1x8x384xbf16> to vector<8x384xbf16>
    %cst_18 = arith.constant dense<0.000000e+00> : vector<8x384xf32>
    %13 = tpu.matmul %10, %12, %cst_18 {dimension_numbers = #tpu.dot_dimension_numbers<[1], [0], [0], [1], [0, 0, 1, 1], [], []>} : vector<8x8xbf16>, vector<8x384xbf16>, vector<8x384xf32> -> vector<8x384xf32>
    %c8 = arith.constant 8 : index
    %c0_19 = arith.constant 0 : index
    %14 = vector.load %arg2[%c8, %c0_19] : memref<72x8xbf16, #tpu.memory_space<vmem>>, vector<8x8xbf16>
    %c0_20 = arith.constant 0 : index
    %c0_21 = arith.constant 0 : index
    %c1 = arith.constant 1 : index
    %15 = vector.load %arg1[%c0_20, %c0_21, %c1] : memref<1x8x512xbf16, #tpu.memory_space<vmem>>, vector<1x8x384xbf16>
    %16 = vector.shape_cast %15 : vector<1x8x384xbf16> to vector<8x384xbf16>
    %cst_22 = arith.constant dense<0.000000e+00> : vector<8x384xf32>
    %17 = tpu.matmul %14, %16, %cst_22 {dimension_numbers = #tpu.dot_dimension_numbers<[1], [0], [0], [1], [0, 0, 1, 1], [], []>} : vector<8x8xbf16>, vector<8x384xbf16>, vector<8x384xf32> -> vector<8x384xf32>
    %18 = arith.addf %13, %17 : vector<8x384xf32>
    %c16 = arith.constant 16 : index
    %c0_23 = arith.constant 0 : index
    %19 = vector.load %arg2[%c16, %c0_23] : memref<72x8xbf16, #tpu.memory_space<vmem>>, vector<8x8xbf16>
    %c0_24 = arith.constant 0 : index
    %c0_25 = arith.constant 0 : index
    %c2 = arith.constant 2 : index
    %20 = vector.load %arg1[%c0_24, %c0_25, %c2] : memref<1x8x512xbf16, #tpu.memory_space<vmem>>, vector<1x8x384xbf16>
    %21 = vector.shape_cast %20 : vector<1x8x384xbf16> to vector<8x384xbf16>
    %cst_26 = arith.constant dense<0.000000e+00> : vector<8x384xf32>
    %22 = tpu.matmul %19, %21, %cst_26 {dimension_numbers = #tpu.dot_dimension_numbers<[1], [0], [0], [1], [0, 0, 1, 1], [], []>} : vector<8x8xbf16>, vector<8x384xbf16>, vector<8x384xf32> -> vector<8x384xf32>
    %23 = arith.addf %18, %22 : vector<8x384xf32>
    %c24 = arith.constant 24 : index
    %c0_27 = arith.constant 0 : index
    %24 = vector.load %arg2[%c24, %c0_27] : memref<72x8xbf16, #tpu.memory_space<vmem>>, vector<8x8xbf16>
    %c0_28 = arith.constant 0 : index
    %c0_29 = arith.constant 0 : index
    %c18 = arith.constant 18 : index
    %25 = vector.load %arg1[%c0_28, %c0_29, %c18] : memref<1x8x512xbf16, #tpu.memory_space<vmem>>, vector<1x8x384xbf16>
    %26 = vector.shape_cast %25 : vector<1x8x384xbf16> to vector<8x384xbf16>
    %cst_30 = arith.constant dense<0.000000e+00> : vector<8x384xf32>
    %27 = tpu.matmul %24, %26, %cst_30 {dimension_numbers = #tpu.dot_dimension_numbers<[1], [0], [0], [1], [0, 0, 1, 1], [], []>} : vector<8x8xbf16>, vector<8x384xbf16>, vector<8x384xf32> -> vector<8x384xf32>
    %28 = arith.addf %23, %27 : vector<8x384xf32>
    %c32 = arith.constant 32 : index
    %c0_31 = arith.constant 0 : index
    %29 = vector.load %arg2[%c32, %c0_31] : memref<72x8xbf16, #tpu.memory_space<vmem>>, vector<8x8xbf16>
    %c0_32 = arith.constant 0 : index
    %c0_33 = arith.constant 0 : index
    %c19 = arith.constant 19 : index
    %30 = vector.load %arg1[%c0_32, %c0_33, %c19] : memref<1x8x512xbf16, #tpu.memory_space<vmem>>, vector<1x8x384xbf16>
    %31 = vector.shape_cast %30 : vector<1x8x384xbf16> to vector<8x384xbf16>
    %cst_34 = arith.constant dense<0.000000e+00> : vector<8x384xf32>
    %32 = tpu.matmul %29, %31, %cst_34 {dimension_numbers = #tpu.dot_dimension_numbers<[1], [0], [0], [1], [0, 0, 1, 1], [], []>} : vector<8x8xbf16>, vector<8x384xbf16>, vector<8x384xf32> -> vector<8x384xf32>
    %33 = arith.addf %28, %32 : vector<8x384xf32>
    %c40 = arith.constant 40 : index
    %c0_35 = arith.constant 0 : index
    %34 = vector.load %arg2[%c40, %c0_35] : memref<72x8xbf16, #tpu.memory_space<vmem>>, vector<8x8xbf16>
    %c0_36 = arith.constant 0 : index
    %c0_37 = arith.constant 0 : index
    %c20 = arith.constant 20 : index
    %35 = vector.load %arg1[%c0_36, %c0_37, %c20] : memref<1x8x512xbf16, #tpu.memory_space<vmem>>, vector<1x8x384xbf16>
    %36 = vector.shape_cast %35 : vector<1x8x384xbf16> to vector<8x384xbf16>
    %cst_38 = arith.constant dense<0.000000e+00> : vector<8x384xf32>
    %37 = tpu.matmul %34, %36, %cst_38 {dimension_numbers = #tpu.dot_dimension_numbers<[1], [0], [0], [1], [0, 0, 1, 1], [], []>} : vector<8x8xbf16>, vector<8x384xbf16>, vector<8x384xf32> -> vector<8x384xf32>
    %38 = arith.addf %33, %37 : vector<8x384xf32>
    %c48 = arith.constant 48 : index
    %c0_39 = arith.constant 0 : index
    %39 = vector.load %arg2[%c48, %c0_39] : memref<72x8xbf16, #tpu.memory_space<vmem>>, vector<8x8xbf16>
    %c0_40 = arith.constant 0 : index
    %c0_41 = arith.constant 0 : index
    %c36 = arith.constant 36 : index
    %40 = vector.load %arg1[%c0_40, %c0_41, %c36] : memref<1x8x512xbf16, #tpu.memory_space<vmem>>, vector<1x8x384xbf16>
    %41 = vector.shape_cast %40 : vector<1x8x384xbf16> to vector<8x384xbf16>
    %cst_42 = arith.constant dense<0.000000e+00> : vector<8x384xf32>
    %42 = tpu.matmul %39, %41, %cst_42 {dimension_numbers = #tpu.dot_dimension_numbers<[1], [0], [0], [1], [0, 0, 1, 1], [], []>} : vector<8x8xbf16>, vector<8x384xbf16>, vector<8x384xf32> -> vector<8x384xf32>
    %43 = arith.addf %38, %42 : vector<8x384xf32>
    %c56 = arith.constant 56 : index
    %c0_43 = arith.constant 0 : index
    %44 = vector.load %arg2[%c56, %c0_43] : memref<72x8xbf16, #tpu.memory_space<vmem>>, vector<8x8xbf16>
    %c0_44 = arith.constant 0 : index
    %c0_45 = arith.constant 0 : index
    %c37 = arith.constant 37 : index
    %45 = vector.load %arg1[%c0_44, %c0_45, %c37] : memref<1x8x512xbf16, #tpu.memory_space<vmem>>, vector<1x8x384xbf16>
    %46 = vector.shape_cast %45 : vector<1x8x384xbf16> to vector<8x384xbf16>
    %cst_46 = arith.constant dense<0.000000e+00> : vector<8x384xf32>
    %47 = tpu.matmul %44, %46, %cst_46 {dimension_numbers = #tpu.dot_dimension_numbers<[1], [0], [0], [1], [0, 0, 1, 1], [], []>} : vector<8x8xbf16>, vector<8x384xbf16>, vector<8x384xf32> -> vector<8x384xf32>
    %48 = arith.addf %43, %47 : vector<8x384xf32>
    %c64 = arith.constant 64 : index
    %c0_47 = arith.constant 0 : index
    %49 = vector.load %arg2[%c64, %c0_47] : memref<72x8xbf16, #tpu.memory_space<vmem>>, vector<8x8xbf16>
    %c0_48 = arith.constant 0 : index
    %c0_49 = arith.constant 0 : index
    %c38 = arith.constant 38 : index
    %50 = vector.load %arg1[%c0_48, %c0_49, %c38] : memref<1x8x512xbf16, #tpu.memory_space<vmem>>, vector<1x8x384xbf16>
    %51 = vector.shape_cast %50 : vector<1x8x384xbf16> to vector<8x384xbf16>
    %cst_50 = arith.constant dense<0.000000e+00> : vector<8x384xf32>
    %52 = tpu.matmul %49, %51, %cst_50 {dimension_numbers = #tpu.dot_dimension_numbers<[1], [0], [0], [1], [0, 0, 1, 1], [], []>} : vector<8x8xbf16>, vector<8x384xbf16>, vector<8x384xf32> -> vector<8x384xf32>
    %53 = arith.addf %48, %52 : vector<8x384xf32>
    %c0_51 = arith.constant 0 : index
    %c0_52 = arith.constant 0 : index
    %54 = vector.load %arg16[%c0_51, %c0_52] : memref<1x384xf32, #tpu.memory_space<vmem>>, vector<1x384xf32>
    %55 = vector.broadcast %54 : vector<1x384xf32> to vector<8x384xf32>
    %56 = arith.mulf %53, %55 : vector<8x384xf32>
    %cst_53 = arith.constant dense<0.000000e+00> : vector<8xf32>
    %57 = vector.multi_reduction <add>, %56, %cst_53 [1] : vector<8x384xf32> to vector<8xf32>
    %58 = vector.shape_cast %57 : vector<8xf32> to vector<8x1xf32>
    %cst_54 = arith.constant 3.906250e-03 : f32
    %59 = vector.broadcast %cst_54 : f32 to vector<8x1xf32>
    %60 = arith.mulf %58, %59 : vector<8x1xf32>
    %61 = arith.mulf %56, %53 : vector<8x384xf32>
    %cst_55 = arith.constant dense<0.000000e+00> : vector<8xf32>
    %62 = vector.multi_reduction <add>, %61, %cst_55 [1] : vector<8x384xf32> to vector<8xf32>
    %63 = vector.shape_cast %62 : vector<8xf32> to vector<8x1xf32>
    %cst_56 = arith.constant 3.906250e-03 : f32
    %64 = vector.broadcast %cst_56 : f32 to vector<8x1xf32>
    %65 = arith.mulf %63, %64 : vector<8x1xf32>
    %66 = arith.mulf %60, %60 : vector<8x1xf32>
    %67 = arith.subf %65, %66 : vector<8x1xf32>
    %cst_57 = arith.constant 0.000000e+00 : f32
    %68 = vector.broadcast %cst_57 : f32 to vector<8x1xf32>
    %69 = arith.maximumf %67, %68 : vector<8x1xf32>
    %c0_58 = arith.constant 0 : index
    %c0_59 = arith.constant 0 : index
    %70 = vector.load %arg3[%c0_58, %c0_59] : memref<8x2xf32, #tpu.memory_space<vmem>>, vector<8x1xf32>
    %cst_60 = arith.constant 9.99999974E-6 : f32
    %71 = vector.broadcast %cst_60 : f32 to vector<8x1xf32>
    %72 = arith.addf %69, %71 : vector<8x1xf32>
    %73 = math.rsqrt %72 : vector<8x1xf32>
    %74 = arith.mulf %70, %73 : vector<8x1xf32>
    %c0_61 = arith.constant 0 : index
    %c1_62 = arith.constant 1 : index
    %75 = vector.load %arg3[%c0_61, %c1_62] : memref<8x2xf32, #tpu.memory_space<vmem>>, vector<8x1xf32>
    %76 = arith.mulf %60, %74 : vector<8x1xf32>
    %77 = arith.subf %75, %76 : vector<8x1xf32>
    %78 = vector.broadcast %74 : vector<8x1xf32> to vector<8x384xf32>
    %79 = arith.mulf %53, %78 : vector<8x384xf32>
    %80 = vector.broadcast %77 : vector<8x1xf32> to vector<8x384xf32>
    %81 = arith.addf %79, %80 : vector<8x384xf32>
    %cst_63 = arith.constant 0.000000e+00 : f32
    %82 = vector.broadcast %cst_63 : f32 to vector<8x384xf32>
    %83 = arith.cmpf oge, %81, %82 : vector<8x384xf32>
    %cst_64 = arith.constant 0.00999999977 : f32
    %84 = vector.broadcast %cst_64 : f32 to vector<8x384xf32>
    %85 = arith.mulf %84, %81 : vector<8x384xf32>
    %86 = arith.select %83, %81, %85 : vector<8x384xi1>, vector<8x384xf32>
    %87 = vector.broadcast %54 : vector<1x384xf32> to vector<8x384xf32>
    %88 = arith.mulf %86, %87 : vector<8x384xf32>
    %89 = arith.truncf %88 : vector<8x384xf32> to vector<8x384xbf16>
    %c0_65 = arith.constant 0 : index
    %c19_66 = arith.constant 19 : index
    %90 = vector.load %arg22[%c0_65, %c19_66] : memref<8x512xbf16, #tpu.memory_space<vmem>>, vector<8x384xbf16>
    tpu.vector_store %arg22[%c0_65, %c19_66], %89 {strides = array<i32>} : memref<8x512xbf16, #tpu.memory_space<vmem>>, vector<8x384xbf16>,
    %c0_67 = arith.constant 0 : index
    %c0_68 = arith.constant 0 : index
    %91 = vector.load %arg4[%c0_67, %c0_68] : memref<72x8xbf16, #tpu.memory_space<vmem>>, vector<8x8xbf16>
    %c0_69 = arith.constant 0 : index
    %c0_70 = arith.constant 0 : index
    %92 = vector.load %arg22[%c0_69, %c0_70] : memref<8x512xbf16, #tpu.memory_space<vmem>>, vector<8x384xbf16>
    %cst_71 = arith.constant dense<0.000000e+00> : vector<8x384xf32>
    %93 = tpu.matmul %91, %92, %cst_71 {dimension_numbers = #tpu.dot_dimension_numbers<[1], [0], [0], [1], [0, 0, 1, 1], [], []>} : vector<8x8xbf16>, vector<8x384xbf16>, vector<8x384xf32> -> vector<8x384xf32>
    %c8_72 = arith.constant 8 : index
    %c0_73 = arith.constant 0 : index
    %94 = vector.load %arg4[%c8_72, %c0_73] : memref<72x8xbf16, #tpu.memory_space<vmem>>, vector<8x8xbf16>
    %c0_74 = arith.constant 0 : index
    %c1_75 = arith.constant 1 : index
    %95 = vector.load %arg22[%c0_74, %c1_75] : memref<8x512xbf16, #tpu.memory_space<vmem>>, vector<8x384xbf16>
    %cst_76 = arith.constant dense<0.000000e+00> : vector<8x384xf32>
    %96 = tpu.matmul %94, %95, %cst_76 {dimension_numbers = #tpu.dot_dimension_numbers<[1], [0], [0], [1], [0, 0, 1, 1], [], []>} : vector<8x8xbf16>, vector<8x384xbf16>, vector<8x384xf32> -> vector<8x384xf32>
    %97 = arith.addf %93, %96 : vector<8x384xf32>
    %c16_77 = arith.constant 16 : index
    %c0_78 = arith.constant 0 : index
    %98 = vector.load %arg4[%c16_77, %c0_78] : memref<72x8xbf16, #tpu.memory_space<vmem>>, vector<8x8xbf16>
    %c0_79 = arith.constant 0 : index
    %c2_80 = arith.constant 2 : index
    %99 = vector.load %arg22[%c0_79, %c2_80] : memref<8x512xbf16, #tpu.memory_space<vmem>>, vector<8x384xbf16>
    %cst_81 = arith.constant dense<0.000000e+00> : vector<8x384xf32>
    %100 = tpu.matmul %98, %99, %cst_81 {dimension_numbers = #tpu.dot_dimension_numbers<[1], [0], [0], [1], [0, 0, 1, 1], [], []>} : vector<8x8xbf16>, vector<8x384xbf16>, vector<8x384xf32> -> vector<8x384xf32>
    %101 = arith.addf %97, %100 : vector<8x384xf32>
    %c24_82 = arith.constant 24 : index
    %c0_83 = arith.constant 0 : index
    %102 = vector.load %arg4[%c24_82, %c0_83] : memref<72x8xbf16, #tpu.memory_space<vmem>>, vector<8x8xbf16>
    %c0_84 = arith.constant 0 : index
    %c18_85 = arith.constant 18 : index
    %103 = vector.load %arg22[%c0_84, %c18_85] : memref<8x512xbf16, #tpu.memory_space<vmem>>, vector<8x384xbf16>
    %cst_86 = arith.constant dense<0.000000e+00> : vector<8x384xf32>
    %104 = tpu.matmul %102, %103, %cst_86 {dimension_numbers = #tpu.dot_dimension_numbers<[1], [0], [0], [1], [0, 0, 1, 1], [], []>} : vector<8x8xbf16>, vector<8x384xbf16>, vector<8x384xf32> -> vector<8x384xf32>
    %105 = arith.addf %101, %104 : vector<8x384xf32>
    %c32_87 = arith.constant 32 : index
    %c0_88 = arith.constant 0 : index
    %106 = vector.load %arg4[%c32_87, %c0_88] : memref<72x8xbf16, #tpu.memory_space<vmem>>, vector<8x8xbf16>
    %c0_89 = arith.constant 0 : index
    %c19_90 = arith.constant 19 : index
    %107 = vector.load %arg22[%c0_89, %c19_90] : memref<8x512xbf16, #tpu.memory_space<vmem>>, vector<8x384xbf16>
    %cst_91 = arith.constant dense<0.000000e+00> : vector<8x384xf32>
    %108 = tpu.matmul %106, %107, %cst_91 {dimension_numbers = #tpu.dot_dimension_numbers<[1], [0], [0], [1], [0, 0, 1, 1], [], []>} : vector<8x8xbf16>, vector<8x384xbf16>, vector<8x384xf32> -> vector<8x384xf32>
    %109 = arith.addf %105, %108 : vector<8x384xf32>
    %c40_92 = arith.constant 40 : index
    %c0_93 = arith.constant 0 : index
    %110 = vector.load %arg4[%c40_92, %c0_93] : memref<72x8xbf16, #tpu.memory_space<vmem>>, vector<8x8xbf16>
    %c0_94 = arith.constant 0 : index
    %c20_95 = arith.constant 20 : index
    %111 = vector.load %arg22[%c0_94, %c20_95] : memref<8x512xbf16, #tpu.memory_space<vmem>>, vector<8x384xbf16>
    %cst_96 = arith.constant dense<0.000000e+00> : vector<8x384xf32>
    %112 = tpu.matmul %110, %111, %cst_96 {dimension_numbers = #tpu.dot_dimension_numbers<[1], [0], [0], [1], [0, 0, 1, 1], [], []>} : vector<8x8xbf16>, vector<8x384xbf16>, vector<8x384xf32> -> vector<8x384xf32>
    %113 = arith.addf %109, %112 : vector<8x384xf32>
    %c48_97 = arith.constant 48 : index
    %c0_98 = arith.constant 0 : index
    %114 = vector.load %arg4[%c48_97, %c0_98] : memref<72x8xbf16, #tpu.memory_space<vmem>>, vector<8x8xbf16>
    %c0_99 = arith.constant 0 : index
    %c36_100 = arith.constant 36 : index
    %115 = vector.load %arg22[%c0_99, %c36_100] : memref<8x512xbf16, #tpu.memory_space<vmem>>, vector<8x384xbf16>
    %cst_101 = arith.constant dense<0.000000e+00> : vector<8x384xf32>
    %116 = tpu.matmul %114, %115, %cst_101 {dimension_numbers = #tpu.dot_dimension_numbers<[1], [0], [0], [1], [0, 0, 1, 1], [], []>} : vector<8x8xbf16>, vector<8x384xbf16>, vector<8x384xf32> -> vector<8x384xf32>
    %117 = arith.addf %113, %116 : vector<8x384xf32>
    %c56_102 = arith.constant 56 : index
    %c0_103 = arith.constant 0 : index
    %118 = vector.load %arg4[%c56_102, %c0_103] : memref<72x8xbf16, #tpu.memory_space<vmem>>, vector<8x8xbf16>
    %c0_104 = arith.constant 0 : index
    %c37_105 = arith.constant 37 : index
    %119 = vector.load %arg22[%c0_104, %c37_105] : memref<8x512xbf16, #tpu.memory_space<vmem>>, vector<8x384xbf16>
    %cst_106 = arith.constant dense<0.000000e+00> : vector<8x384xf32>
    %120 = tpu.matmul %118, %119, %cst_106 {dimension_numbers = #tpu.dot_dimension_numbers<[1], [0], [0], [1], [0, 0, 1, 1], [], []>} : vector<8x8xbf16>, vector<8x384xbf16>, vector<8x384xf32> -> vector<8x384xf32>
    %121 = arith.addf %117, %120 : vector<8x384xf32>
    %c64_107 = arith.constant 64 : index
    %c0_108 = arith.constant 0 : index
    %122 = vector.load %arg4[%c64_107, %c0_108] : memref<72x8xbf16, #tpu.memory_space<vmem>>, vector<8x8xbf16>
    %c0_109 = arith.constant 0 : index
    %c38_110 = arith.constant 38 : index
    %123 = vector.load %arg22[%c0_109, %c38_110] : memref<8x512xbf16, #tpu.memory_space<vmem>>, vector<8x384xbf16>
    %cst_111 = arith.constant dense<0.000000e+00> : vector<8x384xf32>
    %124 = tpu.matmul %122, %123, %cst_111 {dimension_numbers = #tpu.dot_dimension_numbers<[1], [0], [0], [1], [0, 0, 1, 1], [], []>} : vector<8x8xbf16>, vector<8x384xbf16>, vector<8x384xf32> -> vector<8x384xf32>
    %125 = arith.addf %121, %124 : vector<8x384xf32>
    %c0_112 = arith.constant 0 : index
    %c0_113 = arith.constant 0 : index
    %126 = vector.load %arg16[%c0_112, %c0_113] : memref<1x384xf32, #tpu.memory_space<vmem>>, vector<1x384xf32>
    %127 = vector.broadcast %126 : vector<1x384xf32> to vector<8x384xf32>
    %128 = arith.mulf %125, %127 : vector<8x384xf32>
    %cst_114 = arith.constant dense<0.000000e+00> : vector<8xf32>
    %129 = vector.multi_reduction <add>, %128, %cst_114 [1] : vector<8x384xf32> to vector<8xf32>
    %130 = vector.shape_cast %129 : vector<8xf32> to vector<8x1xf32>
    %cst_115 = arith.constant 3.906250e-03 : f32
    %131 = vector.broadcast %cst_115 : f32 to vector<8x1xf32>
    %132 = arith.mulf %130, %131 : vector<8x1xf32>
    %133 = arith.mulf %128, %125 : vector<8x384xf32>
    %cst_116 = arith.constant dense<0.000000e+00> : vector<8xf32>
    %134 = vector.multi_reduction <add>, %133, %cst_116 [1] : vector<8x384xf32> to vector<8xf32>
    %135 = vector.shape_cast %134 : vector<8xf32> to vector<8x1xf32>
    %cst_117 = arith.constant 3.906250e-03 : f32
    %136 = vector.broadcast %cst_117 : f32 to vector<8x1xf32>
    %137 = arith.mulf %135, %136 : vector<8x1xf32>
    %138 = arith.mulf %132, %132 : vector<8x1xf32>
    %139 = arith.subf %137, %138 : vector<8x1xf32>
    %cst_118 = arith.constant 0.000000e+00 : f32
    %140 = vector.broadcast %cst_118 : f32 to vector<8x1xf32>
    %141 = arith.maximumf %139, %140 : vector<8x1xf32>
    %c0_119 = arith.constant 0 : index
    %c0_120 = arith.constant 0 : index
    %142 = vector.load %arg5[%c0_119, %c0_120] : memref<8x2xf32, #tpu.memory_space<vmem>>, vector<8x1xf32>
    %cst_121 = arith.constant 9.99999974E-6 : f32
    %143 = vector.broadcast %cst_121 : f32 to vector<8x1xf32>
    %144 = arith.addf %141, %143 : vector<8x1xf32>
    %145 = math.rsqrt %144 : vector<8x1xf32>
    %146 = arith.mulf %142, %145 : vector<8x1xf32>
    %c0_122 = arith.constant 0 : index
    %c1_123 = arith.constant 1 : index
    %147 = vector.load %arg5[%c0_122, %c1_123] : memref<8x2xf32, #tpu.memory_space<vmem>>, vector<8x1xf32>
    %148 = arith.mulf %132, %146 : vector<8x1xf32>
    %149 = arith.subf %147, %148 : vector<8x1xf32>
    %150 = vector.broadcast %146 : vector<8x1xf32> to vector<8x384xf32>
    %151 = arith.mulf %125, %150 : vector<8x384xf32>
    %152 = vector.broadcast %149 : vector<8x1xf32> to vector<8x384xf32>
    %153 = arith.addf %151, %152 : vector<8x384xf32>
    %cst_124 = arith.constant 0.000000e+00 : f32
    %154 = vector.broadcast %cst_124 : f32 to vector<8x384xf32>
    %155 = arith.cmpf oge, %153, %154 : vector<8x384xf32>
    %cst_125 = arith.constant 0.00999999977 : f32
    %156 = vector.broadcast %cst_125 : f32 to vector<8x384xf32>
    %157 = arith.mulf %156, %153 : vector<8x384xf32>
    %158 = arith.select %155, %153, %157 : vector<8x384xi1>, vector<8x384xf32>
    %159 = vector.broadcast %126 : vector<1x384xf32> to vector<8x384xf32>
    %160 = arith.mulf %158, %159 : vector<8x384xf32>
    %c0_126 = arith.constant 0 : index
    %c0_127 = arith.constant 0 : index
    %c0_128 = arith.constant 0 : index
    %161 = vector.load %arg19[%c0_126, %c0_127, %c0_128] : memref<1x8x384xf32, #tpu.memory_space<vmem>>, vector<1x8x384xf32>
    %162 = vector.shape_cast %161 : vector<1x8x384xf32> to vector<8x384xf32>
    %163 = vector.shape_cast %160 : vector<8x384xf32> to vector<1x8x384xf32>
    tpu.vector_store %arg19[%c0_126, %c0_127, %c0_128], %163 {strides = array<i32>} : memref<1x8x384xf32, #tpu.memory_space<vmem>>, vector<1x8x384xf32>,
    %164 = arith.truncf %160 : vector<8x384xf32> to vector<8x384xbf16>
    %c0_129 = arith.constant 0 : index
    %c19_130 = arith.constant 19 : index
    %165 = vector.load %arg23[%c0_129, %c19_130] : memref<8x512xbf16, #tpu.memory_space<vmem>>, vector<8x384xbf16>
    tpu.vector_store %arg23[%c0_129, %c19_130], %164 {strides = array<i32>} : memref<8x512xbf16, #tpu.memory_space<vmem>>, vector<8x384xbf16>,
    %c0_131 = arith.constant 0 : index
    %c0_132 = arith.constant 0 : index
    %166 = vector.load %arg6[%c0_131, %c0_132] : memref<144x8xbf16, #tpu.memory_space<vmem>>, vector<16x8xbf16>
    %c0_133 = arith.constant 0 : index
    %c0_134 = arith.constant 0 : index
    %167 = vector.load %arg23[%c0_133, %c0_134] : memref<8x512xbf16, #tpu.memory_space<vmem>>, vector<8x384xbf16>
    %cst_135 = arith.constant dense<0.000000e+00> : vector<16x384xf32>
    %168 = tpu.matmul %166, %167, %cst_135 {dimension_numbers = #tpu.dot_dimension_numbers<[1], [0], [0], [1], [0, 0, 1, 1], [], []>} : vector<16x8xbf16>, vector<8x384xbf16>, vector<16x384xf32> -> vector<16x384xf32>
    %c16_136 = arith.constant 16 : index
    %c0_137 = arith.constant 0 : index
    %169 = vector.load %arg6[%c16_136, %c0_137] : memref<144x8xbf16, #tpu.memory_space<vmem>>, vector<16x8xbf16>
    %c0_138 = arith.constant 0 : index
    %c1_139 = arith.constant 1 : index
    %170 = vector.load %arg23[%c0_138, %c1_139] : memref<8x512xbf16, #tpu.memory_space<vmem>>, vector<8x384xbf16>
    %cst_140 = arith.constant dense<0.000000e+00> : vector<16x384xf32>
    %171 = tpu.matmul %169, %170, %cst_140 {dimension_numbers = #tpu.dot_dimension_numbers<[1], [0], [0], [1], [0, 0, 1, 1], [], []>} : vector<16x8xbf16>, vector<8x384xbf16>, vector<16x384xf32> -> vector<16x384xf32>
    %172 = arith.addf %168, %171 : vector<16x384xf32>
    %c32_141 = arith.constant 32 : index
    %c0_142 = arith.constant 0 : index
    %173 = vector.load %arg6[%c32_141, %c0_142] : memref<144x8xbf16, #tpu.memory_space<vmem>>, vector<16x8xbf16>
    %c0_143 = arith.constant 0 : index
    %c2_144 = arith.constant 2 : index
    %174 = vector.load %arg23[%c0_143, %c2_144] : memref<8x512xbf16, #tpu.memory_space<vmem>>, vector<8x384xbf16>
    %cst_145 = arith.constant dense<0.000000e+00> : vector<16x384xf32>
    %175 = tpu.matmul %173, %174, %cst_145 {dimension_numbers = #tpu.dot_dimension_numbers<[1], [0], [0], [1], [0, 0, 1, 1], [], []>} : vector<16x8xbf16>, vector<8x384xbf16>, vector<16x384xf32> -> vector<16x384xf32>
    %176 = arith.addf %172, %175 : vector<16x384xf32>
    %c48_146 = arith.constant 48 : index
    %c0_147 = arith.constant 0 : index
    %177 = vector.load %arg6[%c48_146, %c0_147] : memref<144x8xbf16, #tpu.memory_space<vmem>>, vector<16x8xbf16>
    %c0_148 = arith.constant 0 : index
    %c18_149 = arith.constant 18 : index
    %178 = vector.load %arg23[%c0_148, %c18_149] : memref<8x512xbf16, #tpu.memory_space<vmem>>, vector<8x384xbf16>
    %cst_150 = arith.constant dense<0.000000e+00> : vector<16x384xf32>
    %179 = tpu.matmul %177, %178, %cst_150 {dimension_numbers = #tpu.dot_dimension_numbers<[1], [0], [0], [1], [0, 0, 1, 1], [], []>} : vector<16x8xbf16>, vector<8x384xbf16>, vector<16x384xf32> -> vector<16x384xf32>
    %180 = arith.addf %176, %179 : vector<16x384xf32>
    %c64_151 = arith.constant 64 : index
    %c0_152 = arith.constant 0 : index
    %181 = vector.load %arg6[%c64_151, %c0_152] : memref<144x8xbf16, #tpu.memory_space<vmem>>, vector<16x8xbf16>
    %c0_153 = arith.constant 0 : index
    %c19_154 = arith.constant 19 : index
    %182 = vector.load %arg23[%c0_153, %c19_154] : memref<8x512xbf16, #tpu.memory_space<vmem>>, vector<8x384xbf16>
    %cst_155 = arith.constant dense<0.000000e+00> : vector<16x384xf32>
    %183 = tpu.matmul %181, %182, %cst_155 {dimension_numbers = #tpu.dot_dimension_numbers<[1], [0], [0], [1], [0, 0, 1, 1], [], []>} : vector<16x8xbf16>, vector<8x384xbf16>, vector<16x384xf32> -> vector<16x384xf32>
    %184 = arith.addf %180, %183 : vector<16x384xf32>
    %c80 = arith.constant 80 : index
    %c0_156 = arith.constant 0 : index
    %185 = vector.load %arg6[%c80, %c0_156] : memref<144x8xbf16, #tpu.memory_space<vmem>>, vector<16x8xbf16>
    %c0_157 = arith.constant 0 : index
    %c20_158 = arith.constant 20 : index
    %186 = vector.load %arg23[%c0_157, %c20_158] : memref<8x512xbf16, #tpu.memory_space<vmem>>, vector<8x384xbf16>
    %cst_159 = arith.constant dense<0.000000e+00> : vector<16x384xf32>
    %187 = tpu.matmul %185, %186, %cst_159 {dimension_numbers = #tpu.dot_dimension_numbers<[1], [0], [0], [1], [0, 0, 1, 1], [], []>} : vector<16x8xbf16>, vector<8x384xbf16>, vector<16x384xf32> -> vector<16x384xf32>
    %188 = arith.addf %184, %187 : vector<16x384xf32>
    %c96 = arith.constant 96 : index
    %c0_160 = arith.constant 0 : index
    %189 = vector.load %arg6[%c96, %c0_160] : memref<144x8xbf16, #tpu.memory_space<vmem>>, vector<16x8xbf16>
    %c0_161 = arith.constant 0 : index
    %c36_162 = arith.constant 36 : index
    %190 = vector.load %arg23[%c0_161, %c36_162] : memref<8x512xbf16, #tpu.memory_space<vmem>>, vector<8x384xbf16>
    %cst_163 = arith.constant dense<0.000000e+00> : vector<16x384xf32>
    %191 = tpu.matmul %189, %190, %cst_163 {dimension_numbers = #tpu.dot_dimension_numbers<[1], [0], [0], [1], [0, 0, 1, 1], [], []>} : vector<16x8xbf16>, vector<8x384xbf16>, vector<16x384xf32> -> vector<16x384xf32>
    %192 = arith.addf %188, %191 : vector<16x384xf32>
    %c112 = arith.constant 112 : index
    %c0_164 = arith.constant 0 : index
    %193 = vector.load %arg6[%c112, %c0_164] : memref<144x8xbf16, #tpu.memory_space<vmem>>, vector<16x8xbf16>
    %c0_165 = arith.constant 0 : index
    %c37_166 = arith.constant 37 : index
    %194 = vector.load %arg23[%c0_165, %c37_166] : memref<8x512xbf16, #tpu.memory_space<vmem>>, vector<8x384xbf16>
    %cst_167 = arith.constant dense<0.000000e+00> : vector<16x384xf32>
    %195 = tpu.matmul %193, %194, %cst_167 {dimension_numbers = #tpu.dot_dimension_numbers<[1], [0], [0], [1], [0, 0, 1, 1], [], []>} : vector<16x8xbf16>, vector<8x384xbf16>, vector<16x384xf32> -> vector<16x384xf32>
    %196 = arith.addf %192, %195 : vector<16x384xf32>
    %c128 = arith.constant 128 : index
    %c0_168 = arith.constant 0 : index
    %197 = vector.load %arg6[%c128, %c0_168] : memref<144x8xbf16, #tpu.memory_space<vmem>>, vector<16x8xbf16>
    %c0_169 = arith.constant 0 : index
    %c38_170 = arith.constant 38 : index
    %198 = vector.load %arg23[%c0_169, %c38_170] : memref<8x512xbf16, #tpu.memory_space<vmem>>, vector<8x384xbf16>
    %cst_171 = arith.constant dense<0.000000e+00> : vector<16x384xf32>
    %199 = tpu.matmul %197, %198, %cst_171 {dimension_numbers = #tpu.dot_dimension_numbers<[1], [0], [0], [1], [0, 0, 1, 1], [], []>} : vector<16x8xbf16>, vector<8x384xbf16>, vector<16x384xf32> -> vector<16x384xf32>
    %200 = arith.addf %196, %199 : vector<16x384xf32>
    %201 = arith.truncf %200 : vector<16x384xf32> to vector<16x384xbf16>
    %c0_172 = arith.constant 0 : index
    %c0_173 = arith.constant 0 : index
    %202 = vector.load %arg14[%c0_172, %c0_173] : memref<384x128xbf16, #tpu.memory_space<vmem>>, vector<384x128xbf16>
    %cst_174 = arith.constant dense<0.000000e+00> : vector<16x128xf32>
    %203 = tpu.matmul %201, %202, %cst_174 {dimension_numbers = #tpu.dot_dimension_numbers<[1], [0], [0], [1], [0, 0, 1, 1], [], []>} : vector<16x384xbf16>, vector<384x128xbf16>, vector<16x128xf32> -> vector<16x128xf32>
    %c0_175 = arith.constant 0 : index
    %c0_176 = arith.constant 0 : index
    %204 = vector.load %arg17[%c0_175, %c0_176] : memref<1x128xf32, #tpu.memory_space<vmem>>, vector<1x128xf32>
    %205 = vector.broadcast %204 : vector<1x128xf32> to vector<16x128xf32>
    %206 = arith.mulf %203, %205 : vector<16x128xf32>
    %cst_177 = arith.constant dense<0.000000e+00> : vector<16xf32>
    %207 = vector.multi_reduction <add>, %206, %cst_177 [1] : vector<16x128xf32> to vector<16xf32>
    %208 = vector.shape_cast %207 : vector<16xf32> to vector<16x1xf32>
    %cst_178 = arith.constant 1.562500e-02 : f32
    %209 = vector.broadcast %cst_178 : f32 to vector<16x1xf32>
    %210 = arith.mulf %208, %209 : vector<16x1xf32>
    %211 = arith.mulf %206, %203 : vector<16x128xf32>
    %cst_179 = arith.constant dense<0.000000e+00> : vector<16xf32>
    %212 = vector.multi_reduction <add>, %211, %cst_179 [1] : vector<16x128xf32> to vector<16xf32>
    %213 = vector.shape_cast %212 : vector<16xf32> to vector<16x1xf32>
    %cst_180 = arith.constant 1.562500e-02 : f32
    %214 = vector.broadcast %cst_180 : f32 to vector<16x1xf32>
    %215 = arith.mulf %213, %214 : vector<16x1xf32>
    %216 = arith.mulf %210, %210 : vector<16x1xf32>
    %217 = arith.subf %215, %216 : vector<16x1xf32>
    %cst_181 = arith.constant 0.000000e+00 : f32
    %218 = vector.broadcast %cst_181 : f32 to vector<16x1xf32>
    %219 = arith.maximumf %217, %218 : vector<16x1xf32>
    %c0_182 = arith.constant 0 : index
    %c0_183 = arith.constant 0 : index
    %220 = vector.load %arg7[%c0_182, %c0_183] : memref<16x2xf32, #tpu.memory_space<vmem>>, vector<16x1xf32>
    %cst_184 = arith.constant 9.99999974E-6 : f32
    %221 = vector.broadcast %cst_184 : f32 to vector<16x1xf32>
    %222 = arith.addf %219, %221 : vector<16x1xf32>
    %223 = math.rsqrt %222 : vector<16x1xf32>
    %224 = arith.mulf %220, %223 : vector<16x1xf32>
    %c0_185 = arith.constant 0 : index
    %c1_186 = arith.constant 1 : index
    %225 = vector.load %arg7[%c0_185, %c1_186] : memref<16x2xf32, #tpu.memory_space<vmem>>, vector<16x1xf32>
    %226 = arith.mulf %210, %224 : vector<16x1xf32>
    %227 = arith.subf %225, %226 : vector<16x1xf32>
    %228 = vector.broadcast %224 : vector<16x1xf32> to vector<16x128xf32>
    %229 = arith.mulf %203, %228 : vector<16x128xf32>
    %230 = vector.broadcast %227 : vector<16x1xf32> to vector<16x128xf32>
    %231 = arith.addf %229, %230 : vector<16x128xf32>
    %cst_187 = arith.constant 0.000000e+00 : f32
    %232 = vector.broadcast %cst_187 : f32 to vector<16x128xf32>
    %233 = arith.cmpf oge, %231, %232 : vector<16x128xf32>
    %cst_188 = arith.constant 0.00999999977 : f32
    %234 = vector.broadcast %cst_188 : f32 to vector<16x128xf32>
    %235 = arith.mulf %234, %231 : vector<16x128xf32>
    %236 = arith.select %233, %231, %235 : vector<16x128xi1>, vector<16x128xf32>
    %237 = vector.broadcast %204 : vector<1x128xf32> to vector<16x128xf32>
    %238 = arith.mulf %236, %237 : vector<16x128xf32>
    %239 = arith.truncf %238 : vector<16x128xf32> to vector<16x128xbf16>
    %c0_189 = arith.constant 0 : index
    %c11 = arith.constant 11 : index
    %240 = vector.load %arg24[%c0_189, %c11] : memref<16x256xbf16, #tpu.memory_space<vmem>>, vector<16x128xbf16>
    tpu.vector_store %arg24[%c0_189, %c11], %239 {strides = array<i32>} : memref<16x256xbf16, #tpu.memory_space<vmem>>, vector<16x128xbf16>,
    %c0_190 = arith.constant 0 : index
    %c0_191 = arith.constant 0 : index
    %241 = vector.load %arg8[%c0_190, %c0_191] : memref<144x16xbf16, #tpu.memory_space<vmem>>, vector<16x16xbf16>
    %c0_192 = arith.constant 0 : index
    %c0_193 = arith.constant 0 : index
    %242 = vector.load %arg24[%c0_192, %c0_193] : memref<16x256xbf16, #tpu.memory_space<vmem>>, vector<16x128xbf16>
    %cst_194 = arith.constant dense<0.000000e+00> : vector<16x128xf32>
    %243 = tpu.matmul %241, %242, %cst_194 {dimension_numbers = #tpu.dot_dimension_numbers<[1], [0], [0], [1], [0, 0, 1, 1], [], []>} : vector<16x16xbf16>, vector<16x128xbf16>, vector<16x128xf32> -> vector<16x128xf32>
    %c16_195 = arith.constant 16 : index
    %c0_196 = arith.constant 0 : index
    %244 = vector.load %arg8[%c16_195, %c0_196] : memref<144x16xbf16, #tpu.memory_space<vmem>>, vector<16x16xbf16>
    %c0_197 = arith.constant 0 : index
    %c1_198 = arith.constant 1 : index
    %245 = vector.load %arg24[%c0_197, %c1_198] : memref<16x256xbf16, #tpu.memory_space<vmem>>, vector<16x128xbf16>
    %cst_199 = arith.constant dense<0.000000e+00> : vector<16x128xf32>
    %246 = tpu.matmul %244, %245, %cst_199 {dimension_numbers = #tpu.dot_dimension_numbers<[1], [0], [0], [1], [0, 0, 1, 1], [], []>} : vector<16x16xbf16>, vector<16x128xbf16>, vector<16x128xf32> -> vector<16x128xf32>
    %247 = arith.addf %243, %246 : vector<16x128xf32>
    %c32_200 = arith.constant 32 : index
    %c0_201 = arith.constant 0 : index
    %248 = vector.load %arg8[%c32_200, %c0_201] : memref<144x16xbf16, #tpu.memory_space<vmem>>, vector<16x16xbf16>
    %c0_202 = arith.constant 0 : index
    %c2_203 = arith.constant 2 : index
    %249 = vector.load %arg24[%c0_202, %c2_203] : memref<16x256xbf16, #tpu.memory_space<vmem>>, vector<16x128xbf16>
    %cst_204 = arith.constant dense<0.000000e+00> : vector<16x128xf32>
    %250 = tpu.matmul %248, %249, %cst_204 {dimension_numbers = #tpu.dot_dimension_numbers<[1], [0], [0], [1], [0, 0, 1, 1], [], []>} : vector<16x16xbf16>, vector<16x128xbf16>, vector<16x128xf32> -> vector<16x128xf32>
    %251 = arith.addf %247, %250 : vector<16x128xf32>
    %c48_205 = arith.constant 48 : index
    %c0_206 = arith.constant 0 : index
    %252 = vector.load %arg8[%c48_205, %c0_206] : memref<144x16xbf16, #tpu.memory_space<vmem>>, vector<16x16xbf16>
    %c0_207 = arith.constant 0 : index
    %c10 = arith.constant 10 : index
    %253 = vector.load %arg24[%c0_207, %c10] : memref<16x256xbf16, #tpu.memory_space<vmem>>, vector<16x128xbf16>
    %cst_208 = arith.constant dense<0.000000e+00> : vector<16x128xf32>
    %254 = tpu.matmul %252, %253, %cst_208 {dimension_numbers = #tpu.dot_dimension_numbers<[1], [0], [0], [1], [0, 0, 1, 1], [], []>} : vector<16x16xbf16>, vector<16x128xbf16>, vector<16x128xf32> -> vector<16x128xf32>
    %255 = arith.addf %251, %254 : vector<16x128xf32>
    %c64_209 = arith.constant 64 : index
    %c0_210 = arith.constant 0 : index
    %256 = vector.load %arg8[%c64_209, %c0_210] : memref<144x16xbf16, #tpu.memory_space<vmem>>, vector<16x16xbf16>
    %c0_211 = arith.constant 0 : index
    %c11_212 = arith.constant 11 : index
    %257 = vector.load %arg24[%c0_211, %c11_212] : memref<16x256xbf16, #tpu.memory_space<vmem>>, vector<16x128xbf16>
    %cst_213 = arith.constant dense<0.000000e+00> : vector<16x128xf32>
    %258 = tpu.matmul %256, %257, %cst_213 {dimension_numbers = #tpu.dot_dimension_numbers<[1], [0], [0], [1], [0, 0, 1, 1], [], []>} : vector<16x16xbf16>, vector<16x128xbf16>, vector<16x128xf32> -> vector<16x128xf32>
    %259 = arith.addf %255, %258 : vector<16x128xf32>
    %c80_214 = arith.constant 80 : index
    %c0_215 = arith.constant 0 : index
    %260 = vector.load %arg8[%c80_214, %c0_215] : memref<144x16xbf16, #tpu.memory_space<vmem>>, vector<16x16xbf16>
    %c0_216 = arith.constant 0 : index
    %c12 = arith.constant 12 : index
    %261 = vector.load %arg24[%c0_216, %c12] : memref<16x256xbf16, #tpu.memory_space<vmem>>, vector<16x128xbf16>
    %cst_217 = arith.constant dense<0.000000e+00> : vector<16x128xf32>
    %262 = tpu.matmul %260, %261, %cst_217 {dimension_numbers = #tpu.dot_dimension_numbers<[1], [0], [0], [1], [0, 0, 1, 1], [], []>} : vector<16x16xbf16>, vector<16x128xbf16>, vector<16x128xf32> -> vector<16x128xf32>
    %263 = arith.addf %259, %262 : vector<16x128xf32>
    %c96_218 = arith.constant 96 : index
    %c0_219 = arith.constant 0 : index
    %264 = vector.load %arg8[%c96_218, %c0_219] : memref<144x16xbf16, #tpu.memory_space<vmem>>, vector<16x16xbf16>
    %c0_220 = arith.constant 0 : index
    %c20_221 = arith.constant 20 : index
    %265 = vector.load %arg24[%c0_220, %c20_221] : memref<16x256xbf16, #tpu.memory_space<vmem>>, vector<16x128xbf16>
    %cst_222 = arith.constant dense<0.000000e+00> : vector<16x128xf32>
    %266 = tpu.matmul %264, %265, %cst_222 {dimension_numbers = #tpu.dot_dimension_numbers<[1], [0], [0], [1], [0, 0, 1, 1], [], []>} : vector<16x16xbf16>, vector<16x128xbf16>, vector<16x128xf32> -> vector<16x128xf32>
    %267 = arith.addf %263, %266 : vector<16x128xf32>
    %c112_223 = arith.constant 112 : index
    %c0_224 = arith.constant 0 : index
    %268 = vector.load %arg8[%c112_223, %c0_224] : memref<144x16xbf16, #tpu.memory_space<vmem>>, vector<16x16xbf16>
    %c0_225 = arith.constant 0 : index
    %c21 = arith.constant 21 : index
    %269 = vector.load %arg24[%c0_225, %c21] : memref<16x256xbf16, #tpu.memory_space<vmem>>, vector<16x128xbf16>
    %cst_226 = arith.constant dense<0.000000e+00> : vector<16x128xf32>
    %270 = tpu.matmul %268, %269, %cst_226 {dimension_numbers = #tpu.dot_dimension_numbers<[1], [0], [0], [1], [0, 0, 1, 1], [], []>} : vector<16x16xbf16>, vector<16x128xbf16>, vector<16x128xf32> -> vector<16x128xf32>
    %271 = arith.addf %267, %270 : vector<16x128xf32>
    %c128_227 = arith.constant 128 : index
    %c0_228 = arith.constant 0 : index
    %272 = vector.load %arg8[%c128_227, %c0_228] : memref<144x16xbf16, #tpu.memory_space<vmem>>, vector<16x16xbf16>
    %c0_229 = arith.constant 0 : index
    %c22 = arith.constant 22 : index
    %273 = vector.load %arg24[%c0_229, %c22] : memref<16x256xbf16, #tpu.memory_space<vmem>>, vector<16x128xbf16>
    %cst_230 = arith.constant dense<0.000000e+00> : vector<16x128xf32>
    %274 = tpu.matmul %272, %273, %cst_230 {dimension_numbers = #tpu.dot_dimension_numbers<[1], [0], [0], [1], [0, 0, 1, 1], [], []>} : vector<16x16xbf16>, vector<16x128xbf16>, vector<16x128xf32> -> vector<16x128xf32>
    %275 = arith.addf %271, %274 : vector<16x128xf32>
    %c0_231 = arith.constant 0 : index
    %c0_232 = arith.constant 0 : index
    %276 = vector.load %arg17[%c0_231, %c0_232] : memref<1x128xf32, #tpu.memory_space<vmem>>, vector<1x128xf32>
    %277 = vector.broadcast %276 : vector<1x128xf32> to vector<16x128xf32>
    %278 = arith.mulf %275, %277 : vector<16x128xf32>
    %cst_233 = arith.constant dense<0.000000e+00> : vector<16xf32>
    %279 = vector.multi_reduction <add>, %278, %cst_233 [1] : vector<16x128xf32> to vector<16xf32>
    %280 = vector.shape_cast %279 : vector<16xf32> to vector<16x1xf32>
    %cst_234 = arith.constant 1.562500e-02 : f32
    %281 = vector.broadcast %cst_234 : f32 to vector<16x1xf32>
    %282 = arith.mulf %280, %281 : vector<16x1xf32>
    %283 = arith.mulf %278, %275 : vector<16x128xf32>
    %cst_235 = arith.constant dense<0.000000e+00> : vector<16xf32>
    %284 = vector.multi_reduction <add>, %283, %cst_235 [1] : vector<16x128xf32> to vector<16xf32>
    %285 = vector.shape_cast %284 : vector<16xf32> to vector<16x1xf32>
    %cst_236 = arith.constant 1.562500e-02 : f32
    %286 = vector.broadcast %cst_236 : f32 to vector<16x1xf32>
    %287 = arith.mulf %285, %286 : vector<16x1xf32>
    %288 = arith.mulf %282, %282 : vector<16x1xf32>
    %289 = arith.subf %287, %288 : vector<16x1xf32>
    %cst_237 = arith.constant 0.000000e+00 : f32
    %290 = vector.broadcast %cst_237 : f32 to vector<16x1xf32>
    %291 = arith.maximumf %289, %290 : vector<16x1xf32>
    %c0_238 = arith.constant 0 : index
    %c0_239 = arith.constant 0 : index
    %292 = vector.load %arg9[%c0_238, %c0_239] : memref<16x2xf32, #tpu.memory_space<vmem>>, vector<16x1xf32>
    %cst_240 = arith.constant 9.99999974E-6 : f32
    %293 = vector.broadcast %cst_240 : f32 to vector<16x1xf32>
    %294 = arith.addf %291, %293 : vector<16x1xf32>
    %295 = math.rsqrt %294 : vector<16x1xf32>
    %296 = arith.mulf %292, %295 : vector<16x1xf32>
    %c0_241 = arith.constant 0 : index
    %c1_242 = arith.constant 1 : index
    %297 = vector.load %arg9[%c0_241, %c1_242] : memref<16x2xf32, #tpu.memory_space<vmem>>, vector<16x1xf32>
    %298 = arith.mulf %282, %296 : vector<16x1xf32>
    %299 = arith.subf %297, %298 : vector<16x1xf32>
    %300 = vector.broadcast %296 : vector<16x1xf32> to vector<16x128xf32>
    %301 = arith.mulf %275, %300 : vector<16x128xf32>
    %302 = vector.broadcast %299 : vector<16x1xf32> to vector<16x128xf32>
    %303 = arith.addf %301, %302 : vector<16x128xf32>
    %cst_243 = arith.constant 0.000000e+00 : f32
    %304 = vector.broadcast %cst_243 : f32 to vector<16x128xf32>
    %305 = arith.cmpf oge, %303, %304 : vector<16x128xf32>
    %cst_244 = arith.constant 0.00999999977 : f32
    %306 = vector.broadcast %cst_244 : f32 to vector<16x128xf32>
    %307 = arith.mulf %306, %303 : vector<16x128xf32>
    %308 = arith.select %305, %303, %307 : vector<16x128xi1>, vector<16x128xf32>
    %309 = vector.broadcast %276 : vector<1x128xf32> to vector<16x128xf32>
    %310 = arith.mulf %308, %309 : vector<16x128xf32>
    %c0_245 = arith.constant 0 : index
    %c0_246 = arith.constant 0 : index
    %c0_247 = arith.constant 0 : index
    %311 = vector.load %arg20[%c0_245, %c0_246, %c0_247] : memref<1x16x128xf32, #tpu.memory_space<vmem>>, vector<1x16x128xf32>
    %312 = vector.shape_cast %311 : vector<1x16x128xf32> to vector<16x128xf32>
    %313 = vector.shape_cast %310 : vector<16x128xf32> to vector<1x16x128xf32>
    tpu.vector_store %arg20[%c0_245, %c0_246, %c0_247], %313 {strides = array<i32>} : memref<1x16x128xf32, #tpu.memory_space<vmem>>, vector<1x16x128xf32>,
    %314 = arith.truncf %310 : vector<16x128xf32> to vector<16x128xbf16>
    %c0_248 = arith.constant 0 : index
    %c11_249 = arith.constant 11 : index
    %315 = vector.load %arg25[%c0_248, %c11_249] : memref<16x256xbf16, #tpu.memory_space<vmem>>, vector<16x128xbf16>
    tpu.vector_store %arg25[%c0_248, %c11_249], %314 {strides = array<i32>} : memref<16x256xbf16, #tpu.memory_space<vmem>>, vector<16x128xbf16>,
    %c0_250 = arith.constant 0 : index
    %c0_251 = arith.constant 0 : index
    %316 = vector.load %arg10[%c0_250, %c0_251] : memref<288x16xbf16, #tpu.memory_space<vmem>>, vector<32x16xbf16>
    %c0_252 = arith.constant 0 : index
    %c0_253 = arith.constant 0 : index
    %317 = vector.load %arg25[%c0_252, %c0_253] : memref<16x256xbf16, #tpu.memory_space<vmem>>, vector<16x128xbf16>
    %cst_254 = arith.constant dense<0.000000e+00> : vector<32x128xf32>
    %318 = tpu.matmul %316, %317, %cst_254 {dimension_numbers = #tpu.dot_dimension_numbers<[1], [0], [0], [1], [0, 0, 1, 1], [], []>} : vector<32x16xbf16>, vector<16x128xbf16>, vector<32x128xf32> -> vector<32x128xf32>
    %c32_255 = arith.constant 32 : index
    %c0_256 = arith.constant 0 : index
    %319 = vector.load %arg10[%c32_255, %c0_256] : memref<288x16xbf16, #tpu.memory_space<vmem>>, vector<32x16xbf16>
    %c0_257 = arith.constant 0 : index
    %c1_258 = arith.constant 1 : index
    %320 = vector.load %arg25[%c0_257, %c1_258] : memref<16x256xbf16, #tpu.memory_space<vmem>>, vector<16x128xbf16>
    %cst_259 = arith.constant dense<0.000000e+00> : vector<32x128xf32>
    %321 = tpu.matmul %319, %320, %cst_259 {dimension_numbers = #tpu.dot_dimension_numbers<[1], [0], [0], [1], [0, 0, 1, 1], [], []>} : vector<32x16xbf16>, vector<16x128xbf16>, vector<32x128xf32> -> vector<32x128xf32>
    %322 = arith.addf %318, %321 : vector<32x128xf32>
    %c64_260 = arith.constant 64 : index
    %c0_261 = arith.constant 0 : index
    %323 = vector.load %arg10[%c64_260, %c0_261] : memref<288x16xbf16, #tpu.memory_space<vmem>>, vector<32x16xbf16>
    %c0_262 = arith.constant 0 : index
    %c2_263 = arith.constant 2 : index
    %324 = vector.load %arg25[%c0_262, %c2_263] : memref<16x256xbf16, #tpu.memory_space<vmem>>, vector<16x128xbf16>
    %cst_264 = arith.constant dense<0.000000e+00> : vector<32x128xf32>
    %325 = tpu.matmul %323, %324, %cst_264 {dimension_numbers = #tpu.dot_dimension_numbers<[1], [0], [0], [1], [0, 0, 1, 1], [], []>} : vector<32x16xbf16>, vector<16x128xbf16>, vector<32x128xf32> -> vector<32x128xf32>
    %326 = arith.addf %322, %325 : vector<32x128xf32>
    %c96_265 = arith.constant 96 : index
    %c0_266 = arith.constant 0 : index
    %327 = vector.load %arg10[%c96_265, %c0_266] : memref<288x16xbf16, #tpu.memory_space<vmem>>, vector<32x16xbf16>
    %c0_267 = arith.constant 0 : index
    %c10_268 = arith.constant 10 : index
    %328 = vector.load %arg25[%c0_267, %c10_268] : memref<16x256xbf16, #tpu.memory_space<vmem>>, vector<16x128xbf16>
    %cst_269 = arith.constant dense<0.000000e+00> : vector<32x128xf32>
    %329 = tpu.matmul %327, %328, %cst_269 {dimension_numbers = #tpu.dot_dimension_numbers<[1], [0], [0], [1], [0, 0, 1, 1], [], []>} : vector<32x16xbf16>, vector<16x128xbf16>, vector<32x128xf32> -> vector<32x128xf32>
    %330 = arith.addf %326, %329 : vector<32x128xf32>
    %c128_270 = arith.constant 128 : index
    %c0_271 = arith.constant 0 : index
    %331 = vector.load %arg10[%c128_270, %c0_271] : memref<288x16xbf16, #tpu.memory_space<vmem>>, vector<32x16xbf16>
    %c0_272 = arith.constant 0 : index
    %c11_273 = arith.constant 11 : index
    %332 = vector.load %arg25[%c0_272, %c11_273] : memref<16x256xbf16, #tpu.memory_space<vmem>>, vector<16x128xbf16>
    %cst_274 = arith.constant dense<0.000000e+00> : vector<32x128xf32>
    %333 = tpu.matmul %331, %332, %cst_274 {dimension_numbers = #tpu.dot_dimension_numbers<[1], [0], [0], [1], [0, 0, 1, 1], [], []>} : vector<32x16xbf16>, vector<16x128xbf16>, vector<32x128xf32> -> vector<32x128xf32>
    %334 = arith.addf %330, %333 : vector<32x128xf32>
    %c160 = arith.constant 160 : index
    %c0_275 = arith.constant 0 : index
    %335 = vector.load %arg10[%c160, %c0_275] : memref<288x16xbf16, #tpu.memory_space<vmem>>, vector<32x16xbf16>
    %c0_276 = arith.constant 0 : index
    %c12_277 = arith.constant 12 : index
    %336 = vector.load %arg25[%c0_276, %c12_277] : memref<16x256xbf16, #tpu.memory_space<vmem>>, vector<16x128xbf16>
    %cst_278 = arith.constant dense<0.000000e+00> : vector<32x128xf32>
    %337 = tpu.matmul %335, %336, %cst_278 {dimension_numbers = #tpu.dot_dimension_numbers<[1], [0], [0], [1], [0, 0, 1, 1], [], []>} : vector<32x16xbf16>, vector<16x128xbf16>, vector<32x128xf32> -> vector<32x128xf32>
    %338 = arith.addf %334, %337 : vector<32x128xf32>
    %c192 = arith.constant 192 : index
    %c0_279 = arith.constant 0 : index
    %339 = vector.load %arg10[%c192, %c0_279] : memref<288x16xbf16, #tpu.memory_space<vmem>>, vector<32x16xbf16>
    %c0_280 = arith.constant 0 : index
    %c20_281 = arith.constant 20 : index
    %340 = vector.load %arg25[%c0_280, %c20_281] : memref<16x256xbf16, #tpu.memory_space<vmem>>, vector<16x128xbf16>
    %cst_282 = arith.constant dense<0.000000e+00> : vector<32x128xf32>
    %341 = tpu.matmul %339, %340, %cst_282 {dimension_numbers = #tpu.dot_dimension_numbers<[1], [0], [0], [1], [0, 0, 1, 1], [], []>} : vector<32x16xbf16>, vector<16x128xbf16>, vector<32x128xf32> -> vector<32x128xf32>
    %342 = arith.addf %338, %341 : vector<32x128xf32>
    %c224 = arith.constant 224 : index
    %c0_283 = arith.constant 0 : index
    %343 = vector.load %arg10[%c224, %c0_283] : memref<288x16xbf16, #tpu.memory_space<vmem>>, vector<32x16xbf16>
    %c0_284 = arith.constant 0 : index
    %c21_285 = arith.constant 21 : index
    %344 = vector.load %arg25[%c0_284, %c21_285] : memref<16x256xbf16, #tpu.memory_space<vmem>>, vector<16x128xbf16>
    %cst_286 = arith.constant dense<0.000000e+00> : vector<32x128xf32>
    %345 = tpu.matmul %343, %344, %cst_286 {dimension_numbers = #tpu.dot_dimension_numbers<[1], [0], [0], [1], [0, 0, 1, 1], [], []>} : vector<32x16xbf16>, vector<16x128xbf16>, vector<32x128xf32> -> vector<32x128xf32>
    %346 = arith.addf %342, %345 : vector<32x128xf32>
    %c256 = arith.constant 256 : index
    %c0_287 = arith.constant 0 : index
    %347 = vector.load %arg10[%c256, %c0_287] : memref<288x16xbf16, #tpu.memory_space<vmem>>, vector<32x16xbf16>
    %c0_288 = arith.constant 0 : index
    %c22_289 = arith.constant 22 : index
    %348 = vector.load %arg25[%c0_288, %c22_289] : memref<16x256xbf16, #tpu.memory_space<vmem>>, vector<16x128xbf16>
    %cst_290 = arith.constant dense<0.000000e+00> : vector<32x128xf32>
    %349 = tpu.matmul %347, %348, %cst_290 {dimension_numbers = #tpu.dot_dimension_numbers<[1], [0], [0], [1], [0, 0, 1, 1], [], []>} : vector<32x16xbf16>, vector<16x128xbf16>, vector<32x128xf32> -> vector<32x128xf32>
    %350 = arith.addf %346, %349 : vector<32x128xf32>
    %351 = arith.truncf %350 : vector<32x128xf32> to vector<32x128xbf16>
    %c0_291 = arith.constant 0 : index
    %c0_292 = arith.constant 0 : index
    %352 = vector.load %arg15[%c0_291, %c0_292] : memref<128x128xbf16, #tpu.memory_space<vmem>>, vector<128x128xbf16>
    %cst_293 = arith.constant dense<0.000000e+00> : vector<32x128xf32>
    %353 = tpu.matmul %351, %352, %cst_293 {dimension_numbers = #tpu.dot_dimension_numbers<[1], [0], [0], [1], [0, 0, 1, 1], [], []>} : vector<32x128xbf16>, vector<128x128xbf16>, vector<32x128xf32> -> vector<32x128xf32>
    %c0_294 = arith.constant 0 : index
    %c0_295 = arith.constant 0 : index
    %354 = vector.load %arg18[%c0_294, %c0_295] : memref<1x128xf32, #tpu.memory_space<vmem>>, vector<1x128xf32>
    %355 = vector.broadcast %354 : vector<1x128xf32> to vector<32x128xf32>
    %356 = arith.mulf %353, %355 : vector<32x128xf32>
    %cst_296 = arith.constant dense<0.000000e+00> : vector<32xf32>
    %357 = vector.multi_reduction <add>, %356, %cst_296 [1] : vector<32x128xf32> to vector<32xf32>
    %358 = vector.shape_cast %357 : vector<32xf32> to vector<32x1xf32>
    %cst_297 = arith.constant 6.250000e-02 : f32
    %359 = vector.broadcast %cst_297 : f32 to vector<32x1xf32>
    %360 = arith.mulf %358, %359 : vector<32x1xf32>
    %361 = arith.mulf %356, %353 : vector<32x128xf32>
    %cst_298 = arith.constant dense<0.000000e+00> : vector<32xf32>
    %362 = vector.multi_reduction <add>, %361, %cst_298 [1] : vector<32x128xf32> to vector<32xf32>
    %363 = vector.shape_cast %362 : vector<32xf32> to vector<32x1xf32>
    %cst_299 = arith.constant 6.250000e-02 : f32
    %364 = vector.broadcast %cst_299 : f32 to vector<32x1xf32>
    %365 = arith.mulf %363, %364 : vector<32x1xf32>
    %366 = arith.mulf %360, %360 : vector<32x1xf32>
    %367 = arith.subf %365, %366 : vector<32x1xf32>
    %cst_300 = arith.constant 0.000000e+00 : f32
    %368 = vector.broadcast %cst_300 : f32 to vector<32x1xf32>
    %369 = arith.maximumf %367, %368 : vector<32x1xf32>
    %c0_301 = arith.constant 0 : index
    %c0_302 = arith.constant 0 : index
    %370 = vector.load %arg11[%c0_301, %c0_302] : memref<32x2xf32, #tpu.memory_space<vmem>>, vector<32x1xf32>
    %cst_303 = arith.constant 9.99999974E-6 : f32
    %371 = vector.broadcast %cst_303 : f32 to vector<32x1xf32>
    %372 = arith.addf %369, %371 : vector<32x1xf32>
    %373 = math.rsqrt %372 : vector<32x1xf32>
    %374 = arith.mulf %370, %373 : vector<32x1xf32>
    %c0_304 = arith.constant 0 : index
    %c1_305 = arith.constant 1 : index
    %375 = vector.load %arg11[%c0_304, %c1_305] : memref<32x2xf32, #tpu.memory_space<vmem>>, vector<32x1xf32>
    %376 = arith.mulf %360, %374 : vector<32x1xf32>
    %377 = arith.subf %375, %376 : vector<32x1xf32>
    %378 = vector.broadcast %374 : vector<32x1xf32> to vector<32x128xf32>
    %379 = arith.mulf %353, %378 : vector<32x128xf32>
    %380 = vector.broadcast %377 : vector<32x1xf32> to vector<32x128xf32>
    %381 = arith.addf %379, %380 : vector<32x128xf32>
    %cst_306 = arith.constant 0.000000e+00 : f32
    %382 = vector.broadcast %cst_306 : f32 to vector<32x128xf32>
    %383 = arith.cmpf oge, %381, %382 : vector<32x128xf32>
    %cst_307 = arith.constant 0.00999999977 : f32
    %384 = vector.broadcast %cst_307 : f32 to vector<32x128xf32>
    %385 = arith.mulf %384, %381 : vector<32x128xf32>
    %386 = arith.select %383, %381, %385 : vector<32x128xi1>, vector<32x128xf32>
    %387 = vector.broadcast %354 : vector<1x128xf32> to vector<32x128xf32>
    %388 = arith.mulf %386, %387 : vector<32x128xf32>
    %389 = arith.truncf %388 : vector<32x128xf32> to vector<32x128xbf16>
    %c0_308 = arith.constant 0 : index
    %c7 = arith.constant 7 : index
    %390 = vector.load %arg26[%c0_308, %c7] : memref<32x256xbf16, #tpu.memory_space<vmem>>, vector<32x128xbf16>
    tpu.vector_store %arg26[%c0_308, %c7], %389 {strides = array<i32>} : memref<32x256xbf16, #tpu.memory_space<vmem>>, vector<32x128xbf16>,
    %c0_309 = arith.constant 0 : index
    %c0_310 = arith.constant 0 : index
    %391 = vector.load %arg12[%c0_309, %c0_310] : memref<288x32xbf16, #tpu.memory_space<vmem>>, vector<32x32xbf16>
    %c0_311 = arith.constant 0 : index
    %c0_312 = arith.constant 0 : index
    %392 = vector.load %arg26[%c0_311, %c0_312] : memref<32x256xbf16, #tpu.memory_space<vmem>>, vector<32x128xbf16>
    %cst_313 = arith.constant dense<0.000000e+00> : vector<32x128xf32>
    %393 = tpu.matmul %391, %392, %cst_313 {dimension_numbers = #tpu.dot_dimension_numbers<[1], [0], [0], [1], [0, 0, 1, 1], [], []>} : vector<32x32xbf16>, vector<32x128xbf16>, vector<32x128xf32> -> vector<32x128xf32>
    %c32_314 = arith.constant 32 : index
    %c0_315 = arith.constant 0 : index
    %394 = vector.load %arg12[%c32_314, %c0_315] : memref<288x32xbf16, #tpu.memory_space<vmem>>, vector<32x32xbf16>
    %c0_316 = arith.constant 0 : index
    %c1_317 = arith.constant 1 : index
    %395 = vector.load %arg26[%c0_316, %c1_317] : memref<32x256xbf16, #tpu.memory_space<vmem>>, vector<32x128xbf16>
    %cst_318 = arith.constant dense<0.000000e+00> : vector<32x128xf32>
    %396 = tpu.matmul %394, %395, %cst_318 {dimension_numbers = #tpu.dot_dimension_numbers<[1], [0], [0], [1], [0, 0, 1, 1], [], []>} : vector<32x32xbf16>, vector<32x128xbf16>, vector<32x128xf32> -> vector<32x128xf32>
    %397 = arith.addf %393, %396 : vector<32x128xf32>
    %c64_319 = arith.constant 64 : index
    %c0_320 = arith.constant 0 : index
    %398 = vector.load %arg12[%c64_319, %c0_320] : memref<288x32xbf16, #tpu.memory_space<vmem>>, vector<32x32xbf16>
    %c0_321 = arith.constant 0 : index
    %c2_322 = arith.constant 2 : index
    %399 = vector.load %arg26[%c0_321, %c2_322] : memref<32x256xbf16, #tpu.memory_space<vmem>>, vector<32x128xbf16>
    %cst_323 = arith.constant dense<0.000000e+00> : vector<32x128xf32>
    %400 = tpu.matmul %398, %399, %cst_323 {dimension_numbers = #tpu.dot_dimension_numbers<[1], [0], [0], [1], [0, 0, 1, 1], [], []>} : vector<32x32xbf16>, vector<32x128xbf16>, vector<32x128xf32> -> vector<32x128xf32>
    %401 = arith.addf %397, %400 : vector<32x128xf32>
    %c96_324 = arith.constant 96 : index
    %c0_325 = arith.constant 0 : index
    %402 = vector.load %arg12[%c96_324, %c0_325] : memref<288x32xbf16, #tpu.memory_space<vmem>>, vector<32x32xbf16>
    %c0_326 = arith.constant 0 : index
    %c6 = arith.constant 6 : index
    %403 = vector.load %arg26[%c0_326, %c6] : memref<32x256xbf16, #tpu.memory_space<vmem>>, vector<32x128xbf16>
    %cst_327 = arith.constant dense<0.000000e+00> : vector<32x128xf32>
    %404 = tpu.matmul %402, %403, %cst_327 {dimension_numbers = #tpu.dot_dimension_numbers<[1], [0], [0], [1], [0, 0, 1, 1], [], []>} : vector<32x32xbf16>, vector<32x128xbf16>, vector<32x128xf32> -> vector<32x128xf32>
    %405 = arith.addf %401, %404 : vector<32x128xf32>
    %c128_328 = arith.constant 128 : index
    %c0_329 = arith.constant 0 : index
    %406 = vector.load %arg12[%c128_328, %c0_329] : memref<288x32xbf16, #tpu.memory_space<vmem>>, vector<32x32xbf16>
    %c0_330 = arith.constant 0 : index
    %c7_331 = arith.constant 7 : index
    %407 = vector.load %arg26[%c0_330, %c7_331] : memref<32x256xbf16, #tpu.memory_space<vmem>>, vector<32x128xbf16>
    %cst_332 = arith.constant dense<0.000000e+00> : vector<32x128xf32>
    %408 = tpu.matmul %406, %407, %cst_332 {dimension_numbers = #tpu.dot_dimension_numbers<[1], [0], [0], [1], [0, 0, 1, 1], [], []>} : vector<32x32xbf16>, vector<32x128xbf16>, vector<32x128xf32> -> vector<32x128xf32>
    %409 = arith.addf %405, %408 : vector<32x128xf32>
    %c160_333 = arith.constant 160 : index
    %c0_334 = arith.constant 0 : index
    %410 = vector.load %arg12[%c160_333, %c0_334] : memref<288x32xbf16, #tpu.memory_space<vmem>>, vector<32x32xbf16>
    %c0_335 = arith.constant 0 : index
    %c8_336 = arith.constant 8 : index
    %411 = vector.load %arg26[%c0_335, %c8_336] : memref<32x256xbf16, #tpu.memory_space<vmem>>, vector<32x128xbf16>
    %cst_337 = arith.constant dense<0.000000e+00> : vector<32x128xf32>
    %412 = tpu.matmul %410, %411, %cst_337 {dimension_numbers = #tpu.dot_dimension_numbers<[1], [0], [0], [1], [0, 0, 1, 1], [], []>} : vector<32x32xbf16>, vector<32x128xbf16>, vector<32x128xf32> -> vector<32x128xf32>
    %413 = arith.addf %409, %412 : vector<32x128xf32>
    %c192_338 = arith.constant 192 : index
    %c0_339 = arith.constant 0 : index
    %414 = vector.load %arg12[%c192_338, %c0_339] : memref<288x32xbf16, #tpu.memory_space<vmem>>, vector<32x32xbf16>
    %c0_340 = arith.constant 0 : index
    %c12_341 = arith.constant 12 : index
    %415 = vector.load %arg26[%c0_340, %c12_341] : memref<32x256xbf16, #tpu.memory_space<vmem>>, vector<32x128xbf16>
    %cst_342 = arith.constant dense<0.000000e+00> : vector<32x128xf32>
    %416 = tpu.matmul %414, %415, %cst_342 {dimension_numbers = #tpu.dot_dimension_numbers<[1], [0], [0], [1], [0, 0, 1, 1], [], []>} : vector<32x32xbf16>, vector<32x128xbf16>, vector<32x128xf32> -> vector<32x128xf32>
    %417 = arith.addf %413, %416 : vector<32x128xf32>
    %c224_343 = arith.constant 224 : index
    %c0_344 = arith.constant 0 : index
    %418 = vector.load %arg12[%c224_343, %c0_344] : memref<288x32xbf16, #tpu.memory_space<vmem>>, vector<32x32xbf16>
    %c0_345 = arith.constant 0 : index
    %c13 = arith.constant 13 : index
    %419 = vector.load %arg26[%c0_345, %c13] : memref<32x256xbf16, #tpu.memory_space<vmem>>, vector<32x128xbf16>
    %cst_346 = arith.constant dense<0.000000e+00> : vector<32x128xf32>
    %420 = tpu.matmul %418, %419, %cst_346 {dimension_numbers = #tpu.dot_dimension_numbers<[1], [0], [0], [1], [0, 0, 1, 1], [], []>} : vector<32x32xbf16>, vector<32x128xbf16>, vector<32x128xf32> -> vector<32x128xf32>
    %421 = arith.addf %417, %420 : vector<32x128xf32>
    %c256_347 = arith.constant 256 : index
    %c0_348 = arith.constant 0 : index
    %422 = vector.load %arg12[%c256_347, %c0_348] : memref<288x32xbf16, #tpu.memory_space<vmem>>, vector<32x32xbf16>
    %c0_349 = arith.constant 0 : index
    %c14 = arith.constant 14 : index
    %423 = vector.load %arg26[%c0_349, %c14] : memref<32x256xbf16, #tpu.memory_space<vmem>>, vector<32x128xbf16>
    %cst_350 = arith.constant dense<0.000000e+00> : vector<32x128xf32>
    %424 = tpu.matmul %422, %423, %cst_350 {dimension_numbers = #tpu.dot_dimension_numbers<[1], [0], [0], [1], [0, 0, 1, 1], [], []>} : vector<32x32xbf16>, vector<32x128xbf16>, vector<32x128xf32> -> vector<32x128xf32>
    %425 = arith.addf %421, %424 : vector<32x128xf32>
    %c0_351 = arith.constant 0 : index
    %c0_352 = arith.constant 0 : index
    %426 = vector.load %arg18[%c0_351, %c0_352] : memref<1x128xf32, #tpu.memory_space<vmem>>, vector<1x128xf32>
    %427 = vector.broadcast %426 : vector<1x128xf32> to vector<32x128xf32>
    %428 = arith.mulf %425, %427 : vector<32x128xf32>
    %cst_353 = arith.constant dense<0.000000e+00> : vector<32xf32>
    %429 = vector.multi_reduction <add>, %428, %cst_353 [1] : vector<32x128xf32> to vector<32xf32>
    %430 = vector.shape_cast %429 : vector<32xf32> to vector<32x1xf32>
    %cst_354 = arith.constant 6.250000e-02 : f32
    %431 = vector.broadcast %cst_354 : f32 to vector<32x1xf32>
    %432 = arith.mulf %430, %431 : vector<32x1xf32>
    %433 = arith.mulf %428, %425 : vector<32x128xf32>
    %cst_355 = arith.constant dense<0.000000e+00> : vector<32xf32>
    %434 = vector.multi_reduction <add>, %433, %cst_355 [1] : vector<32x128xf32> to vector<32xf32>
    %435 = vector.shape_cast %434 : vector<32xf32> to vector<32x1xf32>
    %cst_356 = arith.constant 6.250000e-02 : f32
    %436 = vector.broadcast %cst_356 : f32 to vector<32x1xf32>
    %437 = arith.mulf %435, %436 : vector<32x1xf32>
    %438 = arith.mulf %432, %432 : vector<32x1xf32>
    %439 = arith.subf %437, %438 : vector<32x1xf32>
    %cst_357 = arith.constant 0.000000e+00 : f32
    %440 = vector.broadcast %cst_357 : f32 to vector<32x1xf32>
    %441 = arith.maximumf %439, %440 : vector<32x1xf32>
    %c0_358 = arith.constant 0 : index
    %c0_359 = arith.constant 0 : index
    %442 = vector.load %arg13[%c0_358, %c0_359] : memref<32x2xf32, #tpu.memory_space<vmem>>, vector<32x1xf32>
    %cst_360 = arith.constant 9.99999974E-6 : f32
    %443 = vector.broadcast %cst_360 : f32 to vector<32x1xf32>
    %444 = arith.addf %441, %443 : vector<32x1xf32>
    %445 = math.rsqrt %444 : vector<32x1xf32>
    %446 = arith.mulf %442, %445 : vector<32x1xf32>
    %c0_361 = arith.constant 0 : index
    %c1_362 = arith.constant 1 : index
    %447 = vector.load %arg13[%c0_361, %c1_362] : memref<32x2xf32, #tpu.memory_space<vmem>>, vector<32x1xf32>
    %448 = arith.mulf %432, %446 : vector<32x1xf32>
    %449 = arith.subf %447, %448 : vector<32x1xf32>
    %450 = vector.broadcast %446 : vector<32x1xf32> to vector<32x128xf32>
    %451 = arith.mulf %425, %450 : vector<32x128xf32>
    %452 = vector.broadcast %449 : vector<32x1xf32> to vector<32x128xf32>
    %453 = arith.addf %451, %452 : vector<32x128xf32>
    %cst_363 = arith.constant 0.000000e+00 : f32
    %454 = vector.broadcast %cst_363 : f32 to vector<32x128xf32>
    %455 = arith.cmpf oge, %453, %454 : vector<32x128xf32>
    %cst_364 = arith.constant 0.00999999977 : f32
    %456 = vector.broadcast %cst_364 : f32 to vector<32x128xf32>
    %457 = arith.mulf %456, %453 : vector<32x128xf32>
    %458 = arith.select %455, %453, %457 : vector<32x128xi1>, vector<32x128xf32>
    %459 = vector.broadcast %426 : vector<1x128xf32> to vector<32x128xf32>
    %460 = arith.mulf %458, %459 : vector<32x128xf32>
    %c0_365 = arith.constant 0 : index
    %c0_366 = arith.constant 0 : index
    %c0_367 = arith.constant 0 : index
    %461 = vector.load %arg21[%c0_365, %c0_366, %c0_367] : memref<1x32x128xf32, #tpu.memory_space<vmem>>, vector<1x32x128xf32>
    %462 = vector.shape_cast %461 : vector<1x32x128xf32> to vector<32x128xf32>
    %463 = vector.shape_cast %460 : vector<32x128xf32> to vector<1x32x128xf32>
    tpu.vector_store %arg21[%c0_365, %c0_366, %c0_367], %463 {strides = array<i32>} : memref<1x32x128xf32, #tpu.memory_space<vmem>>, vector<1x32x128xf32>,
    return
  }
  func.func @transform_0(%arg0: i32) -> (i32, i32, i32) {
    %c0_i32 = arith.constant 0 : i32
    %c0_i32_0 = arith.constant 0 : i32
    %c0_i32_1 = arith.constant 0 : i32
    return %arg0, %c0_i32, %c0_i32_0 : i32, i32, i32
  }
  func.func @transform_1(%arg0: i32) -> (i32, i32) {
    %c0_i32 = arith.constant 0 : i32
    %c0_i32_0 = arith.constant 0 : i32
    %c0_i32_1 = arith.constant 0 : i32
    return %c0_i32, %c0_i32_0 : i32, i32
  }
  func.func @transform_2(%arg0: i32) -> (i32, i32) {
    %c0_i32 = arith.constant 0 : i32
    %c0_i32_0 = arith.constant 0 : i32
    %c0_i32_1 = arith.constant 0 : i32
    return %c0_i32, %c0_i32_0 : i32, i32
  }
  func.func @transform_3(%arg0: i32) -> (i32, i32) {
    %c0_i32 = arith.constant 0 : i32
    %c0_i32_0 = arith.constant 0 : i32
    %c0_i32_1 = arith.constant 0 : i32
    return %c0_i32, %c0_i32_0 : i32, i32
  }
  func.func @transform_4(%arg0: i32) -> (i32, i32) {
    %c0_i32 = arith.constant 0 : i32
    %c0_i32_0 = arith.constant 0 : i32
    %c0_i32_1 = arith.constant 0 : i32
    return %c0_i32, %c0_i32_0 : i32, i32
  }
  func.func @transform_5(%arg0: i32) -> (i32, i32) {
    %c0_i32 = arith.constant 0 : i32
    %c0_i32_0 = arith.constant 0 : i32
    %c0_i32_1 = arith.constant 0 : i32
    return %c0_i32, %c0_i32_0 : i32, i32
  }
  func.func @transform_6(%arg0: i32) -> (i32, i32) {
    %c0_i32 = arith.constant 0 : i32
    %c0_i32_0 = arith.constant 0 : i32
    %c0_i32_1 = arith.constant 0 : i32
    return %c0_i32, %c0_i32_0 : i32, i32
  }
  func.func @transform_7(%arg0: i32) -> (i32, i32) {
    %c0_i32 = arith.constant 0 : i32
    %c0_i32_0 = arith.constant 0 : i32
    %c0_i32_1 = arith.constant 0 : i32
    return %c0_i32, %c0_i32_0 : i32, i32
  }
  func.func @transform_8(%arg0: i32) -> (i32, i32) {
    %c0_i32 = arith.constant 0 : i32
    %c0_i32_0 = arith.constant 0 : i32
    %c0_i32_1 = arith.constant 0 : i32
    return %c0_i32, %c0_i32_0 : i32, i32
  }
  func.func @transform_9(%arg0: i32) -> (i32, i32) {
    %c0_i32 = arith.constant 0 : i32
    %c0_i32_0 = arith.constant 0 : i32
    %c0_i32_1 = arith.constant 0 : i32
    return %c0_i32, %c0_i32_0 : i32, i32
  }
  func.func @transform_10(%arg0: i32) -> (i32, i32) {
    %c0_i32 = arith.constant 0 : i32
    %c0_i32_0 = arith.constant 0 : i32
    %c0_i32_1 = arith.constant 0 : i32
    return %c0_i32, %c0_i32_0 : i32, i32
  }
  func.func @transform_11(%arg0: i32) -> (i32, i32) {
    %c0_i32 = arith.constant 0 : i32
    %c0_i32_0 = arith.constant 0 : i32
    %c0_i32_1 = arith.constant 0 : i32
    return %c0_i32, %c0_i32_0 : i32, i32
  }
  func.func @transform_12(%arg0: i32) -> (i32, i32) {
    %c0_i32 = arith.constant 0 : i32
    %c0_i32_0 = arith.constant 0 : i32
    %c0_i32_1 = arith.constant 0 : i32
    return %c0_i32, %c0_i32_0 : i32, i32
  }
  func.func @transform_13(%arg0: i32) -> (i32, i32) {
    %c0_i32 = arith.constant 0 : i32
    %c0_i32_0 = arith.constant 0 : i32
    %c0_i32_1 = arith.constant 0 : i32
    return %c0_i32, %c0_i32_0 : i32, i32
  }
  func.func @transform_14(%arg0: i32) -> (i32, i32) {
    %c0_i32 = arith.constant 0 : i32
    %c0_i32_0 = arith.constant 0 : i32
    %c0_i32_1 = arith.constant 0 : i32
    return %c0_i32, %c0_i32_0 : i32, i32
  }
  func.func @transform_15(%arg0: i32) -> (i32, i32) {
    %c0_i32 = arith.constant 0 : i32
    %c0_i32_0 = arith.constant 0 : i32
    %c0_i32_1 = arith.constant 0 : i32
    return %c0_i32, %c0_i32_0 : i32, i32
  }
  func.func @transform_16(%arg0: i32) -> (i32, i32) {
    %c0_i32 = arith.constant 0 : i32
    %c0_i32_0 = arith.constant 0 : i32
    %c0_i32_1 = arith.constant 0 : i32
    return %c0_i32, %c0_i32_0 : i32, i32
  }
  func.func @transform_17(%arg0: i32) -> (i32, i32) {
    %c0_i32 = arith.constant 0 : i32
    %c0_i32_0 = arith.constant 0 : i32
    %c0_i32_1 = arith.constant 0 : i32
    return %c0_i32, %c0_i32_0 : i32, i32
  }
  func.func @transform_18(%arg0: i32) -> (i32, i32, i32) {
    %c0_i32 = arith.constant 0 : i32
    %c0_i32_0 = arith.constant 0 : i32
    %c0_i32_1 = arith.constant 0 : i32
    return %arg0, %c0_i32, %c0_i32_0 : i32, i32, i32
  }
  func.func @transform_19(%arg0: i32) -> (i32, i32, i32) {
    %c0_i32 = arith.constant 0 : i32
    %c0_i32_0 = arith.constant 0 : i32
    %c0_i32_1 = arith.constant 0 : i32
    return %arg0, %c0_i32, %c0_i32_0 : i32, i32, i32
  }
  func.func @transform_20(%arg0: i32) -> (i32, i32, i32) {
    %c0_i32 = arith.constant 0 : i32
    %c0_i32_0 = arith.constant 0 : i32
    %c0_i32_1 = arith.constant 0 : i32
    return %arg0, %c0_i32, %c0_i32_0 : i32, i32, i32
  }
}

</mosaic_0001>

<llo_original>
// kernel: _encoder_forward_impl.1
$region0: #{_encoder_forward_impl.1}
  #allocation0 [shape = 'u32[]', space=smem, size = 0x4, offset = 0x4, fixed_abs, tag = 'smem constant byte address 0x4 - core index']
  #allocation1 [shape = 'u32[144,128]{1,0:T(1,128)}', space=vmem, size = 0x12000, scoped, tag = 'internal scratch']
  #allocation2 [shape = 'bf16[8,512]{1,0:T(8,128)(2,1)}', space=vmem, size = 0x2000, scoped, tag = 'scratch operand']
  #allocation3 [shape = 'bf16[8,512]{1,0:T(8,128)(2,1)}', space=vmem, size = 0x2000, scoped, tag = 'scratch operand']
  #allocation4 [shape = 'bf16[16,256]{1,0:T(16,128)(2,1)}', space=vmem, size = 0x2000, scoped, tag = 'scratch operand']
  #allocation5 [shape = 'bf16[16,256]{1,0:T(16,128)(2,1)}', space=vmem, size = 0x2000, scoped, tag = 'scratch operand']
  #allocation6 [shape = 'bf16[32,256]{1,0:T(16,128)(2,1)}', space=vmem, size = 0x4000, scoped, tag = 'scratch operand']
  %s0 = inlined_call_operand.vmem [shape: bf16[2,8,512], index: 0, kind: input, shape index: {}]
  %s1 = inlined_call_operand.vmem [shape: bf16[72,8], index: 1, kind: input, shape index: {}]
  %s2 = inlined_call_operand.vmem [shape: f32[8,2], index: 2, kind: input, shape index: {}]
  %s3 = inlined_call_operand.vmem [shape: bf16[72,8], index: 3, kind: input, shape index: {}]
  %s4 = inlined_call_operand.vmem [shape: f32[8,2], index: 4, kind: input, shape index: {}]
  %s5 = inlined_call_operand.vmem [shape: bf16[144,8], index: 5, kind: input, shape index: {}]
  %s6 = inlined_call_operand.vmem [shape: f32[16,2], index: 6, kind: input, shape index: {}]
  %s7 = inlined_call_operand.vmem [shape: bf16[144,16], index: 7, kind: input, shape index: {}]
  %s8 = inlined_call_operand.vmem [shape: f32[16,2], index: 8, kind: input, shape index: {}]
  %s9 = inlined_call_operand.vmem [shape: bf16[288,16], index: 9, kind: input, shape index: {}]
  %s10 = inlined_call_operand.vmem [shape: f32[32,2], index: 10, kind: input, shape index: {}]
  %s11 = inlined_call_operand.vmem [shape: bf16[288,32], index: 11, kind: input, shape index: {}]
  %s12 = inlined_call_operand.vmem [shape: f32[32,2], index: 12, kind: input, shape index: {}]
  %s13 = inlined_call_operand.vmem [shape: bf16[384,128], index: 13, kind: input, shape index: {}]
  %s14 = inlined_call_operand.vmem [shape: bf16[128,128], index: 14, kind: input, shape index: {}]
  %s15 = inlined_call_operand.vmem [shape: f32[1,384], index: 15, kind: input, shape index: {}]
  %s16 = inlined_call_operand.vmem [shape: f32[1,128], index: 16, kind: input, shape index: {}]
  %s17 = inlined_call_operand.vmem [shape: f32[1,128], index: 17, kind: input, shape index: {}]
  %s18 = inlined_call_operand.vmem [shape: f32[2,8,384], index: 18, kind: output, shape index: {0}]
  %s19 = inlined_call_operand.vmem [shape: f32[2,16,128], index: 19, kind: output, shape index: {1}]
  %s20 = inlined_call_operand.vmem [shape: f32[2,32,128], index: 20, kind: output, shape index: {2}]
  %21 = xla_tuple %s18, %s19, %s20
  %s22 = sld [smem:[#allocation0]]
  $region121: #{_encoder_forward_impl.1} parent=0
    _
  %s24 = ssub.s32 1, %s22
  %s25 = scalar_select 0, %s24, %s22
  loop: start=0, step=1, limit=4
  $region2: #{_encoder_forward_impl.1} parent=0 // loop_pre_header
    _
  $region3: #{_encoder_forward_impl.1} parent=0 // loop_header
    %s27 = sphi 0, %s31
    %p28 = scmp.ge.s32.totalorder %s27, 4
    %s37 = sphi 0, %s39
    %s40 = sphi 0, %s37
    %s41 = sphi 0, %s40
    %s57 = sphi 0, %s41
    %s61 = sphi 0, %s61
    %s63 = sphi 0, %s61
    %s64 = sphi 0, %s63
    %s78 = sphi 0, %s64
    %s82 = sphi 0, %s82
    %s84 = sphi 0, %s82
    %s85 = sphi 0, %s84
    %s99 = sphi 0, %s85
    %s103 = sphi 0, %s103
    %s105 = sphi 0, %s103
    %s106 = sphi 0, %s105
    %s120 = sphi 0, %s106
    %s124 = sphi 0, %s124
    %s126 = sphi 0, %s124
    %s127 = sphi 0, %s126
    %s141 = sphi 0, %s127
    %s145 = sphi 0, %s145
    %s147 = sphi 0, %s145
    %s148 = sphi 0, %s147
    %s162 = sphi 0, %s148
    %s166 = sphi 0, %s166
    %s168 = sphi 0, %s166
    %s169 = sphi 0, %s168
    %s183 = sphi 0, %s169
    %s187 = sphi 0, %s187
    %s189 = sphi 0, %s187
    %s190 = sphi 0, %s189
    %s204 = sphi 0, %s190
    %s208 = sphi 0, %s208
    %s210 = sphi 0, %s208
    %s211 = sphi 0, %s210
    %s225 = sphi 0, %s211
    %s229 = sphi 0, %s229
    %s231 = sphi 0, %s229
    %s232 = sphi 0, %s231
    %s246 = sphi 0, %s232
    %s250 = sphi 0, %s250
    %s252 = sphi 0, %s250
    %s253 = sphi 0, %s252
    %s267 = sphi 0, %s253
    %s271 = sphi 0, %s271
    %s273 = sphi 0, %s271
    %s274 = sphi 0, %s273
    %s288 = sphi 0, %s274
    %s292 = sphi 0, %s292
    %s294 = sphi 0, %s292
    %s295 = sphi 0, %s294
    %s309 = sphi 0, %s295
    %s313 = sphi 0, %s313
    %s315 = sphi 0, %s313
    %s316 = sphi 0, %s315
    %s330 = sphi 0, %s316
    %s334 = sphi 0, %s334
    %s336 = sphi 0, %s334
    %s337 = sphi 0, %s336
    %s351 = sphi 0, %s337
    %s355 = sphi 0, %s355
    %s357 = sphi 0, %s355
    %s358 = sphi 0, %s357
    %s372 = sphi 0, %s358
    %s376 = sphi 0, %s376
    %s378 = sphi 0, %s376
    %s379 = sphi 0, %s378
    %s393 = sphi 0, %s379
    %s397 = sphi 0, %s397
    %s399 = sphi 0, %s397
    %s400 = sphi 0, %s399
    %s414 = sphi 0, %s400
    %s420 = sphi 0, %s422
    %s423 = sphi 0, %s420
    %s424 = sphi 0, %s423
    %s440 = sphi 0, %s424
    %s446 = sphi 0, %s448
    %s449 = sphi 0, %s446
    %s450 = sphi 0, %s449
    %s466 = sphi 0, %s450
    %s472 = sphi 0, %s474
    %s475 = sphi 0, %s472
    %s476 = sphi 0, %s475
    %s492 = sphi 0, %s476
  $region4: #{_encoder_forward_impl.1} parent=0 // loop_header_branch
    %30 = sbr.rel (%p28) target = $region8
  $region5: #{_encoder_forward_impl.1} parent=0 // loop_body
    %s32 = ssub.s32 %s27, 1
    %s33 = ssub.s32 %s27, 2
    %s34 = sadd.s32 %s27, 1
    %s35 = ssub.s32 %s27, %s34
    %p36 = scmp.eq.s32.totalorder %s35, 0
    %s38 = sadd.s32 %s37, 1
    %s39 = scalar_select %p36, %s37, %s38
    %p42 = pneg %p36
    %p43 = scmp.eq.s32.totalorder %s27, 1
    %p44 = por %p42, %p43
    %p45 = scmp.ne.s32.totalorder %s37, %s40
    %p46 = scmp.eq.s32.totalorder %s27, 0
    %p47 = por %p45, %p46
    %p48 = scmp.ne.s32.totalorder %s37, %s40
    %p49 = scmp.eq.s32.totalorder %s32, 1
    %p50 = por %p48, %p49
    %p51 = scmp.ne.s32.totalorder %s40, %s41
    %p52 = scmp.eq.s32.totalorder %s32, 0
    %p53 = por %p51, %p52
    %p54 = scmp.ne.s32.totalorder %s40, %s41
    %p55 = scmp.eq.s32.totalorder %s33, 1
    %p56 = por %p54, %p55
    %p58 = scmp.ne.s32.totalorder %s41, %s57
    %p59 = scmp.eq.s32.totalorder %s33, 0
    %p60 = por %p58, %p59
    %s62 = sadd.s32 %s61, 1
    %p65 = scmp.eq.s32.totalorder %s27, 1
    %p66 = scmp.ne.s32.totalorder %s61, %s63
    %p67 = scmp.eq.s32.totalorder %s27, 0
    %p68 = por %p66, %p67
    %p69 = scmp.ne.s32.totalorder %s61, %s63
    %p70 = scmp.eq.s32.totalorder %s32, 1
    %p71 = por %p69, %p70
    %p72 = scmp.ne.s32.totalorder %s63, %s64
    %p73 = scmp.eq.s32.totalorder %s32, 0
    %p74 = por %p72, %p73
    %p75 = scmp.ne.s32.totalorder %s63, %s64
    %p76 = scmp.eq.s32.totalorder %s33, 1
    %p77 = por %p75, %p76
    %p79 = scmp.ne.s32.totalorder %s64, %s78
    %p80 = scmp.eq.s32.totalorder %s33, 0
    %p81 = por %p79, %p80
    %s83 = sadd.s32 %s82, 1
    %p86 = scmp.eq.s32.totalorder %s27, 1
    %p87 = scmp.ne.s32.totalorder %s82, %s84
    %p88 = scmp.eq.s32.totalorder %s27, 0
    %p89 = por %p87, %p88
    %p90 = scmp.ne.s32.totalorder %s82, %s84
    %p91 = scmp.eq.s32.totalorder %s32, 1
    %p92 = por %p90, %p91
    %p93 = scmp.ne.s32.totalorder %s84, %s85
    %p94 = scmp.eq.s32.totalorder %s32, 0
    %p95 = por %p93, %p94
    %p96 = scmp.ne.s32.totalorder %s84, %s85
    %p97 = scmp.eq.s32.totalorder %s33, 1
    %p98 = por %p96, %p97
    %p100 = scmp.ne.s32.totalorder %s85, %s99
    %p101 = scmp.eq.s32.totalorder %s33, 0
    %p102 = por %p100, %p101
    %s104 = sadd.s32 %s103, 1
    %p107 = scmp.eq.s32.totalorder %s27, 1
    %p108 = scmp.ne.s32.totalorder %s103, %s105
    %p109 = scmp.eq.s32.totalorder %s27, 0
    %p110 = por %p108, %p109
    %p111 = scmp.ne.s32.totalorder %s103, %s105
    %p112 = scmp.eq.s32.totalorder %s32, 1
    %p113 = por %p111, %p112
    %p114 = scmp.ne.s32.totalorder %s105, %s106
    %p115 = scmp.eq.s32.totalorder %s32, 0
    %p116 = por %p114, %p115
    %p117 = scmp.ne.s32.totalorder %s105, %s106
    %p118 = scmp.eq.s32.totalorder %s33, 1
    %p119 = por %p117, %p118
    %p121 = scmp.ne.s32.totalorder %s106, %s120
    %p122 = scmp.eq.s32.totalorder %s33, 0
    %p123 = por %p121, %p122
    %s125 = sadd.s32 %s124, 1
    %p128 = scmp.eq.s32.totalorder %s27, 1
    %p129 = scmp.ne.s32.totalorder %s124, %s126
    %p130 = scmp.eq.s32.totalorder %s27, 0
    %p131 = por %p129, %p130
    %p132 = scmp.ne.s32.totalorder %s124, %s126
    %p133 = scmp.eq.s32.totalorder %s32, 1
    %p134 = por %p132, %p133
    %p135 = scmp.ne.s32.totalorder %s126, %s127
    %p136 = scmp.eq.s32.totalorder %s32, 0
    %p137 = por %p135, %p136
    %p138 = scmp.ne.s32.totalorder %s126, %s127
    %p139 = scmp.eq.s32.totalorder %s33, 1
    %p140 = por %p138, %p139
    %p142 = scmp.ne.s32.totalorder %s127, %s141
    %p143 = scmp.eq.s32.totalorder %s33, 0
    %p144 = por %p142, %p143
    %s146 = sadd.s32 %s145, 1
    %p149 = scmp.eq.s32.totalorder %s27, 1
    %p150 = scmp.ne.s32.totalorder %s145, %s147
    %p151 = scmp.eq.s32.totalorder %s27, 0
    %p152 = por %p150, %p151
    %p153 = scmp.ne.s32.totalorder %s145, %s147
    %p154 = scmp.eq.s32.totalorder %s32, 1
    %p155 = por %p153, %p154
    %p156 = scmp.ne.s32.totalorder %s147, %s148
    %p157 = scmp.eq.s32.totalorder %s32, 0
    %p158 = por %p156, %p157
    %p159 = scmp.ne.s32.totalorder %s147, %s148
    %p160 = scmp.eq.s32.totalorder %s33, 1
    %p161 = por %p159, %p160
    %p163 = scmp.ne.s32.totalorder %s148, %s162
    %p164 = scmp.eq.s32.totalorder %s33, 0
    %p165 = por %p163, %p164
    %s167 = sadd.s32 %s166, 1
    %p170 = scmp.eq.s32.totalorder %s27, 1
    %p171 = scmp.ne.s32.totalorder %s166, %s168
    %p172 = scmp.eq.s32.totalorder %s27, 0
    %p173 = por %p171, %p172
    %p174 = scmp.ne.s32.totalorder %s166, %s168
    %p175 = scmp.eq.s32.totalorder %s32, 1
    %p176 = por %p174, %p175
    %p177 = scmp.ne.s32.totalorder %s168, %s169
    %p178 = scmp.eq.s32.totalorder %s32, 0
    %p179 = por %p177, %p178
    %p180 = scmp.ne.s32.totalorder %s168, %s169
    %p181 = scmp.eq.s32.totalorder %s33, 1
    %p182 = por %p180, %p181
    %p184 = scmp.ne.s32.totalorder %s169, %s183
    %p185 = scmp.eq.s32.totalorder %s33, 0
    %p186 = por %p184, %p185
    %s188 = sadd.s32 %s187, 1
    %p191 = scmp.eq.s32.totalorder %s27, 1
    %p192 = scmp.ne.s32.totalorder %s187, %s189
    %p193 = scmp.eq.s32.totalorder %s27, 0
    %p194 = por %p192, %p193
    %p195 = scmp.ne.s32.totalorder %s187, %s189
    %p196 = scmp.eq.s32.totalorder %s32, 1
    %p197 = por %p195, %p196
    %p198 = scmp.ne.s32.totalorder %s189, %s190
    %p199 = scmp.eq.s32.totalorder %s32, 0
    %p200 = por %p198, %p199
    %p201 = scmp.ne.s32.totalorder %s189, %s190
    %p202 = scmp.eq.s32.totalorder %s33, 1
    %p203 = por %p201, %p202
    %p205 = scmp.ne.s32.totalorder %s190, %s204
    %p206 = scmp.eq.s32.totalorder %s33, 0
    %p207 = por %p205, %p206
    %s209 = sadd.s32 %s208, 1
    %p212 = scmp.eq.s32.totalorder %s27, 1
    %p213 = scmp.ne.s32.totalorder %s208, %s210
    %p214 = scmp.eq.s32.totalorder %s27, 0
    %p215 = por %p213, %p214
    %p216 = scmp.ne.s32.totalorder %s208, %s210
    %p217 = scmp.eq.s32.totalorder %s32, 1
    %p218 = por %p216, %p217
    %p219 = scmp.ne.s32.totalorder %s210, %s211
    %p220 = scmp.eq.s32.totalorder %s32, 0
    %p221 = por %p219, %p220
    %p222 = scmp.ne.s32.totalorder %s210, %s211
    %p223 = scmp.eq.s32.totalorder %s33, 1
    %p224 = por %p222, %p223
    %p226 = scmp.ne.s32.totalorder %s211, %s225
    %p227 = scmp.eq.s32.totalorder %s33, 0
    %p228 = por %p226, %p227
    %s230 = sadd.s32 %s229, 1
    %p233 = scmp.eq.s32.totalorder %s27, 1
    %p234 = scmp.ne.s32.totalorder %s229, %s231
    %p235 = scmp.eq.s32.totalorder %s27, 0
    %p236 = por %p234, %p235
    %p237 = scmp.ne.s32.totalorder %s229, %s231
    %p238 = scmp.eq.s32.totalorder %s32, 1
    %p239 = por %p237, %p238
    %p240 = scmp.ne.s32.totalorder %s231, %s232
    %p241 = scmp.eq.s32.totalorder %s32, 0
    %p242 = por %p240, %p241
    %p243 = scmp.ne.s32.totalorder %s231, %s232
    %p244 = scmp.eq.s32.totalorder %s33, 1
    %p245 = por %p243, %p244
    %p247 = scmp.ne.s32.totalorder %s232, %s246
    %p248 = scmp.eq.s32.totalorder %s33, 0
    %p249 = por %p247, %p248
    %s251 = sadd.s32 %s250, 1
    %p254 = scmp.eq.s32.totalorder %s27, 1
    %p255 = scmp.ne.s32.totalorder %s250, %s252
    %p256 = scmp.eq.s32.totalorder %s27, 0
    %p257 = por %p255, %p256
    %p258 = scmp.ne.s32.totalorder %s250, %s252
    %p259 = scmp.eq.s32.totalorder %s32, 1
    %p260 = por %p258, %p259
    %p261 = scmp.ne.s32.totalorder %s252, %s253
    %p262 = scmp.eq.s32.totalorder %s32, 0
    %p263 = por %p261, %p262
    %p264 = scmp.ne.s32.totalorder %s252, %s253
    %p265 = scmp.eq.s32.totalorder %s33, 1
    %p266 = por %p264, %p265
    %p268 = scmp.ne.s32.totalorder %s253, %s267
    %p269 = scmp.eq.s32.totalorder %s33, 0
    %p270 = por %p268, %p269
    %s272 = sadd.s32 %s271, 1
    %p275 = scmp.eq.s32.totalorder %s27, 1
    %p276 = scmp.ne.s32.totalorder %s271, %s273
    %p277 = scmp.eq.s32.totalorder %s27, 0
    %p278 = por %p276, %p277
    %p279 = scmp.ne.s32.totalorder %s271, %s273
    %p280 = scmp.eq.s32.totalorder %s32, 1
    %p281 = por %p279, %p280
    %p282 = scmp.ne.s32.totalorder %s273, %s274
    %p283 = scmp.eq.s32.totalorder %s32, 0
    %p284 = por %p282, %p283
    %p285 = scmp.ne.s32.totalorder %s273, %s274
    %p286 = scmp.eq.s32.totalorder %s33, 1
    %p287 = por %p285, %p286
    %p289 = scmp.ne.s32.totalorder %s274, %s288
    %p290 = scmp.eq.s32.totalorder %s33, 0
    %p291 = por %p289, %p290
    %s293 = sadd.s32 %s292, 1
    %p296 = scmp.eq.s32.totalorder %s27, 1
    %p297 = scmp.ne.s32.totalorder %s292, %s294
    %p298 = scmp.eq.s32.totalorder %s27, 0
    %p299 = por %p297, %p298
    %p300 = scmp.ne.s32.totalorder %s292, %s294
    %p301 = scmp.eq.s32.totalorder %s32, 1
    %p302 = por %p300, %p301
    %p303 = scmp.ne.s32.totalorder %s294, %s295
    %p304 = scmp.eq.s32.totalorder %s32, 0
    %p305 = por %p303, %p304
    %p306 = scmp.ne.s32.totalorder %s294, %s295
    %p307 = scmp.eq.s32.totalorder %s33, 1
    %p308 = por %p306, %p307
    %p310 = scmp.ne.s32.totalorder %s295, %s309
    %p311 = scmp.eq.s32.totalorder %s33, 0
    %p312 = por %p310, %p311
    %s314 = sadd.s32 %s313, 1
    %p317 = scmp.eq.s32.totalorder %s27, 1
    %p318 = scmp.ne.s32.totalorder %s313, %s315
    %p319 = scmp.eq.s32.totalorder %s27, 0
    %p320 = por %p318, %p319
    %p321 = scmp.ne.s32.totalorder %s313, %s315
    %p322 = scmp.eq.s32.totalorder %s32, 1
    %p323 = por %p321, %p322
    %p324 = scmp.ne.s32.totalorder %s315, %s316
    %p325 = scmp.eq.s32.totalorder %s32, 0
    %p326 = por %p324, %p325
    %p327 = scmp.ne.s32.totalorder %s315, %s316
    %p328 = scmp.eq.s32.totalorder %s33, 1
    %p329 = por %p327, %p328
    %p331 = scmp.ne.s32.totalorder %s316, %s330
    %p332 = scmp.eq.s32.totalorder %s33, 0
    %p333 = por %p331, %p332
    %s335 = sadd.s32 %s334, 1
    %p338 = scmp.eq.s32.totalorder %s27, 1
    %p339 = scmp.ne.s32.totalorder %s334, %s336
    %p340 = scmp.eq.s32.totalorder %s27, 0
    %p341 = por %p339, %p340
    %p342 = scmp.ne.s32.totalorder %s334, %s336
    %p343 = scmp.eq.s32.totalorder %s32, 1
    %p344 = por %p342, %p343
    %p345 = scmp.ne.s32.totalorder %s336, %s337
    %p346 = scmp.eq.s32.totalorder %s32, 0
    %p347 = por %p345, %p346
    %p348 = scmp.ne.s32.totalorder %s336, %s337
    %p349 = scmp.eq.s32.totalorder %s33, 1
    %p350 = por %p348, %p349
    %p352 = scmp.ne.s32.totalorder %s337, %s351
    %p353 = scmp.eq.s32.totalorder %s33, 0
    %p354 = por %p352, %p353
    %s356 = sadd.s32 %s355, 1
    %p359 = scmp.eq.s32.totalorder %s27, 1
    %p360 = scmp.ne.s32.totalorder %s355, %s357
    %p361 = scmp.eq.s32.totalorder %s27, 0
    %p362 = por %p360, %p361
    %p363 = scmp.ne.s32.totalorder %s355, %s357
    %p364 = scmp.eq.s32.totalorder %s32, 1
    %p365 = por %p363, %p364
    %p366 = scmp.ne.s32.totalorder %s357, %s358
    %p367 = scmp.eq.s32.totalorder %s32, 0
    %p368 = por %p366, %p367
    %p369 = scmp.ne.s32.totalorder %s357, %s358
    %p370 = scmp.eq.s32.totalorder %s33, 1
    %p371 = por %p369, %p370
    %p373 = scmp.ne.s32.totalorder %s358, %s372
    %p374 = scmp.eq.s32.totalorder %s33, 0
    %p375 = por %p373, %p374
    %s377 = sadd.s32 %s376, 1
    %p380 = scmp.eq.s32.totalorder %s27, 1
    %p381 = scmp.ne.s32.totalorder %s376, %s378
    %p382 = scmp.eq.s32.totalorder %s27, 0
    %p383 = por %p381, %p382
    %p384 = scmp.ne.s32.totalorder %s376, %s378
    %p385 = scmp.eq.s32.totalorder %s32, 1
    %p386 = por %p384, %p385
    %p387 = scmp.ne.s32.totalorder %s378, %s379
    %p388 = scmp.eq.s32.totalorder %s32, 0
    %p389 = por %p387, %p388
    %p390 = scmp.ne.s32.totalorder %s378, %s379
    %p391 = scmp.eq.s32.totalorder %s33, 1
    %p392 = por %p390, %p391
    %p394 = scmp.ne.s32.totalorder %s379, %s393
    %p395 = scmp.eq.s32.totalorder %s33, 0
    %p396 = por %p394, %p395
    %s398 = sadd.s32 %s397, 1
    %p401 = scmp.eq.s32.totalorder %s27, 1
    %p402 = scmp.ne.s32.totalorder %s397, %s399
    %p403 = scmp.eq.s32.totalorder %s27, 0
    %p404 = por %p402, %p403
    %p405 = scmp.ne.s32.totalorder %s397, %s399
    %p406 = scmp.eq.s32.totalorder %s32, 1
    %p407 = por %p405, %p406
    %p408 = scmp.ne.s32.totalorder %s399, %s400
    %p409 = scmp.eq.s32.totalorder %s32, 0
    %p410 = por %p408, %p409
    %p411 = scmp.ne.s32.totalorder %s399, %s400
    %p412 = scmp.eq.s32.totalorder %s33, 1
    %p413 = por %p411, %p412
    %p415 = scmp.ne.s32.totalorder %s400, %s414
    %p416 = scmp.eq.s32.totalorder %s33, 0
    %p417 = por %p415, %p416
    %s418 = ssub.s32 %s27, %s34
    %p419 = scmp.eq.s32.totalorder %s418, 0
    %s421 = sadd.s32 %s420, 1
    %s422 = scalar_select %p419, %s420, %s421
    %p425 = pneg %p419
    %p426 = scmp.eq.s32.totalorder %s27, 1
    %p427 = por %p425, %p426
    %p428 = scmp.ne.s32.totalorder %s420, %s423
    %p429 = scmp.eq.s32.totalorder %s27, 0
    %p430 = por %p428, %p429
    %p431 = scmp.ne.s32.totalorder %s420, %s423
    %p432 = scmp.eq.s32.totalorder %s32, 1
    %p433 = por %p431, %p432
    %p434 = scmp.ne.s32.totalorder %s423, %s424
    %p435 = scmp.eq.s32.totalorder %s32, 0
    %p436 = por %p434, %p435
    %p437 = scmp.ne.s32.totalorder %s423, %s424
    %p438 = scmp.eq.s32.totalorder %s33, 1
    %p439 = por %p437, %p438
    %p441 = scmp.ne.s32.totalorder %s424, %s440
    %p442 = scmp.eq.s32.totalorder %s33, 0
    %p443 = por %p441, %p442
    %s444 = ssub.s32 %s27, %s34
    %p445 = scmp.eq.s32.totalorder %s444, 0
    %s447 = sadd.s32 %s446, 1
    %s448 = scalar_select %p445, %s446, %s447
    %p451 = pneg %p445
    %p452 = scmp.eq.s32.totalorder %s27, 1
    %p453 = por %p451, %p452
    %p454 = scmp.ne.s32.totalorder %s446, %s449
    %p455 = scmp.eq.s32.totalorder %s27, 0
    %p456 = por %p454, %p455
    %p457 = scmp.ne.s32.totalorder %s446, %s449
    %p458 = scmp.eq.s32.totalorder %s32, 1
    %p459 = por %p457, %p458
    %p460 = scmp.ne.s32.totalorder %s449, %s450
    %p461 = scmp.eq.s32.totalorder %s32, 0
    %p462 = por %p460, %p461
    %p463 = scmp.ne.s32.totalorder %s449, %s450
    %p464 = scmp.eq.s32.totalorder %s33, 1
    %p465 = por %p463, %p464
    %p467 = scmp.ne.s32.totalorder %s450, %s466
    %p468 = scmp.eq.s32.totalorder %s33, 0
    %p469 = por %p467, %p468
    %s470 = ssub.s32 %s27, %s34
    %p471 = scmp.eq.s32.totalorder %s470, 0
    %s473 = sadd.s32 %s472, 1
    %s474 = scalar_select %p471, %s472, %s473
    %p477 = pneg %p471
    %p478 = scmp.eq.s32.totalorder %s27, 1
    %p479 = por %p477, %p478
    %p480 = scmp.ne.s32.totalorder %s472, %s475
    %p481 = scmp.eq.s32.totalorder %s27, 0
    %p482 = por %p480, %p481
    %p483 = scmp.ne.s32.totalorder %s472, %s475
    %p484 = scmp.eq.s32.totalorder %s32, 1
    %p485 = por %p483, %p484
    %p486 = scmp.ne.s32.totalorder %s475, %s476
    %p487 = scmp.eq.s32.totalorder %s32, 0
    %p488 = por %p486, %p487
    %p489 = scmp.ne.s32.totalorder %s475, %s476
    %p490 = scmp.eq.s32.totalorder %s33, 1
    %p491 = por %p489, %p490
    %p493 = scmp.ne.s32.totalorder %s476, %s492
    %p494 = scmp.eq.s32.totalorder %s33, 0
    %p495 = por %p493, %p494
    %p496 = scmp.le.s32.totalorder 1, %s27
    %p497 = scmp.lt.s32.totalorder %s27, 3
    %p498 = pnand %p496, %p497
    %p499 = pneg %p498
    // Predicated region
    $region9: #{_encoder_forward_impl.1} parent=5 // pred_check
      _
    $region10: #{_encoder_forward_impl.1} parent=5 // pred_check_branch
      %501 = sbr.rel (%p498) target = $region12
    $region11: #{_encoder_forward_impl.1} parent=5 // pred_region
      %s502 = ssub.s32 %s27, 1
      // Predicated region
      $region13: #{_encoder_forward_impl.1} parent=11 // pred_check
        %p503 = pneg %p74
      $region14: #{_encoder_forward_impl.1} parent=11 // pred_check_branch
        %505 = sbr.rel (%p503) target = $region16
      $region15: #{_encoder_forward_impl.1} parent=11 // pred_region
        _
      $region16: #{_encoder_forward_impl.1} parent=11 // pred_fallthru
        _
      // Predicated region
      $region17: #{_encoder_forward_impl.1} parent=11 // pred_check
        %p506 = pneg %p95
      $region18: #{_encoder_forward_impl.1} parent=11 // pred_check_branch
        %508 = sbr.rel (%p506) target = $region20
      $region19: #{_encoder_forward_impl.1} parent=11 // pred_region
        _
      $region20: #{_encoder_forward_impl.1} parent=11 // pred_fallthru
        _
      // Predicated region
      $region21: #{_encoder_forward_impl.1} parent=11 // pred_check
        %p509 = pneg %p116
      $region22: #{_encoder_forward_impl.1} parent=11 // pred_check_branch
        %511 = sbr.rel (%p509) target = $region24
      $region23: #{_encoder_forward_impl.1} parent=11 // pred_region
        _
      $region24: #{_encoder_forward_impl.1} parent=11 // pred_fallthru
        _
      // Predicated region
      $region25: #{_encoder_forward_impl.1} parent=11 // pred_check
        %p512 = pneg %p137
      $region26: #{_encoder_forward_impl.1} parent=11 // pred_check_branch
        %514 = sbr.rel (%p512) target = $region28
      $region27: #{_encoder_forward_impl.1} parent=11 // pred_region
        _
      $region28: #{_encoder_forward_impl.1} parent=11 // pred_fallthru
        _
      // Predicated region
      $region29: #{_encoder_forward_impl.1} parent=11 // pred_check
        %p515 = pneg %p158
      $region30: #{_encoder_forward_impl.1} parent=11 // pred_check_branch
        %517 = sbr.rel (%p515) target = $region32
      $region31: #{_encoder_forward_impl.1} parent=11 // pred_region
        _
      $region32: #{_encoder_forward_impl.1} parent=11 // pred_fallthru
        _
      // Predicated region
      $region33: #{_encoder_forward_impl.1} parent=11 // pred_check
        %p518 = pneg %p179
      $region34: #{_encoder_forward_impl.1} parent=11 // pred_check_branch
        %520 = sbr.rel (%p518) target = $region36
      $region35: #{_encoder_forward_impl.1} parent=11 // pred_region
        _
      $region36: #{_encoder_forward_impl.1} parent=11 // pred_fallthru
        _
      // Predicated region
      $region37: #{_encoder_forward_impl.1} parent=11 // pred_check
        %p521 = pneg %p200
      $region38: #{_encoder_forward_impl.1} parent=11 // pred_check_branch
        %523 = sbr.rel (%p521) target = $region40
      $region39: #{_encoder_forward_impl.1} parent=11 // pred_region
        _
      $region40: #{_encoder_forward_impl.1} parent=11 // pred_fallthru
        _
      // Predicated region
      $region41: #{_encoder_forward_impl.1} parent=11 // pred_check
        %p524 = pneg %p221
      $region42: #{_encoder_forward_impl.1} parent=11 // pred_check_branch
        %526 = sbr.rel (%p524) target = $region44
      $region43: #{_encoder_forward_impl.1} parent=11 // pred_region
        _
      $region44: #{_encoder_forward_impl.1} parent=11 // pred_fallthru
        _
      // Predicated region
      $region45: #{_encoder_forward_impl.1} parent=11 // pred_check
        %p527 = pneg %p242
      $region46: #{_encoder_forward_impl.1} parent=11 // pred_check_branch
        %529 = sbr.rel (%p527) target = $region48
      $region47: #{_encoder_forward_impl.1} parent=11 // pred_region
        _
      $region48: #{_encoder_forward_impl.1} parent=11 // pred_fallthru
        _
      // Predicated region
      $region49: #{_encoder_forward_impl.1} parent=11 // pred_check
        %p530 = pneg %p263
      $region50: #{_encoder_forward_impl.1} parent=11 // pred_check_branch
        %532 = sbr.rel (%p530) target = $region52
      $region51: #{_encoder_forward_impl.1} parent=11 // pred_region
        _
      $region52: #{_encoder_forward_impl.1} parent=11 // pred_fallthru
        _
      // Predicated region
      $region53: #{_encoder_forward_impl.1} parent=11 // pred_check
        %p533 = pneg %p284
      $region54: #{_encoder_forward_impl.1} parent=11 // pred_check_branch
        %535 = sbr.rel (%p533) target = $region56
      $region55: #{_encoder_forward_impl.1} parent=11 // pred_region
        _
      $region56: #{_encoder_forward_impl.1} parent=11 // pred_fallthru
        _
      // Predicated region
      $region57: #{_encoder_forward_impl.1} parent=11 // pred_check
        %p536 = pneg %p305
      $region58: #{_encoder_forward_impl.1} parent=11 // pred_check_branch
        %538 = sbr.rel (%p536) target = $region60
      $region59: #{_encoder_forward_impl.1} parent=11 // pred_region
        _
      $region60: #{_encoder_forward_impl.1} parent=11 // pred_fallthru
        _
      // Predicated region
      $region61: #{_encoder_forward_impl.1} parent=11 // pred_check
        %p539 = pneg %p326
      $region62: #{_encoder_forward_impl.1} parent=11 // pred_check_branch
        %541 = sbr.rel (%p539) target = $region64
      $region63: #{_encoder_forward_impl.1} parent=11 // pred_region
        _
      $region64: #{_encoder_forward_impl.1} parent=11 // pred_fallthru
        _
      // Predicated region
      $region65: #{_encoder_forward_impl.1} parent=11 // pred_check
        %p542 = pneg %p347
      $region66: #{_encoder_forward_impl.1} parent=11 // pred_check_branch
        %544 = sbr.rel (%p542) target = $region68
      $region67: #{_encoder_forward_impl.1} parent=11 // pred_region
        _
      $region68: #{_encoder_forward_impl.1} parent=11 // pred_fallthru
        _
      // Predicated region
      $region69: #{_encoder_forward_impl.1} parent=11 // pred_check
        %p545 = pneg %p368
      $region70: #{_encoder_forward_impl.1} parent=11 // pred_check_branch
        %547 = sbr.rel (%p545) target = $region72
      $region71: #{_encoder_forward_impl.1} parent=11 // pred_region
        _
      $region72: #{_encoder_forward_impl.1} parent=11 // pred_fallthru
        _
      // Predicated region
      $region73: #{_encoder_forward_impl.1} parent=11 // pred_check
        %p548 = pneg %p389
      $region74: #{_encoder_forward_impl.1} parent=11 // pred_check_branch
        %550 = sbr.rel (%p548) target = $region76
      $region75: #{_encoder_forward_impl.1} parent=11 // pred_region
        _
      $region76: #{_encoder_forward_impl.1} parent=11 // pred_fallthru
        _
      // Predicated region
      $region77: #{_encoder_forward_impl.1} parent=11 // pred_check
        %p551 = pneg %p410
      $region78: #{_encoder_forward_impl.1} parent=11 // pred_check_branch
        %553 = sbr.rel (%p551) target = $region80
      $region79: #{_encoder_forward_impl.1} parent=11 // pred_region
        _
      $region80: #{_encoder_forward_impl.1} parent=11 // pred_fallthru
        _
    $region12: #{_encoder_forward_impl.1} parent=5 // pred_fallthru
      _
    %p554 = scmp.lt.s32.totalorder %s27, 2
    // Predicated region
    $region81: #{_encoder_forward_impl.1} parent=5 // pred_check
      %p555 = pneg %p554
    $region82: #{_encoder_forward_impl.1} parent=5 // pred_check_branch
      %557 = sbr.rel (%p555) target = $region84
    $region83: #{_encoder_forward_impl.1} parent=5 // pred_region
      // Predicated region
      $region85: #{_encoder_forward_impl.1} parent=83 // pred_check
        %p558 = pneg %p47
      $region86: #{_encoder_forward_impl.1} parent=83 // pred_check_branch
        %560 = sbr.rel (%p558) target = $region88
      $region87: #{_encoder_forward_impl.1} parent=83 // pred_region
        %p561 = scmp.lt.s32.totalorder %s27, 1
        %s562 = scalar_select %p561, %s27, 1
        %s563 = smul.addr %s562, 4
        %s564 = smul.addr %s563, 4
        %s565 = scalar_lea.vmem %s0, %s564
      $region88: #{_encoder_forward_impl.1} parent=83 // pred_fallthru
        _
    $region84: #{_encoder_forward_impl.1} parent=5 // pred_fallthru
      _
    %p566 = scmp.le.s32.totalorder 1, %s27
    %p567 = scmp.lt.s32.totalorder %s27, 3
    %p568 = pnand %p566, %p567
    %p569 = pneg %p568
    // Predicated region
    $region89: #{_encoder_forward_impl.1} parent=5 // pred_check
      _
    $region90: #{_encoder_forward_impl.1} parent=5 // pred_check_branch
      %571 = sbr.rel (%p568) target = $region92
    $region91: #{_encoder_forward_impl.1} parent=5 // pred_region
      %s572 = ssub.s32 %s27, 1
      %p573 = scmp.lt.s32.totalorder %s32, 1
      %s574 = scalar_select %p573, %s32, 1
      %s575 = smul.addr %s574, 4
      %s576 = smul.addr %s575, 4
      %s577 = scalar_lea.vmem %s0, %s576
      %p578 = pneg %p53
      %p579 = pneg %p50
      %p580 = pneg %p74
      %p581 = pneg %p71
      %p582 = pneg %p95
      %p583 = pneg %p92
      %p584 = pneg %p116
      %p585 = pneg %p113
      %p586 = pneg %p137
      %p587 = pneg %p134
      %p588 = pneg %p158
      %p589 = pneg %p155
      %p590 = pneg %p179
      %p591 = pneg %p176
      %p592 = pneg %p200
      %p593 = pneg %p197
      %p594 = pneg %p221
      %p595 = pneg %p218
      %p596 = pneg %p242
      %p597 = pneg %p239
      %p598 = pneg %p263
      %p599 = pneg %p260
      %p600 = pneg %p284
      %p601 = pneg %p281
      %p602 = pneg %p305
      %p603 = pneg %p302
      %p604 = pneg %p326
      %p605 = pneg %p323
      %p606 = pneg %p347
      %p607 = pneg %p344
      %p608 = pneg %p368
      %p609 = pneg %p365
      %p610 = pneg %p389
      %p611 = pneg %p386
      %p612 = pneg %p410
      %p613 = pneg %p407
      %p614 = pneg %p436
      %p615 = pneg %p433
      %p616 = scmp.lt.s32.totalorder %s32, 1
      %s617 = scalar_select %p616, %s32, 1
      %s618 = smul.addr %s617, 3
      %s619 = smul.addr %s618, 8
      %s620 = scalar_lea.vmem %s18, %s619
      %p621 = pneg %p462
      %p622 = pneg %p459
      %p623 = scmp.lt.s32.totalorder %s32, 1
      %s624 = scalar_select %p623, %s32, 1
      %s625 = smul.addr %s624, 2
      %s626 = smul.addr %s625, 8
      %s627 = scalar_lea.vmem %s19, %s626
      %p628 = pneg %p488
      %p629 = pneg %p485
      %p630 = scmp.lt.s32.totalorder %s32, 1
      %s631 = scalar_select %p630, %s32, 1
      %s632 = smul.addr %s631, 4
      %s633 = smul.addr %s632, 8
      %s634 = scalar_lea.vmem %s20, %s633
      %p635 = scmp.lt.s32.totalorder %s32, 1
      %s636 = scalar_select %p635, %s32, 1
      %s637 = smul.addr %s636, 4
      %s638 = smul.addr %s637, 4
      %s639 = scalar_lea.vmem %s0, %s638
      %p640 = scmp.lt.s32.totalorder %s32, 1
      %s641 = scalar_select %p640, %s32, 1
      %s642 = smul.addr %s641, 3
      %s643 = smul.addr %s642, 8
      %s644 = scalar_lea.vmem %s18, %s643
      %p645 = scmp.lt.s32.totalorder %s32, 1
      %s646 = scalar_select %p645, %s32, 1
      %s647 = smul.addr %s646, 2
      %s648 = smul.addr %s647, 8
      %s649 = scalar_lea.vmem %s19, %s648
      %p650 = scmp.lt.s32.totalorder %s32, 1
      %s651 = scalar_select %p650, %s32, 1
      %s652 = smul.addr %s651, 4
      %s653 = smul.addr %s652, 8
      %s654 = scalar_lea.vmem %s20, %s653
      %656 = vst [vmem:[#allocation2] sm:$0xff] 0
      %657 = vst [vmem:[#allocation2 + $0x8] sm:$0xff] 0
      %658 = vst [vmem:[#allocation3] sm:$0xff] 0
      %659 = vst [vmem:[#allocation3 + $0x8] sm:$0xff] 0
      %660 = vst [vmem:[#allocation4] sm:$0xff] 0
      %661 = vst [vmem:[#allocation4 + $0x8] sm:$0xff] 0
      %662 = vst [vmem:[#allocation5] sm:$0xff] 0
      %663 = vst [vmem:[#allocation5 + $0x8] sm:$0xff] 0
      %664 = vst [vmem:[#allocation6] sm:$0xff] 0
      %665 = vst [vmem:[#allocation6 + $0x8] sm:$0xff] 0
      %666 = vst [vmem:[#allocation6 + $0x10] sm:$0xff] 0
      %667 = vst [vmem:[#allocation6 + $0x18] sm:$0xff] 0
      %v668 = vld [vmem:[%s1] sm:$0xf]
      %v669 = vld [vmem:[%s639] sm:$0xff]
      %v670 = vld [vmem:[%s639 + $0x8] sm:$0xf]
      %v671 = vld [vmem:[%s1 + $0x4] sm:$0xf]
      %v672 = vld [vmem:[%s639] sm:$0xff]
      %v673 = vld [vmem:[%s639 + $0x8] sm:$0xff]
      %v676 = vunpack.c.l.b16 %v672
      %v677 = vunpack.c.h.b16 %v672
      %v678 = vunpack.c.l.b16 %v673
      %v679 = vunpack.c.h.b16 %v673
      %v680 = vpack.c.b16 %v676, %v676
      %v681 = vpack.c.b16 %v677, %v677
      %v682 = vpack.c.b16 %v678, %v678
      %v683 = vpack.c.b16 %v679, %v679
      %684 = vrot.lane.b32.xlu0 %v680, 127
      %v685 = vpop.permute.xlu0 %684
      %686 = vrot.lane.b32.xlu0 %v681, 127
      %v687 = vpop.permute.xlu0 %686
      %688 = vrot.lane.b32.xlu0 %v682, 127
      %v689 = vpop.permute.xlu0 %688
      %690 = vrot.lane.b32.xlu0 %v683, 127
      %v691 = vpop.permute.xlu0 %690
      %vm692 = vcmask 1039360
      %v693 = vsel %vm692, %v685, %v687
      %v694 = vsel %vm692, %v687, %v689
      %v695 = vsel %vm692, %v689, %v691
      %vm696 = vcmask 64512
      %v698 = vsel %vm696, %v671, 0
      %vm700 = vcmask 1043456
      %v702 = vsel %vm700, %v693, 0
      %v705 = vsel %vm700, %v694, 0
      %v708 = vsel %vm700, %v695, 0
      %710 = vmatprep.subr.bf16.mxu0 %v705
      %711 = vmatpush1.bf16.msra.mxu0 %v702
      %712 = vmatprep.subr.bf16.mxu0 0
      %713 = vmatpush1.bf16.msra.mxu0 0
      %714 = vmatprep.subr.bf16.mxu0 0
      %715 = vmatpush1.bf16.msra.mxu0 0
      %716 = vmatprep.subr.bf16.mxu0 0
      %717 = vmatpush1.bf16.msra.mxu0 0
      %718 = vmatprep.subr.bf16.mxu0 0
      %719 = vmatpush1.bf16.msra.mxu0 0
      %720 = vmatprep.subr.bf16.mxu0 0
      %721 = vmatpush1.bf16.msra.mxu0 0
      %722 = vmatprep.subr.bf16.mxu0 0
      %723 = vmatpush1.bf16.msra.mxu0 0
      %724 = vmatprep.subr.bf16.mxu0 0
      %725 = vmatpush1.bf16.msra.mxu0 0
      %726 = vmatprep.subr.bf16.mxu0 0
      %727 = vmatpush1.bf16.msra.mxu0 0
      %728 = vmatprep.subr.bf16.mxu0 0
      %729 = vmatpush1.bf16.msra.mxu0 0
      %730 = vmatprep.subr.bf16.mxu0 0
      %731 = vmatpush1.bf16.msra.mxu0 0
      %732 = vmatprep.subr.bf16.mxu0 0
      %733 = vmatpush1.bf16.msra.mxu0 0
      %734 = vmatprep.subr.bf16.mxu0 0
      %735 = vmatpush1.bf16.msra.mxu0 0
      %736 = vmatprep.subr.bf16.mxu0 0
      %737 = vmatpush1.bf16.msra.mxu0 0
      %738 = vmatprep.subr.bf16.mxu0 0
      %739 = vmatpush1.bf16.msra.mxu0 0
      %740 = vmatprep.subr.bf16.mxu0 0
      %741 = vmatpush1.bf16.msra.mxu0 0
      %742 = vmatprep.mubr.bf16.mxu0 0
      %743 = vmatmul.mubr.bf16.gmra.mrb[0].mxu0 %v698
      %v744 = vpop.f32.mrb[0].mxu0
      %v745 = vadd.f32 0.0, %v744
      %v746 = vpop.f32.mrb[0].mxu0
      %v747 = vadd.f32 0.0, %v746
      %v748 = vpop.f32.mrb[0].mxu0
      %v749 = vpop.f32.mrb[0].mxu0
      %750 = vdwg.mxu0
      %751 = vmatprep.subr.bf16.mxu0 0
      %752 = vmatpush1.bf16.msra.mxu0 %v708
      %753 = vmatprep.subr.bf16.mxu0 0
      %754 = vmatpush1.bf16.msra.mxu0 0
      %755 = vmatprep.subr.bf16.mxu0 0
      %756 = vmatpush1.bf16.msra.mxu0 0
      %757 = vmatprep.subr.bf16.mxu0 0
      %758 = vmatpush1.bf16.msra.mxu0 0
      %759 = vmatprep.subr.bf16.mxu0 0
      %760 = vmatpush1.bf16.msra.mxu0 0
      %761 = vmatprep.subr.bf16.mxu0 0
      %762 = vmatpush1.bf16.msra.mxu0 0
      %763 = vmatprep.subr.bf16.mxu0 0
      %764 = vmatpush1.bf16.msra.mxu0 0
      %765 = vmatprep.subr.bf16.mxu0 0
      %766 = vmatpush1.bf16.msra.mxu0 0
      %767 = vmatprep.subr.bf16.mxu0 0
      %768 = vmatpush1.bf16.msra.mxu0 0
      %769 = vmatprep.subr.bf16.mxu0 0
      %770 = vmatpush1.bf16.msra.mxu0 0
      %771 = vmatprep.subr.bf16.mxu0 0
      %772 = vmatpush1.bf16.msra.mxu0 0
      %773 = vmatprep.subr.bf16.mxu0 0
      %774 = vmatpush1.bf16.msra.mxu0 0
      %775 = vmatprep.subr.bf16.mxu0 0
      %776 = vmatpush1.bf16.msra.mxu0 0
      %777 = vmatprep.subr.bf16.mxu0 0
      %778 = vmatpush1.bf16.msra.mxu0 0
      %779 = vmatprep.subr.bf16.mxu0 0
      %780 = vmatpush1.bf16.msra.mxu0 0
      %781 = vmatprep.subr.bf16.mxu0 0
      %782 = vmatpush1.bf16.msra.mxu0 0
      %783 = vmatprep.mubr.bf16.mxu0 0
      %784 = vmatmul.mubr.bf16.gmra.mrb[0].mxu0 %v698
      %v785 = vpop.f32.mrb[0].mxu0
      %v786 = vadd.f32 0.0, %v785
      %v787 = vpop.f32.mrb[0].mxu0
      %v788 = vpop.f32.mrb[0].mxu0
      %v789 = vpop.f32.mrb[0].mxu0
      %790 = vdwg.mxu0
      %v793 = vunpack.c.l.b16 %v669
      %v794 = vunpack.c.h.b16 %v669
      %v795 = vunpack.c.l.b16 %v670
      %v796 = vpack.c.b16 %v793, %v793
      %v797 = vpack.c.b16 %v794, %v794
      %v798 = vpack.c.b16 %v795, %v795
      %v800 = vsel %vm696, %v668, 0
      %v803 = vsel %vm700, %v796, 0
      %v806 = vsel %vm700, %v797, 0
      %v809 = vsel %vm700, %v798, 0
      %811 = vmatprep.subr.bf16.mxu0 %v806
      %812 = vmatpush1.bf16.msra.mxu0 %v803
      %813 = vmatprep.subr.bf16.mxu0 0
      %814 = vmatpush1.bf16.msra.mxu0 0
      %815 = vmatprep.subr.bf16.mxu0 0
      %816 = vmatpush1.bf16.msra.mxu0 0
      %817 = vmatprep.subr.bf16.mxu0 0
      %818 = vmatpush1.bf16.msra.mxu0 0
      %819 = vmatprep.subr.bf16.mxu0 0
      %820 = vmatpush1.bf16.msra.mxu0 0
      %821 = vmatprep.subr.bf16.mxu0 0
      %822 = vmatpush1.bf16.msra.mxu0 0
      %823 = vmatprep.subr.bf16.mxu0 0
      %824 = vmatpush1.bf16.msra.mxu0 0
      %825 = vmatprep.subr.bf16.mxu0 0
      %826 = vmatpush1.bf16.msra.mxu0 0
      %827 = vmatprep.subr.bf16.mxu0 0
      %828 = vmatpush1.bf16.msra.mxu0 0
      %829 = vmatprep.subr.bf16.mxu0 0
      %830 = vmatpush1.bf16.msra.mxu0 0
      %831 = vmatprep.subr.bf16.mxu0 0
      %832 = vmatpush1.bf16.msra.mxu0 0
      %833 = vmatprep.subr.bf16.mxu0 0
      %834 = vmatpush1.bf16.msra.mxu0 0
      %835 = vmatprep.subr.bf16.mxu0 0
      %836 = vmatpush1.bf16.msra.mxu0 0
      %837 = vmatprep.subr.bf16.mxu0 0
      %838 = vmatpush1.bf16.msra.mxu0 0
      %839 = vmatprep.subr.bf16.mxu0 0
      %840 = vmatpush1.bf16.msra.mxu0 0
      %841 = vmatprep.subr.bf16.mxu0 0
      %842 = vmatpush1.bf16.msra.mxu0 0
      %843 = vmatprep.mubr.bf16.mxu0 0
      %844 = vmatmul.mubr.bf16.gmra.mrb[0].mxu0 %v800
      %v845 = vpop.f32.mrb[0].mxu0
      %v846 = vadd.f32 %v745, %v845
      %v847 = vpop.f32.mrb[0].mxu0
      %v848 = vadd.f32 %v747, %v847
      %v849 = vpop.f32.mrb[0].mxu0
      %v850 = vpop.f32.mrb[0].mxu0
      %851 = vdwg.mxu0
      %852 = vmatprep.subr.bf16.mxu0 0
      %853 = vmatpush1.bf16.msra.mxu0 %v809
      %854 = vmatprep.subr.bf16.mxu0 0
      %855 = vmatpush1.bf16.msra.mxu0 0
      %856 = vmatprep.subr.bf16.mxu0 0
      %857 = vmatpush1.bf16.msra.mxu0 0
      %858 = vmatprep.subr.bf16.mxu0 0
      %859 = vmatpush1.bf16.msra.mxu0 0
      %860 = vmatprep.subr.bf16.mxu0 0
      %861 = vmatpush1.bf16.msra.mxu0 0
      %862 = vmatprep.subr.bf16.mxu0 0
      %863 = vmatpush1.bf16.msra.mxu0 0
      %864 = vmatprep.subr.bf16.mxu0 0
      %865 = vmatpush1.bf16.msra.mxu0 0
      %866 = vmatprep.subr.bf16.mxu0 0
      %867 = vmatpush1.bf16.msra.mxu0 0
      %868 = vmatprep.subr.bf16.mxu0 0
      %869 = vmatpush1.bf16.msra.mxu0 0
      %870 = vmatprep.subr.bf16.mxu0 0
      %871 = vmatpush1.bf16.msra.mxu0 0
      %872 = vmatprep.subr.bf16.mxu0 0
      %873 = vmatpush1.bf16.msra.mxu0 0
      %874 = vmatprep.subr.bf16.mxu0 0
      %875 = vmatpush1.bf16.msra.mxu0 0
      %876 = vmatprep.subr.bf16.mxu0 0
      %877 = vmatpush1.bf16.msra.mxu0 0
      %878 = vmatprep.subr.bf16.mxu0 0
      %879 = vmatpush1.bf16.msra.mxu0 0
      %880 = vmatprep.subr.bf16.mxu0 0
      %881 = vmatpush1.bf16.msra.mxu0 0
      %882 = vmatprep.subr.bf16.mxu0 0
      %883 = vmatpush1.bf16.msra.mxu0 0
      %884 = vmatprep.mubr.bf16.mxu0 0
      %885 = vmatmul.mubr.bf16.gmra.mrb[0].mxu0 %v800
      %v886 = vpop.f32.mrb[0].mxu0
      %v887 = vadd.f32 %v786, %v886
      %v888 = vpop.f32.mrb[0].mxu0
      %v889 = vpop.f32.mrb[0].mxu0
      %v890 = vpop.f32.mrb[0].mxu0
      %891 = vdwg.mxu0
      %v892 = vld [vmem:[%s1 + $0x8] sm:$0xf]
      %893 = vrot.lane.b32.xlu0 %v680, 126
      %v894 = vpop.permute.xlu0 %893
      %895 = vrot.lane.b32.xlu0 %v681, 126
      %v896 = vpop.permute.xlu0 %895
      %897 = vrot.lane.b32.xlu0 %v682, 126
      %v898 = vpop.permute.xlu0 %897
      %899 = vrot.lane.b32.xlu0 %v683, 126
      %v900 = vpop.permute.xlu0 %899
      %vm901 = vcmask 1031168
      %v902 = vsel %vm901, %v894, %v896
      %v903 = vsel %vm901, %v896, %v898
      %v904 = vsel %vm901, %v898, %v900
      %v906 = vsel %vm696, %v892, 0
      %v909 = vsel %vm700, %v902, 0
      %v912 = vsel %vm700, %v903, 0
      %v915 = vsel %vm700, %v904, 0
      %917 = vmatprep.subr.bf16.mxu0 %v912
      %918 = vmatpush1.bf16.msra.mxu0 %v909
      %919 = vmatprep.subr.bf16.mxu0 0
      %920 = vmatpush1.bf16.msra.mxu0 0
      %921 = vmatprep.subr.bf16.mxu0 0
      %922 = vmatpush1.bf16.msra.mxu0 0
      %923 = vmatprep.subr.bf16.mxu0 0
      %924 = vmatpush1.bf16.msra.mxu0 0
      %925 = vmatprep.subr.bf16.mxu0 0
      %926 = vmatpush1.bf16.msra.mxu0 0
      %927 = vmatprep.subr.bf16.mxu0 0
      %928 = vmatpush1.bf16.msra.mxu0 0
      %929 = vmatprep.subr.bf16.mxu0 0
      %930 = vmatpush1.bf16.msra.mxu0 0
      %931 = vmatprep.subr.bf16.mxu0 0
      %932 = vmatpush1.bf16.msra.mxu0 0
      %933 = vmatprep.subr.bf16.mxu0 0
      %934 = vmatpush1.bf16.msra.mxu0 0
      %935 = vmatprep.subr.bf16.mxu0 0
      %936 = vmatpush1.bf16.msra.mxu0 0
      %937 = vmatprep.subr.bf16.mxu0 0
      %938 = vmatpush1.bf16.msra.mxu0 0
      %939 = vmatprep.subr.bf16.mxu0 0
      %940 = vmatpush1.bf16.msra.mxu0 0
      %941 = vmatprep.subr.bf16.mxu0 0
      %942 = vmatpush1.bf16.msra.mxu0 0
      %943 = vmatprep.subr.bf16.mxu0 0
      %944 = vmatpush1.bf16.msra.mxu0 0
      %945 = vmatprep.subr.bf16.mxu0 0
      %946 = vmatpush1.bf16.msra.mxu0 0
      %947 = vmatprep.subr.bf16.mxu0 0
      %948 = vmatpush1.bf16.msra.mxu0 0
      %949 = vmatprep.mubr.bf16.mxu0 0
      %950 = vmatmul.mubr.bf16.gmra.mrb[0].mxu0 %v906
      %v951 = vpop.f32.mrb[0].mxu0
      %v952 = vadd.f32 0.0, %v951
      %v953 = vpop.f32.mrb[0].mxu0
      %v954 = vadd.f32 0.0, %v953
      %v955 = vpop.f32.mrb[0].mxu0
      %v956 = vpop.f32.mrb[0].mxu0
      %957 = vdwg.mxu0
      %958 = vmatprep.subr.bf16.mxu0 0
      %959 = vmatpush1.bf16.msra.mxu0 %v915
      %960 = vmatprep.subr.bf16.mxu0 0
      %961 = vmatpush1.bf16.msra.mxu0 0
      %962 = vmatprep.subr.bf16.mxu0 0
      %963 = vmatpush1.bf16.msra.mxu0 0
      %964 = vmatprep.subr.bf16.mxu0 0
      %965 = vmatpush1.bf16.msra.mxu0 0
      %966 = vmatprep.subr.bf16.mxu0 0
      %967 = vmatpush1.bf16.msra.mxu0 0
      %968 = vmatprep.subr.bf16.mxu0 0
      %969 = vmatpush1.bf16.msra.mxu0 0
      %970 = vmatprep.subr.bf16.mxu0 0
      %971 = vmatpush1.bf16.msra.mxu0 0
      %972 = vmatprep.subr.bf16.mxu0 0
      %973 = vmatpush1.bf16.msra.mxu0 0
      %974 = vmatprep.subr.bf16.mxu0 0
      %975 = vmatpush1.bf16.msra.mxu0 0
      %976 = vmatprep.subr.bf16.mxu0 0
      %977 = vmatpush1.bf16.msra.mxu0 0
      %978 = vmatprep.subr.bf16.mxu0 0
      %979 = vmatpush1.bf16.msra.mxu0 0
      %980 = vmatprep.subr.bf16.mxu0 0
      %981 = vmatpush1.bf16.msra.mxu0 0
      %982 = vmatprep.subr.bf16.mxu0 0
      %983 = vmatpush1.bf16.msra.mxu0 0
      %984 = vmatprep.subr.bf16.mxu0 0
      %985 = vmatpush1.bf16.msra.mxu0 0
      %986 = vmatprep.subr.bf16.mxu0 0
      %987 = vmatpush1.bf16.msra.mxu0 0
      %988 = vmatprep.subr.bf16.mxu0 0
      %989 = vmatpush1.bf16.msra.mxu0 0
      %990 = vmatprep.mubr.bf16.mxu0 0
      %991 = vmatmul.mubr.bf16.gmra.mrb[0].mxu0 %v906
      %v992 = vpop.f32.mrb[0].mxu0
      %v993 = vadd.f32 0.0, %v992
      %v994 = vpop.f32.mrb[0].mxu0
      %v995 = vpop.f32.mrb[0].mxu0
      %v996 = vpop.f32.mrb[0].mxu0
      %997 = vdwg.mxu0
      %v998 = vadd.f32 %v846, %v952
      %v999 = vadd.f32 %v848, %v954
      %v1000 = vadd.f32 %v887, %v993
      %v1001 = vld [vmem:[%s1 + $0xc] sm:$0xf]
      %1002 = vrot.lane.b32.xlu0 %v680, 110
      %v1003 = vpop.permute.xlu0 %1002
      %1004 = vrot.lane.b32.xlu0 %v681, 110
      %v1005 = vpop.permute.xlu0 %1004
      %1006 = vrot.lane.b32.xlu0 %v682, 110
      %v1007 = vpop.permute.xlu0 %1006
      %1008 = vrot.lane.b32.xlu0 %v683, 110
      %v1009 = vpop.permute.xlu0 %1008
      %vm1010 = vcmask 900096
      %v1011 = vsel %vm1010, %v1003, %v1005
      %v1012 = vsel %vm1010, %v1005, %v1007
      %v1013 = vsel %vm1010, %v1007, %v1009
      %v1015 = vsel %vm696, %v1001, 0
      %v1018 = vsel %vm700, %v1011, 0
      %v1021 = vsel %vm700, %v1012, 0
      %v1024 = vsel %vm700, %v1013, 0
      %1026 = vmatprep.subr.bf16.mxu0 %v1021
      %1027 = vmatpush1.bf16.msra.mxu0 %v1018
      %1028 = vmatprep.subr.bf16.mxu0 0
      %1029 = vmatpush1.bf16.msra.mxu0 0
      %1030 = vmatprep.subr.bf16.mxu0 0
      %1031 = vmatpush1.bf16.msra.mxu0 0
      %1032 = vmatprep.subr.bf16.mxu0 0
      %1033 = vmatpush1.bf16.msra.mxu0 0
      %1034 = vmatprep.subr.bf16.mxu0 0
      %1035 = vmatpush1.bf16.msra.mxu0 0
      %1036 = vmatprep.subr.bf16.mxu0 0
      %1037 = vmatpush1.bf16.msra.mxu0 0
      %1038 = vmatprep.subr.bf16.mxu0 0
      %1039 = vmatpush1.bf16.msra.mxu0 0
      %1040 = vmatprep.subr.bf16.mxu0 0
      %1041 = vmatpush1.bf16.msra.mxu0 0
      %1042 = vmatprep.subr.bf16.mxu0 0
      %1043 = vmatpush1.bf16.msra.mxu0 0
      %1044 = vmatprep.subr.bf16.mxu0 0
      %1045 = vmatpush1.bf16.msra.mxu0 0
      %1046 = vmatprep.subr.bf16.mxu0 0
      %1047 = vmatpush1.bf16.msra.mxu0 0
      %1048 = vmatprep.subr.bf16.mxu0 0
      %1049 = vmatpush1.bf16.msra.mxu0 0
      %1050 = vmatprep.subr.bf16.mxu0 0
      %1051 = vmatpush1.bf16.msra.mxu0 0
      %1052 = vmatprep.subr.bf16.mxu0 0
      %1053 = vmatpush1.bf16.msra.mxu0 0
      %1054 = vmatprep.subr.bf16.mxu0 0
      %1055 = vmatpush1.bf16.msra.mxu0 0
      %1056 = vmatprep.subr.bf16.mxu0 0
      %1057 = vmatpush1.bf16.msra.mxu0 0
      %1058 = vmatprep.mubr.bf16.mxu0 0
      %1059 = vmatmul.mubr.bf16.gmra.mrb[0].mxu0 %v1015
      %v1060 = vpop.f32.mrb[0].mxu0
      %v1061 = vadd.f32 0.0, %v1060
      %v1062 = vpop.f32.mrb[0].mxu0
      %v1063 = vadd.f32 0.0, %v1062
      %v1064 = vpop.f32.mrb[0].mxu0
      %v1065 = vpop.f32.mrb[0].mxu0
      %1066 = vdwg.mxu0
      %1067 = vmatprep.subr.bf16.mxu0 0
      %1068 = vmatpush1.bf16.msra.mxu0 %v1024
      %1069 = vmatprep.subr.bf16.mxu0 0
      %1070 = vmatpush1.bf16.msra.mxu0 0
      %1071 = vmatprep.subr.bf16.mxu0 0
      %1072 = vmatpush1.bf16.msra.mxu0 0
      %1073 = vmatprep.subr.bf16.mxu0 0
      %1074 = vmatpush1.bf16.msra.mxu0 0
      %1075 = vmatprep.subr.bf16.mxu0 0
      %1076 = vmatpush1.bf16.msra.mxu0 0
      %1077 = vmatprep.subr.bf16.mxu0 0
      %1078 = vmatpush1.bf16.msra.mxu0 0
      %1079 = vmatprep.subr.bf16.mxu0 0
      %1080 = vmatpush1.bf16.msra.mxu0 0
      %1081 = vmatprep.subr.bf16.mxu0 0
      %1082 = vmatpush1.bf16.msra.mxu0 0
      %1083 = vmatprep.subr.bf16.mxu0 0
      %1084 = vmatpush1.bf16.msra.mxu0 0
      %1085 = vmatprep.subr.bf16.mxu0 0
      %1086 = vmatpush1.bf16.msra.mxu0 0
      %1087 = vmatprep.subr.bf16.mxu0 0
      %1088 = vmatpush1.bf16.msra.mxu0 0
      %1089 = vmatprep.subr.bf16.mxu0 0
      %1090 = vmatpush1.bf16.msra.mxu0 0
      %1091 = vmatprep.subr.bf16.mxu0 0
      %1092 = vmatpush1.bf16.msra.mxu0 0
      %1093 = vmatprep.subr.bf16.mxu0 0
      %1094 = vmatpush1.bf16.msra.mxu0 0
      %1095 = vmatprep.subr.bf16.mxu0 0
      %1096 = vmatpush1.bf16.msra.mxu0 0
      %1097 = vmatprep.subr.bf16.mxu0 0
      %1098 = vmatpush1.bf16.msra.mxu0 0
      %1099 = vmatprep.mubr.bf16.mxu0 0
      %1100 = vmatmul.mubr.bf16.gmra.mrb[0].mxu0 %v1015
      %v1101 = vpop.f32.mrb[0].mxu0
      %v1102 = vadd.f32 0.0, %v1101
      %v1103 = vpop.f32.mrb[0].mxu0
      %v1104 = vpop.f32.mrb[0].mxu0
      %v1105 = vpop.f32.mrb[0].mxu0
      %1106 = vdwg.mxu0
      %v1107 = vadd.f32 %v998, %v1061
      %v1108 = vadd.f32 %v999, %v1063
      %v1109 = vadd.f32 %v1000, %v1102
      %v1110 = vld [vmem:[%s1 + $0x10] sm:$0xf]
      %1111 = vrot.lane.b32.xlu0 %v680, 109
      %v1112 = vpop.permute.xlu0 %1111
      %1113 = vrot.lane.b32.xlu0 %v681, 109
      %v1114 = vpop.permute.xlu0 %1113
      %1115 = vrot.lane.b32.xlu0 %v682, 109
      %v1116 = vpop.permute.xlu0 %1115
      %1117 = vrot.lane.b32.xlu0 %v683, 109
      %v1118 = vpop.permute.xlu0 %1117
      %vm1119 = vcmask 891904
      %v1120 = vsel %vm1119, %v1112, %v1114
      %v1121 = vsel %vm1119, %v1114, %v1116
      %v1122 = vsel %vm1119, %v1116, %v1118
      %v1124 = vsel %vm696, %v1110, 0
      %v1127 = vsel %vm700, %v1120, 0
      %v1130 = vsel %vm700, %v1121, 0
      %v1133 = vsel %vm700, %v1122, 0
      %1135 = vmatprep.subr.bf16.mxu0 %v1130
      %1136 = vmatpush1.bf16.msra.mxu0 %v1127
      %1137 = vmatprep.subr.bf16.mxu0 0
      %1138 = vmatpush1.bf16.msra.mxu0 0
      %1139 = vmatprep.subr.bf16.mxu0 0
      %1140 = vmatpush1.bf16.msra.mxu0 0
      %1141 = vmatprep.subr.bf16.mxu0 0
      %1142 = vmatpush1.bf16.msra.mxu0 0
      %1143 = vmatprep.subr.bf16.mxu0 0
      %1144 = vmatpush1.bf16.msra.mxu0 0
      %1145 = vmatprep.subr.bf16.mxu0 0
      %1146 = vmatpush1.bf16.msra.mxu0 0
      %1147 = vmatprep.subr.bf16.mxu0 0
      %1148 = vmatpush1.bf16.msra.mxu0 0
      %1149 = vmatprep.subr.bf16.mxu0 0
      %1150 = vmatpush1.bf16.msra.mxu0 0
      %1151 = vmatprep.subr.bf16.mxu0 0
      %1152 = vmatpush1.bf16.msra.mxu0 0
      %1153 = vmatprep.subr.bf16.mxu0 0
      %1154 = vmatpush1.bf16.msra.mxu0 0
      %1155 = vmatprep.subr.bf16.mxu0 0
      %1156 = vmatpush1.bf16.msra.mxu0 0
      %1157 = vmatprep.subr.bf16.mxu0 0
      %1158 = vmatpush1.bf16.msra.mxu0 0
      %1159 = vmatprep.subr.bf16.mxu0 0
      %1160 = vmatpush1.bf16.msra.mxu0 0
      %1161 = vmatprep.subr.bf16.mxu0 0
      %1162 = vmatpush1.bf16.msra.mxu0 0
      %1163 = vmatprep.subr.bf16.mxu0 0
      %1164 = vmatpush1.bf16.msra.mxu0 0
      %1165 = vmatprep.subr.bf16.mxu0 0
      %1166 = vmatpush1.bf16.msra.mxu0 0
      %1167 = vmatprep.mubr.bf16.mxu0 0
      %1168 = vmatmul.mubr.bf16.gmra.mrb[0].mxu0 %v1124
      %v1169 = vpop.f32.mrb[0].mxu0
      %v1170 = vadd.f32 0.0, %v1169
      %v1171 = vpop.f32.mrb[0].mxu0
      %v1172 = vadd.f32 0.0, %v1171
      %v1173 = vpop.f32.mrb[0].mxu0
      %v1174 = vpop.f32.mrb[0].mxu0
      %1175 = vdwg.mxu0
      %1176 = vmatprep.subr.bf16.mxu0 0
      %1177 = vmatpush1.bf16.msra.mxu0 %v1133
      %1178 = vmatprep.subr.bf16.mxu0 0
      %1179 = vmatpush1.bf16.msra.mxu0 0
      %1180 = vmatprep.subr.bf16.mxu0 0
      %1181 = vmatpush1.bf16.msra.mxu0 0
      %1182 = vmatprep.subr.bf16.mxu0 0
      %1183 = vmatpush1.bf16.msra.mxu0 0
      %1184 = vmatprep.subr.bf16.mxu0 0
      %1185 = vmatpush1.bf16.msra.mxu0 0
      %1186 = vmatprep.subr.bf16.mxu0 0
      %1187 = vmatpush1.bf16.msra.mxu0 0
      %1188 = vmatprep.subr.bf16.mxu0 0
      %1189 = vmatpush1.bf16.msra.mxu0 0
      %1190 = vmatprep.subr.bf16.mxu0 0
      %1191 = vmatpush1.bf16.msra.mxu0 0
      %1192 = vmatprep.subr.bf16.mxu0 0
      %1193 = vmatpush1.bf16.msra.mxu0 0
      %1194 = vmatprep.subr.bf16.mxu0 0
      %1195 = vmatpush1.bf16.msra.mxu0 0
      %1196 = vmatprep.subr.bf16.mxu0 0
      %1197 = vmatpush1.bf16.msra.mxu0 0
      %1198 = vmatprep.subr.bf16.mxu0 0
      %1199 = vmatpush1.bf16.msra.mxu0 0
      %1200 = vmatprep.subr.bf16.mxu0 0
      %1201 = vmatpush1.bf16.msra.mxu0 0
      %1202 = vmatprep.subr.bf16.mxu0 0
      %1203 = vmatpush1.bf16.msra.mxu0 0
      %1204 = vmatprep.subr.bf16.mxu0 0
      %1205 = vmatpush1.bf16.msra.mxu0 0
      %1206 = vmatprep.subr.bf16.mxu0 0
      %1207 = vmatpush1.bf16.msra.mxu0 0
      %1208 = vmatprep.mubr.bf16.mxu0 0
      %1209 = vmatmul.mubr.bf16.gmra.mrb[0].mxu0 %v1124
      %v1210 = vpop.f32.mrb[0].mxu0
      %v1211 = vadd.f32 0.0, %v1210
      %v1212 = vpop.f32.mrb[0].mxu0
      %v1213 = vpop.f32.mrb[0].mxu0
      %v1214 = vpop.f32.mrb[0].mxu0
      %1215 = vdwg.mxu0
      %v1216 = vadd.f32 %v1107, %v1170
      %v1217 = vadd.f32 %v1108, %v1172
      %v1218 = vadd.f32 %v1109, %v1211
      %v1219 = vld [vmem:[%s1 + $0x14] sm:$0xf]
      %1220 = vrot.lane.b32.xlu0 %v680, 108
      %v1221 = vpop.permute.xlu0 %1220
      %1222 = vrot.lane.b32.xlu0 %v681, 108
      %v1223 = vpop.permute.xlu0 %1222
      %1224 = vrot.lane.b32.xlu0 %v682, 108
      %v1225 = vpop.permute.xlu0 %1224
      %1226 = vrot.lane.b32.xlu0 %v683, 108
      %v1227 = vpop.permute.xlu0 %1226
      %vm1228 = vcmask 883712
      %v1229 = vsel %vm1228, %v1221, %v1223
      %v1230 = vsel %vm1228, %v1223, %v1225
      %v1231 = vsel %vm1228, %v1225, %v1227
      %v1233 = vsel %vm696, %v1219, 0
      %v1236 = vsel %vm700, %v1229, 0
      %v1239 = vsel %vm700, %v1230, 0
      %v1242 = vsel %vm700, %v1231, 0
      %1244 = vmatprep.subr.bf16.mxu0 %v1239
      %1245 = vmatpush1.bf16.msra.mxu0 %v1236
      %1246 = vmatprep.subr.bf16.mxu0 0
      %1247 = vmatpush1.bf16.msra.mxu0 0
      %1248 = vmatprep.subr.bf16.mxu0 0
      %1249 = vmatpush1.bf16.msra.mxu0 0
      %1250 = vmatprep.subr.bf16.mxu0 0
      %1251 = vmatpush1.bf16.msra.mxu0 0
      %1252 = vmatprep.subr.bf16.mxu0 0
      %1253 = vmatpush1.bf16.msra.mxu0 0
      %1254 = vmatprep.subr.bf16.mxu0 0
      %1255 = vmatpush1.bf16.msra.mxu0 0
      %1256 = vmatprep.subr.bf16.mxu0 0
      %1257 = vmatpush1.bf16.msra.mxu0 0
      %1258 = vmatprep.subr.bf16.mxu0 0
      %1259 = vmatpush1.bf16.msra.mxu0 0
      %1260 = vmatprep.subr.bf16.mxu0 0
      %1261 = vmatpush1.bf16.msra.mxu0 0
      %1262 = vmatprep.subr.bf16.mxu0 0
      %1263 = vmatpush1.bf16.msra.mxu0 0
      %1264 = vmatprep.subr.bf16.mxu0 0
      %1265 = vmatpush1.bf16.msra.mxu0 0
      %1266 = vmatprep.subr.bf16.mxu0 0
      %1267 = vmatpush1.bf16.msra.mxu0 0
      %1268 = vmatprep.subr.bf16.mxu0 0
      %1269 = vmatpush1.bf16.msra.mxu0 0
      %1270 = vmatprep.subr.bf16.mxu0 0
      %1271 = vmatpush1.bf16.msra.mxu0 0
      %1272 = vmatprep.subr.bf16.mxu0 0
      %1273 = vmatpush1.bf16.msra.mxu0 0
      %1274 = vmatprep.subr.bf16.mxu0 0
      %1275 = vmatpush1.bf16.msra.mxu0 0
      %1276 = vmatprep.mubr.bf16.mxu0 0
      %1277 = vmatmul.mubr.bf16.gmra.mrb[0].mxu0 %v1233
      %v1278 = vpop.f32.mrb[0].mxu0
      %v1279 = vadd.f32 0.0, %v1278
      %v1280 = vpop.f32.mrb[0].mxu0
      %v1281 = vadd.f32 0.0, %v1280
      %v1282 = vpop.f32.mrb[0].mxu0
      %v1283 = vpop.f32.mrb[0].mxu0
      %1284 = vdwg.mxu0
      %1285 = vmatprep.subr.bf16.mxu0 0
      %1286 = vmatpush1.bf16.msra.mxu0 %v1242
      %1287 = vmatprep.subr.bf16.mxu0 0
      %1288 = vmatpush1.bf16.msra.mxu0 0
      %1289 = vmatprep.subr.bf16.mxu0 0
      %1290 = vmatpush1.bf16.msra.mxu0 0
      %1291 = vmatprep.subr.bf16.mxu0 0
      %1292 = vmatpush1.bf16.msra.mxu0 0
      %1293 = vmatprep.subr.bf16.mxu0 0
      %1294 = vmatpush1.bf16.msra.mxu0 0
      %1295 = vmatprep.subr.bf16.mxu0 0
      %1296 = vmatpush1.bf16.msra.mxu0 0
      %1297 = vmatprep.subr.bf16.mxu0 0
      %1298 = vmatpush1.bf16.msra.mxu0 0
      %1299 = vmatprep.subr.bf16.mxu0 0
      %1300 = vmatpush1.bf16.msra.mxu0 0
      %1301 = vmatprep.subr.bf16.mxu0 0
      %1302 = vmatpush1.bf16.msra.mxu0 0
      %1303 = vmatprep.subr.bf16.mxu0 0
      %1304 = vmatpush1.bf16.msra.mxu0 0
      %1305 = vmatprep.subr.bf16.mxu0 0
      %1306 = vmatpush1.bf16.msra.mxu0 0
      %1307 = vmatprep.subr.bf16.mxu0 0
      %1308 = vmatpush1.bf16.msra.mxu0 0
      %1309 = vmatprep.subr.bf16.mxu0 0
      %1310 = vmatpush1.bf16.msra.mxu0 0
      %1311 = vmatprep.subr.bf16.mxu0 0
      %1312 = vmatpush1.bf16.msra.mxu0 0
      %1313 = vmatprep.subr.bf16.mxu0 0
      %1314 = vmatpush1.bf16.msra.mxu0 0
      %1315 = vmatprep.subr.bf16.mxu0 0
      %1316 = vmatpush1.bf16.msra.mxu0 0
      %1317 = vmatprep.mubr.bf16.mxu0 0
      %1318 = vmatmul.mubr.bf16.gmra.mrb[0].mxu0 %v1233
      %v1319 = vpop.f32.mrb[0].mxu0
      %v1320 = vadd.f32 0.0, %v1319
      %v1321 = vpop.f32.mrb[0].mxu0
      %v1322 = vpop.f32.mrb[0].mxu0
      %v1323 = vpop.f32.mrb[0].mxu0
      %1324 = vdwg.mxu0
      %v1325 = vadd.f32 %v1216, %v1279
      %v1326 = vadd.f32 %v1217, %v1281
      %v1327 = vadd.f32 %v1218, %v1320
      %v1328 = vld [vmem:[%s1 + $0x18] sm:$0xf]
      %1329 = vrot.lane.b32.xlu0 %v680, 92
      %v1330 = vpop.permute.xlu0 %1329
      %1331 = vrot.lane.b32.xlu0 %v681, 92
      %v1332 = vpop.permute.xlu0 %1331
      %1333 = vrot.lane.b32.xlu0 %v682, 92
      %v1334 = vpop.permute.xlu0 %1333
      %1335 = vrot.lane.b32.xlu0 %v683, 92
      %v1336 = vpop.permute.xlu0 %1335
      %vm1337 = vcmask 752640
      %v1338 = vsel %vm1337, %v1330, %v1332
      %v1339 = vsel %vm1337, %v1332, %v1334
      %v1340 = vsel %vm1337, %v1334, %v1336
      %v1342 = vsel %vm696, %v1328, 0
      %v1345 = vsel %vm700, %v1338, 0
      %v1348 = vsel %vm700, %v1339, 0
      %v1351 = vsel %vm700, %v1340, 0
      %1353 = vmatprep.subr.bf16.mxu0 %v1348
      %1354 = vmatpush1.bf16.msra.mxu0 %v1345
      %1355 = vmatprep.subr.bf16.mxu0 0
      %1356 = vmatpush1.bf16.msra.mxu0 0
      %1357 = vmatprep.subr.bf16.mxu0 0
      %1358 = vmatpush1.bf16.msra.mxu0 0
      %1359 = vmatprep.subr.bf16.mxu0 0
      %1360 = vmatpush1.bf16.msra.mxu0 0
      %1361 = vmatprep.subr.bf16.mxu0 0
      %1362 = vmatpush1.bf16.msra.mxu0 0
      %1363 = vmatprep.subr.bf16.mxu0 0
      %1364 = vmatpush1.bf16.msra.mxu0 0
      %1365 = vmatprep.subr.bf16.mxu0 0
      %1366 = vmatpush1.bf16.msra.mxu0 0
      %1367 = vmatprep.subr.bf16.mxu0 0
      %1368 = vmatpush1.bf16.msra.mxu0 0
      %1369 = vmatprep.subr.bf16.mxu0 0
      %1370 = vmatpush1.bf16.msra.mxu0 0
      %1371 = vmatprep.subr.bf16.mxu0 0
      %1372 = vmatpush1.bf16.msra.mxu0 0
      %1373 = vmatprep.subr.bf16.mxu0 0
      %1374 = vmatpush1.bf16.msra.mxu0 0
      %1375 = vmatprep.subr.bf16.mxu0 0
      %1376 = vmatpush1.bf16.msra.mxu0 0
      %1377 = vmatprep.subr.bf16.mxu0 0
      %1378 = vmatpush1.bf16.msra.mxu0 0
      %1379 = vmatprep.subr.bf16.mxu0 0
      %1380 = vmatpush1.bf16.msra.mxu0 0
      %1381 = vmatprep.subr.bf16.mxu0 0
      %1382 = vmatpush1.bf16.msra.mxu0 0
      %1383 = vmatprep.subr.bf16.mxu0 0
      %1384 = vmatpush1.bf16.msra.mxu0 0
      %1385 = vmatprep.mubr.bf16.mxu0 0
      %1386 = vmatmul.mubr.bf16.gmra.mrb[0].mxu0 %v1342
      %v1387 = vpop.f32.mrb[0].mxu0
      %v1388 = vadd.f32 0.0, %v1387
      %v1389 = vpop.f32.mrb[0].mxu0
      %v1390 = vadd.f32 0.0, %v1389
      %v1391 = vpop.f32.mrb[0].mxu0
      %v1392 = vpop.f32.mrb[0].mxu0
      %1393 = vdwg.mxu0
      %1394 = vmatprep.subr.bf16.mxu0 0
      %1395 = vmatpush1.bf16.msra.mxu0 %v1351
      %1396 = vmatprep.subr.bf16.mxu0 0
      %1397 = vmatpush1.bf16.msra.mxu0 0
      %1398 = vmatprep.subr.bf16.mxu0 0
      %1399 = vmatpush1.bf16.msra.mxu0 0
      %1400 = vmatprep.subr.bf16.mxu0 0
      %1401 = vmatpush1.bf16.msra.mxu0 0
      %1402 = vmatprep.subr.bf16.mxu0 0
      %1403 = vmatpush1.bf16.msra.mxu0 0
      %1404 = vmatprep.subr.bf16.mxu0 0
      %1405 = vmatpush1.bf16.msra.mxu0 0
      %1406 = vmatprep.subr.bf16.mxu0 0
      %1407 = vmatpush1.bf16.msra.mxu0 0
      %1408 = vmatprep.subr.bf16.mxu0 0
      %1409 = vmatpush1.bf16.msra.mxu0 0
      %1410 = vmatprep.subr.bf16.mxu0 0
      %1411 = vmatpush1.bf16.msra.mxu0 0
      %1412 = vmatprep.subr.bf16.mxu0 0
      %1413 = vmatpush1.bf16.msra.mxu0 0
      %1414 = vmatprep.subr.bf16.mxu0 0
      %1415 = vmatpush1.bf16.msra.mxu0 0
      %1416 = vmatprep.subr.bf16.mxu0 0
      %1417 = vmatpush1.bf16.msra.mxu0 0
      %1418 = vmatprep.subr.bf16.mxu0 0
      %1419 = vmatpush1.bf16.msra.mxu0 0
      %1420 = vmatprep.subr.bf16.mxu0 0
      %1421 = vmatpush1.bf16.msra.mxu0 0
      %1422 = vmatprep.subr.bf16.mxu0 0
      %1423 = vmatpush1.bf16.msra.mxu0 0
      %1424 = vmatprep.subr.bf16.mxu0 0
      %1425 = vmatpush1.bf16.msra.mxu0 0
      %1426 = vmatprep.mubr.bf16.mxu0 0
      %1427 = vmatmul.mubr.bf16.gmra.mrb[0].mxu0 %v1342
      %v1428 = vpop.f32.mrb[0].mxu0
      %v1429 = vadd.f32 0.0, %v1428
      %v1430 = vpop.f32.mrb[0].mxu0
      %v1431 = vpop.f32.mrb[0].mxu0
      %v1432 = vpop.f32.mrb[0].mxu0
      %1433 = vdwg.mxu0
      %v1434 = vadd.f32 %v1325, %v1388
      %v1435 = vadd.f32 %v1326, %v1390
      %v1436 = vadd.f32 %v1327, %v1429
      %v1437 = vld [vmem:[%s1 + $0x1c] sm:$0xf]
      %1438 = vrot.lane.b32.xlu0 %v680, 91
      %v1439 = vpop.permute.xlu0 %1438
      %1440 = vrot.lane.b32.xlu0 %v681, 91
      %v1441 = vpop.permute.xlu0 %1440
      %1442 = vrot.lane.b32.xlu0 %v682, 91
      %v1443 = vpop.permute.xlu0 %1442
      %1444 = vrot.lane.b32.xlu0 %v683, 91
      %v1445 = vpop.permute.xlu0 %1444
      %vm1446 = vcmask 744448
      %v1447 = vsel %vm1446, %v1439, %v1441
      %v1448 = vsel %vm1446, %v1441, %v1443
      %v1449 = vsel %vm1446, %v1443, %v1445
      %v1451 = vsel %vm696, %v1437, 0
      %v1454 = vsel %vm700, %v1447, 0
      %v1457 = vsel %vm700, %v1448, 0
      %v1460 = vsel %vm700, %v1449, 0
      %1462 = vmatprep.subr.bf16.mxu0 %v1457
      %1463 = vmatpush1.bf16.msra.mxu0 %v1454
      %1464 = vmatprep.subr.bf16.mxu0 0
      %1465 = vmatpush1.bf16.msra.mxu0 0
      %1466 = vmatprep.subr.bf16.mxu0 0
      %1467 = vmatpush1.bf16.msra.mxu0 0
      %1468 = vmatprep.subr.bf16.mxu0 0
      %1469 = vmatpush1.bf16.msra.mxu0 0
      %1470 = vmatprep.subr.bf16.mxu0 0
      %1471 = vmatpush1.bf16.msra.mxu0 0
      %1472 = vmatprep.subr.bf16.mxu0 0
      %1473 = vmatpush1.bf16.msra.mxu0 0
      %1474 = vmatprep.subr.bf16.mxu0 0
      %1475 = vmatpush1.bf16.msra.mxu0 0
      %1476 = vmatprep.subr.bf16.mxu0 0
      %1477 = vmatpush1.bf16.msra.mxu0 0
      %1478 = vmatprep.subr.bf16.mxu0 0
      %1479 = vmatpush1.bf16.msra.mxu0 0
      %1480 = vmatprep.subr.bf16.mxu0 0
      %1481 = vmatpush1.bf16.msra.mxu0 0
      %1482 = vmatprep.subr.bf16.mxu0 0
      %1483 = vmatpush1.bf16.msra.mxu0 0
      %1484 = vmatprep.subr.bf16.mxu0 0
      %1485 = vmatpush1.bf16.msra.mxu0 0
      %1486 = vmatprep.subr.bf16.mxu0 0
      %1487 = vmatpush1.bf16.msra.mxu0 0
      %1488 = vmatprep.subr.bf16.mxu0 0
      %1489 = vmatpush1.bf16.msra.mxu0 0
      %1490 = vmatprep.subr.bf16.mxu0 0
      %1491 = vmatpush1.bf16.msra.mxu0 0
      %1492 = vmatprep.subr.bf16.mxu0 0
      %1493 = vmatpush1.bf16.msra.mxu0 0
      %1494 = vmatprep.mubr.bf16.mxu0 0
      %1495 = vmatmul.mubr.bf16.gmra.mrb[0].mxu0 %v1451
      %v1496 = vpop.f32.mrb[0].mxu0
      %v1497 = vadd.f32 0.0, %v1496
      %v1498 = vpop.f32.mrb[0].mxu0
      %v1499 = vadd.f32 0.0, %v1498
      %v1500 = vpop.f32.mrb[0].mxu0
      %v1501 = vpop.f32.mrb[0].mxu0
      %1502 = vdwg.mxu0
      %1503 = vmatprep.subr.bf16.mxu0 0
      %1504 = vmatpush1.bf16.msra.mxu0 %v1460
      %1505 = vmatprep.subr.bf16.mxu0 0
      %1506 = vmatpush1.bf16.msra.mxu0 0
      %1507 = vmatprep.subr.bf16.mxu0 0
      %1508 = vmatpush1.bf16.msra.mxu0 0
      %1509 = vmatprep.subr.bf16.mxu0 0
      %1510 = vmatpush1.bf16.msra.mxu0 0
      %1511 = vmatprep.subr.bf16.mxu0 0
      %1512 = vmatpush1.bf16.msra.mxu0 0
      %1513 = vmatprep.subr.bf16.mxu0 0
      %1514 = vmatpush1.bf16.msra.mxu0 0
      %1515 = vmatprep.subr.bf16.mxu0 0
      %1516 = vmatpush1.bf16.msra.mxu0 0
      %1517 = vmatprep.subr.bf16.mxu0 0
      %1518 = vmatpush1.bf16.msra.mxu0 0
      %1519 = vmatprep.subr.bf16.mxu0 0
      %1520 = vmatpush1.bf16.msra.mxu0 0
      %1521 = vmatprep.subr.bf16.mxu0 0
      %1522 = vmatpush1.bf16.msra.mxu0 0
      %1523 = vmatprep.subr.bf16.mxu0 0
      %1524 = vmatpush1.bf16.msra.mxu0 0
      %1525 = vmatprep.subr.bf16.mxu0 0
      %1526 = vmatpush1.bf16.msra.mxu0 0
      %1527 = vmatprep.subr.bf16.mxu0 0
      %1528 = vmatpush1.bf16.msra.mxu0 0
      %1529 = vmatprep.subr.bf16.mxu0 0
      %1530 = vmatpush1.bf16.msra.mxu0 0
      %1531 = vmatprep.subr.bf16.mxu0 0
      %1532 = vmatpush1.bf16.msra.mxu0 0
      %1533 = vmatprep.subr.bf16.mxu0 0
      %1534 = vmatpush1.bf16.msra.mxu0 0
      %1535 = vmatprep.mubr.bf16.mxu0 0
      %1536 = vmatmul.mubr.bf16.gmra.mrb[0].mxu0 %v1451
      %v1537 = vpop.f32.mrb[0].mxu0
      %v1538 = vadd.f32 0.0, %v1537
      %v1539 = vpop.f32.mrb[0].mxu0
      %v1540 = vpop.f32.mrb[0].mxu0
      %v1541 = vpop.f32.mrb[0].mxu0
      %1542 = vdwg.mxu0
      %v1543 = vadd.f32 %v1434, %v1497
      %v1544 = vadd.f32 %v1435, %v1499
      %v1545 = vadd.f32 %v1436, %v1538
      %v1546 = vld [vmem:[%s1 + $0x20] sm:$0xf]
      %1547 = vrot.lane.b32.xlu0 %v680, 90
      %v1548 = vpop.permute.xlu0 %1547
      %1549 = vrot.lane.b32.xlu0 %v681, 90
      %v1550 = vpop.permute.xlu0 %1549
      %1551 = vrot.lane.b32.xlu0 %v682, 90
      %v1552 = vpop.permute.xlu0 %1551
      %1553 = vrot.lane.b32.xlu0 %v683, 90
      %v1554 = vpop.permute.xlu0 %1553
      %vm1555 = vcmask 736256
      %v1556 = vsel %vm1555, %v1548, %v1550
      %v1557 = vsel %vm1555, %v1550, %v1552
      %v1558 = vsel %vm1555, %v1552, %v1554
      %v1560 = vsel %vm696, %v1546, 0
      %v1563 = vsel %vm700, %v1556, 0
      %v1566 = vsel %vm700, %v1557, 0
      %v1569 = vsel %vm700, %v1558, 0
      %1571 = vmatprep.subr.bf16.mxu0 %v1566
      %1572 = vmatpush1.bf16.msra.mxu0 %v1563
      %1573 = vmatprep.subr.bf16.mxu0 0
      %1574 = vmatpush1.bf16.msra.mxu0 0
      %1575 = vmatprep.subr.bf16.mxu0 0
      %1576 = vmatpush1.bf16.msra.mxu0 0
      %1577 = vmatprep.subr.bf16.mxu0 0
      %1578 = vmatpush1.bf16.msra.mxu0 0
      %1579 = vmatprep.subr.bf16.mxu0 0
      %1580 = vmatpush1.bf16.msra.mxu0 0
      %1581 = vmatprep.subr.bf16.mxu0 0
      %1582 = vmatpush1.bf16.msra.mxu0 0
      %1583 = vmatprep.subr.bf16.mxu0 0
      %1584 = vmatpush1.bf16.msra.mxu0 0
      %1585 = vmatprep.subr.bf16.mxu0 0
      %1586 = vmatpush1.bf16.msra.mxu0 0
      %1587 = vmatprep.subr.bf16.mxu0 0
      %1588 = vmatpush1.bf16.msra.mxu0 0
      %1589 = vmatprep.subr.bf16.mxu0 0
      %1590 = vmatpush1.bf16.msra.mxu0 0
      %1591 = vmatprep.subr.bf16.mxu0 0
      %1592 = vmatpush1.bf16.msra.mxu0 0
      %1593 = vmatprep.subr.bf16.mxu0 0
      %1594 = vmatpush1.bf16.msra.mxu0 0
      %1595 = vmatprep.subr.bf16.mxu0 0
      %1596 = vmatpush1.bf16.msra.mxu0 0
      %1597 = vmatprep.subr.bf16.mxu0 0
      %1598 = vmatpush1.bf16.msra.mxu0 0
      %1599 = vmatprep.subr.bf16.mxu0 0
      %1600 = vmatpush1.bf16.msra.mxu0 0
      %1601 = vmatprep.subr.bf16.mxu0 0
      %1602 = vmatpush1.bf16.msra.mxu0 0
      %1603 = vmatprep.mubr.bf16.mxu0 0
      %1604 = vmatmul.mubr.bf16.gmra.mrb[0].mxu0 %v1560
      %v1605 = vpop.f32.mrb[0].mxu0
      %v1606 = vadd.f32 0.0, %v1605
      %v1607 = vpop.f32.mrb[0].mxu0
      %v1608 = vadd.f32 0.0, %v1607
      %v1609 = vpop.f32.mrb[0].mxu0
      %v1610 = vpop.f32.mrb[0].mxu0
      %1611 = vdwg.mxu0
      %1612 = vmatprep.subr.bf16.mxu0 0
      %1613 = vmatpush1.bf16.msra.mxu0 %v1569
      %1614 = vmatprep.subr.bf16.mxu0 0
      %1615 = vmatpush1.bf16.msra.mxu0 0
      %1616 = vmatprep.subr.bf16.mxu0 0
      %1617 = vmatpush1.bf16.msra.mxu0 0
      %1618 = vmatprep.subr.bf16.mxu0 0
      %1619 = vmatpush1.bf16.msra.mxu0 0
      %1620 = vmatprep.subr.bf16.mxu0 0
      %1621 = vmatpush1.bf16.msra.mxu0 0
      %1622 = vmatprep.subr.bf16.mxu0 0
      %1623 = vmatpush1.bf16.msra.mxu0 0
      %1624 = vmatprep.subr.bf16.mxu0 0
      %1625 = vmatpush1.bf16.msra.mxu0 0
      %1626 = vmatprep.subr.bf16.mxu0 0
      %1627 = vmatpush1.bf16.msra.mxu0 0
      %1628 = vmatprep.subr.bf16.mxu0 0
      %1629 = vmatpush1.bf16.msra.mxu0 0
      %1630 = vmatprep.subr.bf16.mxu0 0
      %1631 = vmatpush1.bf16.msra.mxu0 0
      %1632 = vmatprep.subr.bf16.mxu0 0
      %1633 = vmatpush1.bf16.msra.mxu0 0
      %1634 = vmatprep.subr.bf16.mxu0 0
      %1635 = vmatpush1.bf16.msra.mxu0 0
      %1636 = vmatprep.subr.bf16.mxu0 0
      %1637 = vmatpush1.bf16.msra.mxu0 0
      %1638 = vmatprep.subr.bf16.mxu0 0
      %1639 = vmatpush1.bf16.msra.mxu0 0
      %1640 = vmatprep.subr.bf16.mxu0 0
      %1641 = vmatpush1.bf16.msra.mxu0 0
      %1642 = vmatprep.subr.bf16.mxu0 0
      %1643 = vmatpush1.bf16.msra.mxu0 0
      %1644 = vmatprep.mubr.bf16.mxu0 0
      %1645 = vmatmul.mubr.bf16.gmra.mrb[0].mxu0 %v1560
      %v1646 = vpop.f32.mrb[0].mxu0
      %v1647 = vadd.f32 0.0, %v1646
      %v1648 = vpop.f32.mrb[0].mxu0
      %v1649 = vpop.f32.mrb[0].mxu0
      %v1650 = vpop.f32.mrb[0].mxu0
      %1651 = vdwg.mxu0
      %v1652 = vadd.f32 %v1543, %v1606
      %v1653 = vadd.f32 %v1544, %v1608
      %v1654 = vadd.f32 %v1545, %v1647
      %v1655 = vld [vmem:[%s15] sm:$0x7]
      %v1657 = vlaneseq
      %v1658 = vshrl.u32 %v1657, 7
      %v1659 = vsub.s32 0, %v1658
      %v1660 = vrot.slane %v1655, %v1659
      %v1661 = vlaneseq
      %v1662 = vshrl.u32 %v1661, 7
      %v1663 = vsub.s32 1, %v1662
      %v1664 = vrot.slane %v1655, %v1663
      %v1665 = vlaneseq
      %v1666 = vshrl.u32 %v1665, 7
      %v1667 = vsub.s32 2, %v1666
      %v1668 = vrot.slane %v1655, %v1667
      %v1672 = vmul.f32 %v1652, %v1660
      %v1673 = vmul.f32 %v1653, %v1664
      %v1674 = vmul.f32 %v1654, %v1668
      %v1675 = vadd.f32 %v1672, %v1673
      %v1676 = vadd.f32 %v1675, %v1674
      %1677 = vadd.xlane.f32.xlu0 %v1676
      %v1678 = vpop.xlane.xlu0 %1677
      %v1679 = vmul.f32 %v1678, 0.00390625
      %v1680 = vmul.f32 %v1672, %v1652
      %v1681 = vmul.f32 %v1673, %v1653
      %v1682 = vmul.f32 %v1674, %v1654
      %v1683 = vadd.f32 %v1680, %v1681
      %v1684 = vadd.f32 %v1683, %v1682
      %1685 = vadd.xlane.f32.xlu0 %v1684
      %v1686 = vpop.xlane.xlu0 %1685
      %v1687 = vmul.f32 %v1686, 0.00390625
      %v1688 = vmul.f32 %v1679, %v1679
      %v1689 = vsub.f32 %v1687, %v1688
      %v1690 = vmax.f32 %v1689, 0.0
      %v1691 = vld [vmem:[%s2] sm:$0xff]
      %v1692 = vadd.f32 %v1690, 1e-05
      %v1693 = vrsqrt.pop %v1692
      %v1694 = vmul.f32 %v1691, %v1693
      %v1695 = vmul.f32 %v1679, %v1694
      %1697 = vrot.lane.b32.xlu0 %v1695, 1
      %v1698 = vpop.permute.xlu0 %1697
      %v1700 = vsub.f32 %v1691, %v1698
      %1702 = vset.pattern.permute.xlu0 0
      %1703 = vperm.xlu0 %1702, %v1694
      %v1704 = vpop.permute.xlu0 %1703
      %v1706 = vmul.f32 %v1652, %v1704
      %v1707 = vmul.f32 %v1653, %v1704
      %v1708 = vmul.f32 %v1654, %v1704
      %1710 = vset.pattern.permute.xlu0 1
      %1711 = vperm.xlu0 %1710, %v1700
      %v1712 = vpop.permute.xlu0 %1711
      %v1714 = vadd.f32 %v1706, %v1712
      %v1715 = vadd.f32 %v1707, %v1712
      %v1716 = vadd.f32 %v1708, %v1712
      %vm1717 = vcmp.ge.f32.partialorder %v1714, 0.0
      %vm1718 = vcmp.ge.f32.partialorder %v1715, 0.0
      %vm1719 = vcmp.ge.f32.partialorder %v1716, 0.0
      %v1720 = vmul.f32 %v1714, 0.01
      %v1721 = vmul.f32 %v1715, 0.01
      %v1722 = vmul.f32 %v1716, 0.01
      %v1723 = vsel %vm1717, %v1714, %v1720
      %v1724 = vsel %vm1718, %v1715, %v1721
      %v1725 = vsel %vm1719, %v1716, %v1722
      %v1726 = vmul.f32 %v1723, %v1660
      %v1727 = vmul.f32 %v1724, %v1664
      %v1728 = vmul.f32 %v1725, %v1668
      %v1729 = vpack.c.bf16 %v1726, %v1726
      %v1730 = vpack.c.bf16 %v1727, %v1727
      %v1731 = vpack.c.bf16 %v1728, %v1728
      %v1735 = vunpack.c.l.b16 %v1729
      %v1736 = vunpack.c.l.b16 %v1730
      %v1737 = vunpack.c.l.b16 %v1731
      %v1738 = vpack.c.b16 %v1736, %v1735
      %v1739 = vpack.c.b16 %v1737, %v1737
      %1740 = vrot.lane.b32.xlu0 %v1738, 19
      %v1741 = vpop.permute.xlu0 %1740
      %1742 = vrot.lane.b32.xlu0 %v1739, 19
      %v1743 = vpop.permute.xlu0 %1742
      %v1744 = vrot.slane %v1741, 4
      %v1745 = vrot.slane %v1743, 4
      %vm1746 = vcmask 154624
      %v1747 = vsel %vm1746, %v1744, %v1741
      %vm1748 = vcmask 1043456
      %v1749 = vsel %vm1748, %v1744, %v1745
      %v1750 = vsel %vm1746, %v1749, %v1743
      %vm1753 = vcmask 1043608
      %vm1754 = vcmask 1047556
      %vm1755 = vmor %vm1754, %vm1753
      %1756 = vst.msk [vmem:[#allocation2] sm:$0xff] %vm1755, %v1747
      %vm1757 = vcmask 154628
      %vm1758 = vmor %vm1757, %vm700
      %1759 = vst.msk [vmem:[#allocation2 + $0x8] sm:$0xff] %vm1758, %v1750
      %v1760 = vld [vmem:[%s3] sm:$0xf]
      %v1761 = vld [vmem:[#allocation2] sm:$0xff]
      %v1762 = vld [vmem:[#allocation2 + $0x8] sm:$0xf]
      %v1763 = vld [vmem:[%s3 + $0x4] sm:$0xf]
      %v1764 = vld [vmem:[#allocation2] sm:$0xff]
      %v1765 = vld [vmem:[#allocation2 + $0x8] sm:$0xff]
      %v1768 = vunpack.c.l.b16 %v1764
      %v1769 = vunpack.c.h.b16 %v1764
      %v1770 = vunpack.c.l.b16 %v1765
      %v1771 = vunpack.c.h.b16 %v1765
      %v1772 = vpack.c.b16 %v1768, %v1768
      %v1773 = vpack.c.b16 %v1769, %v1769
      %v1774 = vpack.c.b16 %v1770, %v1770
      %v1775 = vpack.c.b16 %v1771, %v1771
      %1776 = vrot.lane.b32.xlu0 %v1772, 127
      %v1777 = vpop.permute.xlu0 %1776
      %1778 = vrot.lane.b32.xlu0 %v1773, 127
      %v1779 = vpop.permute.xlu0 %1778
      %1780 = vrot.lane.b32.xlu0 %v1774, 127
      %v1781 = vpop.permute.xlu0 %1780
      %1782 = vrot.lane.b32.xlu0 %v1775, 127
      %v1783 = vpop.permute.xlu0 %1782
      %v1784 = vsel %vm692, %v1777, %v1779
      %v1785 = vsel %vm692, %v1779, %v1781
      %v1786 = vsel %vm692, %v1781, %v1783
      %v1788 = vsel %vm696, %v1763, 0
      %v1791 = vsel %vm700, %v1784, 0
      %v1794 = vsel %vm700, %v1785, 0
      %v1797 = vsel %vm700, %v1786, 0
      %1799 = vmatprep.subr.bf16.mxu0 %v1794
      %1800 = vmatpush1.bf16.msra.mxu0 %v1791
      %1801 = vmatprep.subr.bf16.mxu0 0
      %1802 = vmatpush1.bf16.msra.mxu0 0
      %1803 = vmatprep.subr.bf16.mxu0 0
      %1804 = vmatpush1.bf16.msra.mxu0 0
      %1805 = vmatprep.subr.bf16.mxu0 0
      %1806 = vmatpush1.bf16.msra.mxu0 0
      %1807 = vmatprep.subr.bf16.mxu0 0
      %1808 = vmatpush1.bf16.msra.mxu0 0
      %1809 = vmatprep.subr.bf16.mxu0 0
      %1810 = vmatpush1.bf16.msra.mxu0 0
      %1811 = vmatprep.subr.bf16.mxu0 0
      %1812 = vmatpush1.bf16.msra.mxu0 0
      %1813 = vmatprep.subr.bf16.mxu0 0
      %1814 = vmatpush1.bf16.msra.mxu0 0
      %1815 = vmatprep.subr.bf16.mxu0 0
      %1816 = vmatpush1.bf16.msra.mxu0 0
      %1817 = vmatprep.subr.bf16.mxu0 0
      %1818 = vmatpush1.bf16.msra.mxu0 0
      %1819 = vmatprep.subr.bf16.mxu0 0
      %1820 = vmatpush1.bf16.msra.mxu0 0
      %1821 = vmatprep.subr.bf16.mxu0 0
      %1822 = vmatpush1.bf16.msra.mxu0 0
      %1823 = vmatprep.subr.bf16.mxu0 0
      %1824 = vmatpush1.bf16.msra.mxu0 0
      %1825 = vmatprep.subr.bf16.mxu0 0
      %1826 = vmatpush1.bf16.msra.mxu0 0
      %1827 = vmatprep.subr.bf16.mxu0 0
      %1828 = vmatpush1.bf16.msra.mxu0 0
      %1829 = vmatprep.subr.bf16.mxu0 0
      %1830 = vmatpush1.bf16.msra.mxu0 0
      %1831 = vmatprep.mubr.bf16.mxu0 0
      %1832 = vmatmul.mubr.bf16.gmra.mrb[0].mxu0 %v1788
      %v1833 = vpop.f32.mrb[0].mxu0
      %v1834 = vadd.f32 0.0, %v1833
      %v1835 = vpop.f32.mrb[0].mxu0
      %v1836 = vadd.f32 0.0, %v1835
      %v1837 = vpop.f32.mrb[0].mxu0
      %v1838 = vpop.f32.mrb[0].mxu0
      %1839 = vdwg.mxu0
      %1840 = vmatprep.subr.bf16.mxu0 0
      %1841 = vmatpush1.bf16.msra.mxu0 %v1797
      %1842 = vmatprep.subr.bf16.mxu0 0
      %1843 = vmatpush1.bf16.msra.mxu0 0
      %1844 = vmatprep.subr.bf16.mxu0 0
      %1845 = vmatpush1.bf16.msra.mxu0 0
      %1846 = vmatprep.subr.bf16.mxu0 0
      %1847 = vmatpush1.bf16.msra.mxu0 0
      %1848 = vmatprep.subr.bf16.mxu0 0
      %1849 = vmatpush1.bf16.msra.mxu0 0
      %1850 = vmatprep.subr.bf16.mxu0 0
      %1851 = vmatpush1.bf16.msra.mxu0 0
      %1852 = vmatprep.subr.bf16.mxu0 0
      %1853 = vmatpush1.bf16.msra.mxu0 0
      %1854 = vmatprep.subr.bf16.mxu0 0
      %1855 = vmatpush1.bf16.msra.mxu0 0
      %1856 = vmatprep.subr.bf16.mxu0 0
      %1857 = vmatpush1.bf16.msra.mxu0 0
      %1858 = vmatprep.subr.bf16.mxu0 0
      %1859 = vmatpush1.bf16.msra.mxu0 0
      %1860 = vmatprep.subr.bf16.mxu0 0
      %1861 = vmatpush1.bf16.msra.mxu0 0
      %1862 = vmatprep.subr.bf16.mxu0 0
      %1863 = vmatpush1.bf16.msra.mxu0 0
      %1864 = vmatprep.subr.bf16.mxu0 0
      %1865 = vmatpush1.bf16.msra.mxu0 0
      %1866 = vmatprep.subr.bf16.mxu0 0
      %1867 = vmatpush1.bf16.msra.mxu0 0
      %1868 = vmatprep.subr.bf16.mxu0 0
      %1869 = vmatpush1.bf16.msra.mxu0 0
      %1870 = vmatprep.subr.bf16.mxu0 0
      %1871 = vmatpush1.bf16.msra.mxu0 0
      %1872 = vmatprep.mubr.bf16.mxu0 0
      %1873 = vmatmul.mubr.bf16.gmra.mrb[0].mxu0 %v1788
      %v1874 = vpop.f32.mrb[0].mxu0
      %v1875 = vadd.f32 0.0, %v1874
      %v1876 = vpop.f32.mrb[0].mxu0
      %v1877 = vpop.f32.mrb[0].mxu0
      %v1878 = vpop.f32.mrb[0].mxu0
      %1879 = vdwg.mxu0
      %v1882 = vunpack.c.l.b16 %v1761
      %v1883 = vunpack.c.h.b16 %v1761
      %v1884 = vunpack.c.l.b16 %v1762
      %v1885 = vpack.c.b16 %v1882, %v1882
      %v1886 = vpack.c.b16 %v1883, %v1883
      %v1887 = vpack.c.b16 %v1884, %v1884
      %v1889 = vsel %vm696, %v1760, 0
      %v1892 = vsel %vm700, %v1885, 0
      %v1895 = vsel %vm700, %v1886, 0
      %v1898 = vsel %vm700, %v1887, 0
      %1900 = vmatprep.subr.bf16.mxu0 %v1895
      %1901 = vmatpush1.bf16.msra.mxu0 %v1892
      %1902 = vmatprep.subr.bf16.mxu0 0
      %1903 = vmatpush1.bf16.msra.mxu0 0
      %1904 = vmatprep.subr.bf16.mxu0 0
      %1905 = vmatpush1.bf16.msra.mxu0 0
      %1906 = vmatprep.subr.bf16.mxu0 0
      %1907 = vmatpush1.bf16.msra.mxu0 0
      %1908 = vmatprep.subr.bf16.mxu0 0
      %1909 = vmatpush1.bf16.msra.mxu0 0
      %1910 = vmatprep.subr.bf16.mxu0 0
      %1911 = vmatpush1.bf16.msra.mxu0 0
      %1912 = vmatprep.subr.bf16.mxu0 0
      %1913 = vmatpush1.bf16.msra.mxu0 0
      %1914 = vmatprep.subr.bf16.mxu0 0
      %1915 = vmatpush1.bf16.msra.mxu0 0
      %1916 = vmatprep.subr.bf16.mxu0 0
      %1917 = vmatpush1.bf16.msra.mxu0 0
      %1918 = vmatprep.subr.bf16.mxu0 0
      %1919 = vmatpush1.bf16.msra.mxu0 0
      %1920 = vmatprep.subr.bf16.mxu0 0
      %1921 = vmatpush1.bf16.msra.mxu0 0
      %1922 = vmatprep.subr.bf16.mxu0 0
      %1923 = vmatpush1.bf16.msra.mxu0 0
      %1924 = vmatprep.subr.bf16.mxu0 0
      %1925 = vmatpush1.bf16.msra.mxu0 0
      %1926 = vmatprep.subr.bf16.mxu0 0
      %1927 = vmatpush1.bf16.msra.mxu0 0
      %1928 = vmatprep.subr.bf16.mxu0 0
      %1929 = vmatpush1.bf16.msra.mxu0 0
      %1930 = vmatprep.subr.bf16.mxu0 0
      %1931 = vmatpush1.bf16.msra.mxu0 0
      %1932 = vmatprep.mubr.bf16.mxu0 0
      %1933 = vmatmul.mubr.bf16.gmra.mrb[0].mxu0 %v1889
      %v1934 = vpop.f32.mrb[0].mxu0
      %v1935 = vadd.f32 %v1834, %v1934
      %v1936 = vpop.f32.mrb[0].mxu0
      %v1937 = vadd.f32 %v1836, %v1936
      %v1938 = vpop.f32.mrb[0].mxu0
      %v1939 = vpop.f32.mrb[0].mxu0
      %1940 = vdwg.mxu0
      %1941 = vmatprep.subr.bf16.mxu0 0
      %1942 = vmatpush1.bf16.msra.mxu0 %v1898
      %1943 = vmatprep.subr.bf16.mxu0 0
      %1944 = vmatpush1.bf16.msra.mxu0 0
      %1945 = vmatprep.subr.bf16.mxu0 0
      %1946 = vmatpush1.bf16.msra.mxu0 0
      %1947 = vmatprep.subr.bf16.mxu0 0
      %1948 = vmatpush1.bf16.msra.mxu0 0
      %1949 = vmatprep.subr.bf16.mxu0 0
      %1950 = vmatpush1.bf16.msra.mxu0 0
      %1951 = vmatprep.subr.bf16.mxu0 0
      %1952 = vmatpush1.bf16.msra.mxu0 0
      %1953 = vmatprep.subr.bf16.mxu0 0
      %1954 = vmatpush1.bf16.msra.mxu0 0
      %1955 = vmatprep.subr.bf16.mxu0 0
      %1956 = vmatpush1.bf16.msra.mxu0 0
      %1957 = vmatprep.subr.bf16.mxu0 0
      %1958 = vmatpush1.bf16.msra.mxu0 0
      %1959 = vmatprep.subr.bf16.mxu0 0
      %1960 = vmatpush1.bf16.msra.mxu0 0
      %1961 = vmatprep.subr.bf16.mxu0 0
      %1962 = vmatpush1.bf16.msra.mxu0 0
      %1963 = vmatprep.subr.bf16.mxu0 0
      %1964 = vmatpush1.bf16.msra.mxu0 0
      %1965 = vmatprep.subr.bf16.mxu0 0
      %1966 = vmatpush1.bf16.msra.mxu0 0
      %1967 = vmatprep.subr.bf16.mxu0 0
      %1968 = vmatpush1.bf16.msra.mxu0 0
      %1969 = vmatprep.subr.bf16.mxu0 0
      %1970 = vmatpush1.bf16.msra.mxu0 0
      %1971 = vmatprep.subr.bf16.mxu0 0
      %1972 = vmatpush1.bf16.msra.mxu0 0
      %1973 = vmatprep.mubr.bf16.mxu0 0
      %1974 = vmatmul.mubr.bf16.gmra.mrb[0].mxu0 %v1889
      %v1975 = vpop.f32.mrb[0].mxu0
      %v1976 = vadd.f32 %v1875, %v1975
      %v1977 = vpop.f32.mrb[0].mxu0
      %v1978 = vpop.f32.mrb[0].mxu0
      %v1979 = vpop.f32.mrb[0].mxu0
      %1980 = vdwg.mxu0
      %v1981 = vld [vmem:[%s3 + $0x8] sm:$0xf]
      %1982 = vrot.lane.b32.xlu0 %v1772, 126
      %v1983 = vpop.permute.xlu0 %1982
      %1984 = vrot.lane.b32.xlu0 %v1773, 126
      %v1985 = vpop.permute.xlu0 %1984
      %1986 = vrot.lane.b32.xlu0 %v1774, 126
      %v1987 = vpop.permute.xlu0 %1986
      %1988 = vrot.lane.b32.xlu0 %v1775, 126
      %v1989 = vpop.permute.xlu0 %1988
      %v1990 = vsel %vm901, %v1983, %v1985
      %v1991 = vsel %vm901, %v1985, %v1987
      %v1992 = vsel %vm901, %v1987, %v1989
      %v1994 = vsel %vm696, %v1981, 0
      %v1997 = vsel %vm700, %v1990, 0
      %v2000 = vsel %vm700, %v1991, 0
      %v2003 = vsel %vm700, %v1992, 0
      %2005 = vmatprep.subr.bf16.mxu0 %v2000
      %2006 = vmatpush1.bf16.msra.mxu0 %v1997
      %2007 = vmatprep.subr.bf16.mxu0 0
      %2008 = vmatpush1.bf16.msra.mxu0 0
      %2009 = vmatprep.subr.bf16.mxu0 0
      %2010 = vmatpush1.bf16.msra.mxu0 0
      %2011 = vmatprep.subr.bf16.mxu0 0
      %2012 = vmatpush1.bf16.msra.mxu0 0
      %2013 = vmatprep.subr.bf16.mxu0 0
      %2014 = vmatpush1.bf16.msra.mxu0 0
      %2015 = vmatprep.subr.bf16.mxu0 0
      %2016 = vmatpush1.bf16.msra.mxu0 0
      %2017 = vmatprep.subr.bf16.mxu0 0
      %2018 = vmatpush1.bf16.msra.mxu0 0
      %2019 = vmatprep.subr.bf16.mxu0 0
      %2020 = vmatpush1.bf16.msra.mxu0 0
      %2021 = vmatprep.subr.bf16.mxu0 0
      %2022 = vmatpush1.bf16.msra.mxu0 0
      %2023 = vmatprep.subr.bf16.mxu0 0
      %2024 = vmatpush1.bf16.msra.mxu0 0
      %2025 = vmatprep.subr.bf16.mxu0 0
      %2026 = vmatpush1.bf16.msra.mxu0 0
      %2027 = vmatprep.subr.bf16.mxu0 0
      %2028 = vmatpush1.bf16.msra.mxu0 0
      %2029 = vmatprep.subr.bf16.mxu0 0
      %2030 = vmatpush1.bf16.msra.mxu0 0
      %2031 = vmatprep.subr.bf16.mxu0 0
      %2032 = vmatpush1.bf16.msra.mxu0 0
      %2033 = vmatprep.subr.bf16.mxu0 0
      %2034 = vmatpush1.bf16.msra.mxu0 0
      %2035 = vmatprep.subr.bf16.mxu0 0
      %2036 = vmatpush1.bf16.msra.mxu0 0
      %2037 = vmatprep.mubr.bf16.mxu0 0
      %2038 = vmatmul.mubr.bf16.gmra.mrb[0].mxu0 %v1994
      %v2039 = vpop.f32.mrb[0].mxu0
      %v2040 = vadd.f32 0.0, %v2039
      %v2041 = vpop.f32.mrb[0].mxu0
      %v2042 = vadd.f32 0.0, %v2041
      %v2043 = vpop.f32.mrb[0].mxu0
      %v2044 = vpop.f32.mrb[0].mxu0
      %2045 = vdwg.mxu0
      %2046 = vmatprep.subr.bf16.mxu0 0
      %2047 = vmatpush1.bf16.msra.mxu0 %v2003
      %2048 = vmatprep.subr.bf16.mxu0 0
      %2049 = vmatpush1.bf16.msra.mxu0 0
      %2050 = vmatprep.subr.bf16.mxu0 0
      %2051 = vmatpush1.bf16.msra.mxu0 0
      %2052 = vmatprep.subr.bf16.mxu0 0
      %2053 = vmatpush1.bf16.msra.mxu0 0
      %2054 = vmatprep.subr.bf16.mxu0 0
      %2055 = vmatpush1.bf16.msra.mxu0 0
      %2056 = vmatprep.subr.bf16.mxu0 0
      %2057 = vmatpush1.bf16.msra.mxu0 0
      %2058 = vmatprep.subr.bf16.mxu0 0
      %2059 = vmatpush1.bf16.msra.mxu0 0
      %2060 = vmatprep.subr.bf16.mxu0 0
      %2061 = vmatpush1.bf16.msra.mxu0 0
      %2062 = vmatprep.subr.bf16.mxu0 0
      %2063 = vmatpush1.bf16.msra.mxu0 0
      %2064 = vmatprep.subr.bf16.mxu0 0
      %2065 = vmatpush1.bf16.msra.mxu0 0
      %2066 = vmatprep.subr.bf16.mxu0 0
      %2067 = vmatpush1.bf16.msra.mxu0 0
      %2068 = vmatprep.subr.bf16.mxu0 0
      %2069 = vmatpush1.bf16.msra.mxu0 0
      %2070 = vmatprep.subr.bf16.mxu0 0
      %2071 = vmatpush1.bf16.msra.mxu0 0
      %2072 = vmatprep.subr.bf16.mxu0 0
      %2073 = vmatpush1.bf16.msra.mxu0 0
      %2074 = vmatprep.subr.bf16.mxu0 0
      %2075 = vmatpush1.bf16.msra.mxu0 0
      %2076 = vmatprep.subr.bf16.mxu0 0
      %2077 = vmatpush1.bf16.msra.mxu0 0
      %2078 = vmatprep.mubr.bf16.mxu0 0
      %2079 = vmatmul.mubr.bf16.gmra.mrb[0].mxu0 %v1994
      %v2080 = vpop.f32.mrb[0].mxu0
      %v2081 = vadd.f32 0.0, %v2080
      %v2082 = vpop.f32.mrb[0].mxu0
      %v2083 = vpop.f32.mrb[0].mxu0
      %v2084 = vpop.f32.mrb[0].mxu0
      %2085 = vdwg.mxu0
      %v2086 = vadd.f32 %v1935, %v2040
      %v2087 = vadd.f32 %v1937, %v2042
      %v2088 = vadd.f32 %v1976, %v2081
      %v2089 = vld [vmem:[%s3 + $0xc] sm:$0xf]
      %2090 = vrot.lane.b32.xlu0 %v1772, 110
      %v2091 = vpop.permute.xlu0 %2090
      %2092 = vrot.lane.b32.xlu0 %v1773, 110
      %v2093 = vpop.permute.xlu0 %2092
      %2094 = vrot.lane.b32.xlu0 %v1774, 110
      %v2095 = vpop.permute.xlu0 %2094
      %2096 = vrot.lane.b32.xlu0 %v1775, 110
      %v2097 = vpop.permute.xlu0 %2096
      %v2098 = vsel %vm1010, %v2091, %v2093
      %v2099 = vsel %vm1010, %v2093, %v2095
      %v2100 = vsel %vm1010, %v2095, %v2097
      %v2102 = vsel %vm696, %v2089, 0
      %v2105 = vsel %vm700, %v2098, 0
      %v2108 = vsel %vm700, %v2099, 0
      %v2111 = vsel %vm700, %v2100, 0
      %2113 = vmatprep.subr.bf16.mxu0 %v2108
      %2114 = vmatpush1.bf16.msra.mxu0 %v2105
      %2115 = vmatprep.subr.bf16.mxu0 0
      %2116 = vmatpush1.bf16.msra.mxu0 0
      %2117 = vmatprep.subr.bf16.mxu0 0
      %2118 = vmatpush1.bf16.msra.mxu0 0
      %2119 = vmatprep.subr.bf16.mxu0 0
      %2120 = vmatpush1.bf16.msra.mxu0 0
      %2121 = vmatprep.subr.bf16.mxu0 0
      %2122 = vmatpush1.bf16.msra.mxu0 0
      %2123 = vmatprep.subr.bf16.mxu0 0
      %2124 = vmatpush1.bf16.msra.mxu0 0
      %2125 = vmatprep.subr.bf16.mxu0 0
      %2126 = vmatpush1.bf16.msra.mxu0 0
      %2127 = vmatprep.subr.bf16.mxu0 0
      %2128 = vmatpush1.bf16.msra.mxu0 0
      %2129 = vmatprep.subr.bf16.mxu0 0
      %2130 = vmatpush1.bf16.msra.mxu0 0
      %2131 = vmatprep.subr.bf16.mxu0 0
      %2132 = vmatpush1.bf16.msra.mxu0 0
      %2133 = vmatprep.subr.bf16.mxu0 0
      %2134 = vmatpush1.bf16.msra.mxu0 0
      %2135 = vmatprep.subr.bf16.mxu0 0
      %2136 = vmatpush1.bf16.msra.mxu0 0
      %2137 = vmatprep.subr.bf16.mxu0 0
      %2138 = vmatpush1.bf16.msra.mxu0 0
      %2139 = vmatprep.subr.bf16.mxu0 0
      %2140 = vmatpush1.bf16.msra.mxu0 0
      %2141 = vmatprep.subr.bf16.mxu0 0
      %2142 = vmatpush1.bf16.msra.mxu0 0
      %2143 = vmatprep.subr.bf16.mxu0 0
      %2144 = vmatpush1.bf16.msra.mxu0 0
      %2145 = vmatprep.mubr.bf16.mxu0 0
      %2146 = vmatmul.mubr.bf16.gmra.mrb[0].mxu0 %v2102
      %v2147 = vpop.f32.mrb[0].mxu0
      %v2148 = vadd.f32 0.0, %v2147
      %v2149 = vpop.f32.mrb[0].mxu0
      %v2150 = vadd.f32 0.0, %v2149
      %v2151 = vpop.f32.mrb[0].mxu0
      %v2152 = vpop.f32.mrb[0].mxu0
      %2153 = vdwg.mxu0
      %2154 = vmatprep.subr.bf16.mxu0 0
      %2155 = vmatpush1.bf16.msra.mxu0 %v2111
      %2156 = vmatprep.subr.bf16.mxu0 0
      %2157 = vmatpush1.bf16.msra.mxu0 0
      %2158 = vmatprep.subr.bf16.mxu0 0
      %2159 = vmatpush1.bf16.msra.mxu0 0
      %2160 = vmatprep.subr.bf16.mxu0 0
      %2161 = vmatpush1.bf16.msra.mxu0 0
      %2162 = vmatprep.subr.bf16.mxu0 0
      %2163 = vmatpush1.bf16.msra.mxu0 0
      %2164 = vmatprep.subr.bf16.mxu0 0
      %2165 = vmatpush1.bf16.msra.mxu0 0
      %2166 = vmatprep.subr.bf16.mxu0 0
      %2167 = vmatpush1.bf16.msra.mxu0 0
      %2168 = vmatprep.subr.bf16.mxu0 0
      %2169 = vmatpush1.bf16.msra.mxu0 0
      %2170 = vmatprep.subr.bf16.mxu0 0
      %2171 = vmatpush1.bf16.msra.mxu0 0
      %2172 = vmatprep.subr.bf16.mxu0 0
      %2173 = vmatpush1.bf16.msra.mxu0 0
      %2174 = vmatprep.subr.bf16.mxu0 0
      %2175 = vmatpush1.bf16.msra.mxu0 0
      %2176 = vmatprep.subr.bf16.mxu0 0
      %2177 = vmatpush1.bf16.msra.mxu0 0
      %2178 = vmatprep.subr.bf16.mxu0 0
      %2179 = vmatpush1.bf16.msra.mxu0 0
      %2180 = vmatprep.subr.bf16.mxu0 0
      %2181 = vmatpush1.bf16.msra.mxu0 0
      %2182 = vmatprep.subr.bf16.mxu0 0
      %2183 = vmatpush1.bf16.msra.mxu0 0
      %2184 = vmatprep.subr.bf16.mxu0 0
      %2185 = vmatpush1.bf16.msra.mxu0 0
      %2186 = vmatprep.mubr.bf16.mxu0 0
      %2187 = vmatmul.mubr.bf16.gmra.mrb[0].mxu0 %v2102
      %v2188 = vpop.f32.mrb[0].mxu0
      %v2189 = vadd.f32 0.0, %v2188
      %v2190 = vpop.f32.mrb[0].mxu0
      %v2191 = vpop.f32.mrb[0].mxu0
      %v2192 = vpop.f32.mrb[0].mxu0
      %2193 = vdwg.mxu0
      %v2194 = vadd.f32 %v2086, %v2148
      %v2195 = vadd.f32 %v2087, %v2150
      %v2196 = vadd.f32 %v2088, %v2189
      %v2197 = vld [vmem:[%s3 + $0x10] sm:$0xf]
      %2198 = vrot.lane.b32.xlu0 %v1772, 109
      %v2199 = vpop.permute.xlu0 %2198
      %2200 = vrot.lane.b32.xlu0 %v1773, 109
      %v2201 = vpop.permute.xlu0 %2200
      %2202 = vrot.lane.b32.xlu0 %v1774, 109
      %v2203 = vpop.permute.xlu0 %2202
      %2204 = vrot.lane.b32.xlu0 %v1775, 109
      %v2205 = vpop.permute.xlu0 %2204
      %v2206 = vsel %vm1119, %v2199, %v2201
      %v2207 = vsel %vm1119, %v2201, %v2203
      %v2208 = vsel %vm1119, %v2203, %v2205
      %v2210 = vsel %vm696, %v2197, 0
      %v2213 = vsel %vm700, %v2206, 0
      %v2216 = vsel %vm700, %v2207, 0
      %v2219 = vsel %vm700, %v2208, 0
      %2221 = vmatprep.subr.bf16.mxu0 %v2216
      %2222 = vmatpush1.bf16.msra.mxu0 %v2213
      %2223 = vmatprep.subr.bf16.mxu0 0
      %2224 = vmatpush1.bf16.msra.mxu0 0
      %2225 = vmatprep.subr.bf16.mxu0 0
      %2226 = vmatpush1.bf16.msra.mxu0 0
      %2227 = vmatprep.subr.bf16.mxu0 0
      %2228 = vmatpush1.bf16.msra.mxu0 0
      %2229 = vmatprep.subr.bf16.mxu0 0
      %2230 = vmatpush1.bf16.msra.mxu0 0
      %2231 = vmatprep.subr.bf16.mxu0 0
      %2232 = vmatpush1.bf16.msra.mxu0 0
      %2233 = vmatprep.subr.bf16.mxu0 0
      %2234 = vmatpush1.bf16.msra.mxu0 0
      %2235 = vmatprep.subr.bf16.mxu0 0
      %2236 = vmatpush1.bf16.msra.mxu0 0
      %2237 = vmatprep.subr.bf16.mxu0 0
      %2238 = vmatpush1.bf16.msra.mxu0 0
      %2239 = vmatprep.subr.bf16.mxu0 0
      %2240 = vmatpush1.bf16.msra.mxu0 0
      %2241 = vmatprep.subr.bf16.mxu0 0
      %2242 = vmatpush1.bf16.msra.mxu0 0
      %2243 = vmatprep.subr.bf16.mxu0 0
      %2244 = vmatpush1.bf16.msra.mxu0 0
      %2245 = vmatprep.subr.bf16.mxu0 0
      %2246 = vmatpush1.bf16.msra.mxu0 0
      %2247 = vmatprep.subr.bf16.mxu0 0
      %2248 = vmatpush1.bf16.msra.mxu0 0
      %2249 = vmatprep.subr.bf16.mxu0 0
      %2250 = vmatpush1.bf16.msra.mxu0 0
      %2251 = vmatprep.subr.bf16.mxu0 0
      %2252 = vmatpush1.bf16.msra.mxu0 0
      %2253 = vmatprep.mubr.bf16.mxu0 0
      %2254 = vmatmul.mubr.bf16.gmra.mrb[0].mxu0 %v2210
      %v2255 = vpop.f32.mrb[0].mxu0
      %v2256 = vadd.f32 0.0, %v2255
      %v2257 = vpop.f32.mrb[0].mxu0
      %v2258 = vadd.f32 0.0, %v2257
      %v2259 = vpop.f32.mrb[0].mxu0
      %v2260 = vpop.f32.mrb[0].mxu0
      %2261 = vdwg.mxu0
      %2262 = vmatprep.subr.bf16.mxu0 0
      %2263 = vmatpush1.bf16.msra.mxu0 %v2219
      %2264 = vmatprep.subr.bf16.mxu0 0
      %2265 = vmatpush1.bf16.msra.mxu0 0
      %2266 = vmatprep.subr.bf16.mxu0 0
      %2267 = vmatpush1.bf16.msra.mxu0 0
      %2268 = vmatprep.subr.bf16.mxu0 0
      %2269 = vmatpush1.bf16.msra.mxu0 0
      %2270 = vmatprep.subr.bf16.mxu0 0
      %2271 = vmatpush1.bf16.msra.mxu0 0
      %2272 = vmatprep.subr.bf16.mxu0 0
      %2273 = vmatpush1.bf16.msra.mxu0 0
      %2274 = vmatprep.subr.bf16.mxu0 0
      %2275 = vmatpush1.bf16.msra.mxu0 0
      %2276 = vmatprep.subr.bf16.mxu0 0
      %2277 = vmatpush1.bf16.msra.mxu0 0
      %2278 = vmatprep.subr.bf16.mxu0 0
      %2279 = vmatpush1.bf16.msra.mxu0 0
      %2280 = vmatprep.subr.bf16.mxu0 0
      %2281 = vmatpush1.bf16.msra.mxu0 0
      %2282 = vmatprep.subr.bf16.mxu0 0
      %2283 = vmatpush1.bf16.msra.mxu0 0
      %2284 = vmatprep.subr.bf16.mxu0 0
      %2285 = vmatpush1.bf16.msra.mxu0 0
      %2286 = vmatprep.subr.bf16.mxu0 0
      %2287 = vmatpush1.bf16.msra.mxu0 0
      %2288 = vmatprep.subr.bf16.mxu0 0
      %2289 = vmatpush1.bf16.msra.mxu0 0
      %2290 = vmatprep.subr.bf16.mxu0 0
      %2291 = vmatpush1.bf16.msra.mxu0 0
      %2292 = vmatprep.subr.bf16.mxu0 0
      %2293 = vmatpush1.bf16.msra.mxu0 0
      %2294 = vmatprep.mubr.bf16.mxu0 0
      %2295 = vmatmul.mubr.bf16.gmra.mrb[0].mxu0 %v2210
      %v2296 = vpop.f32.mrb[0].mxu0
      %v2297 = vadd.f32 0.0, %v2296
      %v2298 = vpop.f32.mrb[0].mxu0
      %v2299 = vpop.f32.mrb[0].mxu0
      %v2300 = vpop.f32.mrb[0].mxu0
      %2301 = vdwg.mxu0
      %v2302 = vadd.f32 %v2194, %v2256
      %v2303 = vadd.f32 %v2195, %v2258
      %v2304 = vadd.f32 %v2196, %v2297
      %v2305 = vld [vmem:[%s3 + $0x14] sm:$0xf]
      %2306 = vrot.lane.b32.xlu0 %v1772, 108
      %v2307 = vpop.permute.xlu0 %2306
      %2308 = vrot.lane.b32.xlu0 %v1773, 108
      %v2309 = vpop.permute.xlu0 %2308
      %2310 = vrot.lane.b32.xlu0 %v1774, 108
      %v2311 = vpop.permute.xlu0 %2310
      %2312 = vrot.lane.b32.xlu0 %v1775, 108
      %v2313 = vpop.permute.xlu0 %2312
      %v2314 = vsel %vm1228, %v2307, %v2309
      %v2315 = vsel %vm1228, %v2309, %v2311
      %v2316 = vsel %vm1228, %v2311, %v2313
      %v2318 = vsel %vm696, %v2305, 0
      %v2321 = vsel %vm700, %v2314, 0
      %v2324 = vsel %vm700, %v2315, 0
      %v2327 = vsel %vm700, %v2316, 0
      %2329 = vmatprep.subr.bf16.mxu0 %v2324
      %2330 = vmatpush1.bf16.msra.mxu0 %v2321
      %2331 = vmatprep.subr.bf16.mxu0 0
      %2332 = vmatpush1.bf16.msra.mxu0 0
      %2333 = vmatprep.subr.bf16.mxu0 0
      %2334 = vmatpush1.bf16.msra.mxu0 0
      %2335 = vmatprep.subr.bf16.mxu0 0
      %2336 = vmatpush1.bf16.msra.mxu0 0
      %2337 = vmatprep.subr.bf16.mxu0 0
      %2338 = vmatpush1.bf16.msra.mxu0 0
      %2339 = vmatprep.subr.bf16.mxu0 0
      %2340 = vmatpush1.bf16.msra.mxu0 0
      %2341 = vmatprep.subr.bf16.mxu0 0
      %2342 = vmatpush1.bf16.msra.mxu0 0
      %2343 = vmatprep.subr.bf16.mxu0 0
      %2344 = vmatpush1.bf16.msra.mxu0 0
      %2345 = vmatprep.subr.bf16.mxu0 0
      %2346 = vmatpush1.bf16.msra.mxu0 0
      %2347 = vmatprep.subr.bf16.mxu0 0
      %2348 = vmatpush1.bf16.msra.mxu0 0
      %2349 = vmatprep.subr.bf16.mxu0 0
      %2350 = vmatpush1.bf16.msra.mxu0 0
      %2351 = vmatprep.subr.bf16.mxu0 0
      %2352 = vmatpush1.bf16.msra.mxu0 0
      %2353 = vmatprep.subr.bf16.mxu0 0
      %2354 = vmatpush1.bf16.msra.mxu0 0
      %2355 = vmatprep.subr.bf16.mxu0 0
      %2356 = vmatpush1.bf16.msra.mxu0 0
      %2357 = vmatprep.subr.bf16.mxu0 0
      %2358 = vmatpush1.bf16.msra.mxu0 0
      %2359 = vmatprep.subr.bf16.mxu0 0
      %2360 = vmatpush1.bf16.msra.mxu0 0
      %2361 = vmatprep.mubr.bf16.mxu0 0
      %2362 = vmatmul.mubr.bf16.gmra.mrb[0].mxu0 %v2318
      %v2363 = vpop.f32.mrb[0].mxu0
      %v2364 = vadd.f32 0.0, %v2363
      %v2365 = vpop.f32.mrb[0].mxu0
      %v2366 = vadd.f32 0.0, %v2365
      %v2367 = vpop.f32.mrb[0].mxu0
      %v2368 = vpop.f32.mrb[0].mxu0
      %2369 = vdwg.mxu0
      %2370 = vmatprep.subr.bf16.mxu0 0
      %2371 = vmatpush1.bf16.msra.mxu0 %v2327
      %2372 = vmatprep.subr.bf16.mxu0 0
      %2373 = vmatpush1.bf16.msra.mxu0 0
      %2374 = vmatprep.subr.bf16.mxu0 0
      %2375 = vmatpush1.bf16.msra.mxu0 0
      %2376 = vmatprep.subr.bf16.mxu0 0
      %2377 = vmatpush1.bf16.msra.mxu0 0
      %2378 = vmatprep.subr.bf16.mxu0 0
      %2379 = vmatpush1.bf16.msra.mxu0 0
      %2380 = vmatprep.subr.bf16.mxu0 0
      %2381 = vmatpush1.bf16.msra.mxu0 0
      %2382 = vmatprep.subr.bf16.mxu0 0
      %2383 = vmatpush1.bf16.msra.mxu0 0
      %2384 = vmatprep.subr.bf16.mxu0 0
      %2385 = vmatpush1.bf16.msra.mxu0 0
      %2386 = vmatprep.subr.bf16.mxu0 0
      %2387 = vmatpush1.bf16.msra.mxu0 0
      %2388 = vmatprep.subr.bf16.mxu0 0
      %2389 = vmatpush1.bf16.msra.mxu0 0
      %2390 = vmatprep.subr.bf16.mxu0 0
      %2391 = vmatpush1.bf16.msra.mxu0 0
      %2392 = vmatprep.subr.bf16.mxu0 0
      %2393 = vmatpush1.bf16.msra.mxu0 0
      %2394 = vmatprep.subr.bf16.mxu0 0
      %2395 = vmatpush1.bf16.msra.mxu0 0
      %2396 = vmatprep.subr.bf16.mxu0 0
      %2397 = vmatpush1.bf16.msra.mxu0 0
      %2398 = vmatprep.subr.bf16.mxu0 0
      %2399 = vmatpush1.bf16.msra.mxu0 0
      %2400 = vmatprep.subr.bf16.mxu0 0
      %2401 = vmatpush1.bf16.msra.mxu0 0
      %2402 = vmatprep.mubr.bf16.mxu0 0
      %2403 = vmatmul.mubr.bf16.gmra.mrb[0].mxu0 %v2318
      %v2404 = vpop.f32.mrb[0].mxu0
      %v2405 = vadd.f32 0.0, %v2404
      %v2406 = vpop.f32.mrb[0].mxu0
      %v2407 = vpop.f32.mrb[0].mxu0
      %v2408 = vpop.f32.mrb[0].mxu0
      %2409 = vdwg.mxu0
      %v2410 = vadd.f32 %v2302, %v2364
      %v2411 = vadd.f32 %v2303, %v2366
      %v2412 = vadd.f32 %v2304, %v2405
      %v2413 = vld [vmem:[%s3 + $0x18] sm:$0xf]
      %2414 = vrot.lane.b32.xlu0 %v1772, 92
      %v2415 = vpop.permute.xlu0 %2414
      %2416 = vrot.lane.b32.xlu0 %v1773, 92
      %v2417 = vpop.permute.xlu0 %2416
      %2418 = vrot.lane.b32.xlu0 %v1774, 92
      %v2419 = vpop.permute.xlu0 %2418
      %2420 = vrot.lane.b32.xlu0 %v1775, 92
      %v2421 = vpop.permute.xlu0 %2420
      %v2422 = vsel %vm1337, %v2415, %v2417
      %v2423 = vsel %vm1337, %v2417, %v2419
      %v2424 = vsel %vm1337, %v2419, %v2421
      %v2426 = vsel %vm696, %v2413, 0
      %v2429 = vsel %vm700, %v2422, 0
      %v2432 = vsel %vm700, %v2423, 0
      %v2435 = vsel %vm700, %v2424, 0
      %2437 = vmatprep.subr.bf16.mxu0 %v2432
      %2438 = vmatpush1.bf16.msra.mxu0 %v2429
      %2439 = vmatprep.subr.bf16.mxu0 0
      %2440 = vmatpush1.bf16.msra.mxu0 0
      %2441 = vmatprep.subr.bf16.mxu0 0
      %2442 = vmatpush1.bf16.msra.mxu0 0
      %2443 = vmatprep.subr.bf16.mxu0 0
      %2444 = vmatpush1.bf16.msra.mxu0 0
      %2445 = vmatprep.subr.bf16.mxu0 0
      %2446 = vmatpush1.bf16.msra.mxu0 0
      %2447 = vmatprep.subr.bf16.mxu0 0
      %2448 = vmatpush1.bf16.msra.mxu0 0
      %2449 = vmatprep.subr.bf16.mxu0 0
      %2450 = vmatpush1.bf16.msra.mxu0 0
      %2451 = vmatprep.subr.bf16.mxu0 0
      %2452 = vmatpush1.bf16.msra.mxu0 0
      %2453 = vmatprep.subr.bf16.mxu0 0
      %2454 = vmatpush1.bf16.msra.mxu0 0
      %2455 = vmatprep.subr.bf16.mxu0 0
      %2456 = vmatpush1.bf16.msra.mxu0 0
      %2457 = vmatprep.subr.bf16.mxu0 0
      %2458 = vmatpush1.bf16.msra.mxu0 0
      %2459 = vmatprep.subr.bf16.mxu0 0
      %2460 = vmatpush1.bf16.msra.mxu0 0
      %2461 = vmatprep.subr.bf16.mxu0 0
      %2462 = vmatpush1.bf16.msra.mxu0 0
      %2463 = vmatprep.subr.bf16.mxu0 0
      %2464 = vmatpush1.bf16.msra.mxu0 0
      %2465 = vmatprep.subr.bf16.mxu0 0
      %2466 = vmatpush1.bf16.msra.mxu0 0
      %2467 = vmatprep.subr.bf16.mxu0 0
      %2468 = vmatpush1.bf16.msra.mxu0 0
      %2469 = vmatprep.mubr.bf16.mxu0 0
      %2470 = vmatmul.mubr.bf16.gmra.mrb[0].mxu0 %v2426
      %v2471 = vpop.f32.mrb[0].mxu0
      %v2472 = vadd.f32 0.0, %v2471
      %v2473 = vpop.f32.mrb[0].mxu0
      %v2474 = vadd.f32 0.0, %v2473
      %v2475 = vpop.f32.mrb[0].mxu0
      %v2476 = vpop.f32.mrb[0].mxu0
      %2477 = vdwg.mxu0
      %2478 = vmatprep.subr.bf16.mxu0 0
      %2479 = vmatpush1.bf16.msra.mxu0 %v2435
      %2480 = vmatprep.subr.bf16.mxu0 0
      %2481 = vmatpush1.bf16.msra.mxu0 0
      %2482 = vmatprep.subr.bf16.mxu0 0
      %2483 = vmatpush1.bf16.msra.mxu0 0
      %2484 = vmatprep.subr.bf16.mxu0 0
      %2485 = vmatpush1.bf16.msra.mxu0 0
      %2486 = vmatprep.subr.bf16.mxu0 0
      %2487 = vmatpush1.bf16.msra.mxu0 0
      %2488 = vmatprep.subr.bf16.mxu0 0
      %2489 = vmatpush1.bf16.msra.mxu0 0
      %2490 = vmatprep.subr.bf16.mxu0 0
      %2491 = vmatpush1.bf16.msra.mxu0 0
      %2492 = vmatprep.subr.bf16.mxu0 0
      %2493 = vmatpush1.bf16.msra.mxu0 0
      %2494 = vmatprep.subr.bf16.mxu0 0
      %2495 = vmatpush1.bf16.msra.mxu0 0
      %2496 = vmatprep.subr.bf16.mxu0 0
      %2497 = vmatpush1.bf16.msra.mxu0 0
      %2498 = vmatprep.subr.bf16.mxu0 0
      %2499 = vmatpush1.bf16.msra.mxu0 0
      %2500 = vmatprep.subr.bf16.mxu0 0
      %2501 = vmatpush1.bf16.msra.mxu0 0
      %2502 = vmatprep.subr.bf16.mxu0 0
      %2503 = vmatpush1.bf16.msra.mxu0 0
      %2504 = vmatprep.subr.bf16.mxu0 0
      %2505 = vmatpush1.bf16.msra.mxu0 0
      %2506 = vmatprep.subr.bf16.mxu0 0
      %2507 = vmatpush1.bf16.msra.mxu0 0
      %2508 = vmatprep.subr.bf16.mxu0 0
      %2509 = vmatpush1.bf16.msra.mxu0 0
      %2510 = vmatprep.mubr.bf16.mxu0 0
      %2511 = vmatmul.mubr.bf16.gmra.mrb[0].mxu0 %v2426
      %v2512 = vpop.f32.mrb[0].mxu0
      %v2513 = vadd.f32 0.0, %v2512
      %v2514 = vpop.f32.mrb[0].mxu0
      %v2515 = vpop.f32.mrb[0].mxu0
      %v2516 = vpop.f32.mrb[0].mxu0
      %2517 = vdwg.mxu0
      %v2518 = vadd.f32 %v2410, %v2472
      %v2519 = vadd.f32 %v2411, %v2474
      %v2520 = vadd.f32 %v2412, %v2513
      %v2521 = vld [vmem:[%s3 + $0x1c] sm:$0xf]
      %2522 = vrot.lane.b32.xlu0 %v1772, 91
      %v2523 = vpop.permute.xlu0 %2522
      %2524 = vrot.lane.b32.xlu0 %v1773, 91
      %v2525 = vpop.permute.xlu0 %2524
      %2526 = vrot.lane.b32.xlu0 %v1774, 91
      %v2527 = vpop.permute.xlu0 %2526
      %2528 = vrot.lane.b32.xlu0 %v1775, 91
      %v2529 = vpop.permute.xlu0 %2528
      %v2530 = vsel %vm1446, %v2523, %v2525
      %v2531 = vsel %vm1446, %v2525, %v2527
      %v2532 = vsel %vm1446, %v2527, %v2529
      %v2534 = vsel %vm696, %v2521, 0
      %v2537 = vsel %vm700, %v2530, 0
      %v2540 = vsel %vm700, %v2531, 0
      %v2543 = vsel %vm700, %v2532, 0
      %2545 = vmatprep.subr.bf16.mxu0 %v2540
      %2546 = vmatpush1.bf16.msra.mxu0 %v2537
      %2547 = vmatprep.subr.bf16.mxu0 0
      %2548 = vmatpush1.bf16.msra.mxu0 0
      %2549 = vmatprep.subr.bf16.mxu0 0
      %2550 = vmatpush1.bf16.msra.mxu0 0
      %2551 = vmatprep.subr.bf16.mxu0 0
      %2552 = vmatpush1.bf16.msra.mxu0 0
      %2553 = vmatprep.subr.bf16.mxu0 0
      %2554 = vmatpush1.bf16.msra.mxu0 0
      %2555 = vmatprep.subr.bf16.mxu0 0
      %2556 = vmatpush1.bf16.msra.mxu0 0
      %2557 = vmatprep.subr.bf16.mxu0 0
      %2558 = vmatpush1.bf16.msra.mxu0 0
      %2559 = vmatprep.subr.bf16.mxu0 0
      %2560 = vmatpush1.bf16.msra.mxu0 0
      %2561 = vmatprep.subr.bf16.mxu0 0
      %2562 = vmatpush1.bf16.msra.mxu0 0
      %2563 = vmatprep.subr.bf16.mxu0 0
      %2564 = vmatpush1.bf16.msra.mxu0 0
      %2565 = vmatprep.subr.bf16.mxu0 0
      %2566 = vmatpush1.bf16.msra.mxu0 0
      %2567 = vmatprep.subr.bf16.mxu0 0
      %2568 = vmatpush1.bf16.msra.mxu0 0
      %2569 = vmatprep.subr.bf16.mxu0 0
      %2570 = vmatpush1.bf16.msra.mxu0 0
      %2571 = vmatprep.subr.bf16.mxu0 0
      %2572 = vmatpush1.bf16.msra.mxu0 0
      %2573 = vmatprep.subr.bf16.mxu0 0
      %2574 = vmatpush1.bf16.msra.mxu0 0
      %2575 = vmatprep.subr.bf16.mxu0 0
      %2576 = vmatpush1.bf16.msra.mxu0 0
      %2577 = vmatprep.mubr.bf16.mxu0 0
      %2578 = vmatmul.mubr.bf16.gmra.mrb[0].mxu0 %v2534
      %v2579 = vpop.f32.mrb[0].mxu0
      %v2580 = vadd.f32 0.0, %v2579
      %v2581 = vpop.f32.mrb[0].mxu0
      %v2582 = vadd.f32 0.0, %v2581
      %v2583 = vpop.f32.mrb[0].mxu0
      %v2584 = vpop.f32.mrb[0].mxu0
      %2585 = vdwg.mxu0
      %2586 = vmatprep.subr.bf16.mxu0 0
      %2587 = vmatpush1.bf16.msra.mxu0 %v2543
      %2588 = vmatprep.subr.bf16.mxu0 0
      %2589 = vmatpush1.bf16.msra.mxu0 0
      %2590 = vmatprep.subr.bf16.mxu0 0
      %2591 = vmatpush1.bf16.msra.mxu0 0
      %2592 = vmatprep.subr.bf16.mxu0 0
      %2593 = vmatpush1.bf16.msra.mxu0 0
      %2594 = vmatprep.subr.bf16.mxu0 0
      %2595 = vmatpush1.bf16.msra.mxu0 0
      %2596 = vmatprep.subr.bf16.mxu0 0
      %2597 = vmatpush1.bf16.msra.mxu0 0
      %2598 = vmatprep.subr.bf16.mxu0 0
      %2599 = vmatpush1.bf16.msra.mxu0 0
      %2600 = vmatprep.subr.bf16.mxu0 0
      %2601 = vmatpush1.bf16.msra.mxu0 0
      %2602 = vmatprep.subr.bf16.mxu0 0
      %2603 = vmatpush1.bf16.msra.mxu0 0
      %2604 = vmatprep.subr.bf16.mxu0 0
      %2605 = vmatpush1.bf16.msra.mxu0 0
      %2606 = vmatprep.subr.bf16.mxu0 0
      %2607 = vmatpush1.bf16.msra.mxu0 0
      %2608 = vmatprep.subr.bf16.mxu0 0
      %2609 = vmatpush1.bf16.msra.mxu0 0
      %2610 = vmatprep.subr.bf16.mxu0 0
      %2611 = vmatpush1.bf16.msra.mxu0 0
      %2612 = vmatprep.subr.bf16.mxu0 0
      %2613 = vmatpush1.bf16.msra.mxu0 0
      %2614 = vmatprep.subr.bf16.mxu0 0
      %2615 = vmatpush1.bf16.msra.mxu0 0
      %2616 = vmatprep.subr.bf16.mxu0 0
      %2617 = vmatpush1.bf16.msra.mxu0 0
      %2618 = vmatprep.mubr.bf16.mxu0 0
      %2619 = vmatmul.mubr.bf16.gmra.mrb[0].mxu0 %v2534
      %v2620 = vpop.f32.mrb[0].mxu0
      %v2621 = vadd.f32 0.0, %v2620
      %v2622 = vpop.f32.mrb[0].mxu0
      %v2623 = vpop.f32.mrb[0].mxu0
      %v2624 = vpop.f32.mrb[0].mxu0
      %2625 = vdwg.mxu0
      %v2626 = vadd.f32 %v2518, %v2580
      %v2627 = vadd.f32 %v2519, %v2582
      %v2628 = vadd.f32 %v2520, %v2621
      %v2629 = vld [vmem:[%s3 + $0x20] sm:$0xf]
      %2630 = vrot.lane.b32.xlu0 %v1772, 90
      %v2631 = vpop.permute.xlu0 %2630
      %2632 = vrot.lane.b32.xlu0 %v1773, 90
      %v2633 = vpop.permute.xlu0 %2632
      %2634 = vrot.lane.b32.xlu0 %v1774, 90
      %v2635 = vpop.permute.xlu0 %2634
      %2636 = vrot.lane.b32.xlu0 %v1775, 90
      %v2637 = vpop.permute.xlu0 %2636
      %v2638 = vsel %vm1555, %v2631, %v2633
      %v2639 = vsel %vm1555, %v2633, %v2635
      %v2640 = vsel %vm1555, %v2635, %v2637
      %v2642 = vsel %vm696, %v2629, 0
      %v2645 = vsel %vm700, %v2638, 0
      %v2648 = vsel %vm700, %v2639, 0
      %v2651 = vsel %vm700, %v2640, 0
      %2653 = vmatprep.subr.bf16.mxu0 %v2648
      %2654 = vmatpush1.bf16.msra.mxu0 %v2645
      %2655 = vmatprep.subr.bf16.mxu0 0
      %2656 = vmatpush1.bf16.msra.mxu0 0
      %2657 = vmatprep.subr.bf16.mxu0 0
      %2658 = vmatpush1.bf16.msra.mxu0 0
      %2659 = vmatprep.subr.bf16.mxu0 0
      %2660 = vmatpush1.bf16.msra.mxu0 0
      %2661 = vmatprep.subr.bf16.mxu0 0
      %2662 = vmatpush1.bf16.msra.mxu0 0
      %2663 = vmatprep.subr.bf16.mxu0 0
      %2664 = vmatpush1.bf16.msra.mxu0 0
      %2665 = vmatprep.subr.bf16.mxu0 0
      %2666 = vmatpush1.bf16.msra.mxu0 0
      %2667 = vmatprep.subr.bf16.mxu0 0
      %2668 = vmatpush1.bf16.msra.mxu0 0
      %2669 = vmatprep.subr.bf16.mxu0 0
      %2670 = vmatpush1.bf16.msra.mxu0 0
      %2671 = vmatprep.subr.bf16.mxu0 0
      %2672 = vmatpush1.bf16.msra.mxu0 0
      %2673 = vmatprep.subr.bf16.mxu0 0
      %2674 = vmatpush1.bf16.msra.mxu0 0
      %2675 = vmatprep.subr.bf16.mxu0 0
      %2676 = vmatpush1.bf16.msra.mxu0 0
      %2677 = vmatprep.subr.bf16.mxu0 0
      %2678 = vmatpush1.bf16.msra.mxu0 0
      %2679 = vmatprep.subr.bf16.mxu0 0
      %2680 = vmatpush1.bf16.msra.mxu0 0
      %2681 = vmatprep.subr.bf16.mxu0 0
      %2682 = vmatpush1.bf16.msra.mxu0 0
      %2683 = vmatprep.subr.bf16.mxu0 0
      %2684 = vmatpush1.bf16.msra.mxu0 0
      %2685 = vmatprep.mubr.bf16.mxu0 0
      %2686 = vmatmul.mubr.bf16.gmra.mrb[0].mxu0 %v2642
      %v2687 = vpop.f32.mrb[0].mxu0
      %v2688 = vadd.f32 0.0, %v2687
      %v2689 = vpop.f32.mrb[0].mxu0
      %v2690 = vadd.f32 0.0, %v2689
      %v2691 = vpop.f32.mrb[0].mxu0
      %v2692 = vpop.f32.mrb[0].mxu0
      %2693 = vdwg.mxu0
      %2694 = vmatprep.subr.bf16.mxu0 0
      %2695 = vmatpush1.bf16.msra.mxu0 %v2651
      %2696 = vmatprep.subr.bf16.mxu0 0
      %2697 = vmatpush1.bf16.msra.mxu0 0
      %2698 = vmatprep.subr.bf16.mxu0 0
      %2699 = vmatpush1.bf16.msra.mxu0 0
      %2700 = vmatprep.subr.bf16.mxu0 0
      %2701 = vmatpush1.bf16.msra.mxu0 0
      %2702 = vmatprep.subr.bf16.mxu0 0
      %2703 = vmatpush1.bf16.msra.mxu0 0
      %2704 = vmatprep.subr.bf16.mxu0 0
      %2705 = vmatpush1.bf16.msra.mxu0 0
      %2706 = vmatprep.subr.bf16.mxu0 0
      %2707 = vmatpush1.bf16.msra.mxu0 0
      %2708 = vmatprep.subr.bf16.mxu0 0
      %2709 = vmatpush1.bf16.msra.mxu0 0
      %2710 = vmatprep.subr.bf16.mxu0 0
      %2711 = vmatpush1.bf16.msra.mxu0 0
      %2712 = vmatprep.subr.bf16.mxu0 0
      %2713 = vmatpush1.bf16.msra.mxu0 0
      %2714 = vmatprep.subr.bf16.mxu0 0
      %2715 = vmatpush1.bf16.msra.mxu0 0
      %2716 = vmatprep.subr.bf16.mxu0 0
      %2717 = vmatpush1.bf16.msra.mxu0 0
      %2718 = vmatprep.subr.bf16.mxu0 0
      %2719 = vmatpush1.bf16.msra.mxu0 0
      %2720 = vmatprep.subr.bf16.mxu0 0
      %2721 = vmatpush1.bf16.msra.mxu0 0
      %2722 = vmatprep.subr.bf16.mxu0 0
      %2723 = vmatpush1.bf16.msra.mxu0 0
      %2724 = vmatprep.subr.bf16.mxu0 0
      %2725 = vmatpush1.bf16.msra.mxu0 0
      %2726 = vmatprep.mubr.bf16.mxu0 0
      %2727 = vmatmul.mubr.bf16.gmra.mrb[0].mxu0 %v2642
      %v2728 = vpop.f32.mrb[0].mxu0
      %v2729 = vadd.f32 0.0, %v2728
      %v2730 = vpop.f32.mrb[0].mxu0
      %v2731 = vpop.f32.mrb[0].mxu0
      %v2732 = vpop.f32.mrb[0].mxu0
      %2733 = vdwg.mxu0
      %v2734 = vadd.f32 %v2626, %v2688
      %v2735 = vadd.f32 %v2627, %v2690
      %v2736 = vadd.f32 %v2628, %v2729
      %v2737 = vld [vmem:[%s15] sm:$0x7]
      %v2739 = vlaneseq
      %v2740 = vshrl.u32 %v2739, 7
      %v2741 = vsub.s32 0, %v2740
      %v2742 = vrot.slane %v2737, %v2741
      %v2743 = vlaneseq
      %v2744 = vshrl.u32 %v2743, 7
      %v2745 = vsub.s32 1, %v2744
      %v2746 = vrot.slane %v2737, %v2745
      %v2747 = vlaneseq
      %v2748 = vshrl.u32 %v2747, 7
      %v2749 = vsub.s32 2, %v2748
      %v2750 = vrot.slane %v2737, %v2749
      %v2754 = vmul.f32 %v2734, %v2742
      %v2755 = vmul.f32 %v2735, %v2746
      %v2756 = vmul.f32 %v2736, %v2750
      %v2757 = vadd.f32 %v2754, %v2755
      %v2758 = vadd.f32 %v2757, %v2756
      %2759 = vadd.xlane.f32.xlu0 %v2758
      %v2760 = vpop.xlane.xlu0 %2759
      %v2761 = vmul.f32 %v2760, 0.00390625
      %v2762 = vmul.f32 %v2754, %v2734
      %v2763 = vmul.f32 %v2755, %v2735
      %v2764 = vmul.f32 %v2756, %v2736
      %v2765 = vadd.f32 %v2762, %v2763
      %v2766 = vadd.f32 %v2765, %v2764
      %2767 = vadd.xlane.f32.xlu0 %v2766
      %v2768 = vpop.xlane.xlu0 %2767
      %v2769 = vmul.f32 %v2768, 0.00390625
      %v2770 = vmul.f32 %v2761, %v2761
      %v2771 = vsub.f32 %v2769, %v2770
      %v2772 = vmax.f32 %v2771, 0.0
      %v2773 = vld [vmem:[%s4] sm:$0xff]
      %v2774 = vadd.f32 %v2772, 1e-05
      %v2775 = vrsqrt.pop %v2774
      %v2776 = vmul.f32 %v2773, %v2775
      %v2777 = vmul.f32 %v2761, %v2776
      %2779 = vrot.lane.b32.xlu0 %v2777, 1
      %v2780 = vpop.permute.xlu0 %2779
      %v2782 = vsub.f32 %v2773, %v2780
      %2784 = vset.pattern.permute.xlu0 0
      %2785 = vperm.xlu0 %2784, %v2776
      %v2786 = vpop.permute.xlu0 %2785
      %v2788 = vmul.f32 %v2734, %v2786
      %v2789 = vmul.f32 %v2735, %v2786
      %v2790 = vmul.f32 %v2736, %v2786
      %2792 = vset.pattern.permute.xlu0 1
      %2793 = vperm.xlu0 %2792, %v2782
      %v2794 = vpop.permute.xlu0 %2793
      %v2796 = vadd.f32 %v2788, %v2794
      %v2797 = vadd.f32 %v2789, %v2794
      %v2798 = vadd.f32 %v2790, %v2794
      %vm2799 = vcmp.ge.f32.partialorder %v2796, 0.0
      %vm2800 = vcmp.ge.f32.partialorder %v2797, 0.0
      %vm2801 = vcmp.ge.f32.partialorder %v2798, 0.0
      %v2802 = vmul.f32 %v2796, 0.01
      %v2803 = vmul.f32 %v2797, 0.01
      %v2804 = vmul.f32 %v2798, 0.01
      %v2805 = vsel %vm2799, %v2796, %v2802
      %v2806 = vsel %vm2800, %v2797, %v2803
      %v2807 = vsel %vm2801, %v2798, %v2804
      %v2808 = vmul.f32 %v2805, %v2742
      %v2809 = vmul.f32 %v2806, %v2746
      %v2810 = vmul.f32 %v2807, %v2750
      %2811 = vst [vmem:[%s644] sm:$0xff] %v2808
      %2812 = vst [vmem:[%s644 + $0x8] sm:$0xff] %v2809
      %2813 = vst [vmem:[%s644 + $0x10] sm:$0xff] %v2810
      %v2814 = vpack.c.bf16 %v2808, %v2808
      %v2815 = vpack.c.bf16 %v2809, %v2809
      %v2816 = vpack.c.bf16 %v2810, %v2810
      %v2820 = vunpack.c.l.b16 %v2814
      %v2821 = vunpack.c.l.b16 %v2815
      %v2822 = vunpack.c.l.b16 %v2816
      %v2823 = vpack.c.b16 %v2821, %v2820
      %v2824 = vpack.c.b16 %v2822, %v2822
      %2825 = vrot.lane.b32.xlu0 %v2823, 19
      %v2826 = vpop.permute.xlu0 %2825
      %2827 = vrot.lane.b32.xlu0 %v2824, 19
      %v2828 = vpop.permute.xlu0 %2827
      %v2829 = vrot.slane %v2826, 4
      %v2830 = vrot.slane %v2828, 4
      %v2831 = vsel %vm1746, %v2829, %v2826
      %v2832 = vsel %vm1748, %v2829, %v2830
      %v2833 = vsel %vm1746, %v2832, %v2828
      %2836 = vst.msk [vmem:[#allocation3] sm:$0xff] %vm1755, %v2831
      %2837 = vst.msk [vmem:[#allocation3 + $0x8] sm:$0xff] %vm1758, %v2833
      %v2838 = vld [vmem:[%s5] sm:$0xf]
      %v2839 = vld [vmem:[%s5 + $0x4] sm:$0xf]
      %v2840 = vld [vmem:[#allocation3] sm:$0xff]
      %v2841 = vld [vmem:[#allocation3 + $0x8] sm:$0xf]
      %v2842 = vld [vmem:[%s5 + $0x8] sm:$0xf]
      %v2843 = vld [vmem:[%s5 + $0xc] sm:$0xf]
      %v2844 = vld [vmem:[#allocation3] sm:$0xff]
      %v2845 = vld [vmem:[#allocation3 + $0x8] sm:$0xff]
      %v2848 = vunpack.c.l.b16 %v2842
      %v2849 = vunpack.c.l.b16 %v2843
      %v2850 = vpack.c.b16 %v2849, %v2848
      %v2853 = vunpack.c.l.b16 %v2844
      %v2854 = vunpack.c.h.b16 %v2844
      %v2855 = vunpack.c.l.b16 %v2845
      %v2856 = vunpack.c.h.b16 %v2845
      %v2857 = vpack.c.b16 %v2853, %v2853
      %v2858 = vpack.c.b16 %v2854, %v2854
      %v2859 = vpack.c.b16 %v2855, %v2855
      %v2860 = vpack.c.b16 %v2856, %v2856
      %2861 = vrot.lane.b32.xlu0 %v2857, 127
      %v2862 = vpop.permute.xlu0 %2861
      %2863 = vrot.lane.b32.xlu0 %v2858, 127
      %v2864 = vpop.permute.xlu0 %2863
      %2865 = vrot.lane.b32.xlu0 %v2859, 127
      %v2866 = vpop.permute.xlu0 %2865
      %2867 = vrot.lane.b32.xlu0 %v2860, 127
      %v2868 = vpop.permute.xlu0 %2867
      %v2869 = vsel %vm692, %v2862, %v2864
      %v2870 = vsel %vm692, %v2864, %v2866
      %v2871 = vsel %vm692, %v2866, %v2868
      %v2873 = vsel %vm696, %v2850, 0
      %v2876 = vsel %vm700, %v2869, 0
      %v2879 = vsel %vm700, %v2870, 0
      %v2882 = vsel %vm700, %v2871, 0
      %2884 = vmatprep.subr.bf16.mxu0 %v2879
      %2885 = vmatpush1.bf16.msra.mxu0 %v2876
      %2886 = vmatprep.subr.bf16.mxu0 0
      %2887 = vmatpush1.bf16.msra.mxu0 0
      %2888 = vmatprep.subr.bf16.mxu0 0
      %2889 = vmatpush1.bf16.msra.mxu0 0
      %2890 = vmatprep.subr.bf16.mxu0 0
      %2891 = vmatpush1.bf16.msra.mxu0 0
      %2892 = vmatprep.subr.bf16.mxu0 0
      %2893 = vmatpush1.bf16.msra.mxu0 0
      %2894 = vmatprep.subr.bf16.mxu0 0
      %2895 = vmatpush1.bf16.msra.mxu0 0
      %2896 = vmatprep.subr.bf16.mxu0 0
      %2897 = vmatpush1.bf16.msra.mxu0 0
      %2898 = vmatprep.subr.bf16.mxu0 0
      %2899 = vmatpush1.bf16.msra.mxu0 0
      %2900 = vmatprep.subr.bf16.mxu0 0
      %2901 = vmatpush1.bf16.msra.mxu0 0
      %2902 = vmatprep.subr.bf16.mxu0 0
      %2903 = vmatpush1.bf16.msra.mxu0 0
      %2904 = vmatprep.subr.bf16.mxu0 0
      %2905 = vmatpush1.bf16.msra.mxu0 0
      %2906 = vmatprep.subr.bf16.mxu0 0
      %2907 = vmatpush1.bf16.msra.mxu0 0
      %2908 = vmatprep.subr.bf16.mxu0 0
      %2909 = vmatpush1.bf16.msra.mxu0 0
      %2910 = vmatprep.subr.bf16.mxu0 0
      %2911 = vmatpush1.bf16.msra.mxu0 0
      %2912 = vmatprep.subr.bf16.mxu0 0
      %2913 = vmatpush1.bf16.msra.mxu0 0
      %2914 = vmatprep.subr.bf16.mxu0 0
      %2915 = vmatpush1.bf16.msra.mxu0 0
      %2916 = vmatprep.mubr.bf16.mxu0 0
      %2917 = vmatmul.mubr.bf16.gmra.mrb[0].mxu0 %v2873
      %v2918 = vpop.f32.mrb[0].mxu0
      %v2919 = vadd.f32 0.0, %v2918
      %v2920 = vpop.f32.mrb[0].mxu0
      %v2921 = vadd.f32 0.0, %v2920
      %v2922 = vpop.f32.mrb[0].mxu0
      %v2923 = vadd.f32 0.0, %v2922
      %v2924 = vpop.f32.mrb[0].mxu0
      %v2925 = vadd.f32 0.0, %v2924
      %2926 = vdwg.mxu0
      %2927 = vmatprep.subr.bf16.mxu0 0
      %2928 = vmatpush1.bf16.msra.mxu0 %v2882
      %2929 = vmatprep.subr.bf16.mxu0 0
      %2930 = vmatpush1.bf16.msra.mxu0 0
      %2931 = vmatprep.subr.bf16.mxu0 0
      %2932 = vmatpush1.bf16.msra.mxu0 0
      %2933 = vmatprep.subr.bf16.mxu0 0
      %2934 = vmatpush1.bf16.msra.mxu0 0
      %2935 = vmatprep.subr.bf16.mxu0 0
      %2936 = vmatpush1.bf16.msra.mxu0 0
      %2937 = vmatprep.subr.bf16.mxu0 0
      %2938 = vmatpush1.bf16.msra.mxu0 0
      %2939 = vmatprep.subr.bf16.mxu0 0
      %2940 = vmatpush1.bf16.msra.mxu0 0
      %2941 = vmatprep.subr.bf16.mxu0 0
      %2942 = vmatpush1.bf16.msra.mxu0 0
      %2943 = vmatprep.subr.bf16.mxu0 0
      %2944 = vmatpush1.bf16.msra.mxu0 0
      %2945 = vmatprep.subr.bf16.mxu0 0
      %2946 = vmatpush1.bf16.msra.mxu0 0
      %2947 = vmatprep.subr.bf16.mxu0 0
      %2948 = vmatpush1.bf16.msra.mxu0 0
      %2949 = vmatprep.subr.bf16.mxu0 0
      %2950 = vmatpush1.bf16.msra.mxu0 0
      %2951 = vmatprep.subr.bf16.mxu0 0
      %2952 = vmatpush1.bf16.msra.mxu0 0
      %2953 = vmatprep.subr.bf16.mxu0 0
      %2954 = vmatpush1.bf16.msra.mxu0 0
      %2955 = vmatprep.subr.bf16.mxu0 0
      %2956 = vmatpush1.bf16.msra.mxu0 0
      %2957 = vmatprep.subr.bf16.mxu0 0
      %2958 = vmatpush1.bf16.msra.mxu0 0
      %2959 = vmatprep.mubr.bf16.mxu0 0
      %2960 = vmatmul.mubr.bf16.gmra.mrb[0].mxu0 %v2873
      %v2961 = vpop.f32.mrb[0].mxu0
      %v2962 = vadd.f32 0.0, %v2961
      %v2963 = vpop.f32.mrb[0].mxu0
      %v2964 = vpop.f32.mrb[0].mxu0
      %v2965 = vadd.f32 0.0, %v2964
      %v2966 = vpop.f32.mrb[0].mxu0
      %2967 = vdwg.mxu0
      %v2970 = vunpack.c.l.b16 %v2838
      %v2971 = vunpack.c.l.b16 %v2839
      %v2972 = vpack.c.b16 %v2971, %v2970
      %v2975 = vunpack.c.l.b16 %v2840
      %v2976 = vunpack.c.h.b16 %v2840
      %v2977 = vunpack.c.l.b16 %v2841
      %v2978 = vpack.c.b16 %v2975, %v2975
      %v2979 = vpack.c.b16 %v2976, %v2976
      %v2980 = vpack.c.b16 %v2977, %v2977
      %v2982 = vsel %vm696, %v2972, 0
      %v2985 = vsel %vm700, %v2978, 0
      %v2988 = vsel %vm700, %v2979, 0
      %v2991 = vsel %vm700, %v2980, 0
      %2993 = vmatprep.subr.bf16.mxu0 %v2988
      %2994 = vmatpush1.bf16.msra.mxu0 %v2985
      %2995 = vmatprep.subr.bf16.mxu0 0
      %2996 = vmatpush1.bf16.msra.mxu0 0
      %2997 = vmatprep.subr.bf16.mxu0 0
      %2998 = vmatpush1.bf16.msra.mxu0 0
      %2999 = vmatprep.subr.bf16.mxu0 0
      %3000 = vmatpush1.bf16.msra.mxu0 0
      %3001 = vmatprep.subr.bf16.mxu0 0
      %3002 = vmatpush1.bf16.msra.mxu0 0
      %3003 = vmatprep.subr.bf16.mxu0 0
      %3004 = vmatpush1.bf16.msra.mxu0 0
      %3005 = vmatprep.subr.bf16.mxu0 0
      %3006 = vmatpush1.bf16.msra.mxu0 0
      %3007 = vmatprep.subr.bf16.mxu0 0
      %3008 = vmatpush1.bf16.msra.mxu0 0
      %3009 = vmatprep.subr.bf16.mxu0 0
      %3010 = vmatpush1.bf16.msra.mxu0 0
      %3011 = vmatprep.subr.bf16.mxu0 0
      %3012 = vmatpush1.bf16.msra.mxu0 0
      %3013 = vmatprep.subr.bf16.mxu0 0
      %3014 = vmatpush1.bf16.msra.mxu0 0
      %3015 = vmatprep.subr.bf16.mxu0 0
      %3016 = vmatpush1.bf16.msra.mxu0 0
      %3017 = vmatprep.subr.bf16.mxu0 0
      %3018 = vmatpush1.bf16.msra.mxu0 0
      %3019 = vmatprep.subr.bf16.mxu0 0
      %3020 = vmatpush1.bf16.msra.mxu0 0
      %3021 = vmatprep.subr.bf16.mxu0 0
      %3022 = vmatpush1.bf16.msra.mxu0 0
      %3023 = vmatprep.subr.bf16.mxu0 0
      %3024 = vmatpush1.bf16.msra.mxu0 0
      %3025 = vmatprep.mubr.bf16.mxu0 0
      %3026 = vmatmul.mubr.bf16.gmra.mrb[0].mxu0 %v2982
      %v3027 = vpop.f32.mrb[0].mxu0
      %v3028 = vadd.f32 %v2919, %v3027
      %v3029 = vpop.f32.mrb[0].mxu0
      %v3030 = vadd.f32 %v2921, %v3029
      %v3031 = vpop.f32.mrb[0].mxu0
      %v3032 = vadd.f32 %v2923, %v3031
      %v3033 = vpop.f32.mrb[0].mxu0
      %v3034 = vadd.f32 %v2925, %v3033
      %3035 = vdwg.mxu0
      %3036 = vmatprep.subr.bf16.mxu0 0
      %3037 = vmatpush1.bf16.msra.mxu0 %v2991
      %3038 = vmatprep.subr.bf16.mxu0 0
      %3039 = vmatpush1.bf16.msra.mxu0 0
      %3040 = vmatprep.subr.bf16.mxu0 0
      %3041 = vmatpush1.bf16.msra.mxu0 0
      %3042 = vmatprep.subr.bf16.mxu0 0
      %3043 = vmatpush1.bf16.msra.mxu0 0
      %3044 = vmatprep.subr.bf16.mxu0 0
      %3045 = vmatpush1.bf16.msra.mxu0 0
      %3046 = vmatprep.subr.bf16.mxu0 0
      %3047 = vmatpush1.bf16.msra.mxu0 0
      %3048 = vmatprep.subr.bf16.mxu0 0
      %3049 = vmatpush1.bf16.msra.mxu0 0
      %3050 = vmatprep.subr.bf16.mxu0 0
      %3051 = vmatpush1.bf16.msra.mxu0 0
      %3052 = vmatprep.subr.bf16.mxu0 0
      %3053 = vmatpush1.bf16.msra.mxu0 0
      %3054 = vmatprep.subr.bf16.mxu0 0
      %3055 = vmatpush1.bf16.msra.mxu0 0
      %3056 = vmatprep.subr.bf16.mxu0 0
      %3057 = vmatpush1.bf16.msra.mxu0 0
      %3058 = vmatprep.subr.bf16.mxu0 0
      %3059 = vmatpush1.bf16.msra.mxu0 0
      %3060 = vmatprep.subr.bf16.mxu0 0
      %3061 = vmatpush1.bf16.msra.mxu0 0
      %3062 = vmatprep.subr.bf16.mxu0 0
      %3063 = vmatpush1.bf16.msra.mxu0 0
      %3064 = vmatprep.subr.bf16.mxu0 0
      %3065 = vmatpush1.bf16.msra.mxu0 0
      %3066 = vmatprep.subr.bf16.mxu0 0
      %3067 = vmatpush1.bf16.msra.mxu0 0
      %3068 = vmatprep.mubr.bf16.mxu0 0
      %3069 = vmatmul.mubr.bf16.gmra.mrb[0].mxu0 %v2982
      %v3070 = vpop.f32.mrb[0].mxu0
      %v3071 = vadd.f32 %v2962, %v3070
      %v3072 = vpop.f32.mrb[0].mxu0
      %v3073 = vpop.f32.mrb[0].mxu0
      %v3074 = vadd.f32 %v2965, %v3073
      %v3075 = vpop.f32.mrb[0].mxu0
      %3076 = vdwg.mxu0
      %v3077 = vld [vmem:[%s5 + $0x10] sm:$0xf]
      %v3078 = vld [vmem:[%s5 + $0x14] sm:$0xf]
      %v3081 = vunpack.c.l.b16 %v3077
      %v3082 = vunpack.c.l.b16 %v3078
      %v3083 = vpack.c.b16 %v3082, %v3081
      %3084 = vrot.lane.b32.xlu0 %v2857, 126
      %v3085 = vpop.permute.xlu0 %3084
      %3086 = vrot.lane.b32.xlu0 %v2858, 126
      %v3087 = vpop.permute.xlu0 %3086
      %3088 = vrot.lane.b32.xlu0 %v2859, 126
      %v3089 = vpop.permute.xlu0 %3088
      %3090 = vrot.lane.b32.xlu0 %v2860, 126
      %v3091 = vpop.permute.xlu0 %3090
      %v3092 = vsel %vm901, %v3085, %v3087
      %v3093 = vsel %vm901, %v3087, %v3089
      %v3094 = vsel %vm901, %v3089, %v3091
      %v3096 = vsel %vm696, %v3083, 0
      %v3099 = vsel %vm700, %v3092, 0
      %v3102 = vsel %vm700, %v3093, 0
      %v3105 = vsel %vm700, %v3094, 0
      %3107 = vmatprep.subr.bf16.mxu0 %v3102
      %3108 = vmatpush1.bf16.msra.mxu0 %v3099
      %3109 = vmatprep.subr.bf16.mxu0 0
      %3110 = vmatpush1.bf16.msra.mxu0 0
      %3111 = vmatprep.subr.bf16.mxu0 0
      %3112 = vmatpush1.bf16.msra.mxu0 0
      %3113 = vmatprep.subr.bf16.mxu0 0
      %3114 = vmatpush1.bf16.msra.mxu0 0
      %3115 = vmatprep.subr.bf16.mxu0 0
      %3116 = vmatpush1.bf16.msra.mxu0 0
      %3117 = vmatprep.subr.bf16.mxu0 0
      %3118 = vmatpush1.bf16.msra.mxu0 0
      %3119 = vmatprep.subr.bf16.mxu0 0
      %3120 = vmatpush1.bf16.msra.mxu0 0
      %3121 = vmatprep.subr.bf16.mxu0 0
      %3122 = vmatpush1.bf16.msra.mxu0 0
      %3123 = vmatprep.subr.bf16.mxu0 0
      %3124 = vmatpush1.bf16.msra.mxu0 0
      %3125 = vmatprep.subr.bf16.mxu0 0
      %3126 = vmatpush1.bf16.msra.mxu0 0
      %3127 = vmatprep.subr.bf16.mxu0 0
      %3128 = vmatpush1.bf16.msra.mxu0 0
      %3129 = vmatprep.subr.bf16.mxu0 0
      %3130 = vmatpush1.bf16.msra.mxu0 0
      %3131 = vmatprep.subr.bf16.mxu0 0
      %3132 = vmatpush1.bf16.msra.mxu0 0
      %3133 = vmatprep.subr.bf16.mxu0 0
      %3134 = vmatpush1.bf16.msra.mxu0 0
      %3135 = vmatprep.subr.bf16.mxu0 0
      %3136 = vmatpush1.bf16.msra.mxu0 0
      %3137 = vmatprep.subr.bf16.mxu0 0
      %3138 = vmatpush1.bf16.msra.mxu0 0
      %3139 = vmatprep.mubr.bf16.mxu0 0
      %3140 = vmatmul.mubr.bf16.gmra.mrb[0].mxu0 %v3096
      %v3141 = vpop.f32.mrb[0].mxu0
      %v3142 = vadd.f32 0.0, %v3141
      %v3143 = vpop.f32.mrb[0].mxu0
      %v3144 = vadd.f32 0.0, %v3143
      %v3145 = vpop.f32.mrb[0].mxu0
      %v3146 = vadd.f32 0.0, %v3145
      %v3147 = vpop.f32.mrb[0].mxu0
      %v3148 = vadd.f32 0.0, %v3147
      %3149 = vdwg.mxu0
      %3150 = vmatprep.subr.bf16.mxu0 0
      %3151 = vmatpush1.bf16.msra.mxu0 %v3105
      %3152 = vmatprep.subr.bf16.mxu0 0
      %3153 = vmatpush1.bf16.msra.mxu0 0
      %3154 = vmatprep.subr.bf16.mxu0 0
      %3155 = vmatpush1.bf16.msra.mxu0 0
      %3156 = vmatprep.subr.bf16.mxu0 0
      %3157 = vmatpush1.bf16.msra.mxu0 0
      %3158 = vmatprep.subr.bf16.mxu0 0
      %3159 = vmatpush1.bf16.msra.mxu0 0
      %3160 = vmatprep.subr.bf16.mxu0 0
      %3161 = vmatpush1.bf16.msra.mxu0 0
      %3162 = vmatprep.subr.bf16.mxu0 0
      %3163 = vmatpush1.bf16.msra.mxu0 0
      %3164 = vmatprep.subr.bf16.mxu0 0
      %3165 = vmatpush1.bf16.msra.mxu0 0
      %3166 = vmatprep.subr.bf16.mxu0 0
      %3167 = vmatpush1.bf16.msra.mxu0 0
      %3168 = vmatprep.subr.bf16.mxu0 0
      %3169 = vmatpush1.bf16.msra.mxu0 0
      %3170 = vmatprep.subr.bf16.mxu0 0
      %3171 = vmatpush1.bf16.msra.mxu0 0
      %3172 = vmatprep.subr.bf16.mxu0 0
      %3173 = vmatpush1.bf16.msra.mxu0 0
      %3174 = vmatprep.subr.bf16.mxu0 0
      %3175 = vmatpush1.bf16.msra.mxu0 0
      %3176 = vmatprep.subr.bf16.mxu0 0
      %3177 = vmatpush1.bf16.msra.mxu0 0
      %3178 = vmatprep.subr.bf16.mxu0 0
      %3179 = vmatpush1.bf16.msra.mxu0 0
      %3180 = vmatprep.subr.bf16.mxu0 0
      %3181 = vmatpush1.bf16.msra.mxu0 0
      %3182 = vmatprep.mubr.bf16.mxu0 0
      %3183 = vmatmul.mubr.bf16.gmra.mrb[0].mxu0 %v3096
      %v3184 = vpop.f32.mrb[0].mxu0
      %v3185 = vadd.f32 0.0, %v3184
      %v3186 = vpop.f32.mrb[0].mxu0
      %v3187 = vpop.f32.mrb[0].mxu0
      %v3188 = vadd.f32 0.0, %v3187
      %v3189 = vpop.f32.mrb[0].mxu0
      %3190 = vdwg.mxu0
      %v3191 = vadd.f32 %v3028, %v3142
      %v3192 = vadd.f32 %v3030, %v3144
      %v3193 = vadd.f32 %v3071, %v3185
      %v3194 = vadd.f32 %v3032, %v3146
      %v3195 = vadd.f32 %v3034, %v3148
      %v3196 = vadd.f32 %v3074, %v3188
      %v3197 = vld [vmem:[%s5 + $0x18] sm:$0xf]
      %v3198 = vld [vmem:[%s5 + $0x1c] sm:$0xf]
      %v3201 = vunpack.c.l.b16 %v3197
      %v3202 = vunpack.c.l.b16 %v3198
      %v3203 = vpack.c.b16 %v3202, %v3201
      %3204 = vrot.lane.b32.xlu0 %v2857, 110
      %v3205 = vpop.permute.xlu0 %3204
      %3206 = vrot.lane.b32.xlu0 %v2858, 110
      %v3207 = vpop.permute.xlu0 %3206
      %3208 = vrot.lane.b32.xlu0 %v2859, 110
      %v3209 = vpop.permute.xlu0 %3208
      %3210 = vrot.lane.b32.xlu0 %v2860, 110
      %v3211 = vpop.permute.xlu0 %3210
      %v3212 = vsel %vm1010, %v3205, %v3207
      %v3213 = vsel %vm1010, %v3207, %v3209
      %v3214 = vsel %vm1010, %v3209, %v3211
      %v3216 = vsel %vm696, %v3203, 0
      %v3219 = vsel %vm700, %v3212, 0
      %v3222 = vsel %vm700, %v3213, 0
      %v3225 = vsel %vm700, %v3214, 0
      %3227 = vmatprep.subr.bf16.mxu0 %v3222
      %3228 = vmatpush1.bf16.msra.mxu0 %v3219
      %3229 = vmatprep.subr.bf16.mxu0 0
      %3230 = vmatpush1.bf16.msra.mxu0 0
      %3231 = vmatprep.subr.bf16.mxu0 0
      %3232 = vmatpush1.bf16.msra.mxu0 0
      %3233 = vmatprep.subr.bf16.mxu0 0
      %3234 = vmatpush1.bf16.msra.mxu0 0
      %3235 = vmatprep.subr.bf16.mxu0 0
      %3236 = vmatpush1.bf16.msra.mxu0 0
      %3237 = vmatprep.subr.bf16.mxu0 0
      %3238 = vmatpush1.bf16.msra.mxu0 0
      %3239 = vmatprep.subr.bf16.mxu0 0
      %3240 = vmatpush1.bf16.msra.mxu0 0
      %3241 = vmatprep.subr.bf16.mxu0 0
      %3242 = vmatpush1.bf16.msra.mxu0 0
      %3243 = vmatprep.subr.bf16.mxu0 0
      %3244 = vmatpush1.bf16.msra.mxu0 0
      %3245 = vmatprep.subr.bf16.mxu0 0
      %3246 = vmatpush1.bf16.msra.mxu0 0
      %3247 = vmatprep.subr.bf16.mxu0 0
      %3248 = vmatpush1.bf16.msra.mxu0 0
      %3249 = vmatprep.subr.bf16.mxu0 0
      %3250 = vmatpush1.bf16.msra.mxu0 0
      %3251 = vmatprep.subr.bf16.mxu0 0
      %3252 = vmatpush1.bf16.msra.mxu0 0
      %3253 = vmatprep.subr.bf16.mxu0 0
      %3254 = vmatpush1.bf16.msra.mxu0 0
      %3255 = vmatprep.subr.bf16.mxu0 0
      %3256 = vmatpush1.bf16.msra.mxu0 0
      %3257 = vmatprep.subr.bf16.mxu0 0
      %3258 = vmatpush1.bf16.msra.mxu0 0
      %3259 = vmatprep.mubr.bf16.mxu0 0
      %3260 = vmatmul.mubr.bf16.gmra.mrb[0].mxu0 %v3216
      %v3261 = vpop.f32.mrb[0].mxu0
      %v3262 = vadd.f32 0.0, %v3261
      %v3263 = vpop.f32.mrb[0].mxu0
      %v3264 = vadd.f32 0.0, %v3263
      %v3265 = vpop.f32.mrb[0].mxu0
      %v3266 = vadd.f32 0.0, %v3265
      %v3267 = vpop.f32.mrb[0].mxu0
      %v3268 = vadd.f32 0.0, %v3267
      %3269 = vdwg.mxu0
      %3270 = vmatprep.subr.bf16.mxu0 0
      %3271 = vmatpush1.bf16.msra.mxu0 %v3225
      %3272 = vmatprep.subr.bf16.mxu0 0
      %3273 = vmatpush1.bf16.msra.mxu0 0
      %3274 = vmatprep.subr.bf16.mxu0 0
      %3275 = vmatpush1.bf16.msra.mxu0 0
      %3276 = vmatprep.subr.bf16.mxu0 0
      %3277 = vmatpush1.bf16.msra.mxu0 0
      %3278 = vmatprep.subr.bf16.mxu0 0
      %3279 = vmatpush1.bf16.msra.mxu0 0
      %3280 = vmatprep.subr.bf16.mxu0 0
      %3281 = vmatpush1.bf16.msra.mxu0 0
      %3282 = vmatprep.subr.bf16.mxu0 0
      %3283 = vmatpush1.bf16.msra.mxu0 0
      %3284 = vmatprep.subr.bf16.mxu0 0
      %3285 = vmatpush1.bf16.msra.mxu0 0
      %3286 = vmatprep.subr.bf16.mxu0 0
      %3287 = vmatpush1.bf16.msra.mxu0 0
      %3288 = vmatprep.subr.bf16.mxu0 0
      %3289 = vmatpush1.bf16.msra.mxu0 0
      %3290 = vmatprep.subr.bf16.mxu0 0
      %3291 = vmatpush1.bf16.msra.mxu0 0
      %3292 = vmatprep.subr.bf16.mxu0 0
      %3293 = vmatpush1.bf16.msra.mxu0 0
      %3294 = vmatprep.subr.bf16.mxu0 0
      %3295 = vmatpush1.bf16.msra.mxu0 0
      %3296 = vmatprep.subr.bf16.mxu0 0
      %3297 = vmatpush1.bf16.msra.mxu0 0
      %3298 = vmatprep.subr.bf16.mxu0 0
      %3299 = vmatpush1.bf16.msra.mxu0 0
      %3300 = vmatprep.subr.bf16.mxu0 0
      %3301 = vmatpush1.bf16.msra.mxu0 0
      %3302 = vmatprep.mubr.bf16.mxu0 0
      %3303 = vmatmul.mubr.bf16.gmra.mrb[0].mxu0 %v3216
      %v3304 = vpop.f32.mrb[0].mxu0
      %v3305 = vadd.f32 0.0, %v3304
      %v3306 = vpop.f32.mrb[0].mxu0
      %v3307 = vpop.f32.mrb[0].mxu0
      %v3308 = vadd.f32 0.0, %v3307
      %v3309 = vpop.f32.mrb[0].mxu0
      %3310 = vdwg.mxu0
      %v3311 = vadd.f32 %v3191, %v3262
      %v3312 = vadd.f32 %v3192, %v3264
      %v3313 = vadd.f32 %v3193, %v3305
      %v3314 = vadd.f32 %v3194, %v3266
      %v3315 = vadd.f32 %v3195, %v3268
      %v3316 = vadd.f32 %v3196, %v3308
      %v3317 = vld [vmem:[%s5 + $0x20] sm:$0xf]
      %v3318 = vld [vmem:[%s5 + $0x24] sm:$0xf]
      %v3321 = vunpack.c.l.b16 %v3317
      %v3322 = vunpack.c.l.b16 %v3318
      %v3323 = vpack.c.b16 %v3322, %v3321
      %3324 = vrot.lane.b32.xlu0 %v2857, 109
      %v3325 = vpop.permute.xlu0 %3324
      %3326 = vrot.lane.b32.xlu0 %v2858, 109
      %v3327 = vpop.permute.xlu0 %3326
      %3328 = vrot.lane.b32.xlu0 %v2859, 109
      %v3329 = vpop.permute.xlu0 %3328
      %3330 = vrot.lane.b32.xlu0 %v2860, 109
      %v3331 = vpop.permute.xlu0 %3330
      %v3332 = vsel %vm1119, %v3325, %v3327
      %v3333 = vsel %vm1119, %v3327, %v3329
      %v3334 = vsel %vm1119, %v3329, %v3331
      %v3336 = vsel %vm696, %v3323, 0
      %v3339 = vsel %vm700, %v3332, 0
      %v3342 = vsel %vm700, %v3333, 0
      %v3345 = vsel %vm700, %v3334, 0
      %3347 = vmatprep.subr.bf16.mxu0 %v3342
      %3348 = vmatpush1.bf16.msra.mxu0 %v3339
      %3349 = vmatprep.subr.bf16.mxu0 0
      %3350 = vmatpush1.bf16.msra.mxu0 0
      %3351 = vmatprep.subr.bf16.mxu0 0
      %3352 = vmatpush1.bf16.msra.mxu0 0
      %3353 = vmatprep.subr.bf16.mxu0 0
      %3354 = vmatpush1.bf16.msra.mxu0 0
      %3355 = vmatprep.subr.bf16.mxu0 0
      %3356 = vmatpush1.bf16.msra.mxu0 0
      %3357 = vmatprep.subr.bf16.mxu0 0
      %3358 = vmatpush1.bf16.msra.mxu0 0
      %3359 = vmatprep.subr.bf16.mxu0 0
      %3360 = vmatpush1.bf16.msra.mxu0 0
      %3361 = vmatprep.subr.bf16.mxu0 0
      %3362 = vmatpush1.bf16.msra.mxu0 0
      %3363 = vmatprep.subr.bf16.mxu0 0
      %3364 = vmatpush1.bf16.msra.mxu0 0
      %3365 = vmatprep.subr.bf16.mxu0 0
      %3366 = vmatpush1.bf16.msra.mxu0 0
      %3367 = vmatprep.subr.bf16.mxu0 0
      %3368 = vmatpush1.bf16.msra.mxu0 0
      %3369 = vmatprep.subr.bf16.mxu0 0
      %3370 = vmatpush1.bf16.msra.mxu0 0
      %3371 = vmatprep.subr.bf16.mxu0 0
      %3372 = vmatpush1.bf16.msra.mxu0 0
      %3373 = vmatprep.subr.bf16.mxu0 0
      %3374 = vmatpush1.bf16.msra.mxu0 0
      %3375 = vmatprep.subr.bf16.mxu0 0
      %3376 = vmatpush1.bf16.msra.mxu0 0
      %3377 = vmatprep.subr.bf16.mxu0 0
      %3378 = vmatpush1.bf16.msra.mxu0 0
      %3379 = vmatprep.mubr.bf16.mxu0 0
      %3380 = vmatmul.mubr.bf16.gmra.mrb[0].mxu0 %v3336
      %v3381 = vpop.f32.mrb[0].mxu0
      %v3382 = vadd.f32 0.0, %v3381
      %v3383 = vpop.f32.mrb[0].mxu0
      %v3384 = vadd.f32 0.0, %v3383
      %v3385 = vpop.f32.mrb[0].mxu0
      %v3386 = vadd.f32 0.0, %v3385
      %v3387 = vpop.f32.mrb[0].mxu0
      %v3388 = vadd.f32 0.0, %v3387
      %3389 = vdwg.mxu0
      %3390 = vmatprep.subr.bf16.mxu0 0
      %3391 = vmatpush1.bf16.msra.mxu0 %v3345
      %3392 = vmatprep.subr.bf16.mxu0 0
      %3393 = vmatpush1.bf16.msra.mxu0 0
      %3394 = vmatprep.subr.bf16.mxu0 0
      %3395 = vmatpush1.bf16.msra.mxu0 0
      %3396 = vmatprep.subr.bf16.mxu0 0
      %3397 = vmatpush1.bf16.msra.mxu0 0
      %3398 = vmatprep.subr.bf16.mxu0 0
      %3399 = vmatpush1.bf16.msra.mxu0 0
      %3400 = vmatprep.subr.bf16.mxu0 0
      %3401 = vmatpush1.bf16.msra.mxu0 0
      %3402 = vmatprep.subr.bf16.mxu0 0
      %3403 = vmatpush1.bf16.msra.mxu0 0
      %3404 = vmatprep.subr.bf16.mxu0 0
      %3405 = vmatpush1.bf16.msra.mxu0 0
      %3406 = vmatprep.subr.bf16.mxu0 0
      %3407 = vmatpush1.bf16.msra.mxu0 0
      %3408 = vmatprep.subr.bf16.mxu0 0
      %3409 = vmatpush1.bf16.msra.mxu0 0
      %3410 = vmatprep.subr.bf16.mxu0 0
      %3411 = vmatpush1.bf16.msra.mxu0 0
      %3412 = vmatprep.subr.bf16.mxu0 0
      %3413 = vmatpush1.bf16.msra.mxu0 0
      %3414 = vmatprep.subr.bf16.mxu0 0
      %3415 = vmatpush1.bf16.msra.mxu0 0
      %3416 = vmatprep.subr.bf16.mxu0 0
      %3417 = vmatpush1.bf16.msra.mxu0 0
      %3418 = vmatprep.subr.bf16.mxu0 0
      %3419 = vmatpush1.bf16.msra.mxu0 0
      %3420 = vmatprep.subr.bf16.mxu0 0
      %3421 = vmatpush1.bf16.msra.mxu0 0
      %3422 = vmatprep.mubr.bf16.mxu0 0
      %3423 = vmatmul.mubr.bf16.gmra.mrb[0].mxu0 %v3336
      %v3424 = vpop.f32.mrb[0].mxu0
      %v3425 = vadd.f32 0.0, %v3424
      %v3426 = vpop.f32.mrb[0].mxu0
      %v3427 = vpop.f32.mrb[0].mxu0
      %v3428 = vadd.f32 0.0, %v3427
      %v3429 = vpop.f32.mrb[0].mxu0
      %3430 = vdwg.mxu0
      %v3431 = vadd.f32 %v3311, %v3382
      %v3432 = vadd.f32 %v3312, %v3384
      %v3433 = vadd.f32 %v3313, %v3425
      %v3434 = vadd.f32 %v3314, %v3386
      %v3435 = vadd.f32 %v3315, %v3388
      %v3436 = vadd.f32 %v3316, %v3428
      %v3437 = vld [vmem:[%s5 + $0x28] sm:$0xf]
      %v3438 = vld [vmem:[%s5 + $0x2c] sm:$0xf]
      %v3441 = vunpack.c.l.b16 %v3437
      %v3442 = vunpack.c.l.b16 %v3438
      %v3443 = vpack.c.b16 %v3442, %v3441
      %3444 = vrot.lane.b32.xlu0 %v2857, 108
      %v3445 = vpop.permute.xlu0 %3444
      %3446 = vrot.lane.b32.xlu0 %v2858, 108
      %v3447 = vpop.permute.xlu0 %3446
      %3448 = vrot.lane.b32.xlu0 %v2859, 108
      %v3449 = vpop.permute.xlu0 %3448
      %3450 = vrot.lane.b32.xlu0 %v2860, 108
      %v3451 = vpop.permute.xlu0 %3450
      %v3452 = vsel %vm1228, %v3445, %v3447
      %v3453 = vsel %vm1228, %v3447, %v3449
      %v3454 = vsel %vm1228, %v3449, %v3451
      %v3456 = vsel %vm696, %v3443, 0
      %v3459 = vsel %vm700, %v3452, 0
      %v3462 = vsel %vm700, %v3453, 0
      %v3465 = vsel %vm700, %v3454, 0
      %3467 = vmatprep.subr.bf16.mxu0 %v3462
      %3468 = vmatpush1.bf16.msra.mxu0 %v3459
      %3469 = vmatprep.subr.bf16.mxu0 0
      %3470 = vmatpush1.bf16.msra.mxu0 0
      %3471 = vmatprep.subr.bf16.mxu0 0
      %3472 = vmatpush1.bf16.msra.mxu0 0
      %3473 = vmatprep.subr.bf16.mxu0 0
      %3474 = vmatpush1.bf16.msra.mxu0 0
      %3475 = vmatprep.subr.bf16.mxu0 0
      %3476 = vmatpush1.bf16.msra.mxu0 0
      %3477 = vmatprep.subr.bf16.mxu0 0
      %3478 = vmatpush1.bf16.msra.mxu0 0
      %3479 = vmatprep.subr.bf16.mxu0 0
      %3480 = vmatpush1.bf16.msra.mxu0 0
      %3481 = vmatprep.subr.bf16.mxu0 0
      %3482 = vmatpush1.bf16.msra.mxu0 0
      %3483 = vmatprep.subr.bf16.mxu0 0
      %3484 = vmatpush1.bf16.msra.mxu0 0
      %3485 = vmatprep.subr.bf16.mxu0 0
      %3486 = vmatpush1.bf16.msra.mxu0 0
      %3487 = vmatprep.subr.bf16.mxu0 0
      %3488 = vmatpush1.bf16.msra.mxu0 0
      %3489 = vmatprep.subr.bf16.mxu0 0
      %3490 = vmatpush1.bf16.msra.mxu0 0
      %3491 = vmatprep.subr.bf16.mxu0 0
      %3492 = vmatpush1.bf16.msra.mxu0 0
      %3493 = vmatprep.subr.bf16.mxu0 0
      %3494 = vmatpush1.bf16.msra.mxu0 0
      %3495 = vmatprep.subr.bf16.mxu0 0
      %3496 = vmatpush1.bf16.msra.mxu0 0
      %3497 = vmatprep.subr.bf16.mxu0 0
      %3498 = vmatpush1.bf16.msra.mxu0 0
      %3499 = vmatprep.mubr.bf16.mxu0 0
      %3500 = vmatmul.mubr.bf16.gmra.mrb[0].mxu0 %v3456
      %v3501 = vpop.f32.mrb[0].mxu0
      %v3502 = vadd.f32 0.0, %v3501
      %v3503 = vpop.f32.mrb[0].mxu0
      %v3504 = vadd.f32 0.0, %v3503
      %v3505 = vpop.f32.mrb[0].mxu0
      %v3506 = vadd.f32 0.0, %v3505
      %v3507 = vpop.f32.mrb[0].mxu0
      %v3508 = vadd.f32 0.0, %v3507
      %3509 = vdwg.mxu0
      %3510 = vmatprep.subr.bf16.mxu0 0
      %3511 = vmatpush1.bf16.msra.mxu0 %v3465
      %3512 = vmatprep.subr.bf16.mxu0 0
      %3513 = vmatpush1.bf16.msra.mxu0 0
      %3514 = vmatprep.subr.bf16.mxu0 0
      %3515 = vmatpush1.bf16.msra.mxu0 0
      %3516 = vmatprep.subr.bf16.mxu0 0
      %3517 = vmatpush1.bf16.msra.mxu0 0
      %3518 = vmatprep.subr.bf16.mxu0 0
      %3519 = vmatpush1.bf16.msra.mxu0 0
      %3520 = vmatprep.subr.bf16.mxu0 0
      %3521 = vmatpush1.bf16.msra.mxu0 0
      %3522 = vmatprep.subr.bf16.mxu0 0
      %3523 = vmatpush1.bf16.msra.mxu0 0
      %3524 = vmatprep.subr.bf16.mxu0 0
      %3525 = vmatpush1.bf16.msra.mxu0 0
      %3526 = vmatprep.subr.bf16.mxu0 0
      %3527 = vmatpush1.bf16.msra.mxu0 0
      %3528 = vmatprep.subr.bf16.mxu0 0
      %3529 = vmatpush1.bf16.msra.mxu0 0
      %3530 = vmatprep.subr.bf16.mxu0 0
      %3531 = vmatpush1.bf16.msra.mxu0 0
      %3532 = vmatprep.subr.bf16.mxu0 0
      %3533 = vmatpush1.bf16.msra.mxu0 0
      %3534 = vmatprep.subr.bf16.mxu0 0
      %3535 = vmatpush1.bf16.msra.mxu0 0
      %3536 = vmatprep.subr.bf16.mxu0 0
      %3537 = vmatpush1.bf16.msra.mxu0 0
      %3538 = vmatprep.subr.bf16.mxu0 0
      %3539 = vmatpush1.bf16.msra.mxu0 0
      %3540 = vmatprep.subr.bf16.mxu0 0
      %3541 = vmatpush1.bf16.msra.mxu0 0
      %3542 = vmatprep.mubr.bf16.mxu0 0
      %3543 = vmatmul.mubr.bf16.gmra.mrb[0].mxu0 %v3456
      %v3544 = vpop.f32.mrb[0].mxu0
      %v3545 = vadd.f32 0.0, %v3544
      %v3546 = vpop.f32.mrb[0].mxu0
      %v3547 = vpop.f32.mrb[0].mxu0
      %v3548 = vadd.f32 0.0, %v3547
      %v3549 = vpop.f32.mrb[0].mxu0
      %3550 = vdwg.mxu0
      %v3551 = vadd.f32 %v3431, %v3502
      %v3552 = vadd.f32 %v3432, %v3504
      %v3553 = vadd.f32 %v3433, %v3545
      %v3554 = vadd.f32 %v3434, %v3506
      %v3555 = vadd.f32 %v3435, %v3508
      %v3556 = vadd.f32 %v3436, %v3548
      %v3557 = vld [vmem:[%s5 + $0x30] sm:$0xf]
      %v3558 = vld [vmem:[%s5 + $0x34] sm:$0xf]
      %v3561 = vunpack.c.l.b16 %v3557
      %v3562 = vunpack.c.l.b16 %v3558
      %v3563 = vpack.c.b16 %v3562, %v3561
      %3564 = vrot.lane.b32.xlu0 %v2857, 92
      %v3565 = vpop.permute.xlu0 %3564
      %3566 = vrot.lane.b32.xlu0 %v2858, 92
      %v3567 = vpop.permute.xlu0 %3566
      %3568 = vrot.lane.b32.xlu0 %v2859, 92
      %v3569 = vpop.permute.xlu0 %3568
      %3570 = vrot.lane.b32.xlu0 %v2860, 92
      %v3571 = vpop.permute.xlu0 %3570
      %v3572 = vsel %vm1337, %v3565, %v3567
      %v3573 = vsel %vm1337, %v3567, %v3569
      %v3574 = vsel %vm1337, %v3569, %v3571
      %v3576 = vsel %vm696, %v3563, 0
      %v3579 = vsel %vm700, %v3572, 0
      %v3582 = vsel %vm700, %v3573, 0
      %v3585 = vsel %vm700, %v3574, 0
      %3587 = vmatprep.subr.bf16.mxu0 %v3582
      %3588 = vmatpush1.bf16.msra.mxu0 %v3579
      %3589 = vmatprep.subr.bf16.mxu0 0
      %3590 = vmatpush1.bf16.msra.mxu0 0
      %3591 = vmatprep.subr.bf16.mxu0 0
      %3592 = vmatpush1.bf16.msra.mxu0 0
      %3593 = vmatprep.subr.bf16.mxu0 0
      %3594 = vmatpush1.bf16.msra.mxu0 0
      %3595 = vmatprep.subr.bf16.mxu0 0
      %3596 = vmatpush1.bf16.msra.mxu0 0
      %3597 = vmatprep.subr.bf16.mxu0 0
      %3598 = vmatpush1.bf16.msra.mxu0 0
      %3599 = vmatprep.subr.bf16.mxu0 0
      %3600 = vmatpush1.bf16.msra.mxu0 0
      %3601 = vmatprep.subr.bf16.mxu0 0
      %3602 = vmatpush1.bf16.msra.mxu0 0
      %3603 = vmatprep.subr.bf16.mxu0 0
      %3604 = vmatpush1.bf16.msra.mxu0 0
      %3605 = vmatprep.subr.bf16.mxu0 0
      %3606 = vmatpush1.bf16.msra.mxu0 0
      %3607 = vmatprep.subr.bf16.mxu0 0
      %3608 = vmatpush1.bf16.msra.mxu0 0
      %3609 = vmatprep.subr.bf16.mxu0 0
      %3610 = vmatpush1.bf16.msra.mxu0 0
      %3611 = vmatprep.subr.bf16.mxu0 0
      %3612 = vmatpush1.bf16.msra.mxu0 0
      %3613 = vmatprep.subr.bf16.mxu0 0
      %3614 = vmatpush1.bf16.msra.mxu0 0
      %3615 = vmatprep.subr.bf16.mxu0 0
      %3616 = vmatpush1.bf16.msra.mxu0 0
      %3617 = vmatprep.subr.bf16.mxu0 0
      %3618 = vmatpush1.bf16.msra.mxu0 0
      %3619 = vmatprep.mubr.bf16.mxu0 0
      %3620 = vmatmul.mubr.bf16.gmra.mrb[0].mxu0 %v3576
      %v3621 = vpop.f32.mrb[0].mxu0
      %v3622 = vadd.f32 0.0, %v3621
      %v3623 = vpop.f32.mrb[0].mxu0
      %v3624 = vadd.f32 0.0, %v3623
      %v3625 = vpop.f32.mrb[0].mxu0
      %v3626 = vadd.f32 0.0, %v3625
      %v3627 = vpop.f32.mrb[0].mxu0
      %v3628 = vadd.f32 0.0, %v3627
      %3629 = vdwg.mxu0
      %3630 = vmatprep.subr.bf16.mxu0 0
      %3631 = vmatpush1.bf16.msra.mxu0 %v3585
      %3632 = vmatprep.subr.bf16.mxu0 0
      %3633 = vmatpush1.bf16.msra.mxu0 0
      %3634 = vmatprep.subr.bf16.mxu0 0
      %3635 = vmatpush1.bf16.msra.mxu0 0
      %3636 = vmatprep.subr.bf16.mxu0 0
      %3637 = vmatpush1.bf16.msra.mxu0 0
      %3638 = vmatprep.subr.bf16.mxu0 0
      %3639 = vmatpush1.bf16.msra.mxu0 0
      %3640 = vmatprep.subr.bf16.mxu0 0
      %3641 = vmatpush1.bf16.msra.mxu0 0
      %3642 = vmatprep.subr.bf16.mxu0 0
      %3643 = vmatpush1.bf16.msra.mxu0 0
      %3644 = vmatprep.subr.bf16.mxu0 0
      %3645 = vmatpush1.bf16.msra.mxu0 0
      %3646 = vmatprep.subr.bf16.mxu0 0
      %3647 = vmatpush1.bf16.msra.mxu0 0
      %3648 = vmatprep.subr.bf16.mxu0 0
      %3649 = vmatpush1.bf16.msra.mxu0 0
      %3650 = vmatprep.subr.bf16.mxu0 0
      %3651 = vmatpush1.bf16.msra.mxu0 0
      %3652 = vmatprep.subr.bf16.mxu0 0
      %3653 = vmatpush1.bf16.msra.mxu0 0
      %3654 = vmatprep.subr.bf16.mxu0 0
      %3655 = vmatpush1.bf16.msra.mxu0 0
      %3656 = vmatprep.subr.bf16.mxu0 0
      %3657 = vmatpush1.bf16.msra.mxu0 0
      %3658 = vmatprep.subr.bf16.mxu0 0
      %3659 = vmatpush1.bf16.msra.mxu0 0
      %3660 = vmatprep.subr.bf16.mxu0 0
      %3661 = vmatpush1.bf16.msra.mxu0 0
      %3662 = vmatprep.mubr.bf16.mxu0 0
      %3663 = vmatmul.mubr.bf16.gmra.mrb[0].mxu0 %v3576
      %v3664 = vpop.f32.mrb[0].mxu0
      %v3665 = vadd.f32 0.0, %v3664
      %v3666 = vpop.f32.mrb[0].mxu0
      %v3667 = vpop.f32.mrb[0].mxu0
      %v3668 = vadd.f32 0.0, %v3667
      %v3669 = vpop.f32.mrb[0].mxu0
      %3670 = vdwg.mxu0
      %v3671 = vadd.f32 %v3551, %v3622
      %v3672 = vadd.f32 %v3552, %v3624
      %v3673 = vadd.f32 %v3553, %v3665
      %v3674 = vadd.f32 %v3554, %v3626
      %v3675 = vadd.f32 %v3555, %v3628
      %v3676 = vadd.f32 %v3556, %v3668
      %v3677 = vld [vmem:[%s5 + $0x38] sm:$0xf]
      %v3678 = vld [vmem:[%s5 + $0x3c] sm:$0xf]
      %v3681 = vunpack.c.l.b16 %v3677
      %v3682 = vunpack.c.l.b16 %v3678
      %v3683 = vpack.c.b16 %v3682, %v3681
      %3684 = vrot.lane.b32.xlu0 %v2857, 91
      %v3685 = vpop.permute.xlu0 %3684
      %3686 = vrot.lane.b32.xlu0 %v2858, 91
      %v3687 = vpop.permute.xlu0 %3686
      %3688 = vrot.lane.b32.xlu0 %v2859, 91
      %v3689 = vpop.permute.xlu0 %3688
      %3690 = vrot.lane.b32.xlu0 %v2860, 91
      %v3691 = vpop.permute.xlu0 %3690
      %v3692 = vsel %vm1446, %v3685, %v3687
      %v3693 = vsel %vm1446, %v3687, %v3689
      %v3694 = vsel %vm1446, %v3689, %v3691
      %v3696 = vsel %vm696, %v3683, 0
      %v3699 = vsel %vm700, %v3692, 0
      %v3702 = vsel %vm700, %v3693, 0
      %v3705 = vsel %vm700, %v3694, 0
      %3707 = vmatprep.subr.bf16.mxu0 %v3702
      %3708 = vmatpush1.bf16.msra.mxu0 %v3699
      %3709 = vmatprep.subr.bf16.mxu0 0
      %3710 = vmatpush1.bf16.msra.mxu0 0
      %3711 = vmatprep.subr.bf16.mxu0 0
      %3712 = vmatpush1.bf16.msra.mxu0 0
      %3713 = vmatprep.subr.bf16.mxu0 0
      %3714 = vmatpush1.bf16.msra.mxu0 0
      %3715 = vmatprep.subr.bf16.mxu0 0
      %3716 = vmatpush1.bf16.msra.mxu0 0
      %3717 = vmatprep.subr.bf16.mxu0 0
      %3718 = vmatpush1.bf16.msra.mxu0 0
      %3719 = vmatprep.subr.bf16.mxu0 0
      %3720 = vmatpush1.bf16.msra.mxu0 0
      %3721 = vmatprep.subr.bf16.mxu0 0
      %3722 = vmatpush1.bf16.msra.mxu0 0
      %3723 = vmatprep.subr.bf16.mxu0 0
      %3724 = vmatpush1.bf16.msra.mxu0 0
      %3725 = vmatprep.subr.bf16.mxu0 0
      %3726 = vmatpush1.bf16.msra.mxu0 0
      %3727 = vmatprep.subr.bf16.mxu0 0
      %3728 = vmatpush1.bf16.msra.mxu0 0
      %3729 = vmatprep.subr.bf16.mxu0 0
      %3730 = vmatpush1.bf16.msra.mxu0 0
      %3731 = vmatprep.subr.bf16.mxu0 0
      %3732 = vmatpush1.bf16.msra.mxu0 0
      %3733 = vmatprep.subr.bf16.mxu0 0
      %3734 = vmatpush1.bf16.msra.mxu0 0
      %3735 = vmatprep.subr.bf16.mxu0 0
      %3736 = vmatpush1.bf16.msra.mxu0 0
      %3737 = vmatprep.subr.bf16.mxu0 0
      %3738 = vmatpush1.bf16.msra.mxu0 0
      %3739 = vmatprep.mubr.bf16.mxu0 0
      %3740 = vmatmul.mubr.bf16.gmra.mrb[0].mxu0 %v3696
      %v3741 = vpop.f32.mrb[0].mxu0
      %v3742 = vadd.f32 0.0, %v3741
      %v3743 = vpop.f32.mrb[0].mxu0
      %v3744 = vadd.f32 0.0, %v3743
      %v3745 = vpop.f32.mrb[0].mxu0
      %v3746 = vadd.f32 0.0, %v3745
      %v3747 = vpop.f32.mrb[0].mxu0
      %v3748 = vadd.f32 0.0, %v3747
      %3749 = vdwg.mxu0
      %3750 = vmatprep.subr.bf16.mxu0 0
      %3751 = vmatpush1.bf16.msra.mxu0 %v3705
      %3752 = vmatprep.subr.bf16.mxu0 0
      %3753 = vmatpush1.bf16.msra.mxu0 0
      %3754 = vmatprep.subr.bf16.mxu0 0
      %3755 = vmatpush1.bf16.msra.mxu0 0
      %3756 = vmatprep.subr.bf16.mxu0 0
      %3757 = vmatpush1.bf16.msra.mxu0 0
      %3758 = vmatprep.subr.bf16.mxu0 0
      %3759 = vmatpush1.bf16.msra.mxu0 0
      %3760 = vmatprep.subr.bf16.mxu0 0
      %3761 = vmatpush1.bf16.msra.mxu0 0
      %3762 = vmatprep.subr.bf16.mxu0 0
      %3763 = vmatpush1.bf16.msra.mxu0 0
      %3764 = vmatprep.subr.bf16.mxu0 0
      %3765 = vmatpush1.bf16.msra.mxu0 0
      %3766 = vmatprep.subr.bf16.mxu0 0
      %3767 = vmatpush1.bf16.msra.mxu0 0
      %3768 = vmatprep.subr.bf16.mxu0 0
      %3769 = vmatpush1.bf16.msra.mxu0 0
      %3770 = vmatprep.subr.bf16.mxu0 0
      %3771 = vmatpush1.bf16.msra.mxu0 0
      %3772 = vmatprep.subr.bf16.mxu0 0
      %3773 = vmatpush1.bf16.msra.mxu0 0
      %3774 = vmatprep.subr.bf16.mxu0 0
      %3775 = vmatpush1.bf16.msra.mxu0 0
      %3776 = vmatprep.subr.bf16.mxu0 0
      %3777 = vmatpush1.bf16.msra.mxu0 0
      %3778 = vmatprep.subr.bf16.mxu0 0
      %3779 = vmatpush1.bf16.msra.mxu0 0
      %3780 = vmatprep.subr.bf16.mxu0 0
      %3781 = vmatpush1.bf16.msra.mxu0 0
      %3782 = vmatprep.mubr.bf16.mxu0 0
      %3783 = vmatmul.mubr.bf16.gmra.mrb[0].mxu0 %v3696
      %v3784 = vpop.f32.mrb[0].mxu0
      %v3785 = vadd.f32 0.0, %v3784
      %v3786 = vpop.f32.mrb[0].mxu0
      %v3787 = vpop.f32.mrb[0].mxu0
      %v3788 = vadd.f32 0.0, %v3787
      %v3789 = vpop.f32.mrb[0].mxu0
      %3790 = vdwg.mxu0
      %v3791 = vadd.f32 %v3671, %v3742
      %v3792 = vadd.f32 %v3672, %v3744
      %v3793 = vadd.f32 %v3673, %v3785
      %v3794 = vadd.f32 %v3674, %v3746
      %v3795 = vadd.f32 %v3675, %v3748
      %v3796 = vadd.f32 %v3676, %v3788
      %v3797 = vld [vmem:[%s5 + $0x40] sm:$0xf]
      %v3798 = vld [vmem:[%s5 + $0x44] sm:$0xf]
      %v3801 = vunpack.c.l.b16 %v3797
      %v3802 = vunpack.c.l.b16 %v3798
      %v3803 = vpack.c.b16 %v3802, %v3801
      %3804 = vrot.lane.b32.xlu0 %v2857, 90
      %v3805 = vpop.permute.xlu0 %3804
      %3806 = vrot.lane.b32.xlu0 %v2858, 90
      %v3807 = vpop.permute.xlu0 %3806
      %3808 = vrot.lane.b32.xlu0 %v2859, 90
      %v3809 = vpop.permute.xlu0 %3808
      %3810 = vrot.lane.b32.xlu0 %v2860, 90
      %v3811 = vpop.permute.xlu0 %3810
      %v3812 = vsel %vm1555, %v3805, %v3807
      %v3813 = vsel %vm1555, %v3807, %v3809
      %v3814 = vsel %vm1555, %v3809, %v3811
      %v3816 = vsel %vm696, %v3803, 0
      %v3819 = vsel %vm700, %v3812, 0
      %v3822 = vsel %vm700, %v3813, 0
      %v3825 = vsel %vm700, %v3814, 0
      %3827 = vmatprep.subr.bf16.mxu0 %v3822
      %3828 = vmatpush1.bf16.msra.mxu0 %v3819
      %3829 = vmatprep.subr.bf16.mxu0 0
      %3830 = vmatpush1.bf16.msra.mxu0 0
      %3831 = vmatprep.subr.bf16.mxu0 0
      %3832 = vmatpush1.bf16.msra.mxu0 0
      %3833 = vmatprep.subr.bf16.mxu0 0
      %3834 = vmatpush1.bf16.msra.mxu0 0
      %3835 = vmatprep.subr.bf16.mxu0 0
      %3836 = vmatpush1.bf16.msra.mxu0 0
      %3837 = vmatprep.subr.bf16.mxu0 0
      %3838 = vmatpush1.bf16.msra.mxu0 0
      %3839 = vmatprep.subr.bf16.mxu0 0
      %3840 = vmatpush1.bf16.msra.mxu0 0
      %3841 = vmatprep.subr.bf16.mxu0 0
      %3842 = vmatpush1.bf16.msra.mxu0 0
      %3843 = vmatprep.subr.bf16.mxu0 0
      %3844 = vmatpush1.bf16.msra.mxu0 0
      %3845 = vmatprep.subr.bf16.mxu0 0
      %3846 = vmatpush1.bf16.msra.mxu0 0
      %3847 = vmatprep.subr.bf16.mxu0 0
      %3848 = vmatpush1.bf16.msra.mxu0 0
      %3849 = vmatprep.subr.bf16.mxu0 0
      %3850 = vmatpush1.bf16.msra.mxu0 0
      %3851 = vmatprep.subr.bf16.mxu0 0
      %3852 = vmatpush1.bf16.msra.mxu0 0
      %3853 = vmatprep.subr.bf16.mxu0 0
      %3854 = vmatpush1.bf16.msra.mxu0 0
      %3855 = vmatprep.subr.bf16.mxu0 0
      %3856 = vmatpush1.bf16.msra.mxu0 0
      %3857 = vmatprep.subr.bf16.mxu0 0
      %3858 = vmatpush1.bf16.msra.mxu0 0
      %3859 = vmatprep.mubr.bf16.mxu0 0
      %3860 = vmatmul.mubr.bf16.gmra.mrb[0].mxu0 %v3816
      %v3861 = vpop.f32.mrb[0].mxu0
      %v3862 = vadd.f32 0.0, %v3861
      %v3863 = vpop.f32.mrb[0].mxu0
      %v3864 = vadd.f32 0.0, %v3863
      %v3865 = vpop.f32.mrb[0].mxu0
      %v3866 = vadd.f32 0.0, %v3865
      %v3867 = vpop.f32.mrb[0].mxu0
      %v3868 = vadd.f32 0.0, %v3867
      %3869 = vdwg.mxu0
      %3870 = vmatprep.subr.bf16.mxu0 0
      %3871 = vmatpush1.bf16.msra.mxu0 %v3825
      %3872 = vmatprep.subr.bf16.mxu0 0
      %3873 = vmatpush1.bf16.msra.mxu0 0
      %3874 = vmatprep.subr.bf16.mxu0 0
      %3875 = vmatpush1.bf16.msra.mxu0 0
      %3876 = vmatprep.subr.bf16.mxu0 0
      %3877 = vmatpush1.bf16.msra.mxu0 0
      %3878 = vmatprep.subr.bf16.mxu0 0
      %3879 = vmatpush1.bf16.msra.mxu0 0
      %3880 = vmatprep.subr.bf16.mxu0 0
      %3881 = vmatpush1.bf16.msra.mxu0 0
      %3882 = vmatprep.subr.bf16.mxu0 0
      %3883 = vmatpush1.bf16.msra.mxu0 0
      %3884 = vmatprep.subr.bf16.mxu0 0
      %3885 = vmatpush1.bf16.msra.mxu0 0
      %3886 = vmatprep.subr.bf16.mxu0 0
      %3887 = vmatpush1.bf16.msra.mxu0 0
      %3888 = vmatprep.subr.bf16.mxu0 0
      %3889 = vmatpush1.bf16.msra.mxu0 0
      %3890 = vmatprep.subr.bf16.mxu0 0
      %3891 = vmatpush1.bf16.msra.mxu0 0
      %3892 = vmatprep.subr.bf16.mxu0 0
      %3893 = vmatpush1.bf16.msra.mxu0 0
      %3894 = vmatprep.subr.bf16.mxu0 0
      %3895 = vmatpush1.bf16.msra.mxu0 0
      %3896 = vmatprep.subr.bf16.mxu0 0
      %3897 = vmatpush1.bf16.msra.mxu0 0
      %3898 = vmatprep.subr.bf16.mxu0 0
      %3899 = vmatpush1.bf16.msra.mxu0 0
      %3900 = vmatprep.subr.bf16.mxu0 0
      %3901 = vmatpush1.bf16.msra.mxu0 0
      %3902 = vmatprep.mubr.bf16.mxu0 0
      %3903 = vmatmul.mubr.bf16.gmra.mrb[0].mxu0 %v3816
      %v3904 = vpop.f32.mrb[0].mxu0
      %v3905 = vadd.f32 0.0, %v3904
      %v3906 = vpop.f32.mrb[0].mxu0
      %v3907 = vpop.f32.mrb[0].mxu0
      %v3908 = vadd.f32 0.0, %v3907
      %v3909 = vpop.f32.mrb[0].mxu0
      %3910 = vdwg.mxu0
      %v3911 = vadd.f32 %v3791, %v3862
      %v3912 = vadd.f32 %v3792, %v3864
      %v3913 = vadd.f32 %v3793, %v3905
      %v3914 = vadd.f32 %v3794, %v3866
      %v3915 = vadd.f32 %v3795, %v3868
      %v3916 = vadd.f32 %v3796, %v3908
      %v3917 = vpack.c.bf16 %v3914, %v3911
      %v3918 = vpack.c.bf16 %v3915, %v3912
      %v3919 = vpack.c.bf16 %v3916, %v3913
      %v3920 = vld [vmem:[%s13] sm:$0xf]
      %v3921 = vld [vmem:[%s13 + $0x4] sm:$0xf]
      %v3922 = vld [vmem:[%s13 + $0x8] sm:$0xf]
      %v3923 = vld [vmem:[%s13 + $0xc] sm:$0xf]
      %v3924 = vld [vmem:[%s13 + $0x10] sm:$0xf]
      %v3925 = vld [vmem:[%s13 + $0x14] sm:$0xf]
      %v3926 = vld [vmem:[%s13 + $0x18] sm:$0xf]
      %v3927 = vld [vmem:[%s13 + $0x1c] sm:$0xf]
      %v3928 = vld [vmem:[%s13 + $0x20] sm:$0xf]
      %v3929 = vld [vmem:[%s13 + $0x24] sm:$0xf]
      %v3930 = vld [vmem:[%s13 + $0x28] sm:$0xf]
      %v3931 = vld [vmem:[%s13 + $0x2c] sm:$0xf]
      %v3932 = vld [vmem:[%s13 + $0x30] sm:$0xf]
      %v3933 = vld [vmem:[%s13 + $0x34] sm:$0xf]
      %v3934 = vld [vmem:[%s13 + $0x38] sm:$0xf]
      %v3935 = vld [vmem:[%s13 + $0x3c] sm:$0xf]
      %v3936 = vld [vmem:[%s13 + $0x40] sm:$0xf]
      %v3937 = vld [vmem:[%s13 + $0x44] sm:$0xf]
      %v3938 = vld [vmem:[%s13 + $0x48] sm:$0xf]
      %v3939 = vld [vmem:[%s13 + $0x4c] sm:$0xf]
      %v3940 = vld [vmem:[%s13 + $0x50] sm:$0xf]
      %v3941 = vld [vmem:[%s13 + $0x54] sm:$0xf]
      %v3942 = vld [vmem:[%s13 + $0x58] sm:$0xf]
      %v3943 = vld [vmem:[%s13 + $0x5c] sm:$0xf]
      %v3944 = vld [vmem:[%s13 + $0x60] sm:$0xf]
      %v3945 = vld [vmem:[%s13 + $0x64] sm:$0xf]
      %v3946 = vld [vmem:[%s13 + $0x68] sm:$0xf]
      %v3947 = vld [vmem:[%s13 + $0x6c] sm:$0xf]
      %v3948 = vld [vmem:[%s13 + $0x70] sm:$0xf]
      %v3949 = vld [vmem:[%s13 + $0x74] sm:$0xf]
      %v3950 = vld [vmem:[%s13 + $0x78] sm:$0xf]
      %v3951 = vld [vmem:[%s13 + $0x7c] sm:$0xf]
      %v3952 = vld [vmem:[%s13 + $0x80] sm:$0xf]
      %v3953 = vld [vmem:[%s13 + $0x84] sm:$0xf]
      %v3954 = vld [vmem:[%s13 + $0x88] sm:$0xf]
      %v3955 = vld [vmem:[%s13 + $0x8c] sm:$0xf]
      %v3956 = vld [vmem:[%s13 + $0x90] sm:$0xf]
      %v3957 = vld [vmem:[%s13 + $0x94] sm:$0xf]
      %v3958 = vld [vmem:[%s13 + $0x98] sm:$0xf]
      %v3959 = vld [vmem:[%s13 + $0x9c] sm:$0xf]
      %v3960 = vld [vmem:[%s13 + $0xa0] sm:$0xf]
      %v3961 = vld [vmem:[%s13 + $0xa4] sm:$0xf]
      %v3962 = vld [vmem:[%s13 + $0xa8] sm:$0xf]
      %v3963 = vld [vmem:[%s13 + $0xac] sm:$0xf]
      %v3964 = vld [vmem:[%s13 + $0xb0] sm:$0xf]
      %v3965 = vld [vmem:[%s13 + $0xb4] sm:$0xf]
      %v3966 = vld [vmem:[%s13 + $0xb8] sm:$0xf]
      %v3967 = vld [vmem:[%s13 + $0xbc] sm:$0xf]
      %v4016 = vunpack.c.l.b16 %v3920
      %v4017 = vunpack.c.l.b16 %v3921
      %v4018 = vunpack.c.l.b16 %v3922
      %v4019 = vunpack.c.l.b16 %v3923
      %v4020 = vunpack.c.l.b16 %v3924
      %v4021 = vunpack.c.l.b16 %v3925
      %v4022 = vunpack.c.l.b16 %v3926
      %v4023 = vunpack.c.l.b16 %v3927
      %v4024 = vunpack.c.l.b16 %v3928
      %v4025 = vunpack.c.l.b16 %v3929
      %v4026 = vunpack.c.l.b16 %v3930
      %v4027 = vunpack.c.l.b16 %v3931
      %v4028 = vunpack.c.l.b16 %v3932
      %v4029 = vunpack.c.l.b16 %v3933
      %v4030 = vunpack.c.l.b16 %v3934
      %v4031 = vunpack.c.l.b16 %v3935
      %v4032 = vunpack.c.l.b16 %v3936
      %v4033 = vunpack.c.l.b16 %v3937
      %v4034 = vunpack.c.l.b16 %v3938
      %v4035 = vunpack.c.l.b16 %v3939
      %v4036 = vunpack.c.l.b16 %v3940
      %v4037 = vunpack.c.l.b16 %v3941
      %v4038 = vunpack.c.l.b16 %v3942
      %v4039 = vunpack.c.l.b16 %v3943
      %v4040 = vunpack.c.l.b16 %v3944
      %v4041 = vunpack.c.l.b16 %v3945
      %v4042 = vunpack.c.l.b16 %v3946
      %v4043 = vunpack.c.l.b16 %v3947
      %v4044 = vunpack.c.l.b16 %v3948
      %v4045 = vunpack.c.l.b16 %v3949
      %v4046 = vunpack.c.l.b16 %v3950
      %v4047 = vunpack.c.l.b16 %v3951
      %v4048 = vunpack.c.l.b16 %v3952
      %v4049 = vunpack.c.l.b16 %v3953
      %v4050 = vunpack.c.l.b16 %v3954
      %v4051 = vunpack.c.l.b16 %v3955
      %v4052 = vunpack.c.l.b16 %v3956
      %v4053 = vunpack.c.l.b16 %v3957
      %v4054 = vunpack.c.l.b16 %v3958
      %v4055 = vunpack.c.l.b16 %v3959
      %v4056 = vunpack.c.l.b16 %v3960
      %v4057 = vunpack.c.l.b16 %v3961
      %v4058 = vunpack.c.l.b16 %v3962
      %v4059 = vunpack.c.l.b16 %v3963
      %v4060 = vunpack.c.l.b16 %v3964
      %v4061 = vunpack.c.l.b16 %v3965
      %v4062 = vunpack.c.l.b16 %v3966
      %v4063 = vunpack.c.l.b16 %v3967
      %v4064 = vpack.c.b16 %v4017, %v4016
      %v4065 = vpack.c.b16 %v4019, %v4018
      %v4066 = vpack.c.b16 %v4021, %v4020
      %v4067 = vpack.c.b16 %v4023, %v4022
      %v4068 = vpack.c.b16 %v4025, %v4024
      %v4069 = vpack.c.b16 %v4027, %v4026
      %v4070 = vpack.c.b16 %v4029, %v4028
      %v4071 = vpack.c.b16 %v4031, %v4030
      %v4072 = vpack.c.b16 %v4033, %v4032
      %v4073 = vpack.c.b16 %v4035, %v4034
      %v4074 = vpack.c.b16 %v4037, %v4036
      %v4075 = vpack.c.b16 %v4039, %v4038
      %v4076 = vpack.c.b16 %v4041, %v4040
      %v4077 = vpack.c.b16 %v4043, %v4042
      %v4078 = vpack.c.b16 %v4045, %v4044
      %v4079 = vpack.c.b16 %v4047, %v4046
      %v4080 = vpack.c.b16 %v4049, %v4048
      %v4081 = vpack.c.b16 %v4051, %v4050
      %v4082 = vpack.c.b16 %v4053, %v4052
      %v4083 = vpack.c.b16 %v4055, %v4054
      %v4084 = vpack.c.b16 %v4057, %v4056
      %v4085 = vpack.c.b16 %v4059, %v4058
      %v4086 = vpack.c.b16 %v4061, %v4060
      %v4087 = vpack.c.b16 %v4063, %v4062
      %4112 = vmatprep.subr.bf16.mxu0 0
      %4113 = vmatpush1.bf16.msra.mxu0 %v4064
      %4114 = vmatprep.subr.bf16.mxu0 0
      %4115 = vmatpush1.bf16.msra.mxu0 %v4065
      %4116 = vmatprep.subr.bf16.mxu0 0
      %4117 = vmatpush1.bf16.msra.mxu0 %v4066
      %4118 = vmatprep.subr.bf16.mxu0 0
      %4119 = vmatpush1.bf16.msra.mxu0 %v4067
      %4120 = vmatprep.subr.bf16.mxu0 0
      %4121 = vmatpush1.bf16.msra.mxu0 %v4068
      %4122 = vmatprep.subr.bf16.mxu0 0
      %4123 = vmatpush1.bf16.msra.mxu0 %v4069
      %4124 = vmatprep.subr.bf16.mxu0 0
      %4125 = vmatpush1.bf16.msra.mxu0 %v4070
      %4126 = vmatprep.subr.bf16.mxu0 0
      %4127 = vmatpush1.bf16.msra.mxu0 %v4071
      %4128 = vmatprep.subr.bf16.mxu0 0
      %4129 = vmatpush1.bf16.msra.mxu0 %v4072
      %4130 = vmatprep.subr.bf16.mxu0 0
      %4131 = vmatpush1.bf16.msra.mxu0 %v4073
      %4132 = vmatprep.subr.bf16.mxu0 0
      %4133 = vmatpush1.bf16.msra.mxu0 %v4074
      %4134 = vmatprep.subr.bf16.mxu0 0
      %4135 = vmatpush1.bf16.msra.mxu0 %v4075
      %4136 = vmatprep.subr.bf16.mxu0 0
      %4137 = vmatpush1.bf16.msra.mxu0 %v4076
      %4138 = vmatprep.subr.bf16.mxu0 0
      %4139 = vmatpush1.bf16.msra.mxu0 %v4077
      %4140 = vmatprep.subr.bf16.mxu0 0
      %4141 = vmatpush1.bf16.msra.mxu0 %v4078
      %4142 = vmatprep.subr.bf16.mxu0 0
      %4143 = vmatpush1.bf16.msra.mxu0 %v4079
      %4144 = vmatprep.mubr.bf16.mxu0 %v3918
      %4145 = vmatmul.mubr.bf16.gmra.mrb[0].mxu0 %v3917
      %v4146 = vpop.f32.mrb[0].mxu0
      %v4147 = vadd.f32 0.0, %v4146
      %v4148 = vpop.f32.mrb[0].mxu0
      %v4149 = vpop.f32.mrb[0].mxu0
      %v4150 = vadd.f32 0.0, %v4149
      %v4151 = vpop.f32.mrb[0].mxu0
      %4152 = vdwg.mxu0
      %4153 = vmatprep.subr.bf16.mxu0 0
      %4154 = vmatpush1.bf16.msra.mxu0 %v4080
      %4155 = vmatprep.subr.bf16.mxu0 0
      %4156 = vmatpush1.bf16.msra.mxu0 %v4081
      %4157 = vmatprep.subr.bf16.mxu0 0
      %4158 = vmatpush1.bf16.msra.mxu0 %v4082
      %4159 = vmatprep.subr.bf16.mxu0 0
      %4160 = vmatpush1.bf16.msra.mxu0 %v4083
      %4161 = vmatprep.subr.bf16.mxu0 0
      %4162 = vmatpush1.bf16.msra.mxu0 %v4084
      %4163 = vmatprep.subr.bf16.mxu0 0
      %4164 = vmatpush1.bf16.msra.mxu0 %v4085
      %4165 = vmatprep.subr.bf16.mxu0 0
      %4166 = vmatpush1.bf16.msra.mxu0 %v4086
      %4167 = vmatprep.subr.bf16.mxu0 0
      %4168 = vmatpush1.bf16.msra.mxu0 %v4087
      %4169 = vmatprep.subr.bf16.mxu0 0
      %4170 = vmatpush1.bf16.msra.mxu0 0
      %4171 = vmatprep.subr.bf16.mxu0 0
      %4172 = vmatpush1.bf16.msra.mxu0 0
      %4173 = vmatprep.subr.bf16.mxu0 0
      %4174 = vmatpush1.bf16.msra.mxu0 0
      %4175 = vmatprep.subr.bf16.mxu0 0
      %4176 = vmatpush1.bf16.msra.mxu0 0
      %4177 = vmatprep.subr.bf16.mxu0 0
      %4178 = vmatpush1.bf16.msra.mxu0 0
      %4179 = vmatprep.subr.bf16.mxu0 0
      %4180 = vmatpush1.bf16.msra.mxu0 0
      %4181 = vmatprep.subr.bf16.mxu0 0
      %4182 = vmatpush1.bf16.msra.mxu0 0
      %4183 = vmatprep.subr.bf16.mxu0 0
      %4184 = vmatpush1.bf16.msra.mxu0 0
      %4185 = vmatprep.mubr.bf16.mxu0 0
      %4186 = vmatmul.mubr.bf16.gmra.mrb[0].mxu0 %v3919
      %v4187 = vpop.f32.mrb[0].mxu0
      %v4188 = vadd.f32 %v4147, %v4187
      %v4189 = vpop.f32.mrb[0].mxu0
      %v4190 = vpop.f32.mrb[0].mxu0
      %v4191 = vadd.f32 %v4150, %v4190
      %v4192 = vpop.f32.mrb[0].mxu0
      %4193 = vdwg.mxu0
      %v4194 = vld [vmem:[%s16] sm:$0x1]
      %v4196 = vlaneseq
      %v4197 = vshrl.u32 %v4196, 7
      %v4198 = vsub.s32 0, %v4197
      %v4199 = vrot.slane %v4194, %v4198
      %v4201 = vmul.f32 %v4188, %v4199
      %v4202 = vmul.f32 %v4191, %v4199
      %4203 = vadd.xlane.f32.xlu0 %v4201
      %v4204 = vpop.xlane.xlu0 %4203
      %4205 = vadd.xlane.f32.xlu0 %v4202
      %v4206 = vpop.xlane.xlu0 %4205
      %v4207 = vmul.f32 %v4204, 0.015625
      %v4208 = vmul.f32 %v4206, 0.015625
      %v4209 = vmul.f32 %v4201, %v4188
      %v4210 = vmul.f32 %v4202, %v4191
      %4211 = vadd.xlane.f32.xlu0 %v4209
      %v4212 = vpop.xlane.xlu0 %4211
      %4213 = vadd.xlane.f32.xlu0 %v4210
      %v4214 = vpop.xlane.xlu0 %4213
      %v4215 = vmul.f32 %v4212, 0.015625
      %v4216 = vmul.f32 %v4214, 0.015625
      %v4217 = vmul.f32 %v4207, %v4207
      %v4218 = vmul.f32 %v4208, %v4208
      %v4219 = vsub.f32 %v4215, %v4217
      %v4220 = vsub.f32 %v4216, %v4218
      %v4221 = vmax.f32 %v4219, 0.0
      %v4222 = vmax.f32 %v4220, 0.0
      %v4223 = vld [vmem:[%s6] sm:$0xff]
      %v4224 = vld [vmem:[%s6 + $0x8] sm:$0xff]
      %v4225 = vadd.f32 %v4221, 1e-05
      %v4226 = vadd.f32 %v4222, 1e-05
      %v4227 = vrsqrt.pop %v4225
      %v4228 = vrsqrt.pop %v4226
      %v4229 = vmul.f32 %v4223, %v4227
      %v4230 = vmul.f32 %v4224, %v4228
      %v4231 = vmul.f32 %v4207, %v4229
      %v4232 = vmul.f32 %v4208, %v4230
      %4235 = vrot.lane.b32.xlu0 %v4231, 1
      %v4236 = vpop.permute.xlu0 %4235
      %4237 = vrot.lane.b32.xlu0 %v4232, 1
      %v4238 = vpop.permute.xlu0 %4237
      %v4241 = vsub.f32 %v4223, %v4236
      %v4242 = vsub.f32 %v4224, %v4238
      %4244 = vset.pattern.permute.xlu0 0
      %4245 = vperm.xlu0 %4244, %v4229
      %v4246 = vpop.permute.xlu0 %4245
      %4249 = vset.pattern.permute.xlu0 0
      %4250 = vperm.xlu0 %4249, %v4230
      %v4251 = vpop.permute.xlu0 %4250
      %v4253 = vmul.f32 %v4188, %v4246
      %v4254 = vmul.f32 %v4191, %v4251
      %4256 = vset.pattern.permute.xlu0 1
      %4257 = vperm.xlu0 %4256, %v4241
      %v4258 = vpop.permute.xlu0 %4257
      %4261 = vset.pattern.permute.xlu0 1
      %4262 = vperm.xlu0 %4261, %v4242
      %v4263 = vpop.permute.xlu0 %4262
      %v4265 = vadd.f32 %v4253, %v4258
      %v4266 = vadd.f32 %v4254, %v4263
      %vm4267 = vcmp.ge.f32.partialorder %v4265, 0.0
      %vm4268 = vcmp.ge.f32.partialorder %v4266, 0.0
      %v4269 = vmul.f32 %v4265, 0.01
      %v4270 = vmul.f32 %v4266, 0.01
      %v4271 = vsel %vm4267, %v4265, %v4269
      %v4272 = vsel %vm4268, %v4266, %v4270
      %v4273 = vmul.f32 %v4271, %v4199
      %v4274 = vmul.f32 %v4272, %v4199
      %v4275 = vpack.c.bf16 %v4274, %v4273
      %4277 = vrot.lane.b32.xlu0 %v4275, 11
      %v4278 = vpop.permute.xlu0 %4277
      %vm4280 = vcmask 1047640
      %4281 = vst.msk [vmem:[#allocation4] sm:$0xff] %vm4280, %v4278
      %vm4282 = vcmask 89088
      %4283 = vst.msk [vmem:[#allocation4 + $0x8] sm:$0xff] %vm4282, %v4278
      %v4284 = vld [vmem:[%s7] sm:$0xf]
      %v4285 = vld [vmem:[%s7 + $0x4] sm:$0xf]
      %v4286 = vld [vmem:[#allocation4] sm:$0xff]
      %v4287 = vld [vmem:[%s7 + $0x8] sm:$0xf]
      %v4288 = vld [vmem:[%s7 + $0xc] sm:$0xf]
      %v4289 = vld [vmem:[#allocation4] sm:$0xff]
      %v4290 = vld [vmem:[#allocation4 + $0x8] sm:$0xff]
      %v4293 = vunpack.c.l.b16 %v4287
      %v4294 = vunpack.c.l.b16 %v4288
      %v4295 = vpack.c.b16 %v4294, %v4293
      %4298 = vrot.lane.b32.xlu0 %v4289, 127
      %v4299 = vpop.permute.xlu0 %4298
      %4300 = vrot.lane.b32.xlu0 %v4290, 127
      %v4301 = vpop.permute.xlu0 %4300
      %v4302 = vsel %vm692, %v4299, %v4301
      %vm4304 = vcmask 130048
      %v4306 = vsel %vm4304, %v4295, 0
      %4308 = vmatprep.subr.bf16.mxu0 0
      %4309 = vmatpush1.bf16.msra.mxu0 %v4302
      %4310 = vmatprep.subr.bf16.mxu0 0
      %4311 = vmatpush1.bf16.msra.mxu0 0
      %4312 = vmatprep.subr.bf16.mxu0 0
      %4313 = vmatpush1.bf16.msra.mxu0 0
      %4314 = vmatprep.subr.bf16.mxu0 0
      %4315 = vmatpush1.bf16.msra.mxu0 0
      %4316 = vmatprep.subr.bf16.mxu0 0
      %4317 = vmatpush1.bf16.msra.mxu0 0
      %4318 = vmatprep.subr.bf16.mxu0 0
      %4319 = vmatpush1.bf16.msra.mxu0 0
      %4320 = vmatprep.subr.bf16.mxu0 0
      %4321 = vmatpush1.bf16.msra.mxu0 0
      %4322 = vmatprep.subr.bf16.mxu0 0
      %4323 = vmatpush1.bf16.msra.mxu0 0
      %4324 = vmatprep.subr.bf16.mxu0 0
      %4325 = vmatpush1.bf16.msra.mxu0 0
      %4326 = vmatprep.subr.bf16.mxu0 0
      %4327 = vmatpush1.bf16.msra.mxu0 0
      %4328 = vmatprep.subr.bf16.mxu0 0
      %4329 = vmatpush1.bf16.msra.mxu0 0
      %4330 = vmatprep.subr.bf16.mxu0 0
      %4331 = vmatpush1.bf16.msra.mxu0 0
      %4332 = vmatprep.subr.bf16.mxu0 0
      %4333 = vmatpush1.bf16.msra.mxu0 0
      %4334 = vmatprep.subr.bf16.mxu0 0
      %4335 = vmatpush1.bf16.msra.mxu0 0
      %4336 = vmatprep.subr.bf16.mxu0 0
      %4337 = vmatpush1.bf16.msra.mxu0 0
      %4338 = vmatprep.subr.bf16.mxu0 0
      %4339 = vmatpush1.bf16.msra.mxu0 0
      %4340 = vmatprep.mubr.bf16.mxu0 0
      %4341 = vmatmul.mubr.bf16.gmra.mrb[0].mxu0 %v4306
      %v4342 = vpop.f32.mrb[0].mxu0
      %v4343 = vadd.f32 0.0, %v4342
      %v4344 = vpop.f32.mrb[0].mxu0
      %v4345 = vpop.f32.mrb[0].mxu0
      %v4346 = vadd.f32 0.0, %v4345
      %v4347 = vpop.f32.mrb[0].mxu0
      %4348 = vdwg.mxu0
      %v4351 = vunpack.c.l.b16 %v4284
      %v4352 = vunpack.c.l.b16 %v4285
      %v4353 = vpack.c.b16 %v4352, %v4351
      %v4355 = vsel %vm4304, %v4353, 0
      %4357 = vmatprep.subr.bf16.mxu0 0
      %4358 = vmatpush1.bf16.msra.mxu0 %v4286
      %4359 = vmatprep.subr.bf16.mxu0 0
      %4360 = vmatpush1.bf16.msra.mxu0 0
      %4361 = vmatprep.subr.bf16.mxu0 0
      %4362 = vmatpush1.bf16.msra.mxu0 0
      %4363 = vmatprep.subr.bf16.mxu0 0
      %4364 = vmatpush1.bf16.msra.mxu0 0
      %4365 = vmatprep.subr.bf16.mxu0 0
      %4366 = vmatpush1.bf16.msra.mxu0 0
      %4367 = vmatprep.subr.bf16.mxu0 0
      %4368 = vmatpush1.bf16.msra.mxu0 0
      %4369 = vmatprep.subr.bf16.mxu0 0
      %4370 = vmatpush1.bf16.msra.mxu0 0
      %4371 = vmatprep.subr.bf16.mxu0 0
      %4372 = vmatpush1.bf16.msra.mxu0 0
      %4373 = vmatprep.subr.bf16.mxu0 0
      %4374 = vmatpush1.bf16.msra.mxu0 0
      %4375 = vmatprep.subr.bf16.mxu0 0
      %4376 = vmatpush1.bf16.msra.mxu0 0
      %4377 = vmatprep.subr.bf16.mxu0 0
      %4378 = vmatpush1.bf16.msra.mxu0 0
      %4379 = vmatprep.subr.bf16.mxu0 0
      %4380 = vmatpush1.bf16.msra.mxu0 0
      %4381 = vmatprep.subr.bf16.mxu0 0
      %4382 = vmatpush1.bf16.msra.mxu0 0
      %4383 = vmatprep.subr.bf16.mxu0 0
      %4384 = vmatpush1.bf16.msra.mxu0 0
      %4385 = vmatprep.subr.bf16.mxu0 0
      %4386 = vmatpush1.bf16.msra.mxu0 0
      %4387 = vmatprep.subr.bf16.mxu0 0
      %4388 = vmatpush1.bf16.msra.mxu0 0
      %4389 = vmatprep.mubr.bf16.mxu0 0
      %4390 = vmatmul.mubr.bf16.gmra.mrb[0].mxu0 %v4355
      %v4391 = vpop.f32.mrb[0].mxu0
      %v4392 = vadd.f32 %v4343, %v4391
      %v4393 = vpop.f32.mrb[0].mxu0
      %v4394 = vpop.f32.mrb[0].mxu0
      %v4395 = vadd.f32 %v4346, %v4394
      %v4396 = vpop.f32.mrb[0].mxu0
      %4397 = vdwg.mxu0
      %v4398 = vld [vmem:[%s7 + $0x10] sm:$0xf]
      %v4399 = vld [vmem:[%s7 + $0x14] sm:$0xf]
      %v4402 = vunpack.c.l.b16 %v4398
      %v4403 = vunpack.c.l.b16 %v4399
      %v4404 = vpack.c.b16 %v4403, %v4402
      %4405 = vrot.lane.b32.xlu0 %v4289, 126
      %v4406 = vpop.permute.xlu0 %4405
      %4407 = vrot.lane.b32.xlu0 %v4290, 126
      %v4408 = vpop.permute.xlu0 %4407
      %v4409 = vsel %vm901, %v4406, %v4408
      %v4412 = vsel %vm4304, %v4404, 0
      %4414 = vmatprep.subr.bf16.mxu0 0
      %4415 = vmatpush1.bf16.msra.mxu0 %v4409
      %4416 = vmatprep.subr.bf16.mxu0 0
      %4417 = vmatpush1.bf16.msra.mxu0 0
      %4418 = vmatprep.subr.bf16.mxu0 0
      %4419 = vmatpush1.bf16.msra.mxu0 0
      %4420 = vmatprep.subr.bf16.mxu0 0
      %4421 = vmatpush1.bf16.msra.mxu0 0
      %4422 = vmatprep.subr.bf16.mxu0 0
      %4423 = vmatpush1.bf16.msra.mxu0 0
      %4424 = vmatprep.subr.bf16.mxu0 0
      %4425 = vmatpush1.bf16.msra.mxu0 0
      %4426 = vmatprep.subr.bf16.mxu0 0
      %4427 = vmatpush1.bf16.msra.mxu0 0
      %4428 = vmatprep.subr.bf16.mxu0 0
      %4429 = vmatpush1.bf16.msra.mxu0 0
      %4430 = vmatprep.subr.bf16.mxu0 0
      %4431 = vmatpush1.bf16.msra.mxu0 0
      %4432 = vmatprep.subr.bf16.mxu0 0
      %4433 = vmatpush1.bf16.msra.mxu0 0
      %4434 = vmatprep.subr.bf16.mxu0 0
      %4435 = vmatpush1.bf16.msra.mxu0 0
      %4436 = vmatprep.subr.bf16.mxu0 0
      %4437 = vmatpush1.bf16.msra.mxu0 0
      %4438 = vmatprep.subr.bf16.mxu0 0
      %4439 = vmatpush1.bf16.msra.mxu0 0
      %4440 = vmatprep.subr.bf16.mxu0 0
      %4441 = vmatpush1.bf16.msra.mxu0 0
      %4442 = vmatprep.subr.bf16.mxu0 0
      %4443 = vmatpush1.bf16.msra.mxu0 0
      %4444 = vmatprep.subr.bf16.mxu0 0
      %4445 = vmatpush1.bf16.msra.mxu0 0
      %4446 = vmatprep.mubr.bf16.mxu0 0
      %4447 = vmatmul.mubr.bf16.gmra.mrb[0].mxu0 %v4412
      %v4448 = vpop.f32.mrb[0].mxu0
      %v4449 = vadd.f32 0.0, %v4448
      %v4450 = vpop.f32.mrb[0].mxu0
      %v4451 = vpop.f32.mrb[0].mxu0
      %v4452 = vadd.f32 0.0, %v4451
      %v4453 = vpop.f32.mrb[0].mxu0
      %4454 = vdwg.mxu0
      %v4455 = vadd.f32 %v4392, %v4449
      %v4456 = vadd.f32 %v4395, %v4452
      %v4457 = vld [vmem:[%s7 + $0x18] sm:$0xf]
      %v4458 = vld [vmem:[%s7 + $0x1c] sm:$0xf]
      %v4461 = vunpack.c.l.b16 %v4457
      %v4462 = vunpack.c.l.b16 %v4458
      %v4463 = vpack.c.b16 %v4462, %v4461
      %4464 = vrot.lane.b32.xlu0 %v4289, 118
      %v4465 = vpop.permute.xlu0 %4464
      %4466 = vrot.lane.b32.xlu0 %v4290, 118
      %v4467 = vpop.permute.xlu0 %4466
      %vm4468 = vcmask 965632
      %v4469 = vsel %vm4468, %v4465, %v4467
      %v4472 = vsel %vm4304, %v4463, 0
      %4474 = vmatprep.subr.bf16.mxu0 0
      %4475 = vmatpush1.bf16.msra.mxu0 %v4469
      %4476 = vmatprep.subr.bf16.mxu0 0
      %4477 = vmatpush1.bf16.msra.mxu0 0
      %4478 = vmatprep.subr.bf16.mxu0 0
      %4479 = vmatpush1.bf16.msra.mxu0 0
      %4480 = vmatprep.subr.bf16.mxu0 0
      %4481 = vmatpush1.bf16.msra.mxu0 0
      %4482 = vmatprep.subr.bf16.mxu0 0
      %4483 = vmatpush1.bf16.msra.mxu0 0
      %4484 = vmatprep.subr.bf16.mxu0 0
      %4485 = vmatpush1.bf16.msra.mxu0 0
      %4486 = vmatprep.subr.bf16.mxu0 0
      %4487 = vmatpush1.bf16.msra.mxu0 0
      %4488 = vmatprep.subr.bf16.mxu0 0
      %4489 = vmatpush1.bf16.msra.mxu0 0
      %4490 = vmatprep.subr.bf16.mxu0 0
      %4491 = vmatpush1.bf16.msra.mxu0 0
      %4492 = vmatprep.subr.bf16.mxu0 0
      %4493 = vmatpush1.bf16.msra.mxu0 0
      %4494 = vmatprep.subr.bf16.mxu0 0
      %4495 = vmatpush1.bf16.msra.mxu0 0
      %4496 = vmatprep.subr.bf16.mxu0 0
      %4497 = vmatpush1.bf16.msra.mxu0 0
      %4498 = vmatprep.subr.bf16.mxu0 0
      %4499 = vmatpush1.bf16.msra.mxu0 0
      %4500 = vmatprep.subr.bf16.mxu0 0
      %4501 = vmatpush1.bf16.msra.mxu0 0
      %4502 = vmatprep.subr.bf16.mxu0 0
      %4503 = vmatpush1.bf16.msra.mxu0 0
      %4504 = vmatprep.subr.bf16.mxu0 0
      %4505 = vmatpush1.bf16.msra.mxu0 0
      %4506 = vmatprep.mubr.bf16.mxu0 0
      %4507 = vmatmul.mubr.bf16.gmra.mrb[0].mxu0 %v4472
      %v4508 = vpop.f32.mrb[0].mxu0
      %v4509 = vadd.f32 0.0, %v4508
      %v4510 = vpop.f32.mrb[0].mxu0
      %v4511 = vpop.f32.mrb[0].mxu0
      %v4512 = vadd.f32 0.0, %v4511
      %v4513 = vpop.f32.mrb[0].mxu0
      %4514 = vdwg.mxu0
      %v4515 = vadd.f32 %v4455, %v4509
      %v4516 = vadd.f32 %v4456, %v4512
      %v4517 = vld [vmem:[%s7 + $0x20] sm:$0xf]
      %v4518 = vld [vmem:[%s7 + $0x24] sm:$0xf]
      %v4521 = vunpack.c.l.b16 %v4517
      %v4522 = vunpack.c.l.b16 %v4518
      %v4523 = vpack.c.b16 %v4522, %v4521
      %4524 = vrot.lane.b32.xlu0 %v4289, 117
      %v4525 = vpop.permute.xlu0 %4524
      %4526 = vrot.lane.b32.xlu0 %v4290, 117
      %v4527 = vpop.permute.xlu0 %4526
      %vm4528 = vcmask 957440
      %v4529 = vsel %vm4528, %v4525, %v4527
      %v4532 = vsel %vm4304, %v4523, 0
      %4534 = vmatprep.subr.bf16.mxu0 0
      %4535 = vmatpush1.bf16.msra.mxu0 %v4529
      %4536 = vmatprep.subr.bf16.mxu0 0
      %4537 = vmatpush1.bf16.msra.mxu0 0
      %4538 = vmatprep.subr.bf16.mxu0 0
      %4539 = vmatpush1.bf16.msra.mxu0 0
      %4540 = vmatprep.subr.bf16.mxu0 0
      %4541 = vmatpush1.bf16.msra.mxu0 0
      %4542 = vmatprep.subr.bf16.mxu0 0
      %4543 = vmatpush1.bf16.msra.mxu0 0
      %4544 = vmatprep.subr.bf16.mxu0 0
      %4545 = vmatpush1.bf16.msra.mxu0 0
      %4546 = vmatprep.subr.bf16.mxu0 0
      %4547 = vmatpush1.bf16.msra.mxu0 0
      %4548 = vmatprep.subr.bf16.mxu0 0
      %4549 = vmatpush1.bf16.msra.mxu0 0
      %4550 = vmatprep.subr.bf16.mxu0 0
      %4551 = vmatpush1.bf16.msra.mxu0 0
      %4552 = vmatprep.subr.bf16.mxu0 0
      %4553 = vmatpush1.bf16.msra.mxu0 0
      %4554 = vmatprep.subr.bf16.mxu0 0
      %4555 = vmatpush1.bf16.msra.mxu0 0
      %4556 = vmatprep.subr.bf16.mxu0 0
      %4557 = vmatpush1.bf16.msra.mxu0 0
      %4558 = vmatprep.subr.bf16.mxu0 0
      %4559 = vmatpush1.bf16.msra.mxu0 0
      %4560 = vmatprep.subr.bf16.mxu0 0
      %4561 = vmatpush1.bf16.msra.mxu0 0
      %4562 = vmatprep.subr.bf16.mxu0 0
      %4563 = vmatpush1.bf16.msra.mxu0 0
      %4564 = vmatprep.subr.bf16.mxu0 0
      %4565 = vmatpush1.bf16.msra.mxu0 0
      %4566 = vmatprep.mubr.bf16.mxu0 0
      %4567 = vmatmul.mubr.bf16.gmra.mrb[0].mxu0 %v4532
      %v4568 = vpop.f32.mrb[0].mxu0
      %v4569 = vadd.f32 0.0, %v4568
      %v4570 = vpop.f32.mrb[0].mxu0
      %v4571 = vpop.f32.mrb[0].mxu0
      %v4572 = vadd.f32 0.0, %v4571
      %v4573 = vpop.f32.mrb[0].mxu0
      %4574 = vdwg.mxu0
      %v4575 = vadd.f32 %v4515, %v4569
      %v4576 = vadd.f32 %v4516, %v4572
      %v4577 = vld [vmem:[%s7 + $0x28] sm:$0xf]
      %v4578 = vld [vmem:[%s7 + $0x2c] sm:$0xf]
      %v4581 = vunpack.c.l.b16 %v4577
      %v4582 = vunpack.c.l.b16 %v4578
      %v4583 = vpack.c.b16 %v4582, %v4581
      %4584 = vrot.lane.b32.xlu0 %v4289, 116
      %v4585 = vpop.permute.xlu0 %4584
      %4586 = vrot.lane.b32.xlu0 %v4290, 116
      %v4587 = vpop.permute.xlu0 %4586
      %vm4588 = vcmask 949248
      %v4589 = vsel %vm4588, %v4585, %v4587
      %v4592 = vsel %vm4304, %v4583, 0
      %4594 = vmatprep.subr.bf16.mxu0 0
      %4595 = vmatpush1.bf16.msra.mxu0 %v4589
      %4596 = vmatprep.subr.bf16.mxu0 0
      %4597 = vmatpush1.bf16.msra.mxu0 0
      %4598 = vmatprep.subr.bf16.mxu0 0
      %4599 = vmatpush1.bf16.msra.mxu0 0
      %4600 = vmatprep.subr.bf16.mxu0 0
      %4601 = vmatpush1.bf16.msra.mxu0 0
      %4602 = vmatprep.subr.bf16.mxu0 0
      %4603 = vmatpush1.bf16.msra.mxu0 0
      %4604 = vmatprep.subr.bf16.mxu0 0
      %4605 = vmatpush1.bf16.msra.mxu0 0
      %4606 = vmatprep.subr.bf16.mxu0 0
      %4607 = vmatpush1.bf16.msra.mxu0 0
      %4608 = vmatprep.subr.bf16.mxu0 0
      %4609 = vmatpush1.bf16.msra.mxu0 0
      %4610 = vmatprep.subr.bf16.mxu0 0
      %4611 = vmatpush1.bf16.msra.mxu0 0
      %4612 = vmatprep.subr.bf16.mxu0 0
      %4613 = vmatpush1.bf16.msra.mxu0 0
      %4614 = vmatprep.subr.bf16.mxu0 0
      %4615 = vmatpush1.bf16.msra.mxu0 0
      %4616 = vmatprep.subr.bf16.mxu0 0
      %4617 = vmatpush1.bf16.msra.mxu0 0
      %4618 = vmatprep.subr.bf16.mxu0 0
      %4619 = vmatpush1.bf16.msra.mxu0 0
      %4620 = vmatprep.subr.bf16.mxu0 0
      %4621 = vmatpush1.bf16.msra.mxu0 0
      %4622 = vmatprep.subr.bf16.mxu0 0
      %4623 = vmatpush1.bf16.msra.mxu0 0
      %4624 = vmatprep.subr.bf16.mxu0 0
      %4625 = vmatpush1.bf16.msra.mxu0 0
      %4626 = vmatprep.mubr.bf16.mxu0 0
      %4627 = vmatmul.mubr.bf16.gmra.mrb[0].mxu0 %v4592
      %v4628 = vpop.f32.mrb[0].mxu0
      %v4629 = vadd.f32 0.0, %v4628
      %v4630 = vpop.f32.mrb[0].mxu0
      %v4631 = vpop.f32.mrb[0].mxu0
      %v4632 = vadd.f32 0.0, %v4631
      %v4633 = vpop.f32.mrb[0].mxu0
      %4634 = vdwg.mxu0
      %v4635 = vadd.f32 %v4575, %v4629
      %v4636 = vadd.f32 %v4576, %v4632
      %v4637 = vld [vmem:[%s7 + $0x30] sm:$0xf]
      %v4638 = vld [vmem:[%s7 + $0x34] sm:$0xf]
      %v4641 = vunpack.c.l.b16 %v4637
      %v4642 = vunpack.c.l.b16 %v4638
      %v4643 = vpack.c.b16 %v4642, %v4641
      %4644 = vrot.lane.b32.xlu0 %v4289, 108
      %v4645 = vpop.permute.xlu0 %4644
      %4646 = vrot.lane.b32.xlu0 %v4290, 108
      %v4647 = vpop.permute.xlu0 %4646
      %v4648 = vsel %vm1228, %v4645, %v4647
      %v4651 = vsel %vm4304, %v4643, 0
      %4653 = vmatprep.subr.bf16.mxu0 0
      %4654 = vmatpush1.bf16.msra.mxu0 %v4648
      %4655 = vmatprep.subr.bf16.mxu0 0
      %4656 = vmatpush1.bf16.msra.mxu0 0
      %4657 = vmatprep.subr.bf16.mxu0 0
      %4658 = vmatpush1.bf16.msra.mxu0 0
      %4659 = vmatprep.subr.bf16.mxu0 0
      %4660 = vmatpush1.bf16.msra.mxu0 0
      %4661 = vmatprep.subr.bf16.mxu0 0
      %4662 = vmatpush1.bf16.msra.mxu0 0
      %4663 = vmatprep.subr.bf16.mxu0 0
      %4664 = vmatpush1.bf16.msra.mxu0 0
      %4665 = vmatprep.subr.bf16.mxu0 0
      %4666 = vmatpush1.bf16.msra.mxu0 0
      %4667 = vmatprep.subr.bf16.mxu0 0
      %4668 = vmatpush1.bf16.msra.mxu0 0
      %4669 = vmatprep.subr.bf16.mxu0 0
      %4670 = vmatpush1.bf16.msra.mxu0 0
      %4671 = vmatprep.subr.bf16.mxu0 0
      %4672 = vmatpush1.bf16.msra.mxu0 0
      %4673 = vmatprep.subr.bf16.mxu0 0
      %4674 = vmatpush1.bf16.msra.mxu0 0
      %4675 = vmatprep.subr.bf16.mxu0 0
      %4676 = vmatpush1.bf16.msra.mxu0 0
      %4677 = vmatprep.subr.bf16.mxu0 0
      %4678 = vmatpush1.bf16.msra.mxu0 0
      %4679 = vmatprep.subr.bf16.mxu0 0
      %4680 = vmatpush1.bf16.msra.mxu0 0
      %4681 = vmatprep.subr.bf16.mxu0 0
      %4682 = vmatpush1.bf16.msra.mxu0 0
      %4683 = vmatprep.subr.bf16.mxu0 0
      %4684 = vmatpush1.bf16.msra.mxu0 0
      %4685 = vmatprep.mubr.bf16.mxu0 0
      %4686 = vmatmul.mubr.bf16.gmra.mrb[0].mxu0 %v4651
      %v4687 = vpop.f32.mrb[0].mxu0
      %v4688 = vadd.f32 0.0, %v4687
      %v4689 = vpop.f32.mrb[0].mxu0
      %v4690 = vpop.f32.mrb[0].mxu0
      %v4691 = vadd.f32 0.0, %v4690
      %v4692 = vpop.f32.mrb[0].mxu0
      %4693 = vdwg.mxu0
      %v4694 = vadd.f32 %v4635, %v4688
      %v4695 = vadd.f32 %v4636, %v4691
      %v4696 = vld [vmem:[%s7 + $0x38] sm:$0xf]
      %v4697 = vld [vmem:[%s7 + $0x3c] sm:$0xf]
      %v4700 = vunpack.c.l.b16 %v4696
      %v4701 = vunpack.c.l.b16 %v4697
      %v4702 = vpack.c.b16 %v4701, %v4700
      %4703 = vrot.lane.b32.xlu0 %v4289, 107
      %v4704 = vpop.permute.xlu0 %4703
      %4705 = vrot.lane.b32.xlu0 %v4290, 107
      %v4706 = vpop.permute.xlu0 %4705
      %vm4707 = vcmask 875520
      %v4708 = vsel %vm4707, %v4704, %v4706
      %v4711 = vsel %vm4304, %v4702, 0
      %4713 = vmatprep.subr.bf16.mxu0 0
      %4714 = vmatpush1.bf16.msra.mxu0 %v4708
      %4715 = vmatprep.subr.bf16.mxu0 0
      %4716 = vmatpush1.bf16.msra.mxu0 0
      %4717 = vmatprep.subr.bf16.mxu0 0
      %4718 = vmatpush1.bf16.msra.mxu0 0
      %4719 = vmatprep.subr.bf16.mxu0 0
      %4720 = vmatpush1.bf16.msra.mxu0 0
      %4721 = vmatprep.subr.bf16.mxu0 0
      %4722 = vmatpush1.bf16.msra.mxu0 0
      %4723 = vmatprep.subr.bf16.mxu0 0
      %4724 = vmatpush1.bf16.msra.mxu0 0
      %4725 = vmatprep.subr.bf16.mxu0 0
      %4726 = vmatpush1.bf16.msra.mxu0 0
      %4727 = vmatprep.subr.bf16.mxu0 0
      %4728 = vmatpush1.bf16.msra.mxu0 0
      %4729 = vmatprep.subr.bf16.mxu0 0
      %4730 = vmatpush1.bf16.msra.mxu0 0
      %4731 = vmatprep.subr.bf16.mxu0 0
      %4732 = vmatpush1.bf16.msra.mxu0 0
      %4733 = vmatprep.subr.bf16.mxu0 0
      %4734 = vmatpush1.bf16.msra.mxu0 0
      %4735 = vmatprep.subr.bf16.mxu0 0
      %4736 = vmatpush1.bf16.msra.mxu0 0
      %4737 = vmatprep.subr.bf16.mxu0 0
      %4738 = vmatpush1.bf16.msra.mxu0 0
      %4739 = vmatprep.subr.bf16.mxu0 0
      %4740 = vmatpush1.bf16.msra.mxu0 0
      %4741 = vmatprep.subr.bf16.mxu0 0
      %4742 = vmatpush1.bf16.msra.mxu0 0
      %4743 = vmatprep.subr.bf16.mxu0 0
      %4744 = vmatpush1.bf16.msra.mxu0 0
      %4745 = vmatprep.mubr.bf16.mxu0 0
      %4746 = vmatmul.mubr.bf16.gmra.mrb[0].mxu0 %v4711
      %v4747 = vpop.f32.mrb[0].mxu0
      %v4748 = vadd.f32 0.0, %v4747
      %v4749 = vpop.f32.mrb[0].mxu0
      %v4750 = vpop.f32.mrb[0].mxu0
      %v4751 = vadd.f32 0.0, %v4750
      %v4752 = vpop.f32.mrb[0].mxu0
      %4753 = vdwg.mxu0
      %v4754 = vadd.f32 %v4694, %v4748
      %v4755 = vadd.f32 %v4695, %v4751
      %v4756 = vld [vmem:[%s7 + $0x40] sm:$0xf]
      %v4757 = vld [vmem:[%s7 + $0x44] sm:$0xf]
      %v4760 = vunpack.c.l.b16 %v4756
      %v4761 = vunpack.c.l.b16 %v4757
      %v4762 = vpack.c.b16 %v4761, %v4760
      %4763 = vrot.lane.b32.xlu0 %v4289, 106
      %v4764 = vpop.permute.xlu0 %4763
      %4765 = vrot.lane.b32.xlu0 %v4290, 106
      %v4766 = vpop.permute.xlu0 %4765
      %vm4767 = vcmask 867328
      %v4768 = vsel %vm4767, %v4764, %v4766
      %v4771 = vsel %vm4304, %v4762, 0
      %4773 = vmatprep.subr.bf16.mxu0 0
      %4774 = vmatpush1.bf16.msra.mxu0 %v4768
      %4775 = vmatprep.subr.bf16.mxu0 0
      %4776 = vmatpush1.bf16.msra.mxu0 0
      %4777 = vmatprep.subr.bf16.mxu0 0
      %4778 = vmatpush1.bf16.msra.mxu0 0
      %4779 = vmatprep.subr.bf16.mxu0 0
      %4780 = vmatpush1.bf16.msra.mxu0 0
      %4781 = vmatprep.subr.bf16.mxu0 0
      %4782 = vmatpush1.bf16.msra.mxu0 0
      %4783 = vmatprep.subr.bf16.mxu0 0
      %4784 = vmatpush1.bf16.msra.mxu0 0
      %4785 = vmatprep.subr.bf16.mxu0 0
      %4786 = vmatpush1.bf16.msra.mxu0 0
      %4787 = vmatprep.subr.bf16.mxu0 0
      %4788 = vmatpush1.bf16.msra.mxu0 0
      %4789 = vmatprep.subr.bf16.mxu0 0
      %4790 = vmatpush1.bf16.msra.mxu0 0
      %4791 = vmatprep.subr.bf16.mxu0 0
      %4792 = vmatpush1.bf16.msra.mxu0 0
      %4793 = vmatprep.subr.bf16.mxu0 0
      %4794 = vmatpush1.bf16.msra.mxu0 0
      %4795 = vmatprep.subr.bf16.mxu0 0
      %4796 = vmatpush1.bf16.msra.mxu0 0
      %4797 = vmatprep.subr.bf16.mxu0 0
      %4798 = vmatpush1.bf16.msra.mxu0 0
      %4799 = vmatprep.subr.bf16.mxu0 0
      %4800 = vmatpush1.bf16.msra.mxu0 0
      %4801 = vmatprep.subr.bf16.mxu0 0
      %4802 = vmatpush1.bf16.msra.mxu0 0
      %4803 = vmatprep.subr.bf16.mxu0 0
      %4804 = vmatpush1.bf16.msra.mxu0 0
      %4805 = vmatprep.mubr.bf16.mxu0 0
      %4806 = vmatmul.mubr.bf16.gmra.mrb[0].mxu0 %v4771
      %v4807 = vpop.f32.mrb[0].mxu0
      %v4808 = vadd.f32 0.0, %v4807
      %v4809 = vpop.f32.mrb[0].mxu0
      %v4810 = vpop.f32.mrb[0].mxu0
      %v4811 = vadd.f32 0.0, %v4810
      %v4812 = vpop.f32.mrb[0].mxu0
      %4813 = vdwg.mxu0
      %v4814 = vadd.f32 %v4754, %v4808
      %v4815 = vadd.f32 %v4755, %v4811
      %v4816 = vld [vmem:[%s16] sm:$0x1]
      %v4818 = vlaneseq
      %v4819 = vshrl.u32 %v4818, 7
      %v4820 = vsub.s32 0, %v4819
      %v4821 = vrot.slane %v4816, %v4820
      %v4823 = vmul.f32 %v4814, %v4821
      %v4824 = vmul.f32 %v4815, %v4821
      %4825 = vadd.xlane.f32.xlu0 %v4823
      %v4826 = vpop.xlane.xlu0 %4825
      %4827 = vadd.xlane.f32.xlu0 %v4824
      %v4828 = vpop.xlane.xlu0 %4827
      %v4829 = vmul.f32 %v4826, 0.015625
      %v4830 = vmul.f32 %v4828, 0.015625
      %v4831 = vmul.f32 %v4823, %v4814
      %v4832 = vmul.f32 %v4824, %v4815
      %4833 = vadd.xlane.f32.xlu0 %v4831
      %v4834 = vpop.xlane.xlu0 %4833
      %4835 = vadd.xlane.f32.xlu0 %v4832
      %v4836 = vpop.xlane.xlu0 %4835
      %v4837 = vmul.f32 %v4834, 0.015625
      %v4838 = vmul.f32 %v4836, 0.015625
      %v4839 = vmul.f32 %v4829, %v4829
      %v4840 = vmul.f32 %v4830, %v4830
      %v4841 = vsub.f32 %v4837, %v4839
      %v4842 = vsub.f32 %v4838, %v4840
      %v4843 = vmax.f32 %v4841, 0.0
      %v4844 = vmax.f32 %v4842, 0.0
      %v4845 = vld [vmem:[%s8] sm:$0xff]
      %v4846 = vld [vmem:[%s8 + $0x8] sm:$0xff]
      %v4847 = vadd.f32 %v4843, 1e-05
      %v4848 = vadd.f32 %v4844, 1e-05
      %v4849 = vrsqrt.pop %v4847
      %v4850 = vrsqrt.pop %v4848
      %v4851 = vmul.f32 %v4845, %v4849
      %v4852 = vmul.f32 %v4846, %v4850
      %v4853 = vmul.f32 %v4829, %v4851
      %v4854 = vmul.f32 %v4830, %v4852
      %4857 = vrot.lane.b32.xlu0 %v4853, 1
      %v4858 = vpop.permute.xlu0 %4857
      %4859 = vrot.lane.b32.xlu0 %v4854, 1
      %v4860 = vpop.permute.xlu0 %4859
      %v4863 = vsub.f32 %v4845, %v4858
      %v4864 = vsub.f32 %v4846, %v4860
      %4866 = vset.pattern.permute.xlu0 0
      %4867 = vperm.xlu0 %4866, %v4851
      %v4868 = vpop.permute.xlu0 %4867
      %4871 = vset.pattern.permute.xlu0 0
      %4872 = vperm.xlu0 %4871, %v4852
      %v4873 = vpop.permute.xlu0 %4872
      %v4875 = vmul.f32 %v4814, %v4868
      %v4876 = vmul.f32 %v4815, %v4873
      %4878 = vset.pattern.permute.xlu0 1
      %4879 = vperm.xlu0 %4878, %v4863
      %v4880 = vpop.permute.xlu0 %4879
      %4883 = vset.pattern.permute.xlu0 1
      %4884 = vperm.xlu0 %4883, %v4864
      %v4885 = vpop.permute.xlu0 %4884
      %v4887 = vadd.f32 %v4875, %v4880
      %v4888 = vadd.f32 %v4876, %v4885
      %vm4889 = vcmp.ge.f32.partialorder %v4887, 0.0
      %vm4890 = vcmp.ge.f32.partialorder %v4888, 0.0
      %v4891 = vmul.f32 %v4887, 0.01
      %v4892 = vmul.f32 %v4888, 0.01
      %v4893 = vsel %vm4889, %v4887, %v4891
      %v4894 = vsel %vm4890, %v4888, %v4892
      %v4895 = vmul.f32 %v4893, %v4821
      %v4896 = vmul.f32 %v4894, %v4821
      %4897 = vst [vmem:[%s649] sm:$0xff] %v4895
      %4898 = vst [vmem:[%s649 + $0x8] sm:$0xff] %v4896
      %v4899 = vpack.c.bf16 %v4896, %v4895
      %4901 = vrot.lane.b32.xlu0 %v4899, 11
      %v4902 = vpop.permute.xlu0 %4901
      %4904 = vst.msk [vmem:[#allocation5] sm:$0xff] %vm4280, %v4902
      %4905 = vst.msk [vmem:[#allocation5 + $0x8] sm:$0xff] %vm4282, %v4902
      %v4906 = vld [vmem:[%s9] sm:$0xf]
      %v4907 = vld [vmem:[%s9 + $0x4] sm:$0xf]
      %v4908 = vld [vmem:[%s9 + $0x8] sm:$0xf]
      %v4909 = vld [vmem:[%s9 + $0xc] sm:$0xf]
      %v4910 = vld [vmem:[#allocation5] sm:$0xff]
      %v4911 = vld [vmem:[%s9 + $0x10] sm:$0xf]
      %v4912 = vld [vmem:[%s9 + $0x14] sm:$0xf]
      %v4913 = vld [vmem:[%s9 + $0x18] sm:$0xf]
      %v4914 = vld [vmem:[%s9 + $0x1c] sm:$0xf]
      %v4915 = vld [vmem:[#allocation5] sm:$0xff]
      %v4916 = vld [vmem:[#allocation5 + $0x8] sm:$0xff]
      %v4921 = vunpack.c.l.b16 %v4911
      %v4922 = vunpack.c.l.b16 %v4912
      %v4923 = vunpack.c.l.b16 %v4913
      %v4924 = vunpack.c.l.b16 %v4914
      %v4925 = vpack.c.b16 %v4922, %v4921
      %v4926 = vpack.c.b16 %v4924, %v4923
      %4929 = vrot.lane.b32.xlu0 %v4915, 127
      %v4930 = vpop.permute.xlu0 %4929
      %4931 = vrot.lane.b32.xlu0 %v4916, 127
      %v4932 = vpop.permute.xlu0 %4931
      %v4933 = vsel %vm692, %v4930, %v4932
      %v4936 = vsel %vm4304, %v4925, 0
      %v4939 = vsel %vm4304, %v4926, 0
      %4941 = vmatprep.subr.bf16.mxu0 0
      %4942 = vmatpush1.bf16.msra.mxu0 %v4933
      %4943 = vmatprep.subr.bf16.mxu0 0
      %4944 = vmatpush1.bf16.msra.mxu0 0
      %4945 = vmatprep.subr.bf16.mxu0 0
      %4946 = vmatpush1.bf16.msra.mxu0 0
      %4947 = vmatprep.subr.bf16.mxu0 0
      %4948 = vmatpush1.bf16.msra.mxu0 0
      %4949 = vmatprep.subr.bf16.mxu0 0
      %4950 = vmatpush1.bf16.msra.mxu0 0
      %4951 = vmatprep.subr.bf16.mxu0 0
      %4952 = vmatpush1.bf16.msra.mxu0 0
      %4953 = vmatprep.subr.bf16.mxu0 0
      %4954 = vmatpush1.bf16.msra.mxu0 0
      %4955 = vmatprep.subr.bf16.mxu0 0
      %4956 = vmatpush1.bf16.msra.mxu0 0
      %4957 = vmatprep.subr.bf16.mxu0 0
      %4958 = vmatpush1.bf16.msra.mxu0 0
      %4959 = vmatprep.subr.bf16.mxu0 0
      %4960 = vmatpush1.bf16.msra.mxu0 0
      %4961 = vmatprep.subr.bf16.mxu0 0
      %4962 = vmatpush1.bf16.msra.mxu0 0
      %4963 = vmatprep.subr.bf16.mxu0 0
      %4964 = vmatpush1.bf16.msra.mxu0 0
      %4965 = vmatprep.subr.bf16.mxu0 0
      %4966 = vmatpush1.bf16.msra.mxu0 0
      %4967 = vmatprep.subr.bf16.mxu0 0
      %4968 = vmatpush1.bf16.msra.mxu0 0
      %4969 = vmatprep.subr.bf16.mxu0 0
      %4970 = vmatpush1.bf16.msra.mxu0 0
      %4971 = vmatprep.subr.bf16.mxu0 0
      %4972 = vmatpush1.bf16.msra.mxu0 0
      %4973 = vmatprep.mubr.bf16.mxu0 0
      %4974 = vmatmul.mubr.bf16.gmra.mrb[0].mxu0 %v4936
      %v4975 = vpop.f32.mrb[0].mxu0
      %v4976 = vadd.f32 0.0, %v4975
      %v4977 = vpop.f32.mrb[0].mxu0
      %v4978 = vpop.f32.mrb[0].mxu0
      %v4979 = vadd.f32 0.0, %v4978
      %v4980 = vpop.f32.mrb[0].mxu0
      %4981 = vmatprep.mubr.bf16.mxu0 0
      %4982 = vmatmul.mubr.bf16.gmra.mrb[0].mxu0 %v4939
      %v4983 = vpop.f32.mrb[0].mxu0
      %v4984 = vadd.f32 0.0, %v4983
      %v4985 = vpop.f32.mrb[0].mxu0
      %v4986 = vpop.f32.mrb[0].mxu0
      %v4987 = vadd.f32 0.0, %v4986
      %v4988 = vpop.f32.mrb[0].mxu0
      %4989 = vdwg.mxu0
      %v4994 = vunpack.c.l.b16 %v4906
      %v4995 = vunpack.c.l.b16 %v4907
      %v4996 = vunpack.c.l.b16 %v4908
      %v4997 = vunpack.c.l.b16 %v4909
      %v4998 = vpack.c.b16 %v4995, %v4994
      %v4999 = vpack.c.b16 %v4997, %v4996
      %v5001 = vsel %vm4304, %v4998, 0
      %v5004 = vsel %vm4304, %v4999, 0
      %5006 = vmatprep.subr.bf16.mxu0 0
      %5007 = vmatpush1.bf16.msra.mxu0 %v4910
      %5008 = vmatprep.subr.bf16.mxu0 0
      %5009 = vmatpush1.bf16.msra.mxu0 0
      %5010 = vmatprep.subr.bf16.mxu0 0
      %5011 = vmatpush1.bf16.msra.mxu0 0
      %5012 = vmatprep.subr.bf16.mxu0 0
      %5013 = vmatpush1.bf16.msra.mxu0 0
      %5014 = vmatprep.subr.bf16.mxu0 0
      %5015 = vmatpush1.bf16.msra.mxu0 0
      %5016 = vmatprep.subr.bf16.mxu0 0
      %5017 = vmatpush1.bf16.msra.mxu0 0
      %5018 = vmatprep.subr.bf16.mxu0 0
      %5019 = vmatpush1.bf16.msra.mxu0 0
      %5020 = vmatprep.subr.bf16.mxu0 0
      %5021 = vmatpush1.bf16.msra.mxu0 0
      %5022 = vmatprep.subr.bf16.mxu0 0
      %5023 = vmatpush1.bf16.msra.mxu0 0
      %5024 = vmatprep.subr.bf16.mxu0 0
      %5025 = vmatpush1.bf16.msra.mxu0 0
      %5026 = vmatprep.subr.bf16.mxu0 0
      %5027 = vmatpush1.bf16.msra.mxu0 0
      %5028 = vmatprep.subr.bf16.mxu0 0
      %5029 = vmatpush1.bf16.msra.mxu0 0
      %5030 = vmatprep.subr.bf16.mxu0 0
      %5031 = vmatpush1.bf16.msra.mxu0 0
      %5032 = vmatprep.subr.bf16.mxu0 0
      %5033 = vmatpush1.bf16.msra.mxu0 0
      %5034 = vmatprep.subr.bf16.mxu0 0
      %5035 = vmatpush1.bf16.msra.mxu0 0
      %5036 = vmatprep.subr.bf16.mxu0 0
      %5037 = vmatpush1.bf16.msra.mxu0 0
      %5038 = vmatprep.mubr.bf16.mxu0 0
      %5039 = vmatmul.mubr.bf16.gmra.mrb[0].mxu0 %v5001
      %v5040 = vpop.f32.mrb[0].mxu0
      %v5041 = vadd.f32 %v4976, %v5040
      %v5042 = vpop.f32.mrb[0].mxu0
      %v5043 = vpop.f32.mrb[0].mxu0
      %v5044 = vadd.f32 %v4979, %v5043
      %v5045 = vpop.f32.mrb[0].mxu0
      %5046 = vmatprep.mubr.bf16.mxu0 0
      %5047 = vmatmul.mubr.bf16.gmra.mrb[0].mxu0 %v5004
      %v5048 = vpop.f32.mrb[0].mxu0
      %v5049 = vadd.f32 %v4984, %v5048
      %v5050 = vpop.f32.mrb[0].mxu0
      %v5051 = vpop.f32.mrb[0].mxu0
      %v5052 = vadd.f32 %v4987, %v5051
      %v5053 = vpop.f32.mrb[0].mxu0
      %5054 = vdwg.mxu0
      %v5055 = vld [vmem:[%s9 + $0x20] sm:$0xf]
      %v5056 = vld [vmem:[%s9 + $0x24] sm:$0xf]
      %v5057 = vld [vmem:[%s9 + $0x28] sm:$0xf]
      %v5058 = vld [vmem:[%s9 + $0x2c] sm:$0xf]
      %v5063 = vunpack.c.l.b16 %v5055
      %v5064 = vunpack.c.l.b16 %v5056
      %v5065 = vunpack.c.l.b16 %v5057
      %v5066 = vunpack.c.l.b16 %v5058
      %v5067 = vpack.c.b16 %v5064, %v5063
      %v5068 = vpack.c.b16 %v5066, %v5065
      %5069 = vrot.lane.b32.xlu0 %v4915, 126
      %v5070 = vpop.permute.xlu0 %5069
      %5071 = vrot.lane.b32.xlu0 %v4916, 126
      %v5072 = vpop.permute.xlu0 %5071
      %v5073 = vsel %vm901, %v5070, %v5072
      %v5076 = vsel %vm4304, %v5067, 0
      %v5079 = vsel %vm4304, %v5068, 0
      %5081 = vmatprep.subr.bf16.mxu0 0
      %5082 = vmatpush1.bf16.msra.mxu0 %v5073
      %5083 = vmatprep.subr.bf16.mxu0 0
      %5084 = vmatpush1.bf16.msra.mxu0 0
      %5085 = vmatprep.subr.bf16.mxu0 0
      %5086 = vmatpush1.bf16.msra.mxu0 0
      %5087 = vmatprep.subr.bf16.mxu0 0
      %5088 = vmatpush1.bf16.msra.mxu0 0
      %5089 = vmatprep.subr.bf16.mxu0 0
      %5090 = vmatpush1.bf16.msra.mxu0 0
      %5091 = vmatprep.subr.bf16.mxu0 0
      %5092 = vmatpush1.bf16.msra.mxu0 0
      %5093 = vmatprep.subr.bf16.mxu0 0
      %5094 = vmatpush1.bf16.msra.mxu0 0
      %5095 = vmatprep.subr.bf16.mxu0 0
      %5096 = vmatpush1.bf16.msra.mxu0 0
      %5097 = vmatprep.subr.bf16.mxu0 0
      %5098 = vmatpush1.bf16.msra.mxu0 0
      %5099 = vmatprep.subr.bf16.mxu0 0
      %5100 = vmatpush1.bf16.msra.mxu0 0
      %5101 = vmatprep.subr.bf16.mxu0 0
      %5102 = vmatpush1.bf16.msra.mxu0 0
      %5103 = vmatprep.subr.bf16.mxu0 0
      %5104 = vmatpush1.bf16.msra.mxu0 0
      %5105 = vmatprep.subr.bf16.mxu0 0
      %5106 = vmatpush1.bf16.msra.mxu0 0
      %5107 = vmatprep.subr.bf16.mxu0 0
      %5108 = vmatpush1.bf16.msra.mxu0 0
      %5109 = vmatprep.subr.bf16.mxu0 0
      %5110 = vmatpush1.bf16.msra.mxu0 0
      %5111 = vmatprep.subr.bf16.mxu0 0
      %5112 = vmatpush1.bf16.msra.mxu0 0
      %5113 = vmatprep.mubr.bf16.mxu0 0
      %5114 = vmatmul.mubr.bf16.gmra.mrb[0].mxu0 %v5076
      %v5115 = vpop.f32.mrb[0].mxu0
      %v5116 = vadd.f32 0.0, %v5115
      %v5117 = vpop.f32.mrb[0].mxu0
      %v5118 = vpop.f32.mrb[0].mxu0
      %v5119 = vadd.f32 0.0, %v5118
      %v5120 = vpop.f32.mrb[0].mxu0
      %5121 = vmatprep.mubr.bf16.mxu0 0
      %5122 = vmatmul.mubr.bf16.gmra.mrb[0].mxu0 %v5079
      %v5123 = vpop.f32.mrb[0].mxu0
      %v5124 = vadd.f32 0.0, %v5123
      %v5125 = vpop.f32.mrb[0].mxu0
      %v5126 = vpop.f32.mrb[0].mxu0
      %v5127 = vadd.f32 0.0, %v5126
      %v5128 = vpop.f32.mrb[0].mxu0
      %5129 = vdwg.mxu0
      %v5130 = vadd.f32 %v5041, %v5116
      %v5131 = vadd.f32 %v5044, %v5119
      %v5132 = vadd.f32 %v5049, %v5124
      %v5133 = vadd.f32 %v5052, %v5127
      %v5134 = vld [vmem:[%s9 + $0x30] sm:$0xf]
      %v5135 = vld [vmem:[%s9 + $0x34] sm:$0xf]
      %v5136 = vld [vmem:[%s9 + $0x38] sm:$0xf]
      %v5137 = vld [vmem:[%s9 + $0x3c] sm:$0xf]
      %v5142 = vunpack.c.l.b16 %v5134
      %v5143 = vunpack.c.l.b16 %v5135
      %v5144 = vunpack.c.l.b16 %v5136
      %v5145 = vunpack.c.l.b16 %v5137
      %v5146 = vpack.c.b16 %v5143, %v5142
      %v5147 = vpack.c.b16 %v5145, %v5144
      %5148 = vrot.lane.b32.xlu0 %v4915, 118
      %v5149 = vpop.permute.xlu0 %5148
      %5150 = vrot.lane.b32.xlu0 %v4916, 118
      %v5151 = vpop.permute.xlu0 %5150
      %v5152 = vsel %vm4468, %v5149, %v5151
      %v5155 = vsel %vm4304, %v5146, 0
      %v5158 = vsel %vm4304, %v5147, 0
      %5160 = vmatprep.subr.bf16.mxu0 0
      %5161 = vmatpush1.bf16.msra.mxu0 %v5152
      %5162 = vmatprep.subr.bf16.mxu0 0
      %5163 = vmatpush1.bf16.msra.mxu0 0
      %5164 = vmatprep.subr.bf16.mxu0 0
      %5165 = vmatpush1.bf16.msra.mxu0 0
      %5166 = vmatprep.subr.bf16.mxu0 0
      %5167 = vmatpush1.bf16.msra.mxu0 0
      %5168 = vmatprep.subr.bf16.mxu0 0
      %5169 = vmatpush1.bf16.msra.mxu0 0
      %5170 = vmatprep.subr.bf16.mxu0 0
      %5171 = vmatpush1.bf16.msra.mxu0 0
      %5172 = vmatprep.subr.bf16.mxu0 0
      %5173 = vmatpush1.bf16.msra.mxu0 0
      %5174 = vmatprep.subr.bf16.mxu0 0
      %5175 = vmatpush1.bf16.msra.mxu0 0
      %5176 = vmatprep.subr.bf16.mxu0 0
      %5177 = vmatpush1.bf16.msra.mxu0 0
      %5178 = vmatprep.subr.bf16.mxu0 0
      %5179 = vmatpush1.bf16.msra.mxu0 0
      %5180 = vmatprep.subr.bf16.mxu0 0
      %5181 = vmatpush1.bf16.msra.mxu0 0
      %5182 = vmatprep.subr.bf16.mxu0 0
      %5183 = vmatpush1.bf16.msra.mxu0 0
      %5184 = vmatprep.subr.bf16.mxu0 0
      %5185 = vmatpush1.bf16.msra.mxu0 0
      %5186 = vmatprep.subr.bf16.mxu0 0
      %5187 = vmatpush1.bf16.msra.mxu0 0
      %5188 = vmatprep.subr.bf16.mxu0 0
      %5189 = vmatpush1.bf16.msra.mxu0 0
      %5190 = vmatprep.subr.bf16.mxu0 0
      %5191 = vmatpush1.bf16.msra.mxu0 0
      %5192 = vmatprep.mubr.bf16.mxu0 0
      %5193 = vmatmul.mubr.bf16.gmra.mrb[0].mxu0 %v5155
      %v5194 = vpop.f32.mrb[0].mxu0
      %v5195 = vadd.f32 0.0, %v5194
      %v5196 = vpop.f32.mrb[0].mxu0
      %v5197 = vpop.f32.mrb[0].mxu0
      %v5198 = vadd.f32 0.0, %v5197
      %v5199 = vpop.f32.mrb[0].mxu0
      %5200 = vmatprep.mubr.bf16.mxu0 0
      %5201 = vmatmul.mubr.bf16.gmra.mrb[0].mxu0 %v5158
      %v5202 = vpop.f32.mrb[0].mxu0
      %v5203 = vadd.f32 0.0, %v5202
      %v5204 = vpop.f32.mrb[0].mxu0
      %v5205 = vpop.f32.mrb[0].mxu0
      %v5206 = vadd.f32 0.0, %v5205
      %v5207 = vpop.f32.mrb[0].mxu0
      %5208 = vdwg.mxu0
      %v5209 = vadd.f32 %v5130, %v5195
      %v5210 = vadd.f32 %v5131, %v5198
      %v5211 = vadd.f32 %v5132, %v5203
      %v5212 = vadd.f32 %v5133, %v5206
      %v5213 = vld [vmem:[%s9 + $0x40] sm:$0xf]
      %v5214 = vld [vmem:[%s9 + $0x44] sm:$0xf]
      %v5215 = vld [vmem:[%s9 + $0x48] sm:$0xf]
      %v5216 = vld [vmem:[%s9 + $0x4c] sm:$0xf]
      %v5221 = vunpack.c.l.b16 %v5213
      %v5222 = vunpack.c.l.b16 %v5214
      %v5223 = vunpack.c.l.b16 %v5215
      %v5224 = vunpack.c.l.b16 %v5216
      %v5225 = vpack.c.b16 %v5222, %v5221
      %v5226 = vpack.c.b16 %v5224, %v5223
      %5227 = vrot.lane.b32.xlu0 %v4915, 117
      %v5228 = vpop.permute.xlu0 %5227
      %5229 = vrot.lane.b32.xlu0 %v4916, 117
      %v5230 = vpop.permute.xlu0 %5229
      %v5231 = vsel %vm4528, %v5228, %v5230
      %v5234 = vsel %vm4304, %v5225, 0
      %v5237 = vsel %vm4304, %v5226, 0
      %5239 = vmatprep.subr.bf16.mxu0 0
      %5240 = vmatpush1.bf16.msra.mxu0 %v5231
      %5241 = vmatprep.subr.bf16.mxu0 0
      %5242 = vmatpush1.bf16.msra.mxu0 0
      %5243 = vmatprep.subr.bf16.mxu0 0
      %5244 = vmatpush1.bf16.msra.mxu0 0
      %5245 = vmatprep.subr.bf16.mxu0 0
      %5246 = vmatpush1.bf16.msra.mxu0 0
      %5247 = vmatprep.subr.bf16.mxu0 0
      %5248 = vmatpush1.bf16.msra.mxu0 0
      %5249 = vmatprep.subr.bf16.mxu0 0
      %5250 = vmatpush1.bf16.msra.mxu0 0
      %5251 = vmatprep.subr.bf16.mxu0 0
      %5252 = vmatpush1.bf16.msra.mxu0 0
      %5253 = vmatprep.subr.bf16.mxu0 0
      %5254 = vmatpush1.bf16.msra.mxu0 0
      %5255 = vmatprep.subr.bf16.mxu0 0
      %5256 = vmatpush1.bf16.msra.mxu0 0
      %5257 = vmatprep.subr.bf16.mxu0 0
      %5258 = vmatpush1.bf16.msra.mxu0 0
      %5259 = vmatprep.subr.bf16.mxu0 0
      %5260 = vmatpush1.bf16.msra.mxu0 0
      %5261 = vmatprep.subr.bf16.mxu0 0
      %5262 = vmatpush1.bf16.msra.mxu0 0
      %5263 = vmatprep.subr.bf16.mxu0 0
      %5264 = vmatpush1.bf16.msra.mxu0 0
      %5265 = vmatprep.subr.bf16.mxu0 0
      %5266 = vmatpush1.bf16.msra.mxu0 0
      %5267 = vmatprep.subr.bf16.mxu0 0
      %5268 = vmatpush1.bf16.msra.mxu0 0
      %5269 = vmatprep.subr.bf16.mxu0 0
      %5270 = vmatpush1.bf16.msra.mxu0 0
      %5271 = vmatprep.mubr.bf16.mxu0 0
      %5272 = vmatmul.mubr.bf16.gmra.mrb[0].mxu0 %v5234
      %v5273 = vpop.f32.mrb[0].mxu0
      %v5274 = vadd.f32 0.0, %v5273
      %v5275 = vpop.f32.mrb[0].mxu0
      %v5276 = vpop.f32.mrb[0].mxu0
      %v5277 = vadd.f32 0.0, %v5276
      %v5278 = vpop.f32.mrb[0].mxu0
      %5279 = vmatprep.mubr.bf16.mxu0 0
      %5280 = vmatmul.mubr.bf16.gmra.mrb[0].mxu0 %v5237
      %v5281 = vpop.f32.mrb[0].mxu0
      %v5282 = vadd.f32 0.0, %v5281
      %v5283 = vpop.f32.mrb[0].mxu0
      %v5284 = vpop.f32.mrb[0].mxu0
      %v5285 = vadd.f32 0.0, %v5284
      %v5286 = vpop.f32.mrb[0].mxu0
      %5287 = vdwg.mxu0
      %v5288 = vadd.f32 %v5209, %v5274
      %v5289 = vadd.f32 %v5210, %v5277
      %v5290 = vadd.f32 %v5211, %v5282
      %v5291 = vadd.f32 %v5212, %v5285
      %v5292 = vld [vmem:[%s9 + $0x50] sm:$0xf]
      %v5293 = vld [vmem:[%s9 + $0x54] sm:$0xf]
      %v5294 = vld [vmem:[%s9 + $0x58] sm:$0xf]
      %v5295 = vld [vmem:[%s9 + $0x5c] sm:$0xf]
      %v5300 = vunpack.c.l.b16 %v5292
      %v5301 = vunpack.c.l.b16 %v5293
      %v5302 = vunpack.c.l.b16 %v5294
      %v5303 = vunpack.c.l.b16 %v5295
      %v5304 = vpack.c.b16 %v5301, %v5300
      %v5305 = vpack.c.b16 %v5303, %v5302
      %5306 = vrot.lane.b32.xlu0 %v4915, 116
      %v5307 = vpop.permute.xlu0 %5306
      %5308 = vrot.lane.b32.xlu0 %v4916, 116
      %v5309 = vpop.permute.xlu0 %5308
      %v5310 = vsel %vm4588, %v5307, %v5309
      %v5313 = vsel %vm4304, %v5304, 0
      %v5316 = vsel %vm4304, %v5305, 0
      %5318 = vmatprep.subr.bf16.mxu0 0
      %5319 = vmatpush1.bf16.msra.mxu0 %v5310
      %5320 = vmatprep.subr.bf16.mxu0 0
      %5321 = vmatpush1.bf16.msra.mxu0 0
      %5322 = vmatprep.subr.bf16.mxu0 0
      %5323 = vmatpush1.bf16.msra.mxu0 0
      %5324 = vmatprep.subr.bf16.mxu0 0
      %5325 = vmatpush1.bf16.msra.mxu0 0
      %5326 = vmatprep.subr.bf16.mxu0 0
      %5327 = vmatpush1.bf16.msra.mxu0 0
      %5328 = vmatprep.subr.bf16.mxu0 0
      %5329 = vmatpush1.bf16.msra.mxu0 0
      %5330 = vmatprep.subr.bf16.mxu0 0
      %5331 = vmatpush1.bf16.msra.mxu0 0
      %5332 = vmatprep.subr.bf16.mxu0 0
      %5333 = vmatpush1.bf16.msra.mxu0 0
      %5334 = vmatprep.subr.bf16.mxu0 0
      %5335 = vmatpush1.bf16.msra.mxu0 0
      %5336 = vmatprep.subr.bf16.mxu0 0
      %5337 = vmatpush1.bf16.msra.mxu0 0
      %5338 = vmatprep.subr.bf16.mxu0 0
      %5339 = vmatpush1.bf16.msra.mxu0 0
      %5340 = vmatprep.subr.bf16.mxu0 0
      %5341 = vmatpush1.bf16.msra.mxu0 0
      %5342 = vmatprep.subr.bf16.mxu0 0
      %5343 = vmatpush1.bf16.msra.mxu0 0
      %5344 = vmatprep.subr.bf16.mxu0 0
      %5345 = vmatpush1.bf16.msra.mxu0 0
      %5346 = vmatprep.subr.bf16.mxu0 0
      %5347 = vmatpush1.bf16.msra.mxu0 0
      %5348 = vmatprep.subr.bf16.mxu0 0
      %5349 = vmatpush1.bf16.msra.mxu0 0
      %5350 = vmatprep.mubr.bf16.mxu0 0
      %5351 = vmatmul.mubr.bf16.gmra.mrb[0].mxu0 %v5313
      %v5352 = vpop.f32.mrb[0].mxu0
      %v5353 = vadd.f32 0.0, %v5352
      %v5354 = vpop.f32.mrb[0].mxu0
      %v5355 = vpop.f32.mrb[0].mxu0
      %v5356 = vadd.f32 0.0, %v5355
      %v5357 = vpop.f32.mrb[0].mxu0
      %5358 = vmatprep.mubr.bf16.mxu0 0
      %5359 = vmatmul.mubr.bf16.gmra.mrb[0].mxu0 %v5316
      %v5360 = vpop.f32.mrb[0].mxu0
      %v5361 = vadd.f32 0.0, %v5360
      %v5362 = vpop.f32.mrb[0].mxu0
      %v5363 = vpop.f32.mrb[0].mxu0
      %v5364 = vadd.f32 0.0, %v5363
      %v5365 = vpop.f32.mrb[0].mxu0
      %5366 = vdwg.mxu0
      %v5367 = vadd.f32 %v5288, %v5353
      %v5368 = vadd.f32 %v5289, %v5356
      %v5369 = vadd.f32 %v5290, %v5361
      %v5370 = vadd.f32 %v5291, %v5364
      %v5371 = vld [vmem:[%s9 + $0x60] sm:$0xf]
      %v5372 = vld [vmem:[%s9 + $0x64] sm:$0xf]
      %v5373 = vld [vmem:[%s9 + $0x68] sm:$0xf]
      %v5374 = vld [vmem:[%s9 + $0x6c] sm:$0xf]
      %v5379 = vunpack.c.l.b16 %v5371
      %v5380 = vunpack.c.l.b16 %v5372
      %v5381 = vunpack.c.l.b16 %v5373
      %v5382 = vunpack.c.l.b16 %v5374
      %v5383 = vpack.c.b16 %v5380, %v5379
      %v5384 = vpack.c.b16 %v5382, %v5381
      %5385 = vrot.lane.b32.xlu0 %v4915, 108
      %v5386 = vpop.permute.xlu0 %5385
      %5387 = vrot.lane.b32.xlu0 %v4916, 108
      %v5388 = vpop.permute.xlu0 %5387
      %v5389 = vsel %vm1228, %v5386, %v5388
      %v5392 = vsel %vm4304, %v5383, 0
      %v5395 = vsel %vm4304, %v5384, 0
      %5397 = vmatprep.subr.bf16.mxu0 0
      %5398 = vmatpush1.bf16.msra.mxu0 %v5389
      %5399 = vmatprep.subr.bf16.mxu0 0
      %5400 = vmatpush1.bf16.msra.mxu0 0
      %5401 = vmatprep.subr.bf16.mxu0 0
      %5402 = vmatpush1.bf16.msra.mxu0 0
      %5403 = vmatprep.subr.bf16.mxu0 0
      %5404 = vmatpush1.bf16.msra.mxu0 0
      %5405 = vmatprep.subr.bf16.mxu0 0
      %5406 = vmatpush1.bf16.msra.mxu0 0
      %5407 = vmatprep.subr.bf16.mxu0 0
      %5408 = vmatpush1.bf16.msra.mxu0 0
      %5409 = vmatprep.subr.bf16.mxu0 0
      %5410 = vmatpush1.bf16.msra.mxu0 0
      %5411 = vmatprep.subr.bf16.mxu0 0
      %5412 = vmatpush1.bf16.msra.mxu0 0
      %5413 = vmatprep.subr.bf16.mxu0 0
      %5414 = vmatpush1.bf16.msra.mxu0 0
      %5415 = vmatprep.subr.bf16.mxu0 0
      %5416 = vmatpush1.bf16.msra.mxu0 0
      %5417 = vmatprep.subr.bf16.mxu0 0
      %5418 = vmatpush1.bf16.msra.mxu0 0
      %5419 = vmatprep.subr.bf16.mxu0 0
      %5420 = vmatpush1.bf16.msra.mxu0 0
      %5421 = vmatprep.subr.bf16.mxu0 0
      %5422 = vmatpush1.bf16.msra.mxu0 0
      %5423 = vmatprep.subr.bf16.mxu0 0
      %5424 = vmatpush1.bf16.msra.mxu0 0
      %5425 = vmatprep.subr.bf16.mxu0 0
      %5426 = vmatpush1.bf16.msra.mxu0 0
      %5427 = vmatprep.subr.bf16.mxu0 0
      %5428 = vmatpush1.bf16.msra.mxu0 0
      %5429 = vmatprep.mubr.bf16.mxu0 0
      %5430 = vmatmul.mubr.bf16.gmra.mrb[0].mxu0 %v5392
      %v5431 = vpop.f32.mrb[0].mxu0
      %v5432 = vadd.f32 0.0, %v5431
      %v5433 = vpop.f32.mrb[0].mxu0
      %v5434 = vpop.f32.mrb[0].mxu0
      %v5435 = vadd.f32 0.0, %v5434
      %v5436 = vpop.f32.mrb[0].mxu0
      %5437 = vmatprep.mubr.bf16.mxu0 0
      %5438 = vmatmul.mubr.bf16.gmra.mrb[0].mxu0 %v5395
      %v5439 = vpop.f32.mrb[0].mxu0
      %v5440 = vadd.f32 0.0, %v5439
      %v5441 = vpop.f32.mrb[0].mxu0
      %v5442 = vpop.f32.mrb[0].mxu0
      %v5443 = vadd.f32 0.0, %v5442
      %v5444 = vpop.f32.mrb[0].mxu0
      %5445 = vdwg.mxu0
      %v5446 = vadd.f32 %v5367, %v5432
      %v5447 = vadd.f32 %v5368, %v5435
      %v5448 = vadd.f32 %v5369, %v5440
      %v5449 = vadd.f32 %v5370, %v5443
      %v5450 = vld [vmem:[%s9 + $0x70] sm:$0xf]
      %v5451 = vld [vmem:[%s9 + $0x74] sm:$0xf]
      %v5452 = vld [vmem:[%s9 + $0x78] sm:$0xf]
      %v5453 = vld [vmem:[%s9 + $0x7c] sm:$0xf]
      %v5458 = vunpack.c.l.b16 %v5450
      %v5459 = vunpack.c.l.b16 %v5451
      %v5460 = vunpack.c.l.b16 %v5452
      %v5461 = vunpack.c.l.b16 %v5453
      %v5462 = vpack.c.b16 %v5459, %v5458
      %v5463 = vpack.c.b16 %v5461, %v5460
      %5464 = vrot.lane.b32.xlu0 %v4915, 107
      %v5465 = vpop.permute.xlu0 %5464
      %5466 = vrot.lane.b32.xlu0 %v4916, 107
      %v5467 = vpop.permute.xlu0 %5466
      %v5468 = vsel %vm4707, %v5465, %v5467
      %v5471 = vsel %vm4304, %v5462, 0
      %v5474 = vsel %vm4304, %v5463, 0
      %5476 = vmatprep.subr.bf16.mxu0 0
      %5477 = vmatpush1.bf16.msra.mxu0 %v5468
      %5478 = vmatprep.subr.bf16.mxu0 0
      %5479 = vmatpush1.bf16.msra.mxu0 0
      %5480 = vmatprep.subr.bf16.mxu0 0
      %5481 = vmatpush1.bf16.msra.mxu0 0
      %5482 = vmatprep.subr.bf16.mxu0 0
      %5483 = vmatpush1.bf16.msra.mxu0 0
      %5484 = vmatprep.subr.bf16.mxu0 0
      %5485 = vmatpush1.bf16.msra.mxu0 0
      %5486 = vmatprep.subr.bf16.mxu0 0
      %5487 = vmatpush1.bf16.msra.mxu0 0
      %5488 = vmatprep.subr.bf16.mxu0 0
      %5489 = vmatpush1.bf16.msra.mxu0 0
      %5490 = vmatprep.subr.bf16.mxu0 0
      %5491 = vmatpush1.bf16.msra.mxu0 0
      %5492 = vmatprep.subr.bf16.mxu0 0
      %5493 = vmatpush1.bf16.msra.mxu0 0
      %5494 = vmatprep.subr.bf16.mxu0 0
      %5495 = vmatpush1.bf16.msra.mxu0 0
      %5496 = vmatprep.subr.bf16.mxu0 0
      %5497 = vmatpush1.bf16.msra.mxu0 0
      %5498 = vmatprep.subr.bf16.mxu0 0
      %5499 = vmatpush1.bf16.msra.mxu0 0
      %5500 = vmatprep.subr.bf16.mxu0 0
      %5501 = vmatpush1.bf16.msra.mxu0 0
      %5502 = vmatprep.subr.bf16.mxu0 0
      %5503 = vmatpush1.bf16.msra.mxu0 0
      %5504 = vmatprep.subr.bf16.mxu0 0
      %5505 = vmatpush1.bf16.msra.mxu0 0
      %5506 = vmatprep.subr.bf16.mxu0 0
      %5507 = vmatpush1.bf16.msra.mxu0 0
      %5508 = vmatprep.mubr.bf16.mxu0 0
      %5509 = vmatmul.mubr.bf16.gmra.mrb[0].mxu0 %v5471
      %v5510 = vpop.f32.mrb[0].mxu0
      %v5511 = vadd.f32 0.0, %v5510
      %v5512 = vpop.f32.mrb[0].mxu0
      %v5513 = vpop.f32.mrb[0].mxu0
      %v5514 = vadd.f32 0.0, %v5513
      %v5515 = vpop.f32.mrb[0].mxu0
      %5516 = vmatprep.mubr.bf16.mxu0 0
      %5517 = vmatmul.mubr.bf16.gmra.mrb[0].mxu0 %v5474
      %v5518 = vpop.f32.mrb[0].mxu0
      %v5519 = vadd.f32 0.0, %v5518
      %v5520 = vpop.f32.mrb[0].mxu0
      %v5521 = vpop.f32.mrb[0].mxu0
      %v5522 = vadd.f32 0.0, %v5521
      %v5523 = vpop.f32.mrb[0].mxu0
      %5524 = vdwg.mxu0
      %v5525 = vadd.f32 %v5446, %v5511
      %v5526 = vadd.f32 %v5447, %v5514
      %v5527 = vadd.f32 %v5448, %v5519
      %v5528 = vadd.f32 %v5449, %v5522
      %v5529 = vld [vmem:[%s9 + $0x80] sm:$0xf]
      %v5530 = vld [vmem:[%s9 + $0x84] sm:$0xf]
      %v5531 = vld [vmem:[%s9 + $0x88] sm:$0xf]
      %v5532 = vld [vmem:[%s9 + $0x8c] sm:$0xf]
      %v5537 = vunpack.c.l.b16 %v5529
      %v5538 = vunpack.c.l.b16 %v5530
      %v5539 = vunpack.c.l.b16 %v5531
      %v5540 = vunpack.c.l.b16 %v5532
      %v5541 = vpack.c.b16 %v5538, %v5537
      %v5542 = vpack.c.b16 %v5540, %v5539
      %5543 = vrot.lane.b32.xlu0 %v4915, 106
      %v5544 = vpop.permute.xlu0 %5543
      %5545 = vrot.lane.b32.xlu0 %v4916, 106
      %v5546 = vpop.permute.xlu0 %5545
      %v5547 = vsel %vm4767, %v5544, %v5546
      %v5550 = vsel %vm4304, %v5541, 0
      %v5553 = vsel %vm4304, %v5542, 0
      %5555 = vmatprep.subr.bf16.mxu0 0
      %5556 = vmatpush1.bf16.msra.mxu0 %v5547
      %5557 = vmatprep.subr.bf16.mxu0 0
      %5558 = vmatpush1.bf16.msra.mxu0 0
      %5559 = vmatprep.subr.bf16.mxu0 0
      %5560 = vmatpush1.bf16.msra.mxu0 0
      %5561 = vmatprep.subr.bf16.mxu0 0
      %5562 = vmatpush1.bf16.msra.mxu0 0
      %5563 = vmatprep.subr.bf16.mxu0 0
      %5564 = vmatpush1.bf16.msra.mxu0 0
      %5565 = vmatprep.subr.bf16.mxu0 0
      %5566 = vmatpush1.bf16.msra.mxu0 0
      %5567 = vmatprep.subr.bf16.mxu0 0
      %5568 = vmatpush1.bf16.msra.mxu0 0
      %5569 = vmatprep.subr.bf16.mxu0 0
      %5570 = vmatpush1.bf16.msra.mxu0 0
      %5571 = vmatprep.subr.bf16.mxu0 0
      %5572 = vmatpush1.bf16.msra.mxu0 0
      %5573 = vmatprep.subr.bf16.mxu0 0
      %5574 = vmatpush1.bf16.msra.mxu0 0
      %5575 = vmatprep.subr.bf16.mxu0 0
      %5576 = vmatpush1.bf16.msra.mxu0 0
      %5577 = vmatprep.subr.bf16.mxu0 0
      %5578 = vmatpush1.bf16.msra.mxu0 0
      %5579 = vmatprep.subr.bf16.mxu0 0
      %5580 = vmatpush1.bf16.msra.mxu0 0
      %5581 = vmatprep.subr.bf16.mxu0 0
      %5582 = vmatpush1.bf16.msra.mxu0 0
      %5583 = vmatprep.subr.bf16.mxu0 0
      %5584 = vmatpush1.bf16.msra.mxu0 0
      %5585 = vmatprep.subr.bf16.mxu0 0
      %5586 = vmatpush1.bf16.msra.mxu0 0
      %5587 = vmatprep.mubr.bf16.mxu0 0
      %5588 = vmatmul.mubr.bf16.gmra.mrb[0].mxu0 %v5550
      %v5589 = vpop.f32.mrb[0].mxu0
      %v5590 = vadd.f32 0.0, %v5589
      %v5591 = vpop.f32.mrb[0].mxu0
      %v5592 = vpop.f32.mrb[0].mxu0
      %v5593 = vadd.f32 0.0, %v5592
      %v5594 = vpop.f32.mrb[0].mxu0
      %5595 = vmatprep.mubr.bf16.mxu0 0
      %5596 = vmatmul.mubr.bf16.gmra.mrb[0].mxu0 %v5553
      %v5597 = vpop.f32.mrb[0].mxu0
      %v5598 = vadd.f32 0.0, %v5597
      %v5599 = vpop.f32.mrb[0].mxu0
      %v5600 = vpop.f32.mrb[0].mxu0
      %v5601 = vadd.f32 0.0, %v5600
      %v5602 = vpop.f32.mrb[0].mxu0
      %5603 = vdwg.mxu0
      %v5604 = vadd.f32 %v5525, %v5590
      %v5605 = vadd.f32 %v5526, %v5593
      %v5606 = vadd.f32 %v5527, %v5598
      %v5607 = vadd.f32 %v5528, %v5601
      %v5608 = vpack.c.bf16 %v5605, %v5604
      %v5609 = vpack.c.bf16 %v5607, %v5606
      %v5610 = vld [vmem:[%s14] sm:$0xf]
      %v5611 = vld [vmem:[%s14 + $0x4] sm:$0xf]
      %v5612 = vld [vmem:[%s14 + $0x8] sm:$0xf]
      %v5613 = vld [vmem:[%s14 + $0xc] sm:$0xf]
      %v5614 = vld [vmem:[%s14 + $0x10] sm:$0xf]
      %v5615 = vld [vmem:[%s14 + $0x14] sm:$0xf]
      %v5616 = vld [vmem:[%s14 + $0x18] sm:$0xf]
      %v5617 = vld [vmem:[%s14 + $0x1c] sm:$0xf]
      %v5618 = vld [vmem:[%s14 + $0x20] sm:$0xf]
      %v5619 = vld [vmem:[%s14 + $0x24] sm:$0xf]
      %v5620 = vld [vmem:[%s14 + $0x28] sm:$0xf]
      %v5621 = vld [vmem:[%s14 + $0x2c] sm:$0xf]
      %v5622 = vld [vmem:[%s14 + $0x30] sm:$0xf]
      %v5623 = vld [vmem:[%s14 + $0x34] sm:$0xf]
      %v5624 = vld [vmem:[%s14 + $0x38] sm:$0xf]
      %v5625 = vld [vmem:[%s14 + $0x3c] sm:$0xf]
      %v5642 = vunpack.c.l.b16 %v5610
      %v5643 = vunpack.c.l.b16 %v5611
      %v5644 = vunpack.c.l.b16 %v5612
      %v5645 = vunpack.c.l.b16 %v5613
      %v5646 = vunpack.c.l.b16 %v5614
      %v5647 = vunpack.c.l.b16 %v5615
      %v5648 = vunpack.c.l.b16 %v5616
      %v5649 = vunpack.c.l.b16 %v5617
      %v5650 = vunpack.c.l.b16 %v5618
      %v5651 = vunpack.c.l.b16 %v5619
      %v5652 = vunpack.c.l.b16 %v5620
      %v5653 = vunpack.c.l.b16 %v5621
      %v5654 = vunpack.c.l.b16 %v5622
      %v5655 = vunpack.c.l.b16 %v5623
      %v5656 = vunpack.c.l.b16 %v5624
      %v5657 = vunpack.c.l.b16 %v5625
      %v5658 = vpack.c.b16 %v5643, %v5642
      %v5659 = vpack.c.b16 %v5645, %v5644
      %v5660 = vpack.c.b16 %v5647, %v5646
      %v5661 = vpack.c.b16 %v5649, %v5648
      %v5662 = vpack.c.b16 %v5651, %v5650
      %v5663 = vpack.c.b16 %v5653, %v5652
      %v5664 = vpack.c.b16 %v5655, %v5654
      %v5665 = vpack.c.b16 %v5657, %v5656
      %5674 = vmatprep.subr.bf16.mxu0 0
      %5675 = vmatpush1.bf16.msra.mxu0 %v5658
      %5676 = vmatprep.subr.bf16.mxu0 0
      %5677 = vmatpush1.bf16.msra.mxu0 %v5659
      %5678 = vmatprep.subr.bf16.mxu0 0
      %5679 = vmatpush1.bf16.msra.mxu0 %v5660
      %5680 = vmatprep.subr.bf16.mxu0 0
      %5681 = vmatpush1.bf16.msra.mxu0 %v5661
      %5682 = vmatprep.subr.bf16.mxu0 0
      %5683 = vmatpush1.bf16.msra.mxu0 %v5662
      %5684 = vmatprep.subr.bf16.mxu0 0
      %5685 = vmatpush1.bf16.msra.mxu0 %v5663
      %5686 = vmatprep.subr.bf16.mxu0 0
      %5687 = vmatpush1.bf16.msra.mxu0 %v5664
      %5688 = vmatprep.subr.bf16.mxu0 0
      %5689 = vmatpush1.bf16.msra.mxu0 %v5665
      %5690 = vmatprep.subr.bf16.mxu0 0
      %5691 = vmatpush1.bf16.msra.mxu0 0
      %5692 = vmatprep.subr.bf16.mxu0 0
      %5693 = vmatpush1.bf16.msra.mxu0 0
      %5694 = vmatprep.subr.bf16.mxu0 0
      %5695 = vmatpush1.bf16.msra.mxu0 0
      %5696 = vmatprep.subr.bf16.mxu0 0
      %5697 = vmatpush1.bf16.msra.mxu0 0
      %5698 = vmatprep.subr.bf16.mxu0 0
      %5699 = vmatpush1.bf16.msra.mxu0 0
      %5700 = vmatprep.subr.bf16.mxu0 0
      %5701 = vmatpush1.bf16.msra.mxu0 0
      %5702 = vmatprep.subr.bf16.mxu0 0
      %5703 = vmatpush1.bf16.msra.mxu0 0
      %5704 = vmatprep.subr.bf16.mxu0 0
      %5705 = vmatpush1.bf16.msra.mxu0 0
      %5706 = vmatprep.mubr.bf16.mxu0 0
      %5707 = vmatmul.mubr.bf16.gmra.mrb[0].mxu0 %v5608
      %v5708 = vpop.f32.mrb[0].mxu0
      %v5709 = vadd.f32 0.0, %v5708
      %v5710 = vpop.f32.mrb[0].mxu0
      %v5711 = vpop.f32.mrb[0].mxu0
      %v5712 = vadd.f32 0.0, %v5711
      %v5713 = vpop.f32.mrb[0].mxu0
      %5714 = vmatprep.mubr.bf16.mxu0 0
      %5715 = vmatmul.mubr.bf16.gmra.mrb[0].mxu0 %v5609
      %v5716 = vpop.f32.mrb[0].mxu0
      %v5717 = vadd.f32 0.0, %v5716
      %v5718 = vpop.f32.mrb[0].mxu0
      %v5719 = vpop.f32.mrb[0].mxu0
      %v5720 = vadd.f32 0.0, %v5719
      %v5721 = vpop.f32.mrb[0].mxu0
      %5722 = vdwg.mxu0
      %v5723 = vld [vmem:[%s17] sm:$0x1]
      %v5725 = vlaneseq
      %v5726 = vshrl.u32 %v5725, 7
      %v5727 = vsub.s32 0, %v5726
      %v5728 = vrot.slane %v5723, %v5727
      %v5730 = vmul.f32 %v5709, %v5728
      %v5731 = vmul.f32 %v5712, %v5728
      %v5732 = vmul.f32 %v5717, %v5728
      %v5733 = vmul.f32 %v5720, %v5728
      %5734 = vadd.xlane.f32.xlu0 %v5730
      %v5735 = vpop.xlane.xlu0 %5734
      %5736 = vadd.xlane.f32.xlu0 %v5731
      %v5737 = vpop.xlane.xlu0 %5736
      %5738 = vadd.xlane.f32.xlu0 %v5732
      %v5739 = vpop.xlane.xlu0 %5738
      %5740 = vadd.xlane.f32.xlu0 %v5733
      %v5741 = vpop.xlane.xlu0 %5740
      %v5742 = vmul.f32 %v5735, 0.0625
      %v5743 = vmul.f32 %v5737, 0.0625
      %v5744 = vmul.f32 %v5739, 0.0625
      %v5745 = vmul.f32 %v5741, 0.0625
      %v5746 = vmul.f32 %v5730, %v5709
      %v5747 = vmul.f32 %v5731, %v5712
      %v5748 = vmul.f32 %v5732, %v5717
      %v5749 = vmul.f32 %v5733, %v5720
      %5750 = vadd.xlane.f32.xlu0 %v5746
      %v5751 = vpop.xlane.xlu0 %5750
      %5752 = vadd.xlane.f32.xlu0 %v5747
      %v5753 = vpop.xlane.xlu0 %5752
      %5754 = vadd.xlane.f32.xlu0 %v5748
      %v5755 = vpop.xlane.xlu0 %5754
      %5756 = vadd.xlane.f32.xlu0 %v5749
      %v5757 = vpop.xlane.xlu0 %5756
      %v5758 = vmul.f32 %v5751, 0.0625
      %v5759 = vmul.f32 %v5753, 0.0625
      %v5760 = vmul.f32 %v5755, 0.0625
      %v5761 = vmul.f32 %v5757, 0.0625
      %v5762 = vmul.f32 %v5742, %v5742
      %v5763 = vmul.f32 %v5743, %v5743
      %v5764 = vmul.f32 %v5744, %v5744
      %v5765 = vmul.f32 %v5745, %v5745
      %v5766 = vsub.f32 %v5758, %v5762
      %v5767 = vsub.f32 %v5759, %v5763
      %v5768 = vsub.f32 %v5760, %v5764
      %v5769 = vsub.f32 %v5761, %v5765
      %v5770 = vmax.f32 %v5766, 0.0
      %v5771 = vmax.f32 %v5767, 0.0
      %v5772 = vmax.f32 %v5768, 0.0
      %v5773 = vmax.f32 %v5769, 0.0
      %v5774 = vld [vmem:[%s10] sm:$0xff]
      %v5775 = vld [vmem:[%s10 + $0x8] sm:$0xff]
      %v5776 = vld [vmem:[%s10 + $0x10] sm:$0xff]
      %v5777 = vld [vmem:[%s10 + $0x18] sm:$0xff]
      %v5778 = vadd.f32 %v5770, 1e-05
      %v5779 = vadd.f32 %v5771, 1e-05
      %v5780 = vadd.f32 %v5772, 1e-05
      %v5781 = vadd.f32 %v5773, 1e-05
      %v5782 = vrsqrt.pop %v5778
      %v5783 = vrsqrt.pop %v5779
      %v5784 = vrsqrt.pop %v5780
      %v5785 = vrsqrt.pop %v5781
      %v5786 = vmul.f32 %v5774, %v5782
      %v5787 = vmul.f32 %v5775, %v5783
      %v5788 = vmul.f32 %v5776, %v5784
      %v5789 = vmul.f32 %v5777, %v5785
      %v5790 = vmul.f32 %v5742, %v5786
      %v5791 = vmul.f32 %v5743, %v5787
      %v5792 = vmul.f32 %v5744, %v5788
      %v5793 = vmul.f32 %v5745, %v5789
      %5798 = vrot.lane.b32.xlu0 %v5790, 1
      %v5799 = vpop.permute.xlu0 %5798
      %5800 = vrot.lane.b32.xlu0 %v5791, 1
      %v5801 = vpop.permute.xlu0 %5800
      %5802 = vrot.lane.b32.xlu0 %v5792, 1
      %v5803 = vpop.permute.xlu0 %5802
      %5804 = vrot.lane.b32.xlu0 %v5793, 1
      %v5805 = vpop.permute.xlu0 %5804
      %v5810 = vsub.f32 %v5774, %v5799
      %v5811 = vsub.f32 %v5775, %v5801
      %v5812 = vsub.f32 %v5776, %v5803
      %v5813 = vsub.f32 %v5777, %v5805
      %5815 = vset.pattern.permute.xlu0 0
      %5816 = vperm.xlu0 %5815, %v5786
      %v5817 = vpop.permute.xlu0 %5816
      %5820 = vset.pattern.permute.xlu0 0
      %5821 = vperm.xlu0 %5820, %v5787
      %v5822 = vpop.permute.xlu0 %5821
      %5825 = vset.pattern.permute.xlu0 0
      %5826 = vperm.xlu0 %5825, %v5788
      %v5827 = vpop.permute.xlu0 %5826
      %5830 = vset.pattern.permute.xlu0 0
      %5831 = vperm.xlu0 %5830, %v5789
      %v5832 = vpop.permute.xlu0 %5831
      %v5834 = vmul.f32 %v5709, %v5817
      %v5835 = vmul.f32 %v5712, %v5822
      %v5836 = vmul.f32 %v5717, %v5827
      %v5837 = vmul.f32 %v5720, %v5832
      %5839 = vset.pattern.permute.xlu0 1
      %5840 = vperm.xlu0 %5839, %v5810
      %v5841 = vpop.permute.xlu0 %5840
      %5844 = vset.pattern.permute.xlu0 1
      %5845 = vperm.xlu0 %5844, %v5811
      %v5846 = vpop.permute.xlu0 %5845
      %5849 = vset.pattern.permute.xlu0 1
      %5850 = vperm.xlu0 %5849, %v5812
      %v5851 = vpop.permute.xlu0 %5850
      %5854 = vset.pattern.permute.xlu0 1
      %5855 = vperm.xlu0 %5854, %v5813
      %v5856 = vpop.permute.xlu0 %5855
      %v5858 = vadd.f32 %v5834, %v5841
      %v5859 = vadd.f32 %v5835, %v5846
      %v5860 = vadd.f32 %v5836, %v5851
      %v5861 = vadd.f32 %v5837, %v5856
      %vm5862 = vcmp.ge.f32.partialorder %v5858, 0.0
      %vm5863 = vcmp.ge.f32.partialorder %v5859, 0.0
      %vm5864 = vcmp.ge.f32.partialorder %v5860, 0.0
      %vm5865 = vcmp.ge.f32.partialorder %v5861, 0.0
      %v5866 = vmul.f32 %v5858, 0.01
      %v5867 = vmul.f32 %v5859, 0.01
      %v5868 = vmul.f32 %v5860, 0.01
      %v5869 = vmul.f32 %v5861, 0.01
      %v5870 = vsel %vm5862, %v5858, %v5866
      %v5871 = vsel %vm5863, %v5859, %v5867
      %v5872 = vsel %vm5864, %v5860, %v5868
      %v5873 = vsel %vm5865, %v5861, %v5869
      %v5874 = vmul.f32 %v5870, %v5728
      %v5875 = vmul.f32 %v5871, %v5728
      %v5876 = vmul.f32 %v5872, %v5728
      %v5877 = vmul.f32 %v5873, %v5728
      %v5878 = vpack.c.bf16 %v5875, %v5874
      %v5879 = vpack.c.bf16 %v5877, %v5876
      %5882 = vrot.lane.b32.xlu0 %v5878, 7
      %v5883 = vpop.permute.xlu0 %5882
      %5884 = vrot.lane.b32.xlu0 %v5879, 7
      %v5885 = vpop.permute.xlu0 %5884
      %vm5888 = vcmask 1047608
      %5889 = vst.msk [vmem:[#allocation6] sm:$0xff] %vm5888, %v5883
      %vm5890 = vcmask 56320
      %5891 = vst.msk [vmem:[#allocation6 + $0x8] sm:$0xff] %vm5890, %v5883
      %5892 = vst.msk [vmem:[#allocation6 + $0x10] sm:$0xff] %vm5888, %v5885
      %5893 = vst.msk [vmem:[#allocation6 + $0x18] sm:$0xff] %vm5890, %v5885
      %v5894 = vld [vmem:[%s11] sm:$0xf]
      %v5895 = vld [vmem:[%s11 + $0x4] sm:$0xf]
      %v5896 = vld [vmem:[%s11 + $0x8] sm:$0xf]
      %v5897 = vld [vmem:[%s11 + $0xc] sm:$0xf]
      %v5898 = vld [vmem:[#allocation6] sm:$0xff]
      %v5899 = vld [vmem:[#allocation6 + $0x10] sm:$0xff]
      %v5900 = vld [vmem:[%s11 + $0x10] sm:$0xf]
      %v5901 = vld [vmem:[%s11 + $0x14] sm:$0xf]
      %v5902 = vld [vmem:[%s11 + $0x18] sm:$0xf]
      %v5903 = vld [vmem:[%s11 + $0x1c] sm:$0xf]
      %v5904 = vld [vmem:[#allocation6] sm:$0xff]
      %v5905 = vld [vmem:[#allocation6 + $0x8] sm:$0xff]
      %v5906 = vld [vmem:[#allocation6 + $0x10] sm:$0xff]
      %v5907 = vld [vmem:[#allocation6 + $0x18] sm:$0xff]
      %v5912 = vunpack.c.l.b16 %v5900
      %v5913 = vunpack.c.l.b16 %v5901
      %v5914 = vunpack.c.l.b16 %v5902
      %v5915 = vunpack.c.l.b16 %v5903
      %v5916 = vpack.c.b16 %v5913, %v5912
      %v5917 = vpack.c.b16 %v5915, %v5914
      %5922 = vrot.lane.b32.xlu0 %v5904, 127
      %v5923 = vpop.permute.xlu0 %5922
      %5924 = vrot.lane.b32.xlu0 %v5905, 127
      %v5925 = vpop.permute.xlu0 %5924
      %5926 = vrot.lane.b32.xlu0 %v5906, 127
      %v5927 = vpop.permute.xlu0 %5926
      %5928 = vrot.lane.b32.xlu0 %v5907, 127
      %v5929 = vpop.permute.xlu0 %5928
      %v5930 = vsel %vm692, %v5923, %v5925
      %v5931 = vsel %vm692, %v5927, %v5929
      %vm5934 = vcmask 261120
      %v5936 = vsel %vm5934, %v5916, 0
      %v5939 = vsel %vm5934, %v5917, 0
      %5941 = vmatprep.subr.bf16.mxu0 0
      %5942 = vmatpush1.bf16.msra.mxu0 %v5930
      %5943 = vmatprep.subr.bf16.mxu0 0
      %5944 = vmatpush1.bf16.msra.mxu0 %v5931
      %5945 = vmatprep.subr.bf16.mxu0 0
      %5946 = vmatpush1.bf16.msra.mxu0 0
      %5947 = vmatprep.subr.bf16.mxu0 0
      %5948 = vmatpush1.bf16.msra.mxu0 0
      %5949 = vmatprep.subr.bf16.mxu0 0
      %5950 = vmatpush1.bf16.msra.mxu0 0
      %5951 = vmatprep.subr.bf16.mxu0 0
      %5952 = vmatpush1.bf16.msra.mxu0 0
      %5953 = vmatprep.subr.bf16.mxu0 0
      %5954 = vmatpush1.bf16.msra.mxu0 0
      %5955 = vmatprep.subr.bf16.mxu0 0
      %5956 = vmatpush1.bf16.msra.mxu0 0
      %5957 = vmatprep.subr.bf16.mxu0 0
      %5958 = vmatpush1.bf16.msra.mxu0 0
      %5959 = vmatprep.subr.bf16.mxu0 0
      %5960 = vmatpush1.bf16.msra.mxu0 0
      %5961 = vmatprep.subr.bf16.mxu0 0
      %5962 = vmatpush1.bf16.msra.mxu0 0
      %5963 = vmatprep.subr.bf16.mxu0 0
      %5964 = vmatpush1.bf16.msra.mxu0 0
      %5965 = vmatprep.subr.bf16.mxu0 0
      %5966 = vmatpush1.bf16.msra.mxu0 0
      %5967 = vmatprep.subr.bf16.mxu0 0
      %5968 = vmatpush1.bf16.msra.mxu0 0
      %5969 = vmatprep.subr.bf16.mxu0 0
      %5970 = vmatpush1.bf16.msra.mxu0 0
      %5971 = vmatprep.subr.bf16.mxu0 0
      %5972 = vmatpush1.bf16.msra.mxu0 0
      %5973 = vmatprep.mubr.bf16.mxu0 0
      %5974 = vmatmul.mubr.bf16.gmra.mrb[0].mxu0 %v5936
      %v5975 = vpop.f32.mrb[0].mxu0
      %v5976 = vadd.f32 0.0, %v5975
      %v5977 = vpop.f32.mrb[0].mxu0
      %v5978 = vpop.f32.mrb[0].mxu0
      %v5979 = vadd.f32 0.0, %v5978
      %v5980 = vpop.f32.mrb[0].mxu0
      %5981 = vmatprep.mubr.bf16.mxu0 0
      %5982 = vmatmul.mubr.bf16.gmra.mrb[0].mxu0 %v5939
      %v5983 = vpop.f32.mrb[0].mxu0
      %v5984 = vadd.f32 0.0, %v5983
      %v5985 = vpop.f32.mrb[0].mxu0
      %v5986 = vpop.f32.mrb[0].mxu0
      %v5987 = vadd.f32 0.0, %v5986
      %v5988 = vpop.f32.mrb[0].mxu0
      %5989 = vdwg.mxu0
      %v5994 = vunpack.c.l.b16 %v5894
      %v5995 = vunpack.c.l.b16 %v5895
      %v5996 = vunpack.c.l.b16 %v5896
      %v5997 = vunpack.c.l.b16 %v5897
      %v5998 = vpack.c.b16 %v5995, %v5994
      %v5999 = vpack.c.b16 %v5997, %v5996
      %v6001 = vsel %vm5934, %v5998, 0
      %v6004 = vsel %vm5934, %v5999, 0
      %6006 = vmatprep.subr.bf16.mxu0 0
      %6007 = vmatpush1.bf16.msra.mxu0 %v5898
      %6008 = vmatprep.subr.bf16.mxu0 0
      %6009 = vmatpush1.bf16.msra.mxu0 %v5899
      %6010 = vmatprep.subr.bf16.mxu0 0
      %6011 = vmatpush1.bf16.msra.mxu0 0
      %6012 = vmatprep.subr.bf16.mxu0 0
      %6013 = vmatpush1.bf16.msra.mxu0 0
      %6014 = vmatprep.subr.bf16.mxu0 0
      %6015 = vmatpush1.bf16.msra.mxu0 0
      %6016 = vmatprep.subr.bf16.mxu0 0
      %6017 = vmatpush1.bf16.msra.mxu0 0
      %6018 = vmatprep.subr.bf16.mxu0 0
      %6019 = vmatpush1.bf16.msra.mxu0 0
      %6020 = vmatprep.subr.bf16.mxu0 0
      %6021 = vmatpush1.bf16.msra.mxu0 0
      %6022 = vmatprep.subr.bf16.mxu0 0
      %6023 = vmatpush1.bf16.msra.mxu0 0
      %6024 = vmatprep.subr.bf16.mxu0 0
      %6025 = vmatpush1.bf16.msra.mxu0 0
      %6026 = vmatprep.subr.bf16.mxu0 0
      %6027 = vmatpush1.bf16.msra.mxu0 0
      %6028 = vmatprep.subr.bf16.mxu0 0
      %6029 = vmatpush1.bf16.msra.mxu0 0
      %6030 = vmatprep.subr.bf16.mxu0 0
      %6031 = vmatpush1.bf16.msra.mxu0 0
      %6032 = vmatprep.subr.bf16.mxu0 0
      %6033 = vmatpush1.bf16.msra.mxu0 0
      %6034 = vmatprep.subr.bf16.mxu0 0
      %6035 = vmatpush1.bf16.msra.mxu0 0
      %6036 = vmatprep.subr.bf16.mxu0 0
      %6037 = vmatpush1.bf16.msra.mxu0 0
      %6038 = vmatprep.mubr.bf16.mxu0 0
      %6039 = vmatmul.mubr.bf16.gmra.mrb[0].mxu0 %v6001
      %v6040 = vpop.f32.mrb[0].mxu0
      %v6041 = vadd.f32 %v5976, %v6040
      %v6042 = vpop.f32.mrb[0].mxu0
      %v6043 = vpop.f32.mrb[0].mxu0
      %v6044 = vadd.f32 %v5979, %v6043
      %v6045 = vpop.f32.mrb[0].mxu0
      %6046 = vmatprep.mubr.bf16.mxu0 0
      %6047 = vmatmul.mubr.bf16.gmra.mrb[0].mxu0 %v6004
      %v6048 = vpop.f32.mrb[0].mxu0
      %v6049 = vadd.f32 %v5984, %v6048
      %v6050 = vpop.f32.mrb[0].mxu0
      %v6051 = vpop.f32.mrb[0].mxu0
      %v6052 = vadd.f32 %v5987, %v6051
      %v6053 = vpop.f32.mrb[0].mxu0
      %6054 = vdwg.mxu0
      %v6055 = vld [vmem:[%s11 + $0x20] sm:$0xf]
      %v6056 = vld [vmem:[%s11 + $0x24] sm:$0xf]
      %v6057 = vld [vmem:[%s11 + $0x28] sm:$0xf]
      %v6058 = vld [vmem:[%s11 + $0x2c] sm:$0xf]
      %v6063 = vunpack.c.l.b16 %v6055
      %v6064 = vunpack.c.l.b16 %v6056
      %v6065 = vunpack.c.l.b16 %v6057
      %v6066 = vunpack.c.l.b16 %v6058
      %v6067 = vpack.c.b16 %v6064, %v6063
      %v6068 = vpack.c.b16 %v6066, %v6065
      %6069 = vrot.lane.b32.xlu0 %v5904, 126
      %v6070 = vpop.permute.xlu0 %6069
      %6071 = vrot.lane.b32.xlu0 %v5905, 126
      %v6072 = vpop.permute.xlu0 %6071
      %6073 = vrot.lane.b32.xlu0 %v5906, 126
      %v6074 = vpop.permute.xlu0 %6073
      %6075 = vrot.lane.b32.xlu0 %v5907, 126
      %v6076 = vpop.permute.xlu0 %6075
      %v6077 = vsel %vm901, %v6070, %v6072
      %v6078 = vsel %vm901, %v6074, %v6076
      %v6082 = vsel %vm5934, %v6067, 0
      %v6085 = vsel %vm5934, %v6068, 0
      %6087 = vmatprep.subr.bf16.mxu0 0
      %6088 = vmatpush1.bf16.msra.mxu0 %v6077
      %6089 = vmatprep.subr.bf16.mxu0 0
      %6090 = vmatpush1.bf16.msra.mxu0 %v6078
      %6091 = vmatprep.subr.bf16.mxu0 0
      %6092 = vmatpush1.bf16.msra.mxu0 0
      %6093 = vmatprep.subr.bf16.mxu0 0
      %6094 = vmatpush1.bf16.msra.mxu0 0
      %6095 = vmatprep.subr.bf16.mxu0 0
      %6096 = vmatpush1.bf16.msra.mxu0 0
      %6097 = vmatprep.subr.bf16.mxu0 0
      %6098 = vmatpush1.bf16.msra.mxu0 0
      %6099 = vmatprep.subr.bf16.mxu0 0
      %6100 = vmatpush1.bf16.msra.mxu0 0
      %6101 = vmatprep.subr.bf16.mxu0 0
      %6102 = vmatpush1.bf16.msra.mxu0 0
      %6103 = vmatprep.subr.bf16.mxu0 0
      %6104 = vmatpush1.bf16.msra.mxu0 0
      %6105 = vmatprep.subr.bf16.mxu0 0
      %6106 = vmatpush1.bf16.msra.mxu0 0
      %6107 = vmatprep.subr.bf16.mxu0 0
      %6108 = vmatpush1.bf16.msra.mxu0 0
      %6109 = vmatprep.subr.bf16.mxu0 0
      %6110 = vmatpush1.bf16.msra.mxu0 0
      %6111 = vmatprep.subr.bf16.mxu0 0
      %6112 = vmatpush1.bf16.msra.mxu0 0
      %6113 = vmatprep.subr.bf16.mxu0 0
      %6114 = vmatpush1.bf16.msra.mxu0 0
      %6115 = vmatprep.subr.bf16.mxu0 0
      %6116 = vmatpush1.bf16.msra.mxu0 0
      %6117 = vmatprep.subr.bf16.mxu0 0
      %6118 = vmatpush1.bf16.msra.mxu0 0
      %6119 = vmatprep.mubr.bf16.mxu0 0
      %6120 = vmatmul.mubr.bf16.gmra.mrb[0].mxu0 %v6082
      %v6121 = vpop.f32.mrb[0].mxu0
      %v6122 = vadd.f32 0.0, %v6121
      %v6123 = vpop.f32.mrb[0].mxu0
      %v6124 = vpop.f32.mrb[0].mxu0
      %v6125 = vadd.f32 0.0, %v6124
      %v6126 = vpop.f32.mrb[0].mxu0
      %6127 = vmatprep.mubr.bf16.mxu0 0
      %6128 = vmatmul.mubr.bf16.gmra.mrb[0].mxu0 %v6085
      %v6129 = vpop.f32.mrb[0].mxu0
      %v6130 = vadd.f32 0.0, %v6129
      %v6131 = vpop.f32.mrb[0].mxu0
      %v6132 = vpop.f32.mrb[0].mxu0
      %v6133 = vadd.f32 0.0, %v6132
      %v6134 = vpop.f32.mrb[0].mxu0
      %6135 = vdwg.mxu0
      %v6136 = vadd.f32 %v6041, %v6122
      %v6137 = vadd.f32 %v6044, %v6125
      %v6138 = vadd.f32 %v6049, %v6130
      %v6139 = vadd.f32 %v6052, %v6133
      %v6140 = vld [vmem:[%s11 + $0x30] sm:$0xf]
      %v6141 = vld [vmem:[%s11 + $0x34] sm:$0xf]
      %v6142 = vld [vmem:[%s11 + $0x38] sm:$0xf]
      %v6143 = vld [vmem:[%s11 + $0x3c] sm:$0xf]
      %v6148 = vunpack.c.l.b16 %v6140
      %v6149 = vunpack.c.l.b16 %v6141
      %v6150 = vunpack.c.l.b16 %v6142
      %v6151 = vunpack.c.l.b16 %v6143
      %v6152 = vpack.c.b16 %v6149, %v6148
      %v6153 = vpack.c.b16 %v6151, %v6150
      %6154 = vrot.lane.b32.xlu0 %v5904, 122
      %v6155 = vpop.permute.xlu0 %6154
      %6156 = vrot.lane.b32.xlu0 %v5905, 122
      %v6157 = vpop.permute.xlu0 %6156
      %6158 = vrot.lane.b32.xlu0 %v5906, 122
      %v6159 = vpop.permute.xlu0 %6158
      %6160 = vrot.lane.b32.xlu0 %v5907, 122
      %v6161 = vpop.permute.xlu0 %6160
      %vm6162 = vcmask 998400
      %v6163 = vsel %vm6162, %v6155, %v6157
      %v6164 = vsel %vm6162, %v6159, %v6161
      %v6168 = vsel %vm5934, %v6152, 0
      %v6171 = vsel %vm5934, %v6153, 0
      %6173 = vmatprep.subr.bf16.mxu0 0
      %6174 = vmatpush1.bf16.msra.mxu0 %v6163
      %6175 = vmatprep.subr.bf16.mxu0 0
      %6176 = vmatpush1.bf16.msra.mxu0 %v6164
      %6177 = vmatprep.subr.bf16.mxu0 0
      %6178 = vmatpush1.bf16.msra.mxu0 0
      %6179 = vmatprep.subr.bf16.mxu0 0
      %6180 = vmatpush1.bf16.msra.mxu0 0
      %6181 = vmatprep.subr.bf16.mxu0 0
      %6182 = vmatpush1.bf16.msra.mxu0 0
      %6183 = vmatprep.subr.bf16.mxu0 0
      %6184 = vmatpush1.bf16.msra.mxu0 0
      %6185 = vmatprep.subr.bf16.mxu0 0
      %6186 = vmatpush1.bf16.msra.mxu0 0
      %6187 = vmatprep.subr.bf16.mxu0 0
      %6188 = vmatpush1.bf16.msra.mxu0 0
      %6189 = vmatprep.subr.bf16.mxu0 0
      %6190 = vmatpush1.bf16.msra.mxu0 0
      %6191 = vmatprep.subr.bf16.mxu0 0
      %6192 = vmatpush1.bf16.msra.mxu0 0
      %6193 = vmatprep.subr.bf16.mxu0 0
      %6194 = vmatpush1.bf16.msra.mxu0 0
      %6195 = vmatprep.subr.bf16.mxu0 0
      %6196 = vmatpush1.bf16.msra.mxu0 0
      %6197 = vmatprep.subr.bf16.mxu0 0
      %6198 = vmatpush1.bf16.msra.mxu0 0
      %6199 = vmatprep.subr.bf16.mxu0 0
      %6200 = vmatpush1.bf16.msra.mxu0 0
      %6201 = vmatprep.subr.bf16.mxu0 0
      %6202 = vmatpush1.bf16.msra.mxu0 0
      %6203 = vmatprep.subr.bf16.mxu0 0
      %6204 = vmatpush1.bf16.msra.mxu0 0
      %6205 = vmatprep.mubr.bf16.mxu0 0
      %6206 = vmatmul.mubr.bf16.gmra.mrb[0].mxu0 %v6168
      %v6207 = vpop.f32.mrb[0].mxu0
      %v6208 = vadd.f32 0.0, %v6207
      %v6209 = vpop.f32.mrb[0].mxu0
      %v6210 = vpop.f32.mrb[0].mxu0
      %v6211 = vadd.f32 0.0, %v6210
      %v6212 = vpop.f32.mrb[0].mxu0
      %6213 = vmatprep.mubr.bf16.mxu0 0
      %6214 = vmatmul.mubr.bf16.gmra.mrb[0].mxu0 %v6171
      %v6215 = vpop.f32.mrb[0].mxu0
      %v6216 = vadd.f32 0.0, %v6215
      %v6217 = vpop.f32.mrb[0].mxu0
      %v6218 = vpop.f32.mrb[0].mxu0
      %v6219 = vadd.f32 0.0, %v6218
      %v6220 = vpop.f32.mrb[0].mxu0
      %6221 = vdwg.mxu0
      %v6222 = vadd.f32 %v6136, %v6208
      %v6223 = vadd.f32 %v6137, %v6211
      %v6224 = vadd.f32 %v6138, %v6216
      %v6225 = vadd.f32 %v6139, %v6219
      %v6226 = vld [vmem:[%s11 + $0x40] sm:$0xf]
      %v6227 = vld [vmem:[%s11 + $0x44] sm:$0xf]
      %v6228 = vld [vmem:[%s11 + $0x48] sm:$0xf]
      %v6229 = vld [vmem:[%s11 + $0x4c] sm:$0xf]
      %v6234 = vunpack.c.l.b16 %v6226
      %v6235 = vunpack.c.l.b16 %v6227
      %v6236 = vunpack.c.l.b16 %v6228
      %v6237 = vunpack.c.l.b16 %v6229
      %v6238 = vpack.c.b16 %v6235, %v6234
      %v6239 = vpack.c.b16 %v6237, %v6236
      %6240 = vrot.lane.b32.xlu0 %v5904, 121
      %v6241 = vpop.permute.xlu0 %6240
      %6242 = vrot.lane.b32.xlu0 %v5905, 121
      %v6243 = vpop.permute.xlu0 %6242
      %6244 = vrot.lane.b32.xlu0 %v5906, 121
      %v6245 = vpop.permute.xlu0 %6244
      %6246 = vrot.lane.b32.xlu0 %v5907, 121
      %v6247 = vpop.permute.xlu0 %6246
      %vm6248 = vcmask 990208
      %v6249 = vsel %vm6248, %v6241, %v6243
      %v6250 = vsel %vm6248, %v6245, %v6247
      %v6254 = vsel %vm5934, %v6238, 0
      %v6257 = vsel %vm5934, %v6239, 0
      %6259 = vmatprep.subr.bf16.mxu0 0
      %6260 = vmatpush1.bf16.msra.mxu0 %v6249
      %6261 = vmatprep.subr.bf16.mxu0 0
      %6262 = vmatpush1.bf16.msra.mxu0 %v6250
      %6263 = vmatprep.subr.bf16.mxu0 0
      %6264 = vmatpush1.bf16.msra.mxu0 0
      %6265 = vmatprep.subr.bf16.mxu0 0
      %6266 = vmatpush1.bf16.msra.mxu0 0
      %6267 = vmatprep.subr.bf16.mxu0 0
      %6268 = vmatpush1.bf16.msra.mxu0 0
      %6269 = vmatprep.subr.bf16.mxu0 0
      %6270 = vmatpush1.bf16.msra.mxu0 0
      %6271 = vmatprep.subr.bf16.mxu0 0
      %6272 = vmatpush1.bf16.msra.mxu0 0
      %6273 = vmatprep.subr.bf16.mxu0 0
      %6274 = vmatpush1.bf16.msra.mxu0 0
      %6275 = vmatprep.subr.bf16.mxu0 0
      %6276 = vmatpush1.bf16.msra.mxu0 0
      %6277 = vmatprep.subr.bf16.mxu0 0
      %6278 = vmatpush1.bf16.msra.mxu0 0
      %6279 = vmatprep.subr.bf16.mxu0 0
      %6280 = vmatpush1.bf16.msra.mxu0 0
      %6281 = vmatprep.subr.bf16.mxu0 0
      %6282 = vmatpush1.bf16.msra.mxu0 0
      %6283 = vmatprep.subr.bf16.mxu0 0
      %6284 = vmatpush1.bf16.msra.mxu0 0
      %6285 = vmatprep.subr.bf16.mxu0 0
      %6286 = vmatpush1.bf16.msra.mxu0 0
      %6287 = vmatprep.subr.bf16.mxu0 0
      %6288 = vmatpush1.bf16.msra.mxu0 0
      %6289 = vmatprep.subr.bf16.mxu0 0
      %6290 = vmatpush1.bf16.msra.mxu0 0
      %6291 = vmatprep.mubr.bf16.mxu0 0
      %6292 = vmatmul.mubr.bf16.gmra.mrb[0].mxu0 %v6254
      %v6293 = vpop.f32.mrb[0].mxu0
      %v6294 = vadd.f32 0.0, %v6293
      %v6295 = vpop.f32.mrb[0].mxu0
      %v6296 = vpop.f32.mrb[0].mxu0
      %v6297 = vadd.f32 0.0, %v6296
      %v6298 = vpop.f32.mrb[0].mxu0
      %6299 = vmatprep.mubr.bf16.mxu0 0
      %6300 = vmatmul.mubr.bf16.gmra.mrb[0].mxu0 %v6257
      %v6301 = vpop.f32.mrb[0].mxu0
      %v6302 = vadd.f32 0.0, %v6301
      %v6303 = vpop.f32.mrb[0].mxu0
      %v6304 = vpop.f32.mrb[0].mxu0
      %v6305 = vadd.f32 0.0, %v6304
      %v6306 = vpop.f32.mrb[0].mxu0
      %6307 = vdwg.mxu0
      %v6308 = vadd.f32 %v6222, %v6294
      %v6309 = vadd.f32 %v6223, %v6297
      %v6310 = vadd.f32 %v6224, %v6302
      %v6311 = vadd.f32 %v6225, %v6305
      %v6312 = vld [vmem:[%s11 + $0x50] sm:$0xf]
      %v6313 = vld [vmem:[%s11 + $0x54] sm:$0xf]
      %v6314 = vld [vmem:[%s11 + $0x58] sm:$0xf]
      %v6315 = vld [vmem:[%s11 + $0x5c] sm:$0xf]
      %v6320 = vunpack.c.l.b16 %v6312
      %v6321 = vunpack.c.l.b16 %v6313
      %v6322 = vunpack.c.l.b16 %v6314
      %v6323 = vunpack.c.l.b16 %v6315
      %v6324 = vpack.c.b16 %v6321, %v6320
      %v6325 = vpack.c.b16 %v6323, %v6322
      %6326 = vrot.lane.b32.xlu0 %v5904, 120
      %v6327 = vpop.permute.xlu0 %6326
      %6328 = vrot.lane.b32.xlu0 %v5905, 120
      %v6329 = vpop.permute.xlu0 %6328
      %6330 = vrot.lane.b32.xlu0 %v5906, 120
      %v6331 = vpop.permute.xlu0 %6330
      %6332 = vrot.lane.b32.xlu0 %v5907, 120
      %v6333 = vpop.permute.xlu0 %6332
      %vm6334 = vcmask 982016
      %v6335 = vsel %vm6334, %v6327, %v6329
      %v6336 = vsel %vm6334, %v6331, %v6333
      %v6340 = vsel %vm5934, %v6324, 0
      %v6343 = vsel %vm5934, %v6325, 0
      %6345 = vmatprep.subr.bf16.mxu0 0
      %6346 = vmatpush1.bf16.msra.mxu0 %v6335
      %6347 = vmatprep.subr.bf16.mxu0 0
      %6348 = vmatpush1.bf16.msra.mxu0 %v6336
      %6349 = vmatprep.subr.bf16.mxu0 0
      %6350 = vmatpush1.bf16.msra.mxu0 0
      %6351 = vmatprep.subr.bf16.mxu0 0
      %6352 = vmatpush1.bf16.msra.mxu0 0
      %6353 = vmatprep.subr.bf16.mxu0 0
      %6354 = vmatpush1.bf16.msra.mxu0 0
      %6355 = vmatprep.subr.bf16.mxu0 0
      %6356 = vmatpush1.bf16.msra.mxu0 0
      %6357 = vmatprep.subr.bf16.mxu0 0
      %6358 = vmatpush1.bf16.msra.mxu0 0
      %6359 = vmatprep.subr.bf16.mxu0 0
      %6360 = vmatpush1.bf16.msra.mxu0 0
      %6361 = vmatprep.subr.bf16.mxu0 0
      %6362 = vmatpush1.bf16.msra.mxu0 0
      %6363 = vmatprep.subr.bf16.mxu0 0
      %6364 = vmatpush1.bf16.msra.mxu0 0
      %6365 = vmatprep.subr.bf16.mxu0 0
      %6366 = vmatpush1.bf16.msra.mxu0 0
      %6367 = vmatprep.subr.bf16.mxu0 0
      %6368 = vmatpush1.bf16.msra.mxu0 0
      %6369 = vmatprep.subr.bf16.mxu0 0
      %6370 = vmatpush1.bf16.msra.mxu0 0
      %6371 = vmatprep.subr.bf16.mxu0 0
      %6372 = vmatpush1.bf16.msra.mxu0 0
      %6373 = vmatprep.subr.bf16.mxu0 0
      %6374 = vmatpush1.bf16.msra.mxu0 0
      %6375 = vmatprep.subr.bf16.mxu0 0
      %6376 = vmatpush1.bf16.msra.mxu0 0
      %6377 = vmatprep.mubr.bf16.mxu0 0
      %6378 = vmatmul.mubr.bf16.gmra.mrb[0].mxu0 %v6340
      %v6379 = vpop.f32.mrb[0].mxu0
      %v6380 = vadd.f32 0.0, %v6379
      %v6381 = vpop.f32.mrb[0].mxu0
      %v6382 = vpop.f32.mrb[0].mxu0
      %v6383 = vadd.f32 0.0, %v6382
      %v6384 = vpop.f32.mrb[0].mxu0
      %6385 = vmatprep.mubr.bf16.mxu0 0
      %6386 = vmatmul.mubr.bf16.gmra.mrb[0].mxu0 %v6343
      %v6387 = vpop.f32.mrb[0].mxu0
      %v6388 = vadd.f32 0.0, %v6387
      %v6389 = vpop.f32.mrb[0].mxu0
      %v6390 = vpop.f32.mrb[0].mxu0
      %v6391 = vadd.f32 0.0, %v6390
      %v6392 = vpop.f32.mrb[0].mxu0
      %6393 = vdwg.mxu0
      %v6394 = vadd.f32 %v6308, %v6380
      %v6395 = vadd.f32 %v6309, %v6383
      %v6396 = vadd.f32 %v6310, %v6388
      %v6397 = vadd.f32 %v6311, %v6391
      %v6398 = vld [vmem:[%s11 + $0x60] sm:$0xf]
      %v6399 = vld [vmem:[%s11 + $0x64] sm:$0xf]
      %v6400 = vld [vmem:[%s11 + $0x68] sm:$0xf]
      %v6401 = vld [vmem:[%s11 + $0x6c] sm:$0xf]
      %v6406 = vunpack.c.l.b16 %v6398
      %v6407 = vunpack.c.l.b16 %v6399
      %v6408 = vunpack.c.l.b16 %v6400
      %v6409 = vunpack.c.l.b16 %v6401
      %v6410 = vpack.c.b16 %v6407, %v6406
      %v6411 = vpack.c.b16 %v6409, %v6408
      %6412 = vrot.lane.b32.xlu0 %v5904, 116
      %v6413 = vpop.permute.xlu0 %6412
      %6414 = vrot.lane.b32.xlu0 %v5905, 116
      %v6415 = vpop.permute.xlu0 %6414
      %6416 = vrot.lane.b32.xlu0 %v5906, 116
      %v6417 = vpop.permute.xlu0 %6416
      %6418 = vrot.lane.b32.xlu0 %v5907, 116
      %v6419 = vpop.permute.xlu0 %6418
      %v6420 = vsel %vm4588, %v6413, %v6415
      %v6421 = vsel %vm4588, %v6417, %v6419
      %v6425 = vsel %vm5934, %v6410, 0
      %v6428 = vsel %vm5934, %v6411, 0
      %6430 = vmatprep.subr.bf16.mxu0 0
      %6431 = vmatpush1.bf16.msra.mxu0 %v6420
      %6432 = vmatprep.subr.bf16.mxu0 0
      %6433 = vmatpush1.bf16.msra.mxu0 %v6421
      %6434 = vmatprep.subr.bf16.mxu0 0
      %6435 = vmatpush1.bf16.msra.mxu0 0
      %6436 = vmatprep.subr.bf16.mxu0 0
      %6437 = vmatpush1.bf16.msra.mxu0 0
      %6438 = vmatprep.subr.bf16.mxu0 0
      %6439 = vmatpush1.bf16.msra.mxu0 0
      %6440 = vmatprep.subr.bf16.mxu0 0
      %6441 = vmatpush1.bf16.msra.mxu0 0
      %6442 = vmatprep.subr.bf16.mxu0 0
      %6443 = vmatpush1.bf16.msra.mxu0 0
      %6444 = vmatprep.subr.bf16.mxu0 0
      %6445 = vmatpush1.bf16.msra.mxu0 0
      %6446 = vmatprep.subr.bf16.mxu0 0
      %6447 = vmatpush1.bf16.msra.mxu0 0
      %6448 = vmatprep.subr.bf16.mxu0 0
      %6449 = vmatpush1.bf16.msra.mxu0 0
      %6450 = vmatprep.subr.bf16.mxu0 0
      %6451 = vmatpush1.bf16.msra.mxu0 0
      %6452 = vmatprep.subr.bf16.mxu0 0
      %6453 = vmatpush1.bf16.msra.mxu0 0
      %6454 = vmatprep.subr.bf16.mxu0 0
      %6455 = vmatpush1.bf16.msra.mxu0 0
      %6456 = vmatprep.subr.bf16.mxu0 0
      %6457 = vmatpush1.bf16.msra.mxu0 0
      %6458 = vmatprep.subr.bf16.mxu0 0
      %6459 = vmatpush1.bf16.msra.mxu0 0
      %6460 = vmatprep.subr.bf16.mxu0 0
      %6461 = vmatpush1.bf16.msra.mxu0 0
      %6462 = vmatprep.mubr.bf16.mxu0 0
      %6463 = vmatmul.mubr.bf16.gmra.mrb[0].mxu0 %v6425
      %v6464 = vpop.f32.mrb[0].mxu0
      %v6465 = vadd.f32 0.0, %v6464
      %v6466 = vpop.f32.mrb[0].mxu0
      %v6467 = vpop.f32.mrb[0].mxu0
      %v6468 = vadd.f32 0.0, %v6467
      %v6469 = vpop.f32.mrb[0].mxu0
      %6470 = vmatprep.mubr.bf16.mxu0 0
      %6471 = vmatmul.mubr.bf16.gmra.mrb[0].mxu0 %v6428
      %v6472 = vpop.f32.mrb[0].mxu0
      %v6473 = vadd.f32 0.0, %v6472
      %v6474 = vpop.f32.mrb[0].mxu0
      %v6475 = vpop.f32.mrb[0].mxu0
      %v6476 = vadd.f32 0.0, %v6475
      %v6477 = vpop.f32.mrb[0].mxu0
      %6478 = vdwg.mxu0
      %v6479 = vadd.f32 %v6394, %v6465
      %v6480 = vadd.f32 %v6395, %v6468
      %v6481 = vadd.f32 %v6396, %v6473
      %v6482 = vadd.f32 %v6397, %v6476
      %v6483 = vld [vmem:[%s11 + $0x70] sm:$0xf]
      %v6484 = vld [vmem:[%s11 + $0x74] sm:$0xf]
      %v6485 = vld [vmem:[%s11 + $0x78] sm:$0xf]
      %v6486 = vld [vmem:[%s11 + $0x7c] sm:$0xf]
      %v6491 = vunpack.c.l.b16 %v6483
      %v6492 = vunpack.c.l.b16 %v6484
      %v6493 = vunpack.c.l.b16 %v6485
      %v6494 = vunpack.c.l.b16 %v6486
      %v6495 = vpack.c.b16 %v6492, %v6491
      %v6496 = vpack.c.b16 %v6494, %v6493
      %6497 = vrot.lane.b32.xlu0 %v5904, 115
      %v6498 = vpop.permute.xlu0 %6497
      %6499 = vrot.lane.b32.xlu0 %v5905, 115
      %v6500 = vpop.permute.xlu0 %6499
      %6501 = vrot.lane.b32.xlu0 %v5906, 115
      %v6502 = vpop.permute.xlu0 %6501
      %6503 = vrot.lane.b32.xlu0 %v5907, 115
      %v6504 = vpop.permute.xlu0 %6503
      %vm6505 = vcmask 941056
      %v6506 = vsel %vm6505, %v6498, %v6500
      %v6507 = vsel %vm6505, %v6502, %v6504
      %v6511 = vsel %vm5934, %v6495, 0
      %v6514 = vsel %vm5934, %v6496, 0
      %6516 = vmatprep.subr.bf16.mxu0 0
      %6517 = vmatpush1.bf16.msra.mxu0 %v6506
      %6518 = vmatprep.subr.bf16.mxu0 0
      %6519 = vmatpush1.bf16.msra.mxu0 %v6507
      %6520 = vmatprep.subr.bf16.mxu0 0
      %6521 = vmatpush1.bf16.msra.mxu0 0
      %6522 = vmatprep.subr.bf16.mxu0 0
      %6523 = vmatpush1.bf16.msra.mxu0 0
      %6524 = vmatprep.subr.bf16.mxu0 0
      %6525 = vmatpush1.bf16.msra.mxu0 0
      %6526 = vmatprep.subr.bf16.mxu0 0
      %6527 = vmatpush1.bf16.msra.mxu0 0
      %6528 = vmatprep.subr.bf16.mxu0 0
      %6529 = vmatpush1.bf16.msra.mxu0 0
      %6530 = vmatprep.subr.bf16.mxu0 0
      %6531 = vmatpush1.bf16.msra.mxu0 0
      %6532 = vmatprep.subr.bf16.mxu0 0
      %6533 = vmatpush1.bf16.msra.mxu0 0
      %6534 = vmatprep.subr.bf16.mxu0 0
      %6535 = vmatpush1.bf16.msra.mxu0 0
      %6536 = vmatprep.subr.bf16.mxu0 0
      %6537 = vmatpush1.bf16.msra.mxu0 0
      %6538 = vmatprep.subr.bf16.mxu0 0
      %6539 = vmatpush1.bf16.msra.mxu0 0
      %6540 = vmatprep.subr.bf16.mxu0 0
      %6541 = vmatpush1.bf16.msra.mxu0 0
      %6542 = vmatprep.subr.bf16.mxu0 0
      %6543 = vmatpush1.bf16.msra.mxu0 0
      %6544 = vmatprep.subr.bf16.mxu0 0
      %6545 = vmatpush1.bf16.msra.mxu0 0
      %6546 = vmatprep.subr.bf16.mxu0 0
      %6547 = vmatpush1.bf16.msra.mxu0 0
      %6548 = vmatprep.mubr.bf16.mxu0 0
      %6549 = vmatmul.mubr.bf16.gmra.mrb[0].mxu0 %v6511
      %v6550 = vpop.f32.mrb[0].mxu0
      %v6551 = vadd.f32 0.0, %v6550
      %v6552 = vpop.f32.mrb[0].mxu0
      %v6553 = vpop.f32.mrb[0].mxu0
      %v6554 = vadd.f32 0.0, %v6553
      %v6555 = vpop.f32.mrb[0].mxu0
      %6556 = vmatprep.mubr.bf16.mxu0 0
      %6557 = vmatmul.mubr.bf16.gmra.mrb[0].mxu0 %v6514
      %v6558 = vpop.f32.mrb[0].mxu0
      %v6559 = vadd.f32 0.0, %v6558
      %v6560 = vpop.f32.mrb[0].mxu0
      %v6561 = vpop.f32.mrb[0].mxu0
      %v6562 = vadd.f32 0.0, %v6561
      %v6563 = vpop.f32.mrb[0].mxu0
      %6564 = vdwg.mxu0
      %v6565 = vadd.f32 %v6479, %v6551
      %v6566 = vadd.f32 %v6480, %v6554
      %v6567 = vadd.f32 %v6481, %v6559
      %v6568 = vadd.f32 %v6482, %v6562
      %v6569 = vld [vmem:[%s11 + $0x80] sm:$0xf]
      %v6570 = vld [vmem:[%s11 + $0x84] sm:$0xf]
      %v6571 = vld [vmem:[%s11 + $0x88] sm:$0xf]
      %v6572 = vld [vmem:[%s11 + $0x8c] sm:$0xf]
      %v6577 = vunpack.c.l.b16 %v6569
      %v6578 = vunpack.c.l.b16 %v6570
      %v6579 = vunpack.c.l.b16 %v6571
      %v6580 = vunpack.c.l.b16 %v6572
      %v6581 = vpack.c.b16 %v6578, %v6577
      %v6582 = vpack.c.b16 %v6580, %v6579
      %6583 = vrot.lane.b32.xlu0 %v5904, 114
      %v6584 = vpop.permute.xlu0 %6583
      %6585 = vrot.lane.b32.xlu0 %v5905, 114
      %v6586 = vpop.permute.xlu0 %6585
      %6587 = vrot.lane.b32.xlu0 %v5906, 114
      %v6588 = vpop.permute.xlu0 %6587
      %6589 = vrot.lane.b32.xlu0 %v5907, 114
      %v6590 = vpop.permute.xlu0 %6589
      %vm6591 = vcmask 932864
      %v6592 = vsel %vm6591, %v6584, %v6586
      %v6593 = vsel %vm6591, %v6588, %v6590
      %v6597 = vsel %vm5934, %v6581, 0
      %v6600 = vsel %vm5934, %v6582, 0
      %6602 = vmatprep.subr.bf16.mxu0 0
      %6603 = vmatpush1.bf16.msra.mxu0 %v6592
      %6604 = vmatprep.subr.bf16.mxu0 0
      %6605 = vmatpush1.bf16.msra.mxu0 %v6593
      %6606 = vmatprep.subr.bf16.mxu0 0
      %6607 = vmatpush1.bf16.msra.mxu0 0
      %6608 = vmatprep.subr.bf16.mxu0 0
      %6609 = vmatpush1.bf16.msra.mxu0 0
      %6610 = vmatprep.subr.bf16.mxu0 0
      %6611 = vmatpush1.bf16.msra.mxu0 0
      %6612 = vmatprep.subr.bf16.mxu0 0
      %6613 = vmatpush1.bf16.msra.mxu0 0
      %6614 = vmatprep.subr.bf16.mxu0 0
      %6615 = vmatpush1.bf16.msra.mxu0 0
      %6616 = vmatprep.subr.bf16.mxu0 0
      %6617 = vmatpush1.bf16.msra.mxu0 0
      %6618 = vmatprep.subr.bf16.mxu0 0
      %6619 = vmatpush1.bf16.msra.mxu0 0
      %6620 = vmatprep.subr.bf16.mxu0 0
      %6621 = vmatpush1.bf16.msra.mxu0 0
      %6622 = vmatprep.subr.bf16.mxu0 0
      %6623 = vmatpush1.bf16.msra.mxu0 0
      %6624 = vmatprep.subr.bf16.mxu0 0
      %6625 = vmatpush1.bf16.msra.mxu0 0
      %6626 = vmatprep.subr.bf16.mxu0 0
      %6627 = vmatpush1.bf16.msra.mxu0 0
      %6628 = vmatprep.subr.bf16.mxu0 0
      %6629 = vmatpush1.bf16.msra.mxu0 0
      %6630 = vmatprep.subr.bf16.mxu0 0
      %6631 = vmatpush1.bf16.msra.mxu0 0
      %6632 = vmatprep.subr.bf16.mxu0 0
      %6633 = vmatpush1.bf16.msra.mxu0 0
      %6634 = vmatprep.mubr.bf16.mxu0 0
      %6635 = vmatmul.mubr.bf16.gmra.mrb[0].mxu0 %v6597
      %v6636 = vpop.f32.mrb[0].mxu0
      %v6637 = vadd.f32 0.0, %v6636
      %v6638 = vpop.f32.mrb[0].mxu0
      %v6639 = vpop.f32.mrb[0].mxu0
      %v6640 = vadd.f32 0.0, %v6639
      %v6641 = vpop.f32.mrb[0].mxu0
      %6642 = vmatprep.mubr.bf16.mxu0 0
      %6643 = vmatmul.mubr.bf16.gmra.mrb[0].mxu0 %v6600
      %v6644 = vpop.f32.mrb[0].mxu0
      %v6645 = vadd.f32 0.0, %v6644
      %v6646 = vpop.f32.mrb[0].mxu0
      %v6647 = vpop.f32.mrb[0].mxu0
      %v6648 = vadd.f32 0.0, %v6647
      %v6649 = vpop.f32.mrb[0].mxu0
      %6650 = vdwg.mxu0
      %v6651 = vadd.f32 %v6565, %v6637
      %v6652 = vadd.f32 %v6566, %v6640
      %v6653 = vadd.f32 %v6567, %v6645
      %v6654 = vadd.f32 %v6568, %v6648
      %v6655 = vld [vmem:[%s17] sm:$0x1]
      %v6657 = vlaneseq
      %v6658 = vshrl.u32 %v6657, 7
      %v6659 = vsub.s32 0, %v6658
      %v6660 = vrot.slane %v6655, %v6659
      %v6662 = vmul.f32 %v6651, %v6660
      %v6663 = vmul.f32 %v6652, %v6660
      %v6664 = vmul.f32 %v6653, %v6660
      %v6665 = vmul.f32 %v6654, %v6660
      %6666 = vadd.xlane.f32.xlu0 %v6662
      %v6667 = vpop.xlane.xlu0 %6666
      %6668 = vadd.xlane.f32.xlu0 %v6663
      %v6669 = vpop.xlane.xlu0 %6668
      %6670 = vadd.xlane.f32.xlu0 %v6664
      %v6671 = vpop.xlane.xlu0 %6670
      %6672 = vadd.xlane.f32.xlu0 %v6665
      %v6673 = vpop.xlane.xlu0 %6672
      %v6674 = vmul.f32 %v6667, 0.0625
      %v6675 = vmul.f32 %v6669, 0.0625
      %v6676 = vmul.f32 %v6671, 0.0625
      %v6677 = vmul.f32 %v6673, 0.0625
      %v6678 = vmul.f32 %v6662, %v6651
      %v6679 = vmul.f32 %v6663, %v6652
      %v6680 = vmul.f32 %v6664, %v6653
      %v6681 = vmul.f32 %v6665, %v6654
      %6682 = vadd.xlane.f32.xlu0 %v6678
      %v6683 = vpop.xlane.xlu0 %6682
      %6684 = vadd.xlane.f32.xlu0 %v6679
      %v6685 = vpop.xlane.xlu0 %6684
      %6686 = vadd.xlane.f32.xlu0 %v6680
      %v6687 = vpop.xlane.xlu0 %6686
      %6688 = vadd.xlane.f32.xlu0 %v6681
      %v6689 = vpop.xlane.xlu0 %6688
      %v6690 = vmul.f32 %v6683, 0.0625
      %v6691 = vmul.f32 %v6685, 0.0625
      %v6692 = vmul.f32 %v6687, 0.0625
      %v6693 = vmul.f32 %v6689, 0.0625
      %v6694 = vmul.f32 %v6674, %v6674
      %v6695 = vmul.f32 %v6675, %v6675
      %v6696 = vmul.f32 %v6676, %v6676
      %v6697 = vmul.f32 %v6677, %v6677
      %v6698 = vsub.f32 %v6690, %v6694
      %v6699 = vsub.f32 %v6691, %v6695
      %v6700 = vsub.f32 %v6692, %v6696
      %v6701 = vsub.f32 %v6693, %v6697
      %v6702 = vmax.f32 %v6698, 0.0
      %v6703 = vmax.f32 %v6699, 0.0
      %v6704 = vmax.f32 %v6700, 0.0
      %v6705 = vmax.f32 %v6701, 0.0
      %v6706 = vld [vmem:[%s12] sm:$0xff]
      %v6707 = vld [vmem:[%s12 + $0x8] sm:$0xff]
      %v6708 = vld [vmem:[%s12 + $0x10] sm:$0xff]
      %v6709 = vld [vmem:[%s12 + $0x18] sm:$0xff]
      %v6710 = vadd.f32 %v6702, 1e-05
      %v6711 = vadd.f32 %v6703, 1e-05
      %v6712 = vadd.f32 %v6704, 1e-05
      %v6713 = vadd.f32 %v6705, 1e-05
      %v6714 = vrsqrt.pop %v6710
      %v6715 = vrsqrt.pop %v6711
      %v6716 = vrsqrt.pop %v6712
      %v6717 = vrsqrt.pop %v6713
      %v6718 = vmul.f32 %v6706, %v6714
      %v6719 = vmul.f32 %v6707, %v6715
      %v6720 = vmul.f32 %v6708, %v6716
      %v6721 = vmul.f32 %v6709, %v6717
      %v6722 = vmul.f32 %v6674, %v6718
      %v6723 = vmul.f32 %v6675, %v6719
      %v6724 = vmul.f32 %v6676, %v6720
      %v6725 = vmul.f32 %v6677, %v6721
      %6730 = vrot.lane.b32.xlu0 %v6722, 1
      %v6731 = vpop.permute.xlu0 %6730
      %6732 = vrot.lane.b32.xlu0 %v6723, 1
      %v6733 = vpop.permute.xlu0 %6732
      %6734 = vrot.lane.b32.xlu0 %v6724, 1
      %v6735 = vpop.permute.xlu0 %6734
      %6736 = vrot.lane.b32.xlu0 %v6725, 1
      %v6737 = vpop.permute.xlu0 %6736
      %v6742 = vsub.f32 %v6706, %v6731
      %v6743 = vsub.f32 %v6707, %v6733
      %v6744 = vsub.f32 %v6708, %v6735
      %v6745 = vsub.f32 %v6709, %v6737
      %6747 = vset.pattern.permute.xlu0 0
      %6748 = vperm.xlu0 %6747, %v6718
      %v6749 = vpop.permute.xlu0 %6748
      %6752 = vset.pattern.permute.xlu0 0
      %6753 = vperm.xlu0 %6752, %v6719
      %v6754 = vpop.permute.xlu0 %6753
      %6757 = vset.pattern.permute.xlu0 0
      %6758 = vperm.xlu0 %6757, %v6720
      %v6759 = vpop.permute.xlu0 %6758
      %6762 = vset.pattern.permute.xlu0 0
      %6763 = vperm.xlu0 %6762, %v6721
      %v6764 = vpop.permute.xlu0 %6763
      %v6766 = vmul.f32 %v6651, %v6749
      %v6767 = vmul.f32 %v6652, %v6754
      %v6768 = vmul.f32 %v6653, %v6759
      %v6769 = vmul.f32 %v6654, %v6764
      %6771 = vset.pattern.permute.xlu0 1
      %6772 = vperm.xlu0 %6771, %v6742
      %v6773 = vpop.permute.xlu0 %6772
      %6776 = vset.pattern.permute.xlu0 1
      %6777 = vperm.xlu0 %6776, %v6743
      %v6778 = vpop.permute.xlu0 %6777
      %6781 = vset.pattern.permute.xlu0 1
      %6782 = vperm.xlu0 %6781, %v6744
      %v6783 = vpop.permute.xlu0 %6782
      %6786 = vset.pattern.permute.xlu0 1
      %6787 = vperm.xlu0 %6786, %v6745
      %v6788 = vpop.permute.xlu0 %6787
      %v6790 = vadd.f32 %v6766, %v6773
      %v6791 = vadd.f32 %v6767, %v6778
      %v6792 = vadd.f32 %v6768, %v6783
      %v6793 = vadd.f32 %v6769, %v6788
      %vm6794 = vcmp.ge.f32.partialorder %v6790, 0.0
      %vm6795 = vcmp.ge.f32.partialorder %v6791, 0.0
      %vm6796 = vcmp.ge.f32.partialorder %v6792, 0.0
      %vm6797 = vcmp.ge.f32.partialorder %v6793, 0.0
      %v6798 = vmul.f32 %v6790, 0.01
      %v6799 = vmul.f32 %v6791, 0.01
      %v6800 = vmul.f32 %v6792, 0.01
      %v6801 = vmul.f32 %v6793, 0.01
      %v6802 = vsel %vm6794, %v6790, %v6798
      %v6803 = vsel %vm6795, %v6791, %v6799
      %v6804 = vsel %vm6796, %v6792, %v6800
      %v6805 = vsel %vm6797, %v6793, %v6801
      %v6806 = vmul.f32 %v6802, %v6660
      %v6807 = vmul.f32 %v6803, %v6660
      %v6808 = vmul.f32 %v6804, %v6660
      %v6809 = vmul.f32 %v6805, %v6660
      %6810 = vst [vmem:[%s654] sm:$0xff] %v6806
      %6811 = vst [vmem:[%s654 + $0x8] sm:$0xff] %v6807
      %6812 = vst [vmem:[%s654 + $0x10] sm:$0xff] %v6808
      %6813 = vst [vmem:[%s654 + $0x18] sm:$0xff] %v6809
      %p6814 = scmp.lt.s32.totalorder %s32, 1
      %s6815 = scalar_select %p6814, %s32, 1
      %s6816 = smul.addr %s6815, 3
      %s6817 = smul.addr %s6816, 8
      %s6818 = scalar_lea.vmem %s18, %s6817
      %p6819 = scmp.lt.s32.totalorder %s32, 1
      %s6820 = scalar_select %p6819, %s32, 1
      %s6821 = smul.addr %s6820, 2
      %s6822 = smul.addr %s6821, 8
      %s6823 = scalar_lea.vmem %s19, %s6822
      %p6824 = scmp.lt.s32.totalorder %s32, 1
      %s6825 = scalar_select %p6824, %s32, 1
      %s6826 = smul.addr %s6825, 4
      %s6827 = smul.addr %s6826, 8
      %s6828 = scalar_lea.vmem %s20, %s6827
      // Predicated region
      $region93: #{_encoder_forward_impl.1} parent=91 // pred_check
        %p6829 = pneg %p433
      $region94: #{_encoder_forward_impl.1} parent=91 // pred_check_branch
        %6831 = sbr.rel (%p6829) target = $region96
      $region95: #{_encoder_forward_impl.1} parent=91 // pred_region
        _
      $region96: #{_encoder_forward_impl.1} parent=91 // pred_fallthru
        _
      // Predicated region
      $region97: #{_encoder_forward_impl.1} parent=91 // pred_check
        %p6832 = pneg %p459
      $region98: #{_encoder_forward_impl.1} parent=91 // pred_check_branch
        %6834 = sbr.rel (%p6832) target = $region100
      $region99: #{_encoder_forward_impl.1} parent=91 // pred_region
        _
      $region100: #{_encoder_forward_impl.1} parent=91 // pred_fallthru
        _
      // Predicated region
      $region101: #{_encoder_forward_impl.1} parent=91 // pred_check
        %p6835 = pneg %p485
      $region102: #{_encoder_forward_impl.1} parent=91 // pred_check_branch
        %6837 = sbr.rel (%p6835) target = $region104
      $region103: #{_encoder_forward_impl.1} parent=91 // pred_region
        _
      $region104: #{_encoder_forward_impl.1} parent=91 // pred_fallthru
        _
    $region92: #{_encoder_forward_impl.1} parent=5 // pred_fallthru
      _
    %p6838 = scmp.le.s32.totalorder 2, %s27
    // Predicated region
    $region105: #{_encoder_forward_impl.1} parent=5 // pred_check
      %p6839 = pneg %p6838
    $region106: #{_encoder_forward_impl.1} parent=5 // pred_check_branch
      %6841 = sbr.rel (%p6839) target = $region108
    $region107: #{_encoder_forward_impl.1} parent=5 // pred_region
      %s6842 = ssub.s32 %s27, 2
      // Predicated region
      $region109: #{_encoder_forward_impl.1} parent=107 // pred_check
        %p6843 = pneg %p439
      $region110: #{_encoder_forward_impl.1} parent=107 // pred_check_branch
        %6845 = sbr.rel (%p6843) target = $region112
      $region111: #{_encoder_forward_impl.1} parent=107 // pred_region
        %p6846 = scmp.lt.s32.totalorder %s33, 1
        %s6847 = scalar_select %p6846, %s33, 1
        %s6848 = smul.addr %s6847, 3
        %s6849 = smul.addr %s6848, 8
        %s6850 = scalar_lea.vmem %s18, %s6849
      $region112: #{_encoder_forward_impl.1} parent=107 // pred_fallthru
        _
      // Predicated region
      $region113: #{_encoder_forward_impl.1} parent=107 // pred_check
        %p6851 = pneg %p465
      $region114: #{_encoder_forward_impl.1} parent=107 // pred_check_branch
        %6853 = sbr.rel (%p6851) target = $region116
      $region115: #{_encoder_forward_impl.1} parent=107 // pred_region
        %p6854 = scmp.lt.s32.totalorder %s33, 1
        %s6855 = scalar_select %p6854, %s33, 1
        %s6856 = smul.addr %s6855, 2
        %s6857 = smul.addr %s6856, 8
        %s6858 = scalar_lea.vmem %s19, %s6857
      $region116: #{_encoder_forward_impl.1} parent=107 // pred_fallthru
        _
      // Predicated region
      $region117: #{_encoder_forward_impl.1} parent=107 // pred_check
        %p6859 = pneg %p491
      $region118: #{_encoder_forward_impl.1} parent=107 // pred_check_branch
        %6861 = sbr.rel (%p6859) target = $region120
      $region119: #{_encoder_forward_impl.1} parent=107 // pred_region
        %p6862 = scmp.lt.s32.totalorder %s33, 1
        %s6863 = scalar_select %p6862, %s33, 1
        %s6864 = smul.addr %s6863, 4
        %s6865 = smul.addr %s6864, 8
        %s6866 = scalar_lea.vmem %s20, %s6865
      $region120: #{_encoder_forward_impl.1} parent=107 // pred_fallthru
        _
    $region108: #{_encoder_forward_impl.1} parent=5 // pred_fallthru
      _
  $region6: #{_encoder_forward_impl.1} parent=0 // loop_footer
    %s31 = sadd.s32 1, %s27
  $region7: #{_encoder_forward_impl.1} parent=0 // loop_footer_branch
    %26 = sbr.rel target = $region3
  $region8: #{_encoder_forward_impl.1} parent=0 // loop_exit
    _

</llo_original>
